<compile_context>
chip_gen: v7x
topology: tpu7x:2x2x1
jax: 0.10.0
libtpu: 0.0.40
codegen_flags: <defaults>
</compile_context>

<pallas_src>
import jax
import jax.numpy as jnp
from jax import lax
from jax.experimental import pallas as pl
from jax.experimental.pallas import tpu as pltpu


CFG = (8, 'M', 16, 'M')
NUM_CLASSES = 10


# ---------------------------------------------------------------------------
# Fused kernel: conv1 -> pool -> conv2 -> pool -> avgpool -> fc
# ---------------------------------------------------------------------------

def vgg_fused_kernel(x_ref, w1_ref, w2_ref, fcw_ref, fcb_ref, o_ref,
                     pad1_ref, pad2_ref):
    """Whole VGG_cifar forward for the full batch, all intermediates in VMEM.

    x_ref:   (N, H, W, 3)        NHWC input (whole batch)
    w1_ref:  (9, 3,  C1)         conv1 taps, tap index = dy*3 + dx
    w2_ref:  (9, C1, C2)         conv2 taps
    fcw_ref: (C2, K)             classifier weight (in, out)
    fcb_ref: (1, K)              classifier bias
    o_ref:   (N, K)              logits
    pad1_ref, pad2_ref: VMEM scratch holding the zero-padded conv inputs.
    """
    N, H, W, _ = x_ref.shape
    C2 = w2_ref.shape[2]
    H4, W4 = H // 4, W // 4

    def conv3x3_relu(pad_ref, x_nhwc, w_taps):
        """3x3 conv (pad=1, no bias) + ReLU; one batched matmul for all 9 taps."""
        n, h, w, cin = x_nhwc.shape
        cout = w_taps.shape[2]
        # Zero-pad inside the kernel (VMEM scratch memset + interior store).
        pad_ref[...] = jnp.zeros_like(pad_ref)
        pad_ref[:, 1:h + 1, 1:w + 1, :] = x_nhwc
        xp = pad_ref[...]
        # Stack the 9 shifted tap views along a leading (major) axis -> (9, n*h*w, cin)
        # and contract them all in a single batched dot_general, then sum over taps.
        taps = jnp.stack(
            [xp[:, dy:dy + h, dx:dx + w, :].reshape(n * h * w, cin)
             for dy in range(3) for dx in range(3)],
            axis=0)
        y = lax.dot_general(
            taps, w_taps,
            dimension_numbers=(((2,), (1,)), ((0,), (0,))),
            preferred_element_type=jnp.float32)          # (9, n*h*w, cout)
        y = jnp.sum(y, axis=0)                           # (n*h*w, cout), f32
        return jnp.maximum(y, 0.0).reshape(n, h, w, cout)

    def maxpool2x2(y):
        """2x2 / stride-2 max pool via 3 elementwise maxima (VPU, no reductions)."""
        n, h, w, c = y.shape
        yr = y.reshape(n, h // 2, 2, w // 2, 2, c)
        return jnp.maximum(
            jnp.maximum(yr[:, :, 0, :, 0, :], yr[:, :, 0, :, 1, :]),
            jnp.maximum(yr[:, :, 1, :, 0, :], yr[:, :, 1, :, 1, :]))

    x = x_ref[...].astype(jnp.float32)
    y = maxpool2x2(conv3x3_relu(pad1_ref, x, w1_ref[...]))   # (N, H/2, W/2, C1)
    y = maxpool2x2(conv3x3_relu(pad2_ref, y, w2_ref[...]))   # (N, H/4, W/4, C2)

    # AdaptiveAvgPool2d((1,1)) + flatten == mean over H, W.
    pooled = jnp.mean(y, axis=(1, 2)).reshape(N, C2)         # (N, C2), f32
    logits = jnp.dot(pooled, fcw_ref[...],
                     preferred_element_type=jnp.float32) + fcb_ref[...]
    # Single tiny (N, num_classes) store; the masked-lane cost here is negligible
    # since all fused intermediates above never touch HBM.
    o_ref[...] = logits.astype(o_ref.dtype)
    assert H4 == y.shape[1] and W4 == y.shape[2]  # static sanity (traced once)


# ---------------------------------------------------------------------------
# Wrapper: one pallas_call, whole-tensor blocks, no grid
# ---------------------------------------------------------------------------

def vgg_forward_fused(x_nhwc, w1_taps, w2_taps, fc_w, fc_b):
    N, H, W, Cin = x_nhwc.shape
    C1 = w1_taps.shape[2]
    K = fc_w.shape[1]
    return pl.pallas_call(
        vgg_fused_kernel,
        out_shape=jax.ShapeDtypeStruct((N, K), x_nhwc.dtype),
        # No grid / no tiling: total footprint is ~50 KB, far below VMEM on every
        # TPU generation, so whole-tensor blocks avoid all per-step overhead.
        scratch_shapes=[
            pltpu.VMEM((N, H + 2, W + 2, Cin), jnp.float32),          # conv1 padded input
            pltpu.VMEM((N, H // 2 + 2, W // 2 + 2, C1), jnp.float32),  # conv2 padded input
        ],
    )(x_nhwc, w1_taps, w2_taps, fc_w, fc_b)


@jax.jit
def vgg_cifar_forward(x_nchw, params):
    # PyTorch NCHW -> NHWC once at the boundary (channels -> TPU lanes); everything
    # downstream is fused into a single pallas_call.
    x = jnp.transpose(x_nchw, (0, 2, 3, 1))
    # TODO(synk): self.feature_map = x.detach() is host-side attribute bookkeeping;
    # the returned logits ARE that tensor, so no extra kernel work is needed.
    return vgg_forward_fused(x, params['conv'][0], params['conv'][1],
                             params['fc_w'], params['fc_b'])


# ---------------------------------------------------------------------------
# Parameters (mirrors _initialize_weights) + one-time layout conversion
# ---------------------------------------------------------------------------

def init_params(key, cfg=CFG, num_classes=NUM_CLASSES):
    """PyTorch-layout params: conv weights OIHW, fc weight (in, out), fc bias 0."""
    convs = []
    in_ch = 3
    for v in cfg:
        if v == 'M':
            continue
        key, sub = jax.random.split(key)
        fan_out = v * 3 * 3
        std = (2.0 / fan_out) ** 0.5                       # kaiming_normal, fan_out, relu
        convs.append(jax.random.normal(sub, (v, in_ch, 3, 3), jnp.float32) * std)
        in_ch = v
    key, sub = jax.random.split(key)
    fc_w = jax.random.normal(sub, (in_ch, num_classes), jnp.float32) * 0.01  # N(0, 0.01)
    fc_b = jnp.zeros((1, num_classes), jnp.float32)        # constant_(0)
    return {'conv': convs, 'fc_w': fc_w, 'fc_b': fc_b}


def prepare_params(params):
    """One-time conversion to kernel layouts (done outside the jitted forward).

    Conv OIHW (Cout, Cin, 3, 3) -> (9, Cin, Cout) with tap index dy*3 + dx.
    NOTE: if loading real PyTorch nn.Linear weights (out, in), transpose to (in, out).
    """
    convs = [jnp.transpose(w, (2, 3, 1, 0)).reshape(9, w.shape[1], w.shape[0])
             for w in params['conv']]
    return {'conv': convs, 'fc_w': params['fc_w'], 'fc_b': params['fc_b']}


# ---------------------------------------------------------------------------

if __name__ == "__main__":
    key = jax.random.PRNGKey(0)
    key, xkey = jax.random.split(key)
    x = jax.random.normal(xkey, (2, 3, 16, 16), jnp.float32)   # NCHW, like PyTorch
    params = prepare_params(init_params(key))

    out = vgg_cifar_forward(x, params)
    out = jax.block_until_ready(out)
    assert out.shape == (2, NUM_CLASSES), out.shape
    print("KERNEL_OK")
</pallas_src>

<mosaic_0001>
module attributes {stable_mosaic.version = 11 : i64} {
  func.func @vgg_fused_kernel(%arg0: memref<2x16x16x3xf32, #tpu.memory_space<vmem>>, %arg1: memref<9x3x8xf32, #tpu.memory_space<vmem>>, %arg2: memref<9x8x16xf32, #tpu.memory_space<vmem>>, %arg3: memref<16x10xf32, #tpu.memory_space<vmem>>, %arg4: memref<1x10xf32, #tpu.memory_space<vmem>>, %arg5: memref<2x10xf32, #tpu.memory_space<vmem>>, %arg6: memref<2x18x18x3xf32, #tpu.memory_space<vmem>>, %arg7: memref<2x10x10x8xf32, #tpu.memory_space<vmem>>) attributes {dimension_semantics = [], scalar_prefetch = 0 : i64, scratch_operands = 2 : i64, tpu.core_type = #tpu.core_type<tc>} {
    %c0 = arith.constant 0 : index
    %c0_0 = arith.constant 0 : index
    %c0_1 = arith.constant 0 : index
    %c0_2 = arith.constant 0 : index
    %0 = vector.load %arg0[%c0, %c0_0, %c0_1, %c0_2] : memref<2x16x16x3xf32, #tpu.memory_space<vmem>>, vector<2x16x16x3xf32>
    %c0_3 = arith.constant 0 : index
    %c0_4 = arith.constant 0 : index
    %c0_5 = arith.constant 0 : index
    %1 = vector.load %arg1[%c0_3, %c0_4, %c0_5] : memref<9x3x8xf32, #tpu.memory_space<vmem>>, vector<9x3x8xf32>
    %cst = arith.constant 0.000000e+00 : f32
    %2 = vector.broadcast %cst : f32 to vector<2x18x18x3xf32>
    %c0_6 = arith.constant 0 : index
    %c0_7 = arith.constant 0 : index
    %c0_8 = arith.constant 0 : index
    %c0_9 = arith.constant 0 : index
    %3 = vector.load %arg6[%c0_6, %c0_7, %c0_8, %c0_9] : memref<2x18x18x3xf32, #tpu.memory_space<vmem>>, vector<2x18x18x3xf32>
    tpu.vector_store %arg6[%c0_6, %c0_7, %c0_8, %c0_9], %2 {strides = array<i32>} : memref<2x18x18x3xf32, #tpu.memory_space<vmem>>, vector<2x18x18x3xf32>,
    %c0_10 = arith.constant 0 : index
    %c1 = arith.constant 1 : index
    %c1_11 = arith.constant 1 : index
    %c0_12 = arith.constant 0 : index
    %4 = vector.load %arg6[%c0_10, %c1, %c1_11, %c0_12] : memref<2x18x18x3xf32, #tpu.memory_space<vmem>>, vector<2x16x16x3xf32>
    tpu.vector_store %arg6[%c0_10, %c1, %c1_11, %c0_12], %0 {strides = array<i32>} : memref<2x18x18x3xf32, #tpu.memory_space<vmem>>, vector<2x16x16x3xf32>,
    %c0_13 = arith.constant 0 : index
    %c0_14 = arith.constant 0 : index
    %c0_15 = arith.constant 0 : index
    %c0_16 = arith.constant 0 : index
    %5 = vector.load %arg6[%c0_13, %c0_14, %c0_15, %c0_16] : memref<2x18x18x3xf32, #tpu.memory_space<vmem>>, vector<2x18x18x3xf32>
    %6 = vector.extract_strided_slice %5 {offsets = [0, 0, 0, 0], sizes = [2, 16, 16, 3], strides = [1, 1, 1, 1]} : vector<2x18x18x3xf32> to vector<2x16x16x3xf32>
    %7 = vector.shape_cast %6 : vector<2x16x16x3xf32> to vector<512x3xf32>
    %8 = vector.extract_strided_slice %5 {offsets = [0, 0, 1, 0], sizes = [2, 16, 16, 3], strides = [1, 1, 1, 1]} : vector<2x18x18x3xf32> to vector<2x16x16x3xf32>
    %9 = vector.shape_cast %8 : vector<2x16x16x3xf32> to vector<512x3xf32>
    %10 = vector.extract_strided_slice %5 {offsets = [0, 0, 2, 0], sizes = [2, 16, 16, 3], strides = [1, 1, 1, 1]} : vector<2x18x18x3xf32> to vector<2x16x16x3xf32>
    %11 = vector.shape_cast %10 : vector<2x16x16x3xf32> to vector<512x3xf32>
    %12 = vector.extract_strided_slice %5 {offsets = [0, 1, 0, 0], sizes = [2, 16, 16, 3], strides = [1, 1, 1, 1]} : vector<2x18x18x3xf32> to vector<2x16x16x3xf32>
    %13 = vector.shape_cast %12 : vector<2x16x16x3xf32> to vector<512x3xf32>
    %14 = vector.extract_strided_slice %5 {offsets = [0, 1, 1, 0], sizes = [2, 16, 16, 3], strides = [1, 1, 1, 1]} : vector<2x18x18x3xf32> to vector<2x16x16x3xf32>
    %15 = vector.shape_cast %14 : vector<2x16x16x3xf32> to vector<512x3xf32>
    %16 = vector.extract_strided_slice %5 {offsets = [0, 1, 2, 0], sizes = [2, 16, 16, 3], strides = [1, 1, 1, 1]} : vector<2x18x18x3xf32> to vector<2x16x16x3xf32>
    %17 = vector.shape_cast %16 : vector<2x16x16x3xf32> to vector<512x3xf32>
    %18 = vector.extract_strided_slice %5 {offsets = [0, 2, 0, 0], sizes = [2, 16, 16, 3], strides = [1, 1, 1, 1]} : vector<2x18x18x3xf32> to vector<2x16x16x3xf32>
    %19 = vector.shape_cast %18 : vector<2x16x16x3xf32> to vector<512x3xf32>
    %20 = vector.extract_strided_slice %5 {offsets = [0, 2, 1, 0], sizes = [2, 16, 16, 3], strides = [1, 1, 1, 1]} : vector<2x18x18x3xf32> to vector<2x16x16x3xf32>
    %21 = vector.shape_cast %20 : vector<2x16x16x3xf32> to vector<512x3xf32>
    %22 = vector.extract_strided_slice %5 {offsets = [0, 2, 2, 0], sizes = [2, 16, 16, 3], strides = [1, 1, 1, 1]} : vector<2x18x18x3xf32> to vector<2x16x16x3xf32>
    %23 = vector.shape_cast %22 : vector<2x16x16x3xf32> to vector<512x3xf32>
    %24 = vector.shape_cast %7 : vector<512x3xf32> to vector<1x512x3xf32>
    %25 = vector.shape_cast %9 : vector<512x3xf32> to vector<1x512x3xf32>
    %26 = vector.shape_cast %11 : vector<512x3xf32> to vector<1x512x3xf32>
    %27 = vector.shape_cast %13 : vector<512x3xf32> to vector<1x512x3xf32>
    %28 = vector.shape_cast %15 : vector<512x3xf32> to vector<1x512x3xf32>
    %29 = vector.shape_cast %17 : vector<512x3xf32> to vector<1x512x3xf32>
    %30 = vector.shape_cast %19 : vector<512x3xf32> to vector<1x512x3xf32>
    %31 = vector.shape_cast %21 : vector<512x3xf32> to vector<1x512x3xf32>
    %32 = vector.shape_cast %23 : vector<512x3xf32> to vector<1x512x3xf32>
    %33 = tpu.concatenate %24, %25, %26, %27, %28, %29, %30, %31, %32 in 0 : vector<1x512x3xf32>, vector<1x512x3xf32>, vector<1x512x3xf32>, vector<1x512x3xf32>, vector<1x512x3xf32>, vector<1x512x3xf32>, vector<1x512x3xf32>, vector<1x512x3xf32>, vector<1x512x3xf32> -> vector<9x512x3xf32>
    %cst_17 = arith.constant dense<0.000000e+00> : vector<9x512x8xf32>
    %34 = tpu.matmul %33, %1, %cst_17 {dimension_numbers = #tpu.dot_dimension_numbers<[2], [1], [1], [2], [0, 0, 0, 1, 1, 2], [0], [0]>} : vector<9x512x3xf32>, vector<9x3x8xf32>, vector<9x512x8xf32> -> vector<9x512x8xf32>
    %cst_18 = arith.constant dense<0.000000e+00> : vector<512x8xf32>
    %35 = vector.multi_reduction <add>, %34, %cst_18 [0] : vector<9x512x8xf32> to vector<512x8xf32>
    %cst_19 = arith.constant 0.000000e+00 : f32
    %36 = vector.broadcast %cst_19 : f32 to vector<512x8xf32>
    %37 = arith.maximumf %35, %36 : vector<512x8xf32>
    %38 = vector.shape_cast %37 : vector<512x8xf32> to vector<2x16x16x8xf32>
    %39 = vector.shape_cast %38 : vector<2x16x16x8xf32> to vector<2x8x2x8x2x8xf32>
    %40 = vector.extract_strided_slice %39 {offsets = [0, 0, 0, 0, 0, 0], sizes = [2, 8, 1, 8, 1, 8], strides = [1, 1, 1, 1, 1, 1]} : vector<2x8x2x8x2x8xf32> to vector<2x8x1x8x1x8xf32>
    %41 = vector.shape_cast %40 : vector<2x8x1x8x1x8xf32> to vector<2x8x8x8xf32>
    %42 = vector.extract_strided_slice %39 {offsets = [0, 0, 0, 0, 1, 0], sizes = [2, 8, 1, 8, 1, 8], strides = [1, 1, 1, 1, 1, 1]} : vector<2x8x2x8x2x8xf32> to vector<2x8x1x8x1x8xf32>
    %43 = vector.shape_cast %42 : vector<2x8x1x8x1x8xf32> to vector<2x8x8x8xf32>
    %44 = arith.maximumf %41, %43 : vector<2x8x8x8xf32>
    %45 = vector.extract_strided_slice %39 {offsets = [0, 0, 1, 0, 0, 0], sizes = [2, 8, 1, 8, 1, 8], strides = [1, 1, 1, 1, 1, 1]} : vector<2x8x2x8x2x8xf32> to vector<2x8x1x8x1x8xf32>
    %46 = vector.shape_cast %45 : vector<2x8x1x8x1x8xf32> to vector<2x8x8x8xf32>
    %47 = vector.extract_strided_slice %39 {offsets = [0, 0, 1, 0, 1, 0], sizes = [2, 8, 1, 8, 1, 8], strides = [1, 1, 1, 1, 1, 1]} : vector<2x8x2x8x2x8xf32> to vector<2x8x1x8x1x8xf32>
    %48 = vector.shape_cast %47 : vector<2x8x1x8x1x8xf32> to vector<2x8x8x8xf32>
    %49 = arith.maximumf %46, %48 : vector<2x8x8x8xf32>
    %50 = arith.maximumf %44, %49 : vector<2x8x8x8xf32>
    %c0_20 = arith.constant 0 : index
    %c0_21 = arith.constant 0 : index
    %c0_22 = arith.constant 0 : index
    %51 = vector.load %arg2[%c0_20, %c0_21, %c0_22] : memref<9x8x16xf32, #tpu.memory_space<vmem>>, vector<9x8x16xf32>
    %cst_23 = arith.constant 0.000000e+00 : f32
    %52 = vector.broadcast %cst_23 : f32 to vector<2x10x10x8xf32>
    %c0_24 = arith.constant 0 : index
    %c0_25 = arith.constant 0 : index
    %c0_26 = arith.constant 0 : index
    %c0_27 = arith.constant 0 : index
    %53 = vector.load %arg7[%c0_24, %c0_25, %c0_26, %c0_27] : memref<2x10x10x8xf32, #tpu.memory_space<vmem>>, vector<2x10x10x8xf32>
    tpu.vector_store %arg7[%c0_24, %c0_25, %c0_26, %c0_27], %52 {strides = array<i32>} : memref<2x10x10x8xf32, #tpu.memory_space<vmem>>, vector<2x10x10x8xf32>,
    %c0_28 = arith.constant 0 : index
    %c1_29 = arith.constant 1 : index
    %c1_30 = arith.constant 1 : index
    %c0_31 = arith.constant 0 : index
    %54 = vector.load %arg7[%c0_28, %c1_29, %c1_30, %c0_31] : memref<2x10x10x8xf32, #tpu.memory_space<vmem>>, vector<2x8x8x8xf32>
    tpu.vector_store %arg7[%c0_28, %c1_29, %c1_30, %c0_31], %50 {strides = array<i32>} : memref<2x10x10x8xf32, #tpu.memory_space<vmem>>, vector<2x8x8x8xf32>,
    %c0_32 = arith.constant 0 : index
    %c0_33 = arith.constant 0 : index
    %c0_34 = arith.constant 0 : index
    %c0_35 = arith.constant 0 : index
    %55 = vector.load %arg7[%c0_32, %c0_33, %c0_34, %c0_35] : memref<2x10x10x8xf32, #tpu.memory_space<vmem>>, vector<2x10x10x8xf32>
    %56 = vector.extract_strided_slice %55 {offsets = [0, 0, 0, 0], sizes = [2, 8, 8, 8], strides = [1, 1, 1, 1]} : vector<2x10x10x8xf32> to vector<2x8x8x8xf32>
    %57 = vector.shape_cast %56 : vector<2x8x8x8xf32> to vector<128x8xf32>
    %58 = vector.extract_strided_slice %55 {offsets = [0, 0, 1, 0], sizes = [2, 8, 8, 8], strides = [1, 1, 1, 1]} : vector<2x10x10x8xf32> to vector<2x8x8x8xf32>
    %59 = vector.shape_cast %58 : vector<2x8x8x8xf32> to vector<128x8xf32>
    %60 = vector.extract_strided_slice %55 {offsets = [0, 0, 2, 0], sizes = [2, 8, 8, 8], strides = [1, 1, 1, 1]} : vector<2x10x10x8xf32> to vector<2x8x8x8xf32>
    %61 = vector.shape_cast %60 : vector<2x8x8x8xf32> to vector<128x8xf32>
    %62 = vector.extract_strided_slice %55 {offsets = [0, 1, 0, 0], sizes = [2, 8, 8, 8], strides = [1, 1, 1, 1]} : vector<2x10x10x8xf32> to vector<2x8x8x8xf32>
    %63 = vector.shape_cast %62 : vector<2x8x8x8xf32> to vector<128x8xf32>
    %64 = vector.extract_strided_slice %55 {offsets = [0, 1, 1, 0], sizes = [2, 8, 8, 8], strides = [1, 1, 1, 1]} : vector<2x10x10x8xf32> to vector<2x8x8x8xf32>
    %65 = vector.shape_cast %64 : vector<2x8x8x8xf32> to vector<128x8xf32>
    %66 = vector.extract_strided_slice %55 {offsets = [0, 1, 2, 0], sizes = [2, 8, 8, 8], strides = [1, 1, 1, 1]} : vector<2x10x10x8xf32> to vector<2x8x8x8xf32>
    %67 = vector.shape_cast %66 : vector<2x8x8x8xf32> to vector<128x8xf32>
    %68 = vector.extract_strided_slice %55 {offsets = [0, 2, 0, 0], sizes = [2, 8, 8, 8], strides = [1, 1, 1, 1]} : vector<2x10x10x8xf32> to vector<2x8x8x8xf32>
    %69 = vector.shape_cast %68 : vector<2x8x8x8xf32> to vector<128x8xf32>
    %70 = vector.extract_strided_slice %55 {offsets = [0, 2, 1, 0], sizes = [2, 8, 8, 8], strides = [1, 1, 1, 1]} : vector<2x10x10x8xf32> to vector<2x8x8x8xf32>
    %71 = vector.shape_cast %70 : vector<2x8x8x8xf32> to vector<128x8xf32>
    %72 = vector.extract_strided_slice %55 {offsets = [0, 2, 2, 0], sizes = [2, 8, 8, 8], strides = [1, 1, 1, 1]} : vector<2x10x10x8xf32> to vector<2x8x8x8xf32>
    %73 = vector.shape_cast %72 : vector<2x8x8x8xf32> to vector<128x8xf32>
    %74 = vector.shape_cast %57 : vector<128x8xf32> to vector<1x128x8xf32>
    %75 = vector.shape_cast %59 : vector<128x8xf32> to vector<1x128x8xf32>
    %76 = vector.shape_cast %61 : vector<128x8xf32> to vector<1x128x8xf32>
    %77 = vector.shape_cast %63 : vector<128x8xf32> to vector<1x128x8xf32>
    %78 = vector.shape_cast %65 : vector<128x8xf32> to vector<1x128x8xf32>
    %79 = vector.shape_cast %67 : vector<128x8xf32> to vector<1x128x8xf32>
    %80 = vector.shape_cast %69 : vector<128x8xf32> to vector<1x128x8xf32>
    %81 = vector.shape_cast %71 : vector<128x8xf32> to vector<1x128x8xf32>
    %82 = vector.shape_cast %73 : vector<128x8xf32> to vector<1x128x8xf32>
    %83 = tpu.concatenate %74, %75, %76, %77, %78, %79, %80, %81, %82 in 0 : vector<1x128x8xf32>, vector<1x128x8xf32>, vector<1x128x8xf32>, vector<1x128x8xf32>, vector<1x128x8xf32>, vector<1x128x8xf32>, vector<1x128x8xf32>, vector<1x128x8xf32>, vector<1x128x8xf32> -> vector<9x128x8xf32>
    %cst_36 = arith.constant dense<0.000000e+00> : vector<9x128x16xf32>
    %84 = tpu.matmul %83, %51, %cst_36 {dimension_numbers = #tpu.dot_dimension_numbers<[2], [1], [1], [2], [0, 0, 0, 1, 1, 2], [0], [0]>} : vector<9x128x8xf32>, vector<9x8x16xf32>, vector<9x128x16xf32> -> vector<9x128x16xf32>
    %cst_37 = arith.constant dense<0.000000e+00> : vector<128x16xf32>
    %85 = vector.multi_reduction <add>, %84, %cst_37 [0] : vector<9x128x16xf32> to vector<128x16xf32>
    %cst_38 = arith.constant 0.000000e+00 : f32
    %86 = vector.broadcast %cst_38 : f32 to vector<128x16xf32>
    %87 = arith.maximumf %85, %86 : vector<128x16xf32>
    %88 = vector.shape_cast %87 : vector<128x16xf32> to vector<2x8x8x16xf32>
    %89 = vector.shape_cast %88 : vector<2x8x8x16xf32> to vector<2x4x2x4x2x16xf32>
    %90 = vector.extract_strided_slice %89 {offsets = [0, 0, 0, 0, 0, 0], sizes = [2, 4, 1, 4, 1, 16], strides = [1, 1, 1, 1, 1, 1]} : vector<2x4x2x4x2x16xf32> to vector<2x4x1x4x1x16xf32>
    %91 = vector.shape_cast %90 : vector<2x4x1x4x1x16xf32> to vector<2x4x4x16xf32>
    %92 = vector.extract_strided_slice %89 {offsets = [0, 0, 0, 0, 1, 0], sizes = [2, 4, 1, 4, 1, 16], strides = [1, 1, 1, 1, 1, 1]} : vector<2x4x2x4x2x16xf32> to vector<2x4x1x4x1x16xf32>
    %93 = vector.shape_cast %92 : vector<2x4x1x4x1x16xf32> to vector<2x4x4x16xf32>
    %94 = arith.maximumf %91, %93 : vector<2x4x4x16xf32>
    %95 = vector.extract_strided_slice %89 {offsets = [0, 0, 1, 0, 0, 0], sizes = [2, 4, 1, 4, 1, 16], strides = [1, 1, 1, 1, 1, 1]} : vector<2x4x2x4x2x16xf32> to vector<2x4x1x4x1x16xf32>
    %96 = vector.shape_cast %95 : vector<2x4x1x4x1x16xf32> to vector<2x4x4x16xf32>
    %97 = vector.extract_strided_slice %89 {offsets = [0, 0, 1, 0, 1, 0], sizes = [2, 4, 1, 4, 1, 16], strides = [1, 1, 1, 1, 1, 1]} : vector<2x4x2x4x2x16xf32> to vector<2x4x1x4x1x16xf32>
    %98 = vector.shape_cast %97 : vector<2x4x1x4x1x16xf32> to vector<2x4x4x16xf32>
    %99 = arith.maximumf %96, %98 : vector<2x4x4x16xf32>
    %100 = arith.maximumf %94, %99 : vector<2x4x4x16xf32>
    %cst_39 = arith.constant dense<0.000000e+00> : vector<2x16xf32>
    %101 = vector.multi_reduction <add>, %100, %cst_39 [1, 2] : vector<2x4x4x16xf32> to vector<2x16xf32>
    %cst_40 = arith.constant 1.600000e+01 : f32
    %102 = vector.broadcast %cst_40 : f32 to vector<2x16xf32>
    %103 = arith.divf %101, %102 : vector<2x16xf32>
    %c0_41 = arith.constant 0 : index
    %c0_42 = arith.constant 0 : index
    %104 = vector.load %arg3[%c0_41, %c0_42] : memref<16x10xf32, #tpu.memory_space<vmem>>, vector<16x10xf32>
    %cst_43 = arith.constant dense<0.000000e+00> : vector<2x10xf32>
    %105 = tpu.matmul %103, %104, %cst_43 {dimension_numbers = #tpu.dot_dimension_numbers<[1], [0], [0], [1], [0, 0, 1, 1], [], []>} : vector<2x16xf32>, vector<16x10xf32>, vector<2x10xf32> -> vector<2x10xf32>
    %c0_44 = arith.constant 0 : index
    %c0_45 = arith.constant 0 : index
    %106 = vector.load %arg4[%c0_44, %c0_45] : memref<1x10xf32, #tpu.memory_space<vmem>>, vector<1x10xf32>
    %107 = vector.broadcast %106 : vector<1x10xf32> to vector<2x10xf32>
    %108 = arith.addf %105, %107 : vector<2x10xf32>
    %c0_46 = arith.constant 0 : index
    %c0_47 = arith.constant 0 : index
    %109 = vector.load %arg5[%c0_46, %c0_47] : memref<2x10xf32, #tpu.memory_space<vmem>>, vector<2x10xf32>
    tpu.vector_store %arg5[%c0_46, %c0_47], %108 {strides = array<i32>} : memref<2x10xf32, #tpu.memory_space<vmem>>, vector<2x10xf32>,
    return
  }
}

</mosaic_0001>

<llo_original>
// kernel: vgg_cifar_forward.1
$region0: #{vgg_cifar_forward.1}
  #allocation0 [shape = 'u32[]', space=smem, size = 0x4, offset = 0x4, fixed_abs, tag = 'smem constant byte address 0x4 - core index']
  #allocation1 [shape = 'u32[144,128]{1,0:T(1,128)}', space=vmem, size = 0x12000, scoped, tag = 'internal scratch']
  #allocation2 [shape = 'f32[2,18,18,3]{3,2,1,0:T(8,128)}', space=vmem, size = 0x6c000, scoped, tag = 'scratch operand']
  #allocation3 [shape = 'f32[2,10,10,8]{3,2,1,0:T(8,128)}', space=vmem, size = 0x28000, scoped, tag = 'scratch operand']
  %s0 = inlined_call_operand.vmem [shape: f32[2,16,16,3], index: 0, kind: input, shape index: {}]
  %s1 = inlined_call_operand.vmem [shape: f32[9,3,8], index: 1, kind: input, shape index: {}]
  %s2 = inlined_call_operand.vmem [shape: f32[9,8,16], index: 2, kind: input, shape index: {}]
  %s3 = inlined_call_operand.vmem [shape: f32[16,10], index: 3, kind: input, shape index: {}]
  %s4 = inlined_call_operand.vmem [shape: f32[1,10], index: 4, kind: input, shape index: {}]
  %s5 = inlined_call_operand.hbm [shape: f32[2,10], index: 5, kind: output, shape index: {}]
  %s6 = sld [smem:[#allocation0]]
  $region30: #{vgg_cifar_forward.1} parent=0
    _
  %s8 = ssub.s32 1, %s6
  %s9 = scalar_select 0, %s8, %s6
  $region1: #{vgg_cifar_forward.1} parent=0
    #allocation4 [shape = 'u8[1024]{0}', space=vmem, size = 0x400, scoped, tag = 'output window, operand 0, single buffered']
    #allocation5 [shape = 's32[1]{0}', space=sflag, size = 0x4, scoped, tag = 'scoped memory for vgg_cifar_forward.1']
    %10 = vsyncpa [#allocation5], 0
    // Predicated region
    $region2: #{vgg_cifar_forward.1} parent=1 // pred_check
      _
    $region3: #{vgg_cifar_forward.1} parent=1 // pred_check_branch
      %12 = sbr.rel (0) target = $region5
    $region4: #{vgg_cifar_forward.1} parent=1 // pred_region
      _
    $region5: #{vgg_cifar_forward.1} parent=1 // pred_fallthru
      _
    // Predicated region
    $region6: #{vgg_cifar_forward.1} parent=1 // pred_check
      _
    $region7: #{vgg_cifar_forward.1} parent=1 // pred_check_branch
      %14 = sbr.rel (0) target = $region9
    $region8: #{vgg_cifar_forward.1} parent=1 // pred_region
      _
    $region9: #{vgg_cifar_forward.1} parent=1 // pred_fallthru
      _
    // Predicated region
    $region10: #{vgg_cifar_forward.1} parent=1 // pred_check
      _
    $region11: #{vgg_cifar_forward.1} parent=1 // pred_check_branch
      %16 = sbr.rel (0) target = $region13
    $region12: #{vgg_cifar_forward.1} parent=1 // pred_region
      _
    $region13: #{vgg_cifar_forward.1} parent=1 // pred_fallthru
      _
    // Predicated region
    $region14: #{vgg_cifar_forward.1} parent=1 // pred_check
      _
    $region15: #{vgg_cifar_forward.1} parent=1 // pred_check_branch
      %18 = sbr.rel (0) target = $region17
    $region16: #{vgg_cifar_forward.1} parent=1 // pred_region
      _
    $region17: #{vgg_cifar_forward.1} parent=1 // pred_fallthru
      _
    // Predicated region
    $region18: #{vgg_cifar_forward.1} parent=1 // pred_check
      _
    $region19: #{vgg_cifar_forward.1} parent=1 // pred_check_branch
      %20 = sbr.rel (0) target = $region21
    $region20: #{vgg_cifar_forward.1} parent=1 // pred_region
      _
    $region21: #{vgg_cifar_forward.1} parent=1 // pred_fallthru
      _
    %v21 = vld [vmem:[%s0] sm:$0xff]
    %v22 = vld [vmem:[%s0 + $0x8] sm:$0xff]
    %v23 = vld [vmem:[%s0 + $0x10] sm:$0xff]
    %v24 = vld [vmem:[%s0 + $0x18] sm:$0xff]
    %v25 = vld [vmem:[%s0 + $0x20] sm:$0xff]
    %v26 = vld [vmem:[%s0 + $0x28] sm:$0xff]
    %v27 = vld [vmem:[%s0 + $0x30] sm:$0xff]
    %v28 = vld [vmem:[%s0 + $0x38] sm:$0xff]
    %v29 = vld [vmem:[%s0 + $0x40] sm:$0xff]
    %v30 = vld [vmem:[%s0 + $0x48] sm:$0xff]
    %v31 = vld [vmem:[%s0 + $0x50] sm:$0xff]
    %v32 = vld [vmem:[%s0 + $0x58] sm:$0xff]
    %v33 = vld [vmem:[%s0 + $0x60] sm:$0xff]
    %v34 = vld [vmem:[%s0 + $0x68] sm:$0xff]
    %v35 = vld [vmem:[%s0 + $0x70] sm:$0xff]
    %v36 = vld [vmem:[%s0 + $0x78] sm:$0xff]
    %v37 = vld [vmem:[%s0 + $0x80] sm:$0xff]
    %v38 = vld [vmem:[%s0 + $0x88] sm:$0xff]
    %v39 = vld [vmem:[%s0 + $0x90] sm:$0xff]
    %v40 = vld [vmem:[%s0 + $0x98] sm:$0xff]
    %v41 = vld [vmem:[%s0 + $0xa0] sm:$0xff]
    %v42 = vld [vmem:[%s0 + $0xa8] sm:$0xff]
    %v43 = vld [vmem:[%s0 + $0xb0] sm:$0xff]
    %v44 = vld [vmem:[%s0 + $0xb8] sm:$0xff]
    %v45 = vld [vmem:[%s0 + $0xc0] sm:$0xff]
    %v46 = vld [vmem:[%s0 + $0xc8] sm:$0xff]
    %v47 = vld [vmem:[%s0 + $0xd0] sm:$0xff]
    %v48 = vld [vmem:[%s0 + $0xd8] sm:$0xff]
    %v49 = vld [vmem:[%s0 + $0xe0] sm:$0xff]
    %v50 = vld [vmem:[%s0 + $0xe8] sm:$0xff]
    %v51 = vld [vmem:[%s0 + $0xf0] sm:$0xff]
    %v52 = vld [vmem:[%s0 + $0xf8] sm:$0xff]
    %v53 = vld [vmem:[%s0 + $0x100] sm:$0xff]
    %v54 = vld [vmem:[%s0 + $0x108] sm:$0xff]
    %v55 = vld [vmem:[%s0 + $0x110] sm:$0xff]
    %v56 = vld [vmem:[%s0 + $0x118] sm:$0xff]
    %v57 = vld [vmem:[%s0 + $0x120] sm:$0xff]
    %v58 = vld [vmem:[%s0 + $0x128] sm:$0xff]
    %v59 = vld [vmem:[%s0 + $0x130] sm:$0xff]
    %v60 = vld [vmem:[%s0 + $0x138] sm:$0xff]
    %v61 = vld [vmem:[%s0 + $0x140] sm:$0xff]
    %v62 = vld [vmem:[%s0 + $0x148] sm:$0xff]
    %v63 = vld [vmem:[%s0 + $0x150] sm:$0xff]
    %v64 = vld [vmem:[%s0 + $0x158] sm:$0xff]
    %v65 = vld [vmem:[%s0 + $0x160] sm:$0xff]
    %v66 = vld [vmem:[%s0 + $0x168] sm:$0xff]
    %v67 = vld [vmem:[%s0 + $0x170] sm:$0xff]
    %v68 = vld [vmem:[%s0 + $0x178] sm:$0xff]
    %v69 = vld [vmem:[%s0 + $0x180] sm:$0xff]
    %v70 = vld [vmem:[%s0 + $0x188] sm:$0xff]
    %v71 = vld [vmem:[%s0 + $0x190] sm:$0xff]
    %v72 = vld [vmem:[%s0 + $0x198] sm:$0xff]
    %v73 = vld [vmem:[%s0 + $0x1a0] sm:$0xff]
    %v74 = vld [vmem:[%s0 + $0x1a8] sm:$0xff]
    %v75 = vld [vmem:[%s0 + $0x1b0] sm:$0xff]
    %v76 = vld [vmem:[%s0 + $0x1b8] sm:$0xff]
    %v77 = vld [vmem:[%s0 + $0x1c0] sm:$0xff]
    %v78 = vld [vmem:[%s0 + $0x1c8] sm:$0xff]
    %v79 = vld [vmem:[%s0 + $0x1d0] sm:$0xff]
    %v80 = vld [vmem:[%s0 + $0x1d8] sm:$0xff]
    %v81 = vld [vmem:[%s0 + $0x1e0] sm:$0xff]
    %v82 = vld [vmem:[%s0 + $0x1e8] sm:$0xff]
    %v83 = vld [vmem:[%s0 + $0x1f0] sm:$0xff]
    %v84 = vld [vmem:[%s0 + $0x1f8] sm:$0xff]
    %v85 = vld [vmem:[%s1] sm:$0x7]
    %v86 = vld [vmem:[%s1 + $0x4] sm:$0x7]
    %v87 = vld [vmem:[%s1 + $0x8] sm:$0x7]
    %v88 = vld [vmem:[%s1 + $0xc] sm:$0x7]
    %v89 = vld [vmem:[%s1 + $0x10] sm:$0x7]
    %v90 = vld [vmem:[%s1 + $0x14] sm:$0x7]
    %v91 = vld [vmem:[%s1 + $0x18] sm:$0x7]
    %v92 = vld [vmem:[%s1 + $0x1c] sm:$0x7]
    %v93 = vld [vmem:[%s1 + $0x20] sm:$0x7]
    %vm94 = vcmask 23552
    %95 = vst.msk [vmem:[#allocation2] sm:$0xff] %vm94, 0.0
    %96 = vst.msk [vmem:[#allocation2 + $0x8] sm:$0xff] %vm94, 0.0
    %vm97 = vcmask 17408
    %98 = vst.msk [vmem:[#allocation2 + $0x10] sm:$0x3] %vm97, 0.0
    %99 = vst.msk [vmem:[#allocation2 + $0x18] sm:$0xff] %vm94, 0.0
    %100 = vst.msk [vmem:[#allocation2 + $0x20] sm:$0xff] %vm94, 0.0
    %101 = vst.msk [vmem:[#allocation2 + $0x28] sm:$0x3] %vm97, 0.0
    %102 = vst.msk [vmem:[#allocation2 + $0x30] sm:$0xff] %vm94, 0.0
    %103 = vst.msk [vmem:[#allocation2 + $0x38] sm:$0xff] %vm94, 0.0
    %104 = vst.msk [vmem:[#allocation2 + $0x40] sm:$0x3] %vm97, 0.0
    %105 = vst.msk [vmem:[#allocation2 + $0x48] sm:$0xff] %vm94, 0.0
    %106 = vst.msk [vmem:[#allocation2 + $0x50] sm:$0xff] %vm94, 0.0
    %107 = vst.msk [vmem:[#allocation2 + $0x58] sm:$0x3] %vm97, 0.0
    %108 = vst.msk [vmem:[#allocation2 + $0x60] sm:$0xff] %vm94, 0.0
    %109 = vst.msk [vmem:[#allocation2 + $0x68] sm:$0xff] %vm94, 0.0
    %110 = vst.msk [vmem:[#allocation2 + $0x70] sm:$0x3] %vm97, 0.0
    %111 = vst.msk [vmem:[#allocation2 + $0x78] sm:$0xff] %vm94, 0.0
    %112 = vst.msk [vmem:[#allocation2 + $0x80] sm:$0xff] %vm94, 0.0
    %113 = vst.msk [vmem:[#allocation2 + $0x88] sm:$0x3] %vm97, 0.0
    %114 = vst.msk [vmem:[#allocation2 + $0x90] sm:$0xff] %vm94, 0.0
    %115 = vst.msk [vmem:[#allocation2 + $0x98] sm:$0xff] %vm94, 0.0
    %116 = vst.msk [vmem:[#allocation2 + $0xa0] sm:$0x3] %vm97, 0.0
    %117 = vst.msk [vmem:[#allocation2 + $0xa8] sm:$0xff] %vm94, 0.0
    %118 = vst.msk [vmem:[#allocation2 + $0xb0] sm:$0xff] %vm94, 0.0
    %119 = vst.msk [vmem:[#allocation2 + $0xb8] sm:$0x3] %vm97, 0.0
    %120 = vst.msk [vmem:[#allocation2 + $0xc0] sm:$0xff] %vm94, 0.0
    %121 = vst.msk [vmem:[#allocation2 + $0xc8] sm:$0xff] %vm94, 0.0
    %122 = vst.msk [vmem:[#allocation2 + $0xd0] sm:$0x3] %vm97, 0.0
    %123 = vst.msk [vmem:[#allocation2 + $0xd8] sm:$0xff] %vm94, 0.0
    %124 = vst.msk [vmem:[#allocation2 + $0xe0] sm:$0xff] %vm94, 0.0
    %125 = vst.msk [vmem:[#allocation2 + $0xe8] sm:$0x3] %vm97, 0.0
    %126 = vst.msk [vmem:[#allocation2 + $0xf0] sm:$0xff] %vm94, 0.0
    %127 = vst.msk [vmem:[#allocation2 + $0xf8] sm:$0xff] %vm94, 0.0
    %128 = vst.msk [vmem:[#allocation2 + $0x100] sm:$0x3] %vm97, 0.0
    %129 = vst.msk [vmem:[#allocation2 + $0x108] sm:$0xff] %vm94, 0.0
    %130 = vst.msk [vmem:[#allocation2 + $0x110] sm:$0xff] %vm94, 0.0
    %131 = vst.msk [vmem:[#allocation2 + $0x118] sm:$0x3] %vm97, 0.0
    %132 = vst.msk [vmem:[#allocation2 + $0x120] sm:$0xff] %vm94, 0.0
    %133 = vst.msk [vmem:[#allocation2 + $0x128] sm:$0xff] %vm94, 0.0
    %134 = vst.msk [vmem:[#allocation2 + $0x130] sm:$0x3] %vm97, 0.0
    %135 = vst.msk [vmem:[#allocation2 + $0x138] sm:$0xff] %vm94, 0.0
    %136 = vst.msk [vmem:[#allocation2 + $0x140] sm:$0xff] %vm94, 0.0
    %137 = vst.msk [vmem:[#allocation2 + $0x148] sm:$0x3] %vm97, 0.0
    %138 = vst.msk [vmem:[#allocation2 + $0x150] sm:$0xff] %vm94, 0.0
    %139 = vst.msk [vmem:[#allocation2 + $0x158] sm:$0xff] %vm94, 0.0
    %140 = vst.msk [vmem:[#allocation2 + $0x160] sm:$0x3] %vm97, 0.0
    %141 = vst.msk [vmem:[#allocation2 + $0x168] sm:$0xff] %vm94, 0.0
    %142 = vst.msk [vmem:[#allocation2 + $0x170] sm:$0xff] %vm94, 0.0
    %143 = vst.msk [vmem:[#allocation2 + $0x178] sm:$0x3] %vm97, 0.0
    %144 = vst.msk [vmem:[#allocation2 + $0x180] sm:$0xff] %vm94, 0.0
    %145 = vst.msk [vmem:[#allocation2 + $0x188] sm:$0xff] %vm94, 0.0
    %146 = vst.msk [vmem:[#allocation2 + $0x190] sm:$0x3] %vm97, 0.0
    %147 = vst.msk [vmem:[#allocation2 + $0x198] sm:$0xff] %vm94, 0.0
    %148 = vst.msk [vmem:[#allocation2 + $0x1a0] sm:$0xff] %vm94, 0.0
    %149 = vst.msk [vmem:[#allocation2 + $0x1a8] sm:$0x3] %vm97, 0.0
    %150 = vst.msk [vmem:[#allocation2 + $0x1b0] sm:$0xff] %vm94, 0.0
    %151 = vst.msk [vmem:[#allocation2 + $0x1b8] sm:$0xff] %vm94, 0.0
    %152 = vst.msk [vmem:[#allocation2 + $0x1c0] sm:$0x3] %vm97, 0.0
    %153 = vst.msk [vmem:[#allocation2 + $0x1c8] sm:$0xff] %vm94, 0.0
    %154 = vst.msk [vmem:[#allocation2 + $0x1d0] sm:$0xff] %vm94, 0.0
    %155 = vst.msk [vmem:[#allocation2 + $0x1d8] sm:$0x3] %vm97, 0.0
    %156 = vst.msk [vmem:[#allocation2 + $0x1e0] sm:$0xff] %vm94, 0.0
    %157 = vst.msk [vmem:[#allocation2 + $0x1e8] sm:$0xff] %vm94, 0.0
    %158 = vst.msk [vmem:[#allocation2 + $0x1f0] sm:$0x3] %vm97, 0.0
    %159 = vst.msk [vmem:[#allocation2 + $0x1f8] sm:$0xff] %vm94, 0.0
    %160 = vst.msk [vmem:[#allocation2 + $0x200] sm:$0xff] %vm94, 0.0
    %161 = vst.msk [vmem:[#allocation2 + $0x208] sm:$0x3] %vm97, 0.0
    %162 = vst.msk [vmem:[#allocation2 + $0x210] sm:$0xff] %vm94, 0.0
    %163 = vst.msk [vmem:[#allocation2 + $0x218] sm:$0xff] %vm94, 0.0
    %164 = vst.msk [vmem:[#allocation2 + $0x220] sm:$0x3] %vm97, 0.0
    %165 = vst.msk [vmem:[#allocation2 + $0x228] sm:$0xff] %vm94, 0.0
    %166 = vst.msk [vmem:[#allocation2 + $0x230] sm:$0xff] %vm94, 0.0
    %167 = vst.msk [vmem:[#allocation2 + $0x238] sm:$0x3] %vm97, 0.0
    %168 = vst.msk [vmem:[#allocation2 + $0x240] sm:$0xff] %vm94, 0.0
    %169 = vst.msk [vmem:[#allocation2 + $0x248] sm:$0xff] %vm94, 0.0
    %170 = vst.msk [vmem:[#allocation2 + $0x250] sm:$0x3] %vm97, 0.0
    %171 = vst.msk [vmem:[#allocation2 + $0x258] sm:$0xff] %vm94, 0.0
    %172 = vst.msk [vmem:[#allocation2 + $0x260] sm:$0xff] %vm94, 0.0
    %173 = vst.msk [vmem:[#allocation2 + $0x268] sm:$0x3] %vm97, 0.0
    %174 = vst.msk [vmem:[#allocation2 + $0x270] sm:$0xff] %vm94, 0.0
    %175 = vst.msk [vmem:[#allocation2 + $0x278] sm:$0xff] %vm94, 0.0
    %176 = vst.msk [vmem:[#allocation2 + $0x280] sm:$0x3] %vm97, 0.0
    %177 = vst.msk [vmem:[#allocation2 + $0x288] sm:$0xff] %vm94, 0.0
    %178 = vst.msk [vmem:[#allocation2 + $0x290] sm:$0xff] %vm94, 0.0
    %179 = vst.msk [vmem:[#allocation2 + $0x298] sm:$0x3] %vm97, 0.0
    %180 = vst.msk [vmem:[#allocation2 + $0x2a0] sm:$0xff] %vm94, 0.0
    %181 = vst.msk [vmem:[#allocation2 + $0x2a8] sm:$0xff] %vm94, 0.0
    %182 = vst.msk [vmem:[#allocation2 + $0x2b0] sm:$0x3] %vm97, 0.0
    %183 = vst.msk [vmem:[#allocation2 + $0x2b8] sm:$0xff] %vm94, 0.0
    %184 = vst.msk [vmem:[#allocation2 + $0x2c0] sm:$0xff] %vm94, 0.0
    %185 = vst.msk [vmem:[#allocation2 + $0x2c8] sm:$0x3] %vm97, 0.0
    %186 = vst.msk [vmem:[#allocation2 + $0x2d0] sm:$0xff] %vm94, 0.0
    %187 = vst.msk [vmem:[#allocation2 + $0x2d8] sm:$0xff] %vm94, 0.0
    %188 = vst.msk [vmem:[#allocation2 + $0x2e0] sm:$0x3] %vm97, 0.0
    %189 = vst.msk [vmem:[#allocation2 + $0x2e8] sm:$0xff] %vm94, 0.0
    %190 = vst.msk [vmem:[#allocation2 + $0x2f0] sm:$0xff] %vm94, 0.0
    %191 = vst.msk [vmem:[#allocation2 + $0x2f8] sm:$0x3] %vm97, 0.0
    %192 = vst.msk [vmem:[#allocation2 + $0x300] sm:$0xff] %vm94, 0.0
    %193 = vst.msk [vmem:[#allocation2 + $0x308] sm:$0xff] %vm94, 0.0
    %194 = vst.msk [vmem:[#allocation2 + $0x310] sm:$0x3] %vm97, 0.0
    %195 = vst.msk [vmem:[#allocation2 + $0x318] sm:$0xff] %vm94, 0.0
    %196 = vst.msk [vmem:[#allocation2 + $0x320] sm:$0xff] %vm94, 0.0
    %197 = vst.msk [vmem:[#allocation2 + $0x328] sm:$0x3] %vm97, 0.0
    %198 = vst.msk [vmem:[#allocation2 + $0x330] sm:$0xff] %vm94, 0.0
    %199 = vst.msk [vmem:[#allocation2 + $0x338] sm:$0xff] %vm94, 0.0
    %200 = vst.msk [vmem:[#allocation2 + $0x340] sm:$0x3] %vm97, 0.0
    %201 = vst.msk [vmem:[#allocation2 + $0x348] sm:$0xff] %vm94, 0.0
    %202 = vst.msk [vmem:[#allocation2 + $0x350] sm:$0xff] %vm94, 0.0
    %203 = vst.msk [vmem:[#allocation2 + $0x358] sm:$0x3] %vm97, 0.0
    %s204 = scalar_lea.vmem [#allocation2], 24
    %205 = vst.msk [vmem:[%s204 + $0x1] sm:$0xff] %vm94, %v21
    %206 = vst.msk [vmem:[%s204 + $0x9] sm:$0xff] %vm94, %v22
    %207 = vst.msk [vmem:[%s204 + $0x19] sm:$0xff] %vm94, %v23
    %208 = vst.msk [vmem:[%s204 + $0x21] sm:$0xff] %vm94, %v24
    %209 = vst.msk [vmem:[%s204 + $0x31] sm:$0xff] %vm94, %v25
    %210 = vst.msk [vmem:[%s204 + $0x39] sm:$0xff] %vm94, %v26
    %211 = vst.msk [vmem:[%s204 + $0x49] sm:$0xff] %vm94, %v27
    %212 = vst.msk [vmem:[%s204 + $0x51] sm:$0xff] %vm94, %v28
    %213 = vst.msk [vmem:[%s204 + $0x61] sm:$0xff] %vm94, %v29
    %214 = vst.msk [vmem:[%s204 + $0x69] sm:$0xff] %vm94, %v30
    %215 = vst.msk [vmem:[%s204 + $0x79] sm:$0xff] %vm94, %v31
    %216 = vst.msk [vmem:[%s204 + $0x81] sm:$0xff] %vm94, %v32
    %217 = vst.msk [vmem:[%s204 + $0x91] sm:$0xff] %vm94, %v33
    %218 = vst.msk [vmem:[%s204 + $0x99] sm:$0xff] %vm94, %v34
    %219 = vst.msk [vmem:[%s204 + $0xa9] sm:$0xff] %vm94, %v35
    %220 = vst.msk [vmem:[%s204 + $0xb1] sm:$0xff] %vm94, %v36
    %221 = vst.msk [vmem:[%s204 + $0xc1] sm:$0xff] %vm94, %v37
    %222 = vst.msk [vmem:[%s204 + $0xc9] sm:$0xff] %vm94, %v38
    %223 = vst.msk [vmem:[%s204 + $0xd9] sm:$0xff] %vm94, %v39
    %224 = vst.msk [vmem:[%s204 + $0xe1] sm:$0xff] %vm94, %v40
    %225 = vst.msk [vmem:[%s204 + $0xf1] sm:$0xff] %vm94, %v41
    %226 = vst.msk [vmem:[%s204 + $0xf9] sm:$0xff] %vm94, %v42
    %227 = vst.msk [vmem:[%s204 + $0x109] sm:$0xff] %vm94, %v43
    %228 = vst.msk [vmem:[%s204 + $0x111] sm:$0xff] %vm94, %v44
    %229 = vst.msk [vmem:[%s204 + $0x121] sm:$0xff] %vm94, %v45
    %230 = vst.msk [vmem:[%s204 + $0x129] sm:$0xff] %vm94, %v46
    %231 = vst.msk [vmem:[%s204 + $0x139] sm:$0xff] %vm94, %v47
    %232 = vst.msk [vmem:[%s204 + $0x141] sm:$0xff] %vm94, %v48
    %233 = vst.msk [vmem:[%s204 + $0x151] sm:$0xff] %vm94, %v49
    %234 = vst.msk [vmem:[%s204 + $0x159] sm:$0xff] %vm94, %v50
    %235 = vst.msk [vmem:[%s204 + $0x169] sm:$0xff] %vm94, %v51
    %236 = vst.msk [vmem:[%s204 + $0x171] sm:$0xff] %vm94, %v52
    %237 = vst.msk [vmem:[%s204 + $0x1b1] sm:$0xff] %vm94, %v53
    %238 = vst.msk [vmem:[%s204 + $0x1b9] sm:$0xff] %vm94, %v54
    %239 = vst.msk [vmem:[%s204 + $0x1c9] sm:$0xff] %vm94, %v55
    %240 = vst.msk [vmem:[%s204 + $0x1d1] sm:$0xff] %vm94, %v56
    %241 = vst.msk [vmem:[%s204 + $0x1e1] sm:$0xff] %vm94, %v57
    %242 = vst.msk [vmem:[%s204 + $0x1e9] sm:$0xff] %vm94, %v58
    %243 = vst.msk [vmem:[%s204 + $0x1f9] sm:$0xff] %vm94, %v59
    %244 = vst.msk [vmem:[%s204 + $0x201] sm:$0xff] %vm94, %v60
    %245 = vst.msk [vmem:[%s204 + $0x211] sm:$0xff] %vm94, %v61
    %246 = vst.msk [vmem:[%s204 + $0x219] sm:$0xff] %vm94, %v62
    %247 = vst.msk [vmem:[%s204 + $0x229] sm:$0xff] %vm94, %v63
    %248 = vst.msk [vmem:[%s204 + $0x231] sm:$0xff] %vm94, %v64
    %249 = vst.msk [vmem:[%s204 + $0x241] sm:$0xff] %vm94, %v65
    %250 = vst.msk [vmem:[%s204 + $0x249] sm:$0xff] %vm94, %v66
    %251 = vst.msk [vmem:[%s204 + $0x259] sm:$0xff] %vm94, %v67
    %252 = vst.msk [vmem:[%s204 + $0x261] sm:$0xff] %vm94, %v68
    %253 = vst.msk [vmem:[%s204 + $0x271] sm:$0xff] %vm94, %v69
    %254 = vst.msk [vmem:[%s204 + $0x279] sm:$0xff] %vm94, %v70
    %255 = vst.msk [vmem:[%s204 + $0x289] sm:$0xff] %vm94, %v71
    %256 = vst.msk [vmem:[%s204 + $0x291] sm:$0xff] %vm94, %v72
    %257 = vst.msk [vmem:[%s204 + $0x2a1] sm:$0xff] %vm94, %v73
    %258 = vst.msk [vmem:[%s204 + $0x2a9] sm:$0xff] %vm94, %v74
    %259 = vst.msk [vmem:[%s204 + $0x2b9] sm:$0xff] %vm94, %v75
    %260 = vst.msk [vmem:[%s204 + $0x2c1] sm:$0xff] %vm94, %v76
    %261 = vst.msk [vmem:[%s204 + $0x2d1] sm:$0xff] %vm94, %v77
    %262 = vst.msk [vmem:[%s204 + $0x2d9] sm:$0xff] %vm94, %v78
    %263 = vst.msk [vmem:[%s204 + $0x2e9] sm:$0xff] %vm94, %v79
    %264 = vst.msk [vmem:[%s204 + $0x2f1] sm:$0xff] %vm94, %v80
    %265 = vst.msk [vmem:[%s204 + $0x301] sm:$0xff] %vm94, %v81
    %266 = vst.msk [vmem:[%s204 + $0x309] sm:$0xff] %vm94, %v82
    %267 = vst.msk [vmem:[%s204 + $0x319] sm:$0xff] %vm94, %v83
    %268 = vst.msk [vmem:[%s204 + $0x321] sm:$0xff] %vm94, %v84
    %v269 = vld [vmem:[#allocation2] sm:$0xff]
    %v270 = vld [vmem:[#allocation2 + $0x8] sm:$0xff]
    %v271 = vld [vmem:[#allocation2 + $0x10] sm:$0x3]
    %v272 = vld [vmem:[#allocation2 + $0x18] sm:$0xff]
    %v273 = vld [vmem:[#allocation2 + $0x20] sm:$0xff]
    %v274 = vld [vmem:[#allocation2 + $0x28] sm:$0x3]
    %v275 = vld [vmem:[#allocation2 + $0x30] sm:$0xff]
    %v276 = vld [vmem:[#allocation2 + $0x38] sm:$0xff]
    %v277 = vld [vmem:[#allocation2 + $0x40] sm:$0x3]
    %v278 = vld [vmem:[#allocation2 + $0x48] sm:$0xff]
    %v279 = vld [vmem:[#allocation2 + $0x50] sm:$0xff]
    %v280 = vld [vmem:[#allocation2 + $0x58] sm:$0x3]
    %v281 = vld [vmem:[#allocation2 + $0x60] sm:$0xff]
    %v282 = vld [vmem:[#allocation2 + $0x68] sm:$0xff]
    %v283 = vld [vmem:[#allocation2 + $0x70] sm:$0x3]
    %v284 = vld [vmem:[#allocation2 + $0x78] sm:$0xff]
    %v285 = vld [vmem:[#allocation2 + $0x80] sm:$0xff]
    %v286 = vld [vmem:[#allocation2 + $0x88] sm:$0x3]
    %v287 = vld [vmem:[#allocation2 + $0x90] sm:$0xff]
    %v288 = vld [vmem:[#allocation2 + $0x98] sm:$0xff]
    %v289 = vld [vmem:[#allocation2 + $0xa0] sm:$0x3]
    %v290 = vld [vmem:[#allocation2 + $0xa8] sm:$0xff]
    %v291 = vld [vmem:[#allocation2 + $0xb0] sm:$0xff]
    %v292 = vld [vmem:[#allocation2 + $0xb8] sm:$0x3]
    %v293 = vld [vmem:[#allocation2 + $0xc0] sm:$0xff]
    %v294 = vld [vmem:[#allocation2 + $0xc8] sm:$0xff]
    %v295 = vld [vmem:[#allocation2 + $0xd0] sm:$0x3]
    %v296 = vld [vmem:[#allocation2 + $0xd8] sm:$0xff]
    %v297 = vld [vmem:[#allocation2 + $0xe0] sm:$0xff]
    %v298 = vld [vmem:[#allocation2 + $0xe8] sm:$0x3]
    %v299 = vld [vmem:[#allocation2 + $0xf0] sm:$0xff]
    %v300 = vld [vmem:[#allocation2 + $0xf8] sm:$0xff]
    %v301 = vld [vmem:[#allocation2 + $0x100] sm:$0x3]
    %v302 = vld [vmem:[#allocation2 + $0x108] sm:$0xff]
    %v303 = vld [vmem:[#allocation2 + $0x110] sm:$0xff]
    %v304 = vld [vmem:[#allocation2 + $0x118] sm:$0x3]
    %v305 = vld [vmem:[#allocation2 + $0x120] sm:$0xff]
    %v306 = vld [vmem:[#allocation2 + $0x128] sm:$0xff]
    %v307 = vld [vmem:[#allocation2 + $0x130] sm:$0x3]
    %v308 = vld [vmem:[#allocation2 + $0x138] sm:$0xff]
    %v309 = vld [vmem:[#allocation2 + $0x140] sm:$0xff]
    %v310 = vld [vmem:[#allocation2 + $0x148] sm:$0x3]
    %v311 = vld [vmem:[#allocation2 + $0x150] sm:$0xff]
    %v312 = vld [vmem:[#allocation2 + $0x158] sm:$0xff]
    %v313 = vld [vmem:[#allocation2 + $0x160] sm:$0x3]
    %v314 = vld [vmem:[#allocation2 + $0x168] sm:$0xff]
    %v315 = vld [vmem:[#allocation2 + $0x170] sm:$0xff]
    %v316 = vld [vmem:[#allocation2 + $0x178] sm:$0x3]
    %v317 = vld [vmem:[#allocation2 + $0x180] sm:$0xff]
    %v318 = vld [vmem:[#allocation2 + $0x188] sm:$0xff]
    %v319 = vld [vmem:[#allocation2 + $0x190] sm:$0x3]
    %v320 = vld [vmem:[#allocation2 + $0x198] sm:$0xff]
    %v321 = vld [vmem:[#allocation2 + $0x1a0] sm:$0xff]
    %v322 = vld [vmem:[#allocation2 + $0x1a8] sm:$0x3]
    %v323 = vld [vmem:[#allocation2 + $0x1b0] sm:$0xff]
    %v324 = vld [vmem:[#allocation2 + $0x1b8] sm:$0xff]
    %v325 = vld [vmem:[#allocation2 + $0x1c0] sm:$0x3]
    %v326 = vld [vmem:[#allocation2 + $0x1c8] sm:$0xff]
    %v327 = vld [vmem:[#allocation2 + $0x1d0] sm:$0xff]
    %v328 = vld [vmem:[#allocation2 + $0x1d8] sm:$0x3]
    %v329 = vld [vmem:[#allocation2 + $0x1e0] sm:$0xff]
    %v330 = vld [vmem:[#allocation2 + $0x1e8] sm:$0xff]
    %v331 = vld [vmem:[#allocation2 + $0x1f0] sm:$0x3]
    %v332 = vld [vmem:[#allocation2 + $0x1f8] sm:$0xff]
    %v333 = vld [vmem:[#allocation2 + $0x200] sm:$0xff]
    %v334 = vld [vmem:[#allocation2 + $0x208] sm:$0x3]
    %v335 = vld [vmem:[#allocation2 + $0x210] sm:$0xff]
    %v336 = vld [vmem:[#allocation2 + $0x218] sm:$0xff]
    %v337 = vld [vmem:[#allocation2 + $0x220] sm:$0x3]
    %v338 = vld [vmem:[#allocation2 + $0x228] sm:$0xff]
    %v339 = vld [vmem:[#allocation2 + $0x230] sm:$0xff]
    %v340 = vld [vmem:[#allocation2 + $0x238] sm:$0x3]
    %v341 = vld [vmem:[#allocation2 + $0x240] sm:$0xff]
    %v342 = vld [vmem:[#allocation2 + $0x248] sm:$0xff]
    %v343 = vld [vmem:[#allocation2 + $0x250] sm:$0x3]
    %v344 = vld [vmem:[#allocation2 + $0x258] sm:$0xff]
    %v345 = vld [vmem:[#allocation2 + $0x260] sm:$0xff]
    %v346 = vld [vmem:[#allocation2 + $0x268] sm:$0x3]
    %v347 = vld [vmem:[#allocation2 + $0x270] sm:$0xff]
    %v348 = vld [vmem:[#allocation2 + $0x278] sm:$0xff]
    %v349 = vld [vmem:[#allocation2 + $0x280] sm:$0x3]
    %v350 = vld [vmem:[#allocation2 + $0x288] sm:$0xff]
    %v351 = vld [vmem:[#allocation2 + $0x290] sm:$0xff]
    %v352 = vld [vmem:[#allocation2 + $0x298] sm:$0x3]
    %v353 = vld [vmem:[#allocation2 + $0x2a0] sm:$0xff]
    %v354 = vld [vmem:[#allocation2 + $0x2a8] sm:$0xff]
    %v355 = vld [vmem:[#allocation2 + $0x2b0] sm:$0x3]
    %v356 = vld [vmem:[#allocation2 + $0x2b8] sm:$0xff]
    %v357 = vld [vmem:[#allocation2 + $0x2c0] sm:$0xff]
    %v358 = vld [vmem:[#allocation2 + $0x2c8] sm:$0x3]
    %v359 = vld [vmem:[#allocation2 + $0x2d0] sm:$0xff]
    %v360 = vld [vmem:[#allocation2 + $0x2d8] sm:$0xff]
    %v361 = vld [vmem:[#allocation2 + $0x2e0] sm:$0x3]
    %v362 = vld [vmem:[#allocation2 + $0x2e8] sm:$0xff]
    %v363 = vld [vmem:[#allocation2 + $0x2f0] sm:$0xff]
    %v364 = vld [vmem:[#allocation2 + $0x2f8] sm:$0x3]
    %v365 = vld [vmem:[#allocation2 + $0x300] sm:$0xff]
    %v366 = vld [vmem:[#allocation2 + $0x308] sm:$0xff]
    %v367 = vld [vmem:[#allocation2 + $0x310] sm:$0x3]
    %v368 = vld [vmem:[#allocation2 + $0x318] sm:$0xff]
    %v369 = vld [vmem:[#allocation2 + $0x320] sm:$0xff]
    %v370 = vld [vmem:[#allocation2 + $0x328] sm:$0x3]
    %v371 = vld [vmem:[#allocation2 + $0x330] sm:$0xff]
    %v372 = vld [vmem:[#allocation2 + $0x338] sm:$0xff]
    %v373 = vld [vmem:[#allocation2 + $0x340] sm:$0x3]
    %v374 = vld [vmem:[#allocation2 + $0x348] sm:$0xff]
    %v375 = vld [vmem:[#allocation2 + $0x350] sm:$0xff]
    %v376 = vld [vmem:[#allocation2 + $0x358] sm:$0x3]
    %vm473 = vcmask 1046528
    %v474 = vrot.slane %v269, 1
    %v475 = vrot.slane %v270, 1
    %v476 = vsel %vm473, %v474, %v475
    %v477 = vrot.slane %v271, 1
    %v478 = vsel %vm473, %v475, %v477
    %v479 = vrot.slane %v272, 1
    %v480 = vrot.slane %v273, 1
    %v481 = vsel %vm473, %v479, %v480
    %v482 = vrot.slane %v274, 1
    %v483 = vsel %vm473, %v480, %v482
    %v484 = vrot.slane %v275, 1
    %v485 = vrot.slane %v276, 1
    %v486 = vsel %vm473, %v484, %v485
    %v487 = vrot.slane %v277, 1
    %v488 = vsel %vm473, %v485, %v487
    %v489 = vrot.slane %v278, 1
    %v490 = vrot.slane %v279, 1
    %v491 = vsel %vm473, %v489, %v490
    %v492 = vrot.slane %v280, 1
    %v493 = vsel %vm473, %v490, %v492
    %v494 = vrot.slane %v281, 1
    %v495 = vrot.slane %v282, 1
    %v496 = vsel %vm473, %v494, %v495
    %v497 = vrot.slane %v283, 1
    %v498 = vsel %vm473, %v495, %v497
    %v499 = vrot.slane %v284, 1
    %v500 = vrot.slane %v285, 1
    %v501 = vsel %vm473, %v499, %v500
    %v502 = vrot.slane %v286, 1
    %v503 = vsel %vm473, %v500, %v502
    %v504 = vrot.slane %v287, 1
    %v505 = vrot.slane %v288, 1
    %v506 = vsel %vm473, %v504, %v505
    %v507 = vrot.slane %v289, 1
    %v508 = vsel %vm473, %v505, %v507
    %v509 = vrot.slane %v290, 1
    %v510 = vrot.slane %v291, 1
    %v511 = vsel %vm473, %v509, %v510
    %v512 = vrot.slane %v292, 1
    %v513 = vsel %vm473, %v510, %v512
    %v514 = vrot.slane %v293, 1
    %v515 = vrot.slane %v294, 1
    %v516 = vsel %vm473, %v514, %v515
    %v517 = vrot.slane %v295, 1
    %v518 = vsel %vm473, %v515, %v517
    %v519 = vrot.slane %v296, 1
    %v520 = vrot.slane %v297, 1
    %v521 = vsel %vm473, %v519, %v520
    %v522 = vrot.slane %v298, 1
    %v523 = vsel %vm473, %v520, %v522
    %v524 = vrot.slane %v299, 1
    %v525 = vrot.slane %v300, 1
    %v526 = vsel %vm473, %v524, %v525
    %v527 = vrot.slane %v301, 1
    %v528 = vsel %vm473, %v525, %v527
    %v529 = vrot.slane %v302, 1
    %v530 = vrot.slane %v303, 1
    %v531 = vsel %vm473, %v529, %v530
    %v532 = vrot.slane %v304, 1
    %v533 = vsel %vm473, %v530, %v532
    %v534 = vrot.slane %v305, 1
    %v535 = vrot.slane %v306, 1
    %v536 = vsel %vm473, %v534, %v535
    %v537 = vrot.slane %v307, 1
    %v538 = vsel %vm473, %v535, %v537
    %v539 = vrot.slane %v308, 1
    %v540 = vrot.slane %v309, 1
    %v541 = vsel %vm473, %v539, %v540
    %v542 = vrot.slane %v310, 1
    %v543 = vsel %vm473, %v540, %v542
    %v544 = vrot.slane %v311, 1
    %v545 = vrot.slane %v312, 1
    %v546 = vsel %vm473, %v544, %v545
    %v547 = vrot.slane %v313, 1
    %v548 = vsel %vm473, %v545, %v547
    %v549 = vrot.slane %v314, 1
    %v550 = vrot.slane %v315, 1
    %v551 = vsel %vm473, %v549, %v550
    %v552 = vrot.slane %v316, 1
    %v553 = vsel %vm473, %v550, %v552
    %v554 = vrot.slane %v323, 1
    %v555 = vrot.slane %v324, 1
    %v556 = vsel %vm473, %v554, %v555
    %v557 = vrot.slane %v325, 1
    %v558 = vsel %vm473, %v555, %v557
    %v559 = vrot.slane %v326, 1
    %v560 = vrot.slane %v327, 1
    %v561 = vsel %vm473, %v559, %v560
    %v562 = vrot.slane %v328, 1
    %v563 = vsel %vm473, %v560, %v562
    %v564 = vrot.slane %v329, 1
    %v565 = vrot.slane %v330, 1
    %v566 = vsel %vm473, %v564, %v565
    %v567 = vrot.slane %v331, 1
    %v568 = vsel %vm473, %v565, %v567
    %v569 = vrot.slane %v332, 1
    %v570 = vrot.slane %v333, 1
    %v571 = vsel %vm473, %v569, %v570
    %v572 = vrot.slane %v334, 1
    %v573 = vsel %vm473, %v570, %v572
    %v574 = vrot.slane %v335, 1
    %v575 = vrot.slane %v336, 1
    %v576 = vsel %vm473, %v574, %v575
    %v577 = vrot.slane %v337, 1
    %v578 = vsel %vm473, %v575, %v577
    %v579 = vrot.slane %v338, 1
    %v580 = vrot.slane %v339, 1
    %v581 = vsel %vm473, %v579, %v580
    %v582 = vrot.slane %v340, 1
    %v583 = vsel %vm473, %v580, %v582
    %v584 = vrot.slane %v341, 1
    %v585 = vrot.slane %v342, 1
    %v586 = vsel %vm473, %v584, %v585
    %v587 = vrot.slane %v343, 1
    %v588 = vsel %vm473, %v585, %v587
    %v589 = vrot.slane %v344, 1
    %v590 = vrot.slane %v345, 1
    %v591 = vsel %vm473, %v589, %v590
    %v592 = vrot.slane %v346, 1
    %v593 = vsel %vm473, %v590, %v592
    %v594 = vrot.slane %v347, 1
    %v595 = vrot.slane %v348, 1
    %v596 = vsel %vm473, %v594, %v595
    %v597 = vrot.slane %v349, 1
    %v598 = vsel %vm473, %v595, %v597
    %v599 = vrot.slane %v350, 1
    %v600 = vrot.slane %v351, 1
    %v601 = vsel %vm473, %v599, %v600
    %v602 = vrot.slane %v352, 1
    %v603 = vsel %vm473, %v600, %v602
    %v604 = vrot.slane %v353, 1
    %v605 = vrot.slane %v354, 1
    %v606 = vsel %vm473, %v604, %v605
    %v607 = vrot.slane %v355, 1
    %v608 = vsel %vm473, %v605, %v607
    %v609 = vrot.slane %v356, 1
    %v610 = vrot.slane %v357, 1
    %v611 = vsel %vm473, %v609, %v610
    %v612 = vrot.slane %v358, 1
    %v613 = vsel %vm473, %v610, %v612
    %v614 = vrot.slane %v359, 1
    %v615 = vrot.slane %v360, 1
    %v616 = vsel %vm473, %v614, %v615
    %v617 = vrot.slane %v361, 1
    %v618 = vsel %vm473, %v615, %v617
    %v619 = vrot.slane %v362, 1
    %v620 = vrot.slane %v363, 1
    %v621 = vsel %vm473, %v619, %v620
    %v622 = vrot.slane %v364, 1
    %v623 = vsel %vm473, %v620, %v622
    %v624 = vrot.slane %v365, 1
    %v625 = vrot.slane %v366, 1
    %v626 = vsel %vm473, %v624, %v625
    %v627 = vrot.slane %v367, 1
    %v628 = vsel %vm473, %v625, %v627
    %v629 = vrot.slane %v368, 1
    %v630 = vrot.slane %v369, 1
    %v631 = vsel %vm473, %v629, %v630
    %v632 = vrot.slane %v370, 1
    %v633 = vsel %vm473, %v630, %v632
    %vm634 = vcmask 1045504
    %v635 = vrot.slane %v269, 2
    %v636 = vrot.slane %v270, 2
    %v637 = vsel %vm634, %v635, %v636
    %v638 = vrot.slane %v271, 2
    %v639 = vsel %vm634, %v636, %v638
    %v640 = vrot.slane %v272, 2
    %v641 = vrot.slane %v273, 2
    %v642 = vsel %vm634, %v640, %v641
    %v643 = vrot.slane %v274, 2
    %v644 = vsel %vm634, %v641, %v643
    %v645 = vrot.slane %v275, 2
    %v646 = vrot.slane %v276, 2
    %v647 = vsel %vm634, %v645, %v646
    %v648 = vrot.slane %v277, 2
    %v649 = vsel %vm634, %v646, %v648
    %v650 = vrot.slane %v278, 2
    %v651 = vrot.slane %v279, 2
    %v652 = vsel %vm634, %v650, %v651
    %v653 = vrot.slane %v280, 2
    %v654 = vsel %vm634, %v651, %v653
    %v655 = vrot.slane %v281, 2
    %v656 = vrot.slane %v282, 2
    %v657 = vsel %vm634, %v655, %v656
    %v658 = vrot.slane %v283, 2
    %v659 = vsel %vm634, %v656, %v658
    %v660 = vrot.slane %v284, 2
    %v661 = vrot.slane %v285, 2
    %v662 = vsel %vm634, %v660, %v661
    %v663 = vrot.slane %v286, 2
    %v664 = vsel %vm634, %v661, %v663
    %v665 = vrot.slane %v287, 2
    %v666 = vrot.slane %v288, 2
    %v667 = vsel %vm634, %v665, %v666
    %v668 = vrot.slane %v289, 2
    %v669 = vsel %vm634, %v666, %v668
    %v670 = vrot.slane %v290, 2
    %v671 = vrot.slane %v291, 2
    %v672 = vsel %vm634, %v670, %v671
    %v673 = vrot.slane %v292, 2
    %v674 = vsel %vm634, %v671, %v673
    %v675 = vrot.slane %v293, 2
    %v676 = vrot.slane %v294, 2
    %v677 = vsel %vm634, %v675, %v676
    %v678 = vrot.slane %v295, 2
    %v679 = vsel %vm634, %v676, %v678
    %v680 = vrot.slane %v296, 2
    %v681 = vrot.slane %v297, 2
    %v682 = vsel %vm634, %v680, %v681
    %v683 = vrot.slane %v298, 2
    %v684 = vsel %vm634, %v681, %v683
    %v685 = vrot.slane %v299, 2
    %v686 = vrot.slane %v300, 2
    %v687 = vsel %vm634, %v685, %v686
    %v688 = vrot.slane %v301, 2
    %v689 = vsel %vm634, %v686, %v688
    %v690 = vrot.slane %v302, 2
    %v691 = vrot.slane %v303, 2
    %v692 = vsel %vm634, %v690, %v691
    %v693 = vrot.slane %v304, 2
    %v694 = vsel %vm634, %v691, %v693
    %v695 = vrot.slane %v305, 2
    %v696 = vrot.slane %v306, 2
    %v697 = vsel %vm634, %v695, %v696
    %v698 = vrot.slane %v307, 2
    %v699 = vsel %vm634, %v696, %v698
    %v700 = vrot.slane %v308, 2
    %v701 = vrot.slane %v309, 2
    %v702 = vsel %vm634, %v700, %v701
    %v703 = vrot.slane %v310, 2
    %v704 = vsel %vm634, %v701, %v703
    %v705 = vrot.slane %v311, 2
    %v706 = vrot.slane %v312, 2
    %v707 = vsel %vm634, %v705, %v706
    %v708 = vrot.slane %v313, 2
    %v709 = vsel %vm634, %v706, %v708
    %v710 = vrot.slane %v314, 2
    %v711 = vrot.slane %v315, 2
    %v712 = vsel %vm634, %v710, %v711
    %v713 = vrot.slane %v316, 2
    %v714 = vsel %vm634, %v711, %v713
    %v715 = vrot.slane %v323, 2
    %v716 = vrot.slane %v324, 2
    %v717 = vsel %vm634, %v715, %v716
    %v718 = vrot.slane %v325, 2
    %v719 = vsel %vm634, %v716, %v718
    %v720 = vrot.slane %v326, 2
    %v721 = vrot.slane %v327, 2
    %v722 = vsel %vm634, %v720, %v721
    %v723 = vrot.slane %v328, 2
    %v724 = vsel %vm634, %v721, %v723
    %v725 = vrot.slane %v329, 2
    %v726 = vrot.slane %v330, 2
    %v727 = vsel %vm634, %v725, %v726
    %v728 = vrot.slane %v331, 2
    %v729 = vsel %vm634, %v726, %v728
    %v730 = vrot.slane %v332, 2
    %v731 = vrot.slane %v333, 2
    %v732 = vsel %vm634, %v730, %v731
    %v733 = vrot.slane %v334, 2
    %v734 = vsel %vm634, %v731, %v733
    %v735 = vrot.slane %v335, 2
    %v736 = vrot.slane %v336, 2
    %v737 = vsel %vm634, %v735, %v736
    %v738 = vrot.slane %v337, 2
    %v739 = vsel %vm634, %v736, %v738
    %v740 = vrot.slane %v338, 2
    %v741 = vrot.slane %v339, 2
    %v742 = vsel %vm634, %v740, %v741
    %v743 = vrot.slane %v340, 2
    %v744 = vsel %vm634, %v741, %v743
    %v745 = vrot.slane %v341, 2
    %v746 = vrot.slane %v342, 2
    %v747 = vsel %vm634, %v745, %v746
    %v748 = vrot.slane %v343, 2
    %v749 = vsel %vm634, %v746, %v748
    %v750 = vrot.slane %v344, 2
    %v751 = vrot.slane %v345, 2
    %v752 = vsel %vm634, %v750, %v751
    %v753 = vrot.slane %v346, 2
    %v754 = vsel %vm634, %v751, %v753
    %v755 = vrot.slane %v347, 2
    %v756 = vrot.slane %v348, 2
    %v757 = vsel %vm634, %v755, %v756
    %v758 = vrot.slane %v349, 2
    %v759 = vsel %vm634, %v756, %v758
    %v760 = vrot.slane %v350, 2
    %v761 = vrot.slane %v351, 2
    %v762 = vsel %vm634, %v760, %v761
    %v763 = vrot.slane %v352, 2
    %v764 = vsel %vm634, %v761, %v763
    %v765 = vrot.slane %v353, 2
    %v766 = vrot.slane %v354, 2
    %v767 = vsel %vm634, %v765, %v766
    %v768 = vrot.slane %v355, 2
    %v769 = vsel %vm634, %v766, %v768
    %v770 = vrot.slane %v356, 2
    %v771 = vrot.slane %v357, 2
    %v772 = vsel %vm634, %v770, %v771
    %v773 = vrot.slane %v358, 2
    %v774 = vsel %vm634, %v771, %v773
    %v775 = vrot.slane %v359, 2
    %v776 = vrot.slane %v360, 2
    %v777 = vsel %vm634, %v775, %v776
    %v778 = vrot.slane %v361, 2
    %v779 = vsel %vm634, %v776, %v778
    %v780 = vrot.slane %v362, 2
    %v781 = vrot.slane %v363, 2
    %v782 = vsel %vm634, %v780, %v781
    %v783 = vrot.slane %v364, 2
    %v784 = vsel %vm634, %v781, %v783
    %v785 = vrot.slane %v365, 2
    %v786 = vrot.slane %v366, 2
    %v787 = vsel %vm634, %v785, %v786
    %v788 = vrot.slane %v367, 2
    %v789 = vsel %vm634, %v786, %v788
    %v790 = vrot.slane %v368, 2
    %v791 = vrot.slane %v369, 2
    %v792 = vsel %vm634, %v790, %v791
    %v793 = vrot.slane %v370, 2
    %v794 = vsel %vm634, %v791, %v793
    %v801 = vrot.slane %v317, 1
    %v802 = vrot.slane %v318, 1
    %v803 = vsel %vm473, %v801, %v802
    %v804 = vrot.slane %v319, 1
    %v805 = vsel %vm473, %v802, %v804
    %v806 = vrot.slane %v371, 1
    %v807 = vrot.slane %v372, 1
    %v808 = vsel %vm473, %v806, %v807
    %v809 = vrot.slane %v373, 1
    %v810 = vsel %vm473, %v807, %v809
    %v811 = vrot.slane %v317, 2
    %v812 = vrot.slane %v318, 2
    %v813 = vsel %vm634, %v811, %v812
    %v814 = vrot.slane %v319, 2
    %v815 = vsel %vm634, %v812, %v814
    %v816 = vrot.slane %v371, 2
    %v817 = vrot.slane %v372, 2
    %v818 = vsel %vm634, %v816, %v817
    %v819 = vrot.slane %v373, 2
    %v820 = vsel %vm634, %v817, %v819
    %v827 = vrot.slane %v320, 1
    %v828 = vrot.slane %v321, 1
    %v829 = vsel %vm473, %v827, %v828
    %v830 = vrot.slane %v322, 1
    %v831 = vsel %vm473, %v828, %v830
    %v832 = vrot.slane %v374, 1
    %v833 = vrot.slane %v375, 1
    %v834 = vsel %vm473, %v832, %v833
    %v835 = vrot.slane %v376, 1
    %v836 = vsel %vm473, %v833, %v835
    %v837 = vrot.slane %v320, 2
    %v838 = vrot.slane %v321, 2
    %v839 = vsel %vm634, %v837, %v838
    %v840 = vrot.slane %v322, 2
    %v841 = vsel %vm634, %v838, %v840
    %v842 = vrot.slane %v374, 2
    %v843 = vrot.slane %v375, 2
    %v844 = vsel %vm634, %v842, %v843
    %v845 = vrot.slane %v376, 2
    %v846 = vsel %vm634, %v843, %v845
    %v847 = vsel %vm94, %v269, 0
    %v849 = vsel %vm94, %v270, 0
    %v851 = vsel %vm94, %v272, 0
    %v853 = vsel %vm94, %v273, 0
    %v855 = vsel %vm94, %v275, 0
    %v857 = vsel %vm94, %v276, 0
    %v859 = vsel %vm94, %v278, 0
    %v861 = vsel %vm94, %v279, 0
    %v863 = vsel %vm94, %v281, 0
    %v865 = vsel %vm94, %v282, 0
    %v867 = vsel %vm94, %v284, 0
    %v869 = vsel %vm94, %v285, 0
    %v871 = vsel %vm94, %v287, 0
    %v873 = vsel %vm94, %v288, 0
    %v875 = vsel %vm94, %v290, 0
    %v877 = vsel %vm94, %v291, 0
    %v879 = vsel %vm94, %v293, 0
    %v881 = vsel %vm94, %v294, 0
    %v883 = vsel %vm94, %v296, 0
    %v885 = vsel %vm94, %v297, 0
    %v887 = vsel %vm94, %v299, 0
    %v889 = vsel %vm94, %v300, 0
    %v891 = vsel %vm94, %v302, 0
    %v893 = vsel %vm94, %v303, 0
    %v895 = vsel %vm94, %v305, 0
    %v897 = vsel %vm94, %v306, 0
    %v899 = vsel %vm94, %v308, 0
    %v901 = vsel %vm94, %v309, 0
    %v903 = vsel %vm94, %v311, 0
    %v905 = vsel %vm94, %v312, 0
    %v907 = vsel %vm94, %v314, 0
    %v909 = vsel %vm94, %v315, 0
    %v911 = vsel %vm94, %v323, 0
    %v913 = vsel %vm94, %v324, 0
    %v915 = vsel %vm94, %v326, 0
    %v917 = vsel %vm94, %v327, 0
    %v919 = vsel %vm94, %v329, 0
    %v921 = vsel %vm94, %v330, 0
    %v923 = vsel %vm94, %v332, 0
    %v925 = vsel %vm94, %v333, 0
    %v927 = vsel %vm94, %v335, 0
    %v929 = vsel %vm94, %v336, 0
    %v931 = vsel %vm94, %v338, 0
    %v933 = vsel %vm94, %v339, 0
    %v935 = vsel %vm94, %v341, 0
    %v937 = vsel %vm94, %v342, 0
    %v939 = vsel %vm94, %v344, 0
    %v941 = vsel %vm94, %v345, 0
    %v943 = vsel %vm94, %v347, 0
    %v945 = vsel %vm94, %v348, 0
    %v947 = vsel %vm94, %v350, 0
    %v949 = vsel %vm94, %v351, 0
    %v951 = vsel %vm94, %v353, 0
    %v953 = vsel %vm94, %v354, 0
    %v955 = vsel %vm94, %v356, 0
    %v957 = vsel %vm94, %v357, 0
    %v959 = vsel %vm94, %v359, 0
    %v961 = vsel %vm94, %v360, 0
    %v963 = vsel %vm94, %v362, 0
    %v965 = vsel %vm94, %v363, 0
    %v967 = vsel %vm94, %v365, 0
    %v969 = vsel %vm94, %v366, 0
    %v971 = vsel %vm94, %v368, 0
    %v973 = vsel %vm94, %v369, 0
    %vm975 = vcmask 1042432
    %v977 = vsel %vm975, %v85, 0
    %979 = vmatprep.subr.mxu0 0.0
    %980 = vmatpush1.msra.mxu0 %v977
    %981 = vmatprep.subr.mxu0 0.0
    %982 = vmatpush1.msra.mxu0 0.0
    %983 = vmatprep.subr.mxu0 0.0
    %984 = vmatpush1.msra.mxu0 0.0
    %985 = vmatprep.subr.mxu0 0.0
    %986 = vmatpush1.msra.mxu0 0.0
    %987 = vmatprep.subr.mxu0 0.0
    %988 = vmatpush1.msra.mxu0 0.0
    %989 = vmatprep.subr.mxu0 0.0
    %990 = vmatpush1.msra.mxu0 0.0
    %991 = vmatprep.subr.mxu0 0.0
    %992 = vmatpush1.msra.mxu0 0.0
    %993 = vmatprep.subr.mxu0 0.0
    %994 = vmatpush1.msra.mxu0 0.0
    %995 = vmatprep.subr.mxu0 0.0
    %996 = vmatpush1.msra.mxu0 0.0
    %997 = vmatprep.subr.mxu0 0.0
    %998 = vmatpush1.msra.mxu0 0.0
    %999 = vmatprep.subr.mxu0 0.0
    %1000 = vmatpush1.msra.mxu0 0.0
    %1001 = vmatprep.subr.mxu0 0.0
    %1002 = vmatpush1.msra.mxu0 0.0
    %1003 = vmatprep.subr.mxu0 0.0
    %1004 = vmatpush1.msra.mxu0 0.0
    %1005 = vmatprep.subr.mxu0 0.0
    %1006 = vmatpush1.msra.mxu0 0.0
    %1007 = vmatprep.subr.mxu0 0.0
    %1008 = vmatpush1.msra.mxu0 0.0
    %1009 = vmatprep.subr.mxu0 0.0
    %1010 = vmatpush1.msra.mxu0 0.0
    %1011 = vmatprep.subr.mxu0 0.0
    %1012 = vmatpush1.msra.mxu0 0.0
    %1013 = vmatprep.subr.mxu0 0.0
    %1014 = vmatpush1.msra.mxu0 0.0
    %1015 = vmatprep.subr.mxu0 0.0
    %1016 = vmatpush1.msra.mxu0 0.0
    %1017 = vmatprep.subr.mxu0 0.0
    %1018 = vmatpush1.msra.mxu0 0.0
    %1019 = vmatprep.subr.mxu0 0.0
    %1020 = vmatpush1.msra.mxu0 0.0
    %1021 = vmatprep.subr.mxu0 0.0
    %1022 = vmatpush1.msra.mxu0 0.0
    %1023 = vmatprep.subr.mxu0 0.0
    %1024 = vmatpush1.msra.mxu0 0.0
    %1025 = vmatprep.subr.mxu0 0.0
    %1026 = vmatpush1.msra.mxu0 0.0
    %1027 = vmatprep.subr.mxu0 0.0
    %1028 = vmatpush1.msra.mxu0 0.0
    %1029 = vmatprep.subr.mxu0 0.0
    %1030 = vmatpush1.msra.mxu0 0.0
    %1031 = vmatprep.subr.mxu0 0.0
    %1032 = vmatpush1.msra.mxu0 0.0
    %1033 = vmatprep.subr.mxu0 0.0
    %1034 = vmatpush1.msra.mxu0 0.0
    %1035 = vmatprep.subr.mxu0 0.0
    %1036 = vmatpush1.msra.mxu0 0.0
    %1037 = vmatprep.subr.mxu0 0.0
    %1038 = vmatpush1.msra.mxu0 0.0
    %1039 = vmatprep.subr.mxu0 0.0
    %1040 = vmatpush1.msra.mxu0 0.0
    %1041 = vmatprep.subr.mxu0 0.0
    %1042 = vmatpush1.msra.mxu0 0.0
    %1043 = vmatprep.mubr.f32.mxu0 0.0
    %1044 = vmatmul.mubr.f32.gmra.mrb[0].mxu0 %v847
    %v1045 = vpop.f32.mrb[0].mxu0
    %v1046 = vadd.f32 0.0, %v1045
    %v1047 = vpop.f32.mrb[0].mxu0
    %1048 = vmatprep.mubr.f32.mxu0 0.0
    %1049 = vmatmul.mubr.f32.gmra.mrb[0].mxu0 %v849
    %v1050 = vpop.f32.mrb[0].mxu0
    %v1051 = vadd.f32 0.0, %v1050
    %v1052 = vpop.f32.mrb[0].mxu0
    %1053 = vmatprep.mubr.f32.mxu0 0.0
    %1054 = vmatmul.mubr.f32.gmra.mrb[0].mxu0 %v851
    %v1055 = vpop.f32.mrb[0].mxu0
    %v1056 = vadd.f32 0.0, %v1055
    %v1057 = vpop.f32.mrb[0].mxu0
    %1058 = vmatprep.mubr.f32.mxu0 0.0
    %1059 = vmatmul.mubr.f32.gmra.mrb[0].mxu0 %v853
    %v1060 = vpop.f32.mrb[0].mxu0
    %v1061 = vadd.f32 0.0, %v1060
    %v1062 = vpop.f32.mrb[0].mxu0
    %1063 = vmatprep.mubr.f32.mxu0 0.0
    %1064 = vmatmul.mubr.f32.gmra.mrb[0].mxu0 %v855
    %v1065 = vpop.f32.mrb[0].mxu0
    %v1066 = vadd.f32 0.0, %v1065
    %v1067 = vpop.f32.mrb[0].mxu0
    %1068 = vmatprep.mubr.f32.mxu0 0.0
    %1069 = vmatmul.mubr.f32.gmra.mrb[0].mxu0 %v857
    %v1070 = vpop.f32.mrb[0].mxu0
    %v1071 = vadd.f32 0.0, %v1070
    %v1072 = vpop.f32.mrb[0].mxu0
    %1073 = vmatprep.mubr.f32.mxu0 0.0
    %1074 = vmatmul.mubr.f32.gmra.mrb[0].mxu0 %v859
    %v1075 = vpop.f32.mrb[0].mxu0
    %v1076 = vadd.f32 0.0, %v1075
    %v1077 = vpop.f32.mrb[0].mxu0
    %1078 = vmatprep.mubr.f32.mxu0 0.0
    %1079 = vmatmul.mubr.f32.gmra.mrb[0].mxu0 %v861
    %v1080 = vpop.f32.mrb[0].mxu0
    %v1081 = vadd.f32 0.0, %v1080
    %v1082 = vpop.f32.mrb[0].mxu0
    %1083 = vmatprep.mubr.f32.mxu0 0.0
    %1084 = vmatmul.mubr.f32.gmra.mrb[0].mxu0 %v863
    %v1085 = vpop.f32.mrb[0].mxu0
    %v1086 = vadd.f32 0.0, %v1085
    %v1087 = vpop.f32.mrb[0].mxu0
    %1088 = vmatprep.mubr.f32.mxu0 0.0
    %1089 = vmatmul.mubr.f32.gmra.mrb[0].mxu0 %v865
    %v1090 = vpop.f32.mrb[0].mxu0
    %v1091 = vadd.f32 0.0, %v1090
    %v1092 = vpop.f32.mrb[0].mxu0
    %1093 = vmatprep.mubr.f32.mxu0 0.0
    %1094 = vmatmul.mubr.f32.gmra.mrb[0].mxu0 %v867
    %v1095 = vpop.f32.mrb[0].mxu0
    %v1096 = vadd.f32 0.0, %v1095
    %v1097 = vpop.f32.mrb[0].mxu0
    %1098 = vmatprep.mubr.f32.mxu0 0.0
    %1099 = vmatmul.mubr.f32.gmra.mrb[0].mxu0 %v869
    %v1100 = vpop.f32.mrb[0].mxu0
    %v1101 = vadd.f32 0.0, %v1100
    %v1102 = vpop.f32.mrb[0].mxu0
    %1103 = vmatprep.mubr.f32.mxu0 0.0
    %1104 = vmatmul.mubr.f32.gmra.mrb[0].mxu0 %v871
    %v1105 = vpop.f32.mrb[0].mxu0
    %v1106 = vadd.f32 0.0, %v1105
    %v1107 = vpop.f32.mrb[0].mxu0
    %1108 = vmatprep.mubr.f32.mxu0 0.0
    %1109 = vmatmul.mubr.f32.gmra.mrb[0].mxu0 %v873
    %v1110 = vpop.f32.mrb[0].mxu0
    %v1111 = vadd.f32 0.0, %v1110
    %v1112 = vpop.f32.mrb[0].mxu0
    %1113 = vmatprep.mubr.f32.mxu0 0.0
    %1114 = vmatmul.mubr.f32.gmra.mrb[0].mxu0 %v875
    %v1115 = vpop.f32.mrb[0].mxu0
    %v1116 = vadd.f32 0.0, %v1115
    %v1117 = vpop.f32.mrb[0].mxu0
    %1118 = vmatprep.mubr.f32.mxu0 0.0
    %1119 = vmatmul.mubr.f32.gmra.mrb[0].mxu0 %v877
    %v1120 = vpop.f32.mrb[0].mxu0
    %v1121 = vadd.f32 0.0, %v1120
    %v1122 = vpop.f32.mrb[0].mxu0
    %1123 = vmatprep.mubr.f32.mxu0 0.0
    %1124 = vmatmul.mubr.f32.gmra.mrb[0].mxu0 %v879
    %v1125 = vpop.f32.mrb[0].mxu0
    %v1126 = vadd.f32 0.0, %v1125
    %v1127 = vpop.f32.mrb[0].mxu0
    %1128 = vmatprep.mubr.f32.mxu0 0.0
    %1129 = vmatmul.mubr.f32.gmra.mrb[0].mxu0 %v881
    %v1130 = vpop.f32.mrb[0].mxu0
    %v1131 = vadd.f32 0.0, %v1130
    %v1132 = vpop.f32.mrb[0].mxu0
    %1133 = vmatprep.mubr.f32.mxu0 0.0
    %1134 = vmatmul.mubr.f32.gmra.mrb[0].mxu0 %v883
    %v1135 = vpop.f32.mrb[0].mxu0
    %v1136 = vadd.f32 0.0, %v1135
    %v1137 = vpop.f32.mrb[0].mxu0
    %1138 = vmatprep.mubr.f32.mxu0 0.0
    %1139 = vmatmul.mubr.f32.gmra.mrb[0].mxu0 %v885
    %v1140 = vpop.f32.mrb[0].mxu0
    %v1141 = vadd.f32 0.0, %v1140
    %v1142 = vpop.f32.mrb[0].mxu0
    %1143 = vmatprep.mubr.f32.mxu0 0.0
    %1144 = vmatmul.mubr.f32.gmra.mrb[0].mxu0 %v887
    %v1145 = vpop.f32.mrb[0].mxu0
    %v1146 = vadd.f32 0.0, %v1145
    %v1147 = vpop.f32.mrb[0].mxu0
    %1148 = vmatprep.mubr.f32.mxu0 0.0
    %1149 = vmatmul.mubr.f32.gmra.mrb[0].mxu0 %v889
    %v1150 = vpop.f32.mrb[0].mxu0
    %v1151 = vadd.f32 0.0, %v1150
    %v1152 = vpop.f32.mrb[0].mxu0
    %1153 = vmatprep.mubr.f32.mxu0 0.0
    %1154 = vmatmul.mubr.f32.gmra.mrb[0].mxu0 %v891
    %v1155 = vpop.f32.mrb[0].mxu0
    %v1156 = vadd.f32 0.0, %v1155
    %v1157 = vpop.f32.mrb[0].mxu0
    %1158 = vmatprep.mubr.f32.mxu0 0.0
    %1159 = vmatmul.mubr.f32.gmra.mrb[0].mxu0 %v893
    %v1160 = vpop.f32.mrb[0].mxu0
    %v1161 = vadd.f32 0.0, %v1160
    %v1162 = vpop.f32.mrb[0].mxu0
    %1163 = vmatprep.mubr.f32.mxu0 0.0
    %1164 = vmatmul.mubr.f32.gmra.mrb[0].mxu0 %v895
    %v1165 = vpop.f32.mrb[0].mxu0
    %v1166 = vadd.f32 0.0, %v1165
    %v1167 = vpop.f32.mrb[0].mxu0
    %1168 = vmatprep.mubr.f32.mxu0 0.0
    %1169 = vmatmul.mubr.f32.gmra.mrb[0].mxu0 %v897
    %v1170 = vpop.f32.mrb[0].mxu0
    %v1171 = vadd.f32 0.0, %v1170
    %v1172 = vpop.f32.mrb[0].mxu0
    %1173 = vmatprep.mubr.f32.mxu0 0.0
    %1174 = vmatmul.mubr.f32.gmra.mrb[0].mxu0 %v899
    %v1175 = vpop.f32.mrb[0].mxu0
    %v1176 = vadd.f32 0.0, %v1175
    %v1177 = vpop.f32.mrb[0].mxu0
    %1178 = vmatprep.mubr.f32.mxu0 0.0
    %1179 = vmatmul.mubr.f32.gmra.mrb[0].mxu0 %v901
    %v1180 = vpop.f32.mrb[0].mxu0
    %v1181 = vadd.f32 0.0, %v1180
    %v1182 = vpop.f32.mrb[0].mxu0
    %1183 = vmatprep.mubr.f32.mxu0 0.0
    %1184 = vmatmul.mubr.f32.gmra.mrb[0].mxu0 %v903
    %v1185 = vpop.f32.mrb[0].mxu0
    %v1186 = vadd.f32 0.0, %v1185
    %v1187 = vpop.f32.mrb[0].mxu0
    %1188 = vmatprep.mubr.f32.mxu0 0.0
    %1189 = vmatmul.mubr.f32.gmra.mrb[0].mxu0 %v905
    %v1190 = vpop.f32.mrb[0].mxu0
    %v1191 = vadd.f32 0.0, %v1190
    %v1192 = vpop.f32.mrb[0].mxu0
    %1193 = vmatprep.mubr.f32.mxu0 0.0
    %1194 = vmatmul.mubr.f32.gmra.mrb[0].mxu0 %v907
    %v1195 = vpop.f32.mrb[0].mxu0
    %v1196 = vadd.f32 0.0, %v1195
    %v1197 = vpop.f32.mrb[0].mxu0
    %1198 = vmatprep.mubr.f32.mxu0 0.0
    %1199 = vmatmul.mubr.f32.gmra.mrb[0].mxu0 %v909
    %v1200 = vpop.f32.mrb[0].mxu0
    %v1201 = vadd.f32 0.0, %v1200
    %v1202 = vpop.f32.mrb[0].mxu0
    %1203 = vmatprep.mubr.f32.mxu0 0.0
    %1204 = vmatmul.mubr.f32.gmra.mrb[0].mxu0 %v911
    %v1205 = vpop.f32.mrb[0].mxu0
    %v1206 = vadd.f32 0.0, %v1205
    %v1207 = vpop.f32.mrb[0].mxu0
    %1208 = vmatprep.mubr.f32.mxu0 0.0
    %1209 = vmatmul.mubr.f32.gmra.mrb[0].mxu0 %v913
    %v1210 = vpop.f32.mrb[0].mxu0
    %v1211 = vadd.f32 0.0, %v1210
    %v1212 = vpop.f32.mrb[0].mxu0
    %1213 = vmatprep.mubr.f32.mxu0 0.0
    %1214 = vmatmul.mubr.f32.gmra.mrb[0].mxu0 %v915
    %v1215 = vpop.f32.mrb[0].mxu0
    %v1216 = vadd.f32 0.0, %v1215
    %v1217 = vpop.f32.mrb[0].mxu0
    %1218 = vmatprep.mubr.f32.mxu0 0.0
    %1219 = vmatmul.mubr.f32.gmra.mrb[0].mxu0 %v917
    %v1220 = vpop.f32.mrb[0].mxu0
    %v1221 = vadd.f32 0.0, %v1220
    %v1222 = vpop.f32.mrb[0].mxu0
    %1223 = vmatprep.mubr.f32.mxu0 0.0
    %1224 = vmatmul.mubr.f32.gmra.mrb[0].mxu0 %v919
    %v1225 = vpop.f32.mrb[0].mxu0
    %v1226 = vadd.f32 0.0, %v1225
    %v1227 = vpop.f32.mrb[0].mxu0
    %1228 = vmatprep.mubr.f32.mxu0 0.0
    %1229 = vmatmul.mubr.f32.gmra.mrb[0].mxu0 %v921
    %v1230 = vpop.f32.mrb[0].mxu0
    %v1231 = vadd.f32 0.0, %v1230
    %v1232 = vpop.f32.mrb[0].mxu0
    %1233 = vmatprep.mubr.f32.mxu0 0.0
    %1234 = vmatmul.mubr.f32.gmra.mrb[0].mxu0 %v923
    %v1235 = vpop.f32.mrb[0].mxu0
    %v1236 = vadd.f32 0.0, %v1235
    %v1237 = vpop.f32.mrb[0].mxu0
    %1238 = vmatprep.mubr.f32.mxu0 0.0
    %1239 = vmatmul.mubr.f32.gmra.mrb[0].mxu0 %v925
    %v1240 = vpop.f32.mrb[0].mxu0
    %v1241 = vadd.f32 0.0, %v1240
    %v1242 = vpop.f32.mrb[0].mxu0
    %1243 = vmatprep.mubr.f32.mxu0 0.0
    %1244 = vmatmul.mubr.f32.gmra.mrb[0].mxu0 %v927
    %v1245 = vpop.f32.mrb[0].mxu0
    %v1246 = vadd.f32 0.0, %v1245
    %v1247 = vpop.f32.mrb[0].mxu0
    %1248 = vmatprep.mubr.f32.mxu0 0.0
    %1249 = vmatmul.mubr.f32.gmra.mrb[0].mxu0 %v929
    %v1250 = vpop.f32.mrb[0].mxu0
    %v1251 = vadd.f32 0.0, %v1250
    %v1252 = vpop.f32.mrb[0].mxu0
    %1253 = vmatprep.mubr.f32.mxu0 0.0
    %1254 = vmatmul.mubr.f32.gmra.mrb[0].mxu0 %v931
    %v1255 = vpop.f32.mrb[0].mxu0
    %v1256 = vadd.f32 0.0, %v1255
    %v1257 = vpop.f32.mrb[0].mxu0
    %1258 = vmatprep.mubr.f32.mxu0 0.0
    %1259 = vmatmul.mubr.f32.gmra.mrb[0].mxu0 %v933
    %v1260 = vpop.f32.mrb[0].mxu0
    %v1261 = vadd.f32 0.0, %v1260
    %v1262 = vpop.f32.mrb[0].mxu0
    %1263 = vmatprep.mubr.f32.mxu0 0.0
    %1264 = vmatmul.mubr.f32.gmra.mrb[0].mxu0 %v935
    %v1265 = vpop.f32.mrb[0].mxu0
    %v1266 = vadd.f32 0.0, %v1265
    %v1267 = vpop.f32.mrb[0].mxu0
    %1268 = vmatprep.mubr.f32.mxu0 0.0
    %1269 = vmatmul.mubr.f32.gmra.mrb[0].mxu0 %v937
    %v1270 = vpop.f32.mrb[0].mxu0
    %v1271 = vadd.f32 0.0, %v1270
    %v1272 = vpop.f32.mrb[0].mxu0
    %1273 = vmatprep.mubr.f32.mxu0 0.0
    %1274 = vmatmul.mubr.f32.gmra.mrb[0].mxu0 %v939
    %v1275 = vpop.f32.mrb[0].mxu0
    %v1276 = vadd.f32 0.0, %v1275
    %v1277 = vpop.f32.mrb[0].mxu0
    %1278 = vmatprep.mubr.f32.mxu0 0.0
    %1279 = vmatmul.mubr.f32.gmra.mrb[0].mxu0 %v941
    %v1280 = vpop.f32.mrb[0].mxu0
    %v1281 = vadd.f32 0.0, %v1280
    %v1282 = vpop.f32.mrb[0].mxu0
    %1283 = vmatprep.mubr.f32.mxu0 0.0
    %1284 = vmatmul.mubr.f32.gmra.mrb[0].mxu0 %v943
    %v1285 = vpop.f32.mrb[0].mxu0
    %v1286 = vadd.f32 0.0, %v1285
    %v1287 = vpop.f32.mrb[0].mxu0
    %1288 = vmatprep.mubr.f32.mxu0 0.0
    %1289 = vmatmul.mubr.f32.gmra.mrb[0].mxu0 %v945
    %v1290 = vpop.f32.mrb[0].mxu0
    %v1291 = vadd.f32 0.0, %v1290
    %v1292 = vpop.f32.mrb[0].mxu0
    %1293 = vmatprep.mubr.f32.mxu0 0.0
    %1294 = vmatmul.mubr.f32.gmra.mrb[0].mxu0 %v947
    %v1295 = vpop.f32.mrb[0].mxu0
    %v1296 = vadd.f32 0.0, %v1295
    %v1297 = vpop.f32.mrb[0].mxu0
    %1298 = vmatprep.mubr.f32.mxu0 0.0
    %1299 = vmatmul.mubr.f32.gmra.mrb[0].mxu0 %v949
    %v1300 = vpop.f32.mrb[0].mxu0
    %v1301 = vadd.f32 0.0, %v1300
    %v1302 = vpop.f32.mrb[0].mxu0
    %1303 = vmatprep.mubr.f32.mxu0 0.0
    %1304 = vmatmul.mubr.f32.gmra.mrb[0].mxu0 %v951
    %v1305 = vpop.f32.mrb[0].mxu0
    %v1306 = vadd.f32 0.0, %v1305
    %v1307 = vpop.f32.mrb[0].mxu0
    %1308 = vmatprep.mubr.f32.mxu0 0.0
    %1309 = vmatmul.mubr.f32.gmra.mrb[0].mxu0 %v953
    %v1310 = vpop.f32.mrb[0].mxu0
    %v1311 = vadd.f32 0.0, %v1310
    %v1312 = vpop.f32.mrb[0].mxu0
    %1313 = vmatprep.mubr.f32.mxu0 0.0
    %1314 = vmatmul.mubr.f32.gmra.mrb[0].mxu0 %v955
    %v1315 = vpop.f32.mrb[0].mxu0
    %v1316 = vadd.f32 0.0, %v1315
    %v1317 = vpop.f32.mrb[0].mxu0
    %1318 = vmatprep.mubr.f32.mxu0 0.0
    %1319 = vmatmul.mubr.f32.gmra.mrb[0].mxu0 %v957
    %v1320 = vpop.f32.mrb[0].mxu0
    %v1321 = vadd.f32 0.0, %v1320
    %v1322 = vpop.f32.mrb[0].mxu0
    %1323 = vmatprep.mubr.f32.mxu0 0.0
    %1324 = vmatmul.mubr.f32.gmra.mrb[0].mxu0 %v959
    %v1325 = vpop.f32.mrb[0].mxu0
    %v1326 = vadd.f32 0.0, %v1325
    %v1327 = vpop.f32.mrb[0].mxu0
    %1328 = vmatprep.mubr.f32.mxu0 0.0
    %1329 = vmatmul.mubr.f32.gmra.mrb[0].mxu0 %v961
    %v1330 = vpop.f32.mrb[0].mxu0
    %v1331 = vadd.f32 0.0, %v1330
    %v1332 = vpop.f32.mrb[0].mxu0
    %1333 = vmatprep.mubr.f32.mxu0 0.0
    %1334 = vmatmul.mubr.f32.gmra.mrb[0].mxu0 %v963
    %v1335 = vpop.f32.mrb[0].mxu0
    %v1336 = vadd.f32 0.0, %v1335
    %v1337 = vpop.f32.mrb[0].mxu0
    %1338 = vmatprep.mubr.f32.mxu0 0.0
    %1339 = vmatmul.mubr.f32.gmra.mrb[0].mxu0 %v965
    %v1340 = vpop.f32.mrb[0].mxu0
    %v1341 = vadd.f32 0.0, %v1340
    %v1342 = vpop.f32.mrb[0].mxu0
    %1343 = vmatprep.mubr.f32.mxu0 0.0
    %1344 = vmatmul.mubr.f32.gmra.mrb[0].mxu0 %v967
    %v1345 = vpop.f32.mrb[0].mxu0
    %v1346 = vadd.f32 0.0, %v1345
    %v1347 = vpop.f32.mrb[0].mxu0
    %1348 = vmatprep.mubr.f32.mxu0 0.0
    %1349 = vmatmul.mubr.f32.gmra.mrb[0].mxu0 %v969
    %v1350 = vpop.f32.mrb[0].mxu0
    %v1351 = vadd.f32 0.0, %v1350
    %v1352 = vpop.f32.mrb[0].mxu0
    %1353 = vmatprep.mubr.f32.mxu0 0.0
    %1354 = vmatmul.mubr.f32.gmra.mrb[0].mxu0 %v971
    %v1355 = vpop.f32.mrb[0].mxu0
    %v1356 = vadd.f32 0.0, %v1355
    %v1357 = vpop.f32.mrb[0].mxu0
    %1358 = vmatprep.mubr.f32.mxu0 0.0
    %1359 = vmatmul.mubr.f32.gmra.mrb[0].mxu0 %v973
    %v1360 = vpop.f32.mrb[0].mxu0
    %v1361 = vadd.f32 0.0, %v1360
    %v1362 = vpop.f32.mrb[0].mxu0
    %1363 = vdwg.mxu0
    %v1364 = vsel %vm94, %v476, 0
    %v1366 = vsel %vm94, %v478, 0
    %v1368 = vsel %vm94, %v481, 0
    %v1370 = vsel %vm94, %v483, 0
    %v1372 = vsel %vm94, %v486, 0
    %v1374 = vsel %vm94, %v488, 0
    %v1376 = vsel %vm94, %v491, 0
    %v1378 = vsel %vm94, %v493, 0
    %v1380 = vsel %vm94, %v496, 0
    %v1382 = vsel %vm94, %v498, 0
    %v1384 = vsel %vm94, %v501, 0
    %v1386 = vsel %vm94, %v503, 0
    %v1388 = vsel %vm94, %v506, 0
    %v1390 = vsel %vm94, %v508, 0
    %v1392 = vsel %vm94, %v511, 0
    %v1394 = vsel %vm94, %v513, 0
    %v1396 = vsel %vm94, %v516, 0
    %v1398 = vsel %vm94, %v518, 0
    %v1400 = vsel %vm94, %v521, 0
    %v1402 = vsel %vm94, %v523, 0
    %v1404 = vsel %vm94, %v526, 0
    %v1406 = vsel %vm94, %v528, 0
    %v1408 = vsel %vm94, %v531, 0
    %v1410 = vsel %vm94, %v533, 0
    %v1412 = vsel %vm94, %v536, 0
    %v1414 = vsel %vm94, %v538, 0
    %v1416 = vsel %vm94, %v541, 0
    %v1418 = vsel %vm94, %v543, 0
    %v1420 = vsel %vm94, %v546, 0
    %v1422 = vsel %vm94, %v548, 0
    %v1424 = vsel %vm94, %v551, 0
    %v1426 = vsel %vm94, %v553, 0
    %v1428 = vsel %vm94, %v556, 0
    %v1430 = vsel %vm94, %v558, 0
    %v1432 = vsel %vm94, %v561, 0
    %v1434 = vsel %vm94, %v563, 0
    %v1436 = vsel %vm94, %v566, 0
    %v1438 = vsel %vm94, %v568, 0
    %v1440 = vsel %vm94, %v571, 0
    %v1442 = vsel %vm94, %v573, 0
    %v1444 = vsel %vm94, %v576, 0
    %v1446 = vsel %vm94, %v578, 0
    %v1448 = vsel %vm94, %v581, 0
    %v1450 = vsel %vm94, %v583, 0
    %v1452 = vsel %vm94, %v586, 0
    %v1454 = vsel %vm94, %v588, 0
    %v1456 = vsel %vm94, %v591, 0
    %v1458 = vsel %vm94, %v593, 0
    %v1460 = vsel %vm94, %v596, 0
    %v1462 = vsel %vm94, %v598, 0
    %v1464 = vsel %vm94, %v601, 0
    %v1466 = vsel %vm94, %v603, 0
    %v1468 = vsel %vm94, %v606, 0
    %v1470 = vsel %vm94, %v608, 0
    %v1472 = vsel %vm94, %v611, 0
    %v1474 = vsel %vm94, %v613, 0
    %v1476 = vsel %vm94, %v616, 0
    %v1478 = vsel %vm94, %v618, 0
    %v1480 = vsel %vm94, %v621, 0
    %v1482 = vsel %vm94, %v623, 0
    %v1484 = vsel %vm94, %v626, 0
    %v1486 = vsel %vm94, %v628, 0
    %v1488 = vsel %vm94, %v631, 0
    %v1490 = vsel %vm94, %v633, 0
    %v1493 = vsel %vm975, %v86, 0
    %1495 = vmatprep.subr.mxu0 0.0
    %1496 = vmatpush1.msra.mxu0 %v1493
    %1497 = vmatprep.subr.mxu0 0.0
    %1498 = vmatpush1.msra.mxu0 0.0
    %1499 = vmatprep.subr.mxu0 0.0
    %1500 = vmatpush1.msra.mxu0 0.0
    %1501 = vmatprep.subr.mxu0 0.0
    %1502 = vmatpush1.msra.mxu0 0.0
    %1503 = vmatprep.subr.mxu0 0.0
    %1504 = vmatpush1.msra.mxu0 0.0
    %1505 = vmatprep.subr.mxu0 0.0
    %1506 = vmatpush1.msra.mxu0 0.0
    %1507 = vmatprep.subr.mxu0 0.0
    %1508 = vmatpush1.msra.mxu0 0.0
    %1509 = vmatprep.subr.mxu0 0.0
    %1510 = vmatpush1.msra.mxu0 0.0
    %1511 = vmatprep.subr.mxu0 0.0
    %1512 = vmatpush1.msra.mxu0 0.0
    %1513 = vmatprep.subr.mxu0 0.0
    %1514 = vmatpush1.msra.mxu0 0.0
    %1515 = vmatprep.subr.mxu0 0.0
    %1516 = vmatpush1.msra.mxu0 0.0
    %1517 = vmatprep.subr.mxu0 0.0
    %1518 = vmatpush1.msra.mxu0 0.0
    %1519 = vmatprep.subr.mxu0 0.0
    %1520 = vmatpush1.msra.mxu0 0.0
    %1521 = vmatprep.subr.mxu0 0.0
    %1522 = vmatpush1.msra.mxu0 0.0
    %1523 = vmatprep.subr.mxu0 0.0
    %1524 = vmatpush1.msra.mxu0 0.0
    %1525 = vmatprep.subr.mxu0 0.0
    %1526 = vmatpush1.msra.mxu0 0.0
    %1527 = vmatprep.subr.mxu0 0.0
    %1528 = vmatpush1.msra.mxu0 0.0
    %1529 = vmatprep.subr.mxu0 0.0
    %1530 = vmatpush1.msra.mxu0 0.0
    %1531 = vmatprep.subr.mxu0 0.0
    %1532 = vmatpush1.msra.mxu0 0.0
    %1533 = vmatprep.subr.mxu0 0.0
    %1534 = vmatpush1.msra.mxu0 0.0
    %1535 = vmatprep.subr.mxu0 0.0
    %1536 = vmatpush1.msra.mxu0 0.0
    %1537 = vmatprep.subr.mxu0 0.0
    %1538 = vmatpush1.msra.mxu0 0.0
    %1539 = vmatprep.subr.mxu0 0.0
    %1540 = vmatpush1.msra.mxu0 0.0
    %1541 = vmatprep.subr.mxu0 0.0
    %1542 = vmatpush1.msra.mxu0 0.0
    %1543 = vmatprep.subr.mxu0 0.0
    %1544 = vmatpush1.msra.mxu0 0.0
    %1545 = vmatprep.subr.mxu0 0.0
    %1546 = vmatpush1.msra.mxu0 0.0
    %1547 = vmatprep.subr.mxu0 0.0
    %1548 = vmatpush1.msra.mxu0 0.0
    %1549 = vmatprep.subr.mxu0 0.0
    %1550 = vmatpush1.msra.mxu0 0.0
    %1551 = vmatprep.subr.mxu0 0.0
    %1552 = vmatpush1.msra.mxu0 0.0
    %1553 = vmatprep.subr.mxu0 0.0
    %1554 = vmatpush1.msra.mxu0 0.0
    %1555 = vmatprep.subr.mxu0 0.0
    %1556 = vmatpush1.msra.mxu0 0.0
    %1557 = vmatprep.subr.mxu0 0.0
    %1558 = vmatpush1.msra.mxu0 0.0
    %1559 = vmatprep.mubr.f32.mxu0 0.0
    %1560 = vmatmul.mubr.f32.gmra.mrb[0].mxu0 %v1364
    %v1561 = vpop.f32.mrb[0].mxu0
    %v1562 = vadd.f32 0.0, %v1561
    %v1563 = vpop.f32.mrb[0].mxu0
    %1564 = vmatprep.mubr.f32.mxu0 0.0
    %1565 = vmatmul.mubr.f32.gmra.mrb[0].mxu0 %v1366
    %v1566 = vpop.f32.mrb[0].mxu0
    %v1567 = vadd.f32 0.0, %v1566
    %v1568 = vpop.f32.mrb[0].mxu0
    %1569 = vmatprep.mubr.f32.mxu0 0.0
    %1570 = vmatmul.mubr.f32.gmra.mrb[0].mxu0 %v1368
    %v1571 = vpop.f32.mrb[0].mxu0
    %v1572 = vadd.f32 0.0, %v1571
    %v1573 = vpop.f32.mrb[0].mxu0
    %1574 = vmatprep.mubr.f32.mxu0 0.0
    %1575 = vmatmul.mubr.f32.gmra.mrb[0].mxu0 %v1370
    %v1576 = vpop.f32.mrb[0].mxu0
    %v1577 = vadd.f32 0.0, %v1576
    %v1578 = vpop.f32.mrb[0].mxu0
    %1579 = vmatprep.mubr.f32.mxu0 0.0
    %1580 = vmatmul.mubr.f32.gmra.mrb[0].mxu0 %v1372
    %v1581 = vpop.f32.mrb[0].mxu0
    %v1582 = vadd.f32 0.0, %v1581
    %v1583 = vpop.f32.mrb[0].mxu0
    %1584 = vmatprep.mubr.f32.mxu0 0.0
    %1585 = vmatmul.mubr.f32.gmra.mrb[0].mxu0 %v1374
    %v1586 = vpop.f32.mrb[0].mxu0
    %v1587 = vadd.f32 0.0, %v1586
    %v1588 = vpop.f32.mrb[0].mxu0
    %1589 = vmatprep.mubr.f32.mxu0 0.0
    %1590 = vmatmul.mubr.f32.gmra.mrb[0].mxu0 %v1376
    %v1591 = vpop.f32.mrb[0].mxu0
    %v1592 = vadd.f32 0.0, %v1591
    %v1593 = vpop.f32.mrb[0].mxu0
    %1594 = vmatprep.mubr.f32.mxu0 0.0
    %1595 = vmatmul.mubr.f32.gmra.mrb[0].mxu0 %v1378
    %v1596 = vpop.f32.mrb[0].mxu0
    %v1597 = vadd.f32 0.0, %v1596
    %v1598 = vpop.f32.mrb[0].mxu0
    %1599 = vmatprep.mubr.f32.mxu0 0.0
    %1600 = vmatmul.mubr.f32.gmra.mrb[0].mxu0 %v1380
    %v1601 = vpop.f32.mrb[0].mxu0
    %v1602 = vadd.f32 0.0, %v1601
    %v1603 = vpop.f32.mrb[0].mxu0
    %1604 = vmatprep.mubr.f32.mxu0 0.0
    %1605 = vmatmul.mubr.f32.gmra.mrb[0].mxu0 %v1382
    %v1606 = vpop.f32.mrb[0].mxu0
    %v1607 = vadd.f32 0.0, %v1606
    %v1608 = vpop.f32.mrb[0].mxu0
    %1609 = vmatprep.mubr.f32.mxu0 0.0
    %1610 = vmatmul.mubr.f32.gmra.mrb[0].mxu0 %v1384
    %v1611 = vpop.f32.mrb[0].mxu0
    %v1612 = vadd.f32 0.0, %v1611
    %v1613 = vpop.f32.mrb[0].mxu0
    %1614 = vmatprep.mubr.f32.mxu0 0.0
    %1615 = vmatmul.mubr.f32.gmra.mrb[0].mxu0 %v1386
    %v1616 = vpop.f32.mrb[0].mxu0
    %v1617 = vadd.f32 0.0, %v1616
    %v1618 = vpop.f32.mrb[0].mxu0
    %1619 = vmatprep.mubr.f32.mxu0 0.0
    %1620 = vmatmul.mubr.f32.gmra.mrb[0].mxu0 %v1388
    %v1621 = vpop.f32.mrb[0].mxu0
    %v1622 = vadd.f32 0.0, %v1621
    %v1623 = vpop.f32.mrb[0].mxu0
    %1624 = vmatprep.mubr.f32.mxu0 0.0
    %1625 = vmatmul.mubr.f32.gmra.mrb[0].mxu0 %v1390
    %v1626 = vpop.f32.mrb[0].mxu0
    %v1627 = vadd.f32 0.0, %v1626
    %v1628 = vpop.f32.mrb[0].mxu0
    %1629 = vmatprep.mubr.f32.mxu0 0.0
    %1630 = vmatmul.mubr.f32.gmra.mrb[0].mxu0 %v1392
    %v1631 = vpop.f32.mrb[0].mxu0
    %v1632 = vadd.f32 0.0, %v1631
    %v1633 = vpop.f32.mrb[0].mxu0
    %1634 = vmatprep.mubr.f32.mxu0 0.0
    %1635 = vmatmul.mubr.f32.gmra.mrb[0].mxu0 %v1394
    %v1636 = vpop.f32.mrb[0].mxu0
    %v1637 = vadd.f32 0.0, %v1636
    %v1638 = vpop.f32.mrb[0].mxu0
    %1639 = vmatprep.mubr.f32.mxu0 0.0
    %1640 = vmatmul.mubr.f32.gmra.mrb[0].mxu0 %v1396
    %v1641 = vpop.f32.mrb[0].mxu0
    %v1642 = vadd.f32 0.0, %v1641
    %v1643 = vpop.f32.mrb[0].mxu0
    %1644 = vmatprep.mubr.f32.mxu0 0.0
    %1645 = vmatmul.mubr.f32.gmra.mrb[0].mxu0 %v1398
    %v1646 = vpop.f32.mrb[0].mxu0
    %v1647 = vadd.f32 0.0, %v1646
    %v1648 = vpop.f32.mrb[0].mxu0
    %1649 = vmatprep.mubr.f32.mxu0 0.0
    %1650 = vmatmul.mubr.f32.gmra.mrb[0].mxu0 %v1400
    %v1651 = vpop.f32.mrb[0].mxu0
    %v1652 = vadd.f32 0.0, %v1651
    %v1653 = vpop.f32.mrb[0].mxu0
    %1654 = vmatprep.mubr.f32.mxu0 0.0
    %1655 = vmatmul.mubr.f32.gmra.mrb[0].mxu0 %v1402
    %v1656 = vpop.f32.mrb[0].mxu0
    %v1657 = vadd.f32 0.0, %v1656
    %v1658 = vpop.f32.mrb[0].mxu0
    %1659 = vmatprep.mubr.f32.mxu0 0.0
    %1660 = vmatmul.mubr.f32.gmra.mrb[0].mxu0 %v1404
    %v1661 = vpop.f32.mrb[0].mxu0
    %v1662 = vadd.f32 0.0, %v1661
    %v1663 = vpop.f32.mrb[0].mxu0
    %1664 = vmatprep.mubr.f32.mxu0 0.0
    %1665 = vmatmul.mubr.f32.gmra.mrb[0].mxu0 %v1406
    %v1666 = vpop.f32.mrb[0].mxu0
    %v1667 = vadd.f32 0.0, %v1666
    %v1668 = vpop.f32.mrb[0].mxu0
    %1669 = vmatprep.mubr.f32.mxu0 0.0
    %1670 = vmatmul.mubr.f32.gmra.mrb[0].mxu0 %v1408
    %v1671 = vpop.f32.mrb[0].mxu0
    %v1672 = vadd.f32 0.0, %v1671
    %v1673 = vpop.f32.mrb[0].mxu0
    %1674 = vmatprep.mubr.f32.mxu0 0.0
    %1675 = vmatmul.mubr.f32.gmra.mrb[0].mxu0 %v1410
    %v1676 = vpop.f32.mrb[0].mxu0
    %v1677 = vadd.f32 0.0, %v1676
    %v1678 = vpop.f32.mrb[0].mxu0
    %1679 = vmatprep.mubr.f32.mxu0 0.0
    %1680 = vmatmul.mubr.f32.gmra.mrb[0].mxu0 %v1412
    %v1681 = vpop.f32.mrb[0].mxu0
    %v1682 = vadd.f32 0.0, %v1681
    %v1683 = vpop.f32.mrb[0].mxu0
    %1684 = vmatprep.mubr.f32.mxu0 0.0
    %1685 = vmatmul.mubr.f32.gmra.mrb[0].mxu0 %v1414
    %v1686 = vpop.f32.mrb[0].mxu0
    %v1687 = vadd.f32 0.0, %v1686
    %v1688 = vpop.f32.mrb[0].mxu0
    %1689 = vmatprep.mubr.f32.mxu0 0.0
    %1690 = vmatmul.mubr.f32.gmra.mrb[0].mxu0 %v1416
    %v1691 = vpop.f32.mrb[0].mxu0
    %v1692 = vadd.f32 0.0, %v1691
    %v1693 = vpop.f32.mrb[0].mxu0
    %1694 = vmatprep.mubr.f32.mxu0 0.0
    %1695 = vmatmul.mubr.f32.gmra.mrb[0].mxu0 %v1418
    %v1696 = vpop.f32.mrb[0].mxu0
    %v1697 = vadd.f32 0.0, %v1696
    %v1698 = vpop.f32.mrb[0].mxu0
    %1699 = vmatprep.mubr.f32.mxu0 0.0
    %1700 = vmatmul.mubr.f32.gmra.mrb[0].mxu0 %v1420
    %v1701 = vpop.f32.mrb[0].mxu0
    %v1702 = vadd.f32 0.0, %v1701
    %v1703 = vpop.f32.mrb[0].mxu0
    %1704 = vmatprep.mubr.f32.mxu0 0.0
    %1705 = vmatmul.mubr.f32.gmra.mrb[0].mxu0 %v1422
    %v1706 = vpop.f32.mrb[0].mxu0
    %v1707 = vadd.f32 0.0, %v1706
    %v1708 = vpop.f32.mrb[0].mxu0
    %1709 = vmatprep.mubr.f32.mxu0 0.0
    %1710 = vmatmul.mubr.f32.gmra.mrb[0].mxu0 %v1424
    %v1711 = vpop.f32.mrb[0].mxu0
    %v1712 = vadd.f32 0.0, %v1711
    %v1713 = vpop.f32.mrb[0].mxu0
    %1714 = vmatprep.mubr.f32.mxu0 0.0
    %1715 = vmatmul.mubr.f32.gmra.mrb[0].mxu0 %v1426
    %v1716 = vpop.f32.mrb[0].mxu0
    %v1717 = vadd.f32 0.0, %v1716
    %v1718 = vpop.f32.mrb[0].mxu0
    %1719 = vmatprep.mubr.f32.mxu0 0.0
    %1720 = vmatmul.mubr.f32.gmra.mrb[0].mxu0 %v1428
    %v1721 = vpop.f32.mrb[0].mxu0
    %v1722 = vadd.f32 0.0, %v1721
    %v1723 = vpop.f32.mrb[0].mxu0
    %1724 = vmatprep.mubr.f32.mxu0 0.0
    %1725 = vmatmul.mubr.f32.gmra.mrb[0].mxu0 %v1430
    %v1726 = vpop.f32.mrb[0].mxu0
    %v1727 = vadd.f32 0.0, %v1726
    %v1728 = vpop.f32.mrb[0].mxu0
    %1729 = vmatprep.mubr.f32.mxu0 0.0
    %1730 = vmatmul.mubr.f32.gmra.mrb[0].mxu0 %v1432
    %v1731 = vpop.f32.mrb[0].mxu0
    %v1732 = vadd.f32 0.0, %v1731
    %v1733 = vpop.f32.mrb[0].mxu0
    %1734 = vmatprep.mubr.f32.mxu0 0.0
    %1735 = vmatmul.mubr.f32.gmra.mrb[0].mxu0 %v1434
    %v1736 = vpop.f32.mrb[0].mxu0
    %v1737 = vadd.f32 0.0, %v1736
    %v1738 = vpop.f32.mrb[0].mxu0
    %1739 = vmatprep.mubr.f32.mxu0 0.0
    %1740 = vmatmul.mubr.f32.gmra.mrb[0].mxu0 %v1436
    %v1741 = vpop.f32.mrb[0].mxu0
    %v1742 = vadd.f32 0.0, %v1741
    %v1743 = vpop.f32.mrb[0].mxu0
    %1744 = vmatprep.mubr.f32.mxu0 0.0
    %1745 = vmatmul.mubr.f32.gmra.mrb[0].mxu0 %v1438
    %v1746 = vpop.f32.mrb[0].mxu0
    %v1747 = vadd.f32 0.0, %v1746
    %v1748 = vpop.f32.mrb[0].mxu0
    %1749 = vmatprep.mubr.f32.mxu0 0.0
    %1750 = vmatmul.mubr.f32.gmra.mrb[0].mxu0 %v1440
    %v1751 = vpop.f32.mrb[0].mxu0
    %v1752 = vadd.f32 0.0, %v1751
    %v1753 = vpop.f32.mrb[0].mxu0
    %1754 = vmatprep.mubr.f32.mxu0 0.0
    %1755 = vmatmul.mubr.f32.gmra.mrb[0].mxu0 %v1442
    %v1756 = vpop.f32.mrb[0].mxu0
    %v1757 = vadd.f32 0.0, %v1756
    %v1758 = vpop.f32.mrb[0].mxu0
    %1759 = vmatprep.mubr.f32.mxu0 0.0
    %1760 = vmatmul.mubr.f32.gmra.mrb[0].mxu0 %v1444
    %v1761 = vpop.f32.mrb[0].mxu0
    %v1762 = vadd.f32 0.0, %v1761
    %v1763 = vpop.f32.mrb[0].mxu0
    %1764 = vmatprep.mubr.f32.mxu0 0.0
    %1765 = vmatmul.mubr.f32.gmra.mrb[0].mxu0 %v1446
    %v1766 = vpop.f32.mrb[0].mxu0
    %v1767 = vadd.f32 0.0, %v1766
    %v1768 = vpop.f32.mrb[0].mxu0
    %1769 = vmatprep.mubr.f32.mxu0 0.0
    %1770 = vmatmul.mubr.f32.gmra.mrb[0].mxu0 %v1448
    %v1771 = vpop.f32.mrb[0].mxu0
    %v1772 = vadd.f32 0.0, %v1771
    %v1773 = vpop.f32.mrb[0].mxu0
    %1774 = vmatprep.mubr.f32.mxu0 0.0
    %1775 = vmatmul.mubr.f32.gmra.mrb[0].mxu0 %v1450
    %v1776 = vpop.f32.mrb[0].mxu0
    %v1777 = vadd.f32 0.0, %v1776
    %v1778 = vpop.f32.mrb[0].mxu0
    %1779 = vmatprep.mubr.f32.mxu0 0.0
    %1780 = vmatmul.mubr.f32.gmra.mrb[0].mxu0 %v1452
    %v1781 = vpop.f32.mrb[0].mxu0
    %v1782 = vadd.f32 0.0, %v1781
    %v1783 = vpop.f32.mrb[0].mxu0
    %1784 = vmatprep.mubr.f32.mxu0 0.0
    %1785 = vmatmul.mubr.f32.gmra.mrb[0].mxu0 %v1454
    %v1786 = vpop.f32.mrb[0].mxu0
    %v1787 = vadd.f32 0.0, %v1786
    %v1788 = vpop.f32.mrb[0].mxu0
    %1789 = vmatprep.mubr.f32.mxu0 0.0
    %1790 = vmatmul.mubr.f32.gmra.mrb[0].mxu0 %v1456
    %v1791 = vpop.f32.mrb[0].mxu0
    %v1792 = vadd.f32 0.0, %v1791
    %v1793 = vpop.f32.mrb[0].mxu0
    %1794 = vmatprep.mubr.f32.mxu0 0.0
    %1795 = vmatmul.mubr.f32.gmra.mrb[0].mxu0 %v1458
    %v1796 = vpop.f32.mrb[0].mxu0
    %v1797 = vadd.f32 0.0, %v1796
    %v1798 = vpop.f32.mrb[0].mxu0
    %1799 = vmatprep.mubr.f32.mxu0 0.0
    %1800 = vmatmul.mubr.f32.gmra.mrb[0].mxu0 %v1460
    %v1801 = vpop.f32.mrb[0].mxu0
    %v1802 = vadd.f32 0.0, %v1801
    %v1803 = vpop.f32.mrb[0].mxu0
    %1804 = vmatprep.mubr.f32.mxu0 0.0
    %1805 = vmatmul.mubr.f32.gmra.mrb[0].mxu0 %v1462
    %v1806 = vpop.f32.mrb[0].mxu0
    %v1807 = vadd.f32 0.0, %v1806
    %v1808 = vpop.f32.mrb[0].mxu0
    %1809 = vmatprep.mubr.f32.mxu0 0.0
    %1810 = vmatmul.mubr.f32.gmra.mrb[0].mxu0 %v1464
    %v1811 = vpop.f32.mrb[0].mxu0
    %v1812 = vadd.f32 0.0, %v1811
    %v1813 = vpop.f32.mrb[0].mxu0
    %1814 = vmatprep.mubr.f32.mxu0 0.0
    %1815 = vmatmul.mubr.f32.gmra.mrb[0].mxu0 %v1466
    %v1816 = vpop.f32.mrb[0].mxu0
    %v1817 = vadd.f32 0.0, %v1816
    %v1818 = vpop.f32.mrb[0].mxu0
    %1819 = vmatprep.mubr.f32.mxu0 0.0
    %1820 = vmatmul.mubr.f32.gmra.mrb[0].mxu0 %v1468
    %v1821 = vpop.f32.mrb[0].mxu0
    %v1822 = vadd.f32 0.0, %v1821
    %v1823 = vpop.f32.mrb[0].mxu0
    %1824 = vmatprep.mubr.f32.mxu0 0.0
    %1825 = vmatmul.mubr.f32.gmra.mrb[0].mxu0 %v1470
    %v1826 = vpop.f32.mrb[0].mxu0
    %v1827 = vadd.f32 0.0, %v1826
    %v1828 = vpop.f32.mrb[0].mxu0
    %1829 = vmatprep.mubr.f32.mxu0 0.0
    %1830 = vmatmul.mubr.f32.gmra.mrb[0].mxu0 %v1472
    %v1831 = vpop.f32.mrb[0].mxu0
    %v1832 = vadd.f32 0.0, %v1831
    %v1833 = vpop.f32.mrb[0].mxu0
    %1834 = vmatprep.mubr.f32.mxu0 0.0
    %1835 = vmatmul.mubr.f32.gmra.mrb[0].mxu0 %v1474
    %v1836 = vpop.f32.mrb[0].mxu0
    %v1837 = vadd.f32 0.0, %v1836
    %v1838 = vpop.f32.mrb[0].mxu0
    %1839 = vmatprep.mubr.f32.mxu0 0.0
    %1840 = vmatmul.mubr.f32.gmra.mrb[0].mxu0 %v1476
    %v1841 = vpop.f32.mrb[0].mxu0
    %v1842 = vadd.f32 0.0, %v1841
    %v1843 = vpop.f32.mrb[0].mxu0
    %1844 = vmatprep.mubr.f32.mxu0 0.0
    %1845 = vmatmul.mubr.f32.gmra.mrb[0].mxu0 %v1478
    %v1846 = vpop.f32.mrb[0].mxu0
    %v1847 = vadd.f32 0.0, %v1846
    %v1848 = vpop.f32.mrb[0].mxu0
    %1849 = vmatprep.mubr.f32.mxu0 0.0
    %1850 = vmatmul.mubr.f32.gmra.mrb[0].mxu0 %v1480
    %v1851 = vpop.f32.mrb[0].mxu0
    %v1852 = vadd.f32 0.0, %v1851
    %v1853 = vpop.f32.mrb[0].mxu0
    %1854 = vmatprep.mubr.f32.mxu0 0.0
    %1855 = vmatmul.mubr.f32.gmra.mrb[0].mxu0 %v1482
    %v1856 = vpop.f32.mrb[0].mxu0
    %v1857 = vadd.f32 0.0, %v1856
    %v1858 = vpop.f32.mrb[0].mxu0
    %1859 = vmatprep.mubr.f32.mxu0 0.0
    %1860 = vmatmul.mubr.f32.gmra.mrb[0].mxu0 %v1484
    %v1861 = vpop.f32.mrb[0].mxu0
    %v1862 = vadd.f32 0.0, %v1861
    %v1863 = vpop.f32.mrb[0].mxu0
    %1864 = vmatprep.mubr.f32.mxu0 0.0
    %1865 = vmatmul.mubr.f32.gmra.mrb[0].mxu0 %v1486
    %v1866 = vpop.f32.mrb[0].mxu0
    %v1867 = vadd.f32 0.0, %v1866
    %v1868 = vpop.f32.mrb[0].mxu0
    %1869 = vmatprep.mubr.f32.mxu0 0.0
    %1870 = vmatmul.mubr.f32.gmra.mrb[0].mxu0 %v1488
    %v1871 = vpop.f32.mrb[0].mxu0
    %v1872 = vadd.f32 0.0, %v1871
    %v1873 = vpop.f32.mrb[0].mxu0
    %1874 = vmatprep.mubr.f32.mxu0 0.0
    %1875 = vmatmul.mubr.f32.gmra.mrb[0].mxu0 %v1490
    %v1876 = vpop.f32.mrb[0].mxu0
    %v1877 = vadd.f32 0.0, %v1876
    %v1878 = vpop.f32.mrb[0].mxu0
    %1879 = vdwg.mxu0
    %v1880 = vsel %vm94, %v637, 0
    %v1882 = vsel %vm94, %v639, 0
    %v1884 = vsel %vm94, %v642, 0
    %v1886 = vsel %vm94, %v644, 0
    %v1888 = vsel %vm94, %v647, 0
    %v1890 = vsel %vm94, %v649, 0
    %v1892 = vsel %vm94, %v652, 0
    %v1894 = vsel %vm94, %v654, 0
    %v1896 = vsel %vm94, %v657, 0
    %v1898 = vsel %vm94, %v659, 0
    %v1900 = vsel %vm94, %v662, 0
    %v1902 = vsel %vm94, %v664, 0
    %v1904 = vsel %vm94, %v667, 0
    %v1906 = vsel %vm94, %v669, 0
    %v1908 = vsel %vm94, %v672, 0
    %v1910 = vsel %vm94, %v674, 0
    %v1912 = vsel %vm94, %v677, 0
    %v1914 = vsel %vm94, %v679, 0
    %v1916 = vsel %vm94, %v682, 0
    %v1918 = vsel %vm94, %v684, 0
    %v1920 = vsel %vm94, %v687, 0
    %v1922 = vsel %vm94, %v689, 0
    %v1924 = vsel %vm94, %v692, 0
    %v1926 = vsel %vm94, %v694, 0
    %v1928 = vsel %vm94, %v697, 0
    %v1930 = vsel %vm94, %v699, 0
    %v1932 = vsel %vm94, %v702, 0
    %v1934 = vsel %vm94, %v704, 0
    %v1936 = vsel %vm94, %v707, 0
    %v1938 = vsel %vm94, %v709, 0
    %v1940 = vsel %vm94, %v712, 0
    %v1942 = vsel %vm94, %v714, 0
    %v1944 = vsel %vm94, %v717, 0
    %v1946 = vsel %vm94, %v719, 0
    %v1948 = vsel %vm94, %v722, 0
    %v1950 = vsel %vm94, %v724, 0
    %v1952 = vsel %vm94, %v727, 0
    %v1954 = vsel %vm94, %v729, 0
    %v1956 = vsel %vm94, %v732, 0
    %v1958 = vsel %vm94, %v734, 0
    %v1960 = vsel %vm94, %v737, 0
    %v1962 = vsel %vm94, %v739, 0
    %v1964 = vsel %vm94, %v742, 0
    %v1966 = vsel %vm94, %v744, 0
    %v1968 = vsel %vm94, %v747, 0
    %v1970 = vsel %vm94, %v749, 0
    %v1972 = vsel %vm94, %v752, 0
    %v1974 = vsel %vm94, %v754, 0
    %v1976 = vsel %vm94, %v757, 0
    %v1978 = vsel %vm94, %v759, 0
    %v1980 = vsel %vm94, %v762, 0
    %v1982 = vsel %vm94, %v764, 0
    %v1984 = vsel %vm94, %v767, 0
    %v1986 = vsel %vm94, %v769, 0
    %v1988 = vsel %vm94, %v772, 0
    %v1990 = vsel %vm94, %v774, 0
    %v1992 = vsel %vm94, %v777, 0
    %v1994 = vsel %vm94, %v779, 0
    %v1996 = vsel %vm94, %v782, 0
    %v1998 = vsel %vm94, %v784, 0
    %v2000 = vsel %vm94, %v787, 0
    %v2002 = vsel %vm94, %v789, 0
    %v2004 = vsel %vm94, %v792, 0
    %v2006 = vsel %vm94, %v794, 0
    %v2009 = vsel %vm975, %v87, 0
    %2011 = vmatprep.subr.mxu0 0.0
    %2012 = vmatpush1.msra.mxu0 %v2009
    %2013 = vmatprep.subr.mxu0 0.0
    %2014 = vmatpush1.msra.mxu0 0.0
    %2015 = vmatprep.subr.mxu0 0.0
    %2016 = vmatpush1.msra.mxu0 0.0
    %2017 = vmatprep.subr.mxu0 0.0
    %2018 = vmatpush1.msra.mxu0 0.0
    %2019 = vmatprep.subr.mxu0 0.0
    %2020 = vmatpush1.msra.mxu0 0.0
    %2021 = vmatprep.subr.mxu0 0.0
    %2022 = vmatpush1.msra.mxu0 0.0
    %2023 = vmatprep.subr.mxu0 0.0
    %2024 = vmatpush1.msra.mxu0 0.0
    %2025 = vmatprep.subr.mxu0 0.0
    %2026 = vmatpush1.msra.mxu0 0.0
    %2027 = vmatprep.subr.mxu0 0.0
    %2028 = vmatpush1.msra.mxu0 0.0
    %2029 = vmatprep.subr.mxu0 0.0
    %2030 = vmatpush1.msra.mxu0 0.0
    %2031 = vmatprep.subr.mxu0 0.0
    %2032 = vmatpush1.msra.mxu0 0.0
    %2033 = vmatprep.subr.mxu0 0.0
    %2034 = vmatpush1.msra.mxu0 0.0
    %2035 = vmatprep.subr.mxu0 0.0
    %2036 = vmatpush1.msra.mxu0 0.0
    %2037 = vmatprep.subr.mxu0 0.0
    %2038 = vmatpush1.msra.mxu0 0.0
    %2039 = vmatprep.subr.mxu0 0.0
    %2040 = vmatpush1.msra.mxu0 0.0
    %2041 = vmatprep.subr.mxu0 0.0
    %2042 = vmatpush1.msra.mxu0 0.0
    %2043 = vmatprep.subr.mxu0 0.0
    %2044 = vmatpush1.msra.mxu0 0.0
    %2045 = vmatprep.subr.mxu0 0.0
    %2046 = vmatpush1.msra.mxu0 0.0
    %2047 = vmatprep.subr.mxu0 0.0
    %2048 = vmatpush1.msra.mxu0 0.0
    %2049 = vmatprep.subr.mxu0 0.0
    %2050 = vmatpush1.msra.mxu0 0.0
    %2051 = vmatprep.subr.mxu0 0.0
    %2052 = vmatpush1.msra.mxu0 0.0
    %2053 = vmatprep.subr.mxu0 0.0
    %2054 = vmatpush1.msra.mxu0 0.0
    %2055 = vmatprep.subr.mxu0 0.0
    %2056 = vmatpush1.msra.mxu0 0.0
    %2057 = vmatprep.subr.mxu0 0.0
    %2058 = vmatpush1.msra.mxu0 0.0
    %2059 = vmatprep.subr.mxu0 0.0
    %2060 = vmatpush1.msra.mxu0 0.0
    %2061 = vmatprep.subr.mxu0 0.0
    %2062 = vmatpush1.msra.mxu0 0.0
    %2063 = vmatprep.subr.mxu0 0.0
    %2064 = vmatpush1.msra.mxu0 0.0
    %2065 = vmatprep.subr.mxu0 0.0
    %2066 = vmatpush1.msra.mxu0 0.0
    %2067 = vmatprep.subr.mxu0 0.0
    %2068 = vmatpush1.msra.mxu0 0.0
    %2069 = vmatprep.subr.mxu0 0.0
    %2070 = vmatpush1.msra.mxu0 0.0
    %2071 = vmatprep.subr.mxu0 0.0
    %2072 = vmatpush1.msra.mxu0 0.0
    %2073 = vmatprep.subr.mxu0 0.0
    %2074 = vmatpush1.msra.mxu0 0.0
    %2075 = vmatprep.mubr.f32.mxu0 0.0
    %2076 = vmatmul.mubr.f32.gmra.mrb[0].mxu0 %v1880
    %v2077 = vpop.f32.mrb[0].mxu0
    %v2078 = vadd.f32 0.0, %v2077
    %v2079 = vpop.f32.mrb[0].mxu0
    %2080 = vmatprep.mubr.f32.mxu0 0.0
    %2081 = vmatmul.mubr.f32.gmra.mrb[0].mxu0 %v1882
    %v2082 = vpop.f32.mrb[0].mxu0
    %v2083 = vadd.f32 0.0, %v2082
    %v2084 = vpop.f32.mrb[0].mxu0
    %2085 = vmatprep.mubr.f32.mxu0 0.0
    %2086 = vmatmul.mubr.f32.gmra.mrb[0].mxu0 %v1884
    %v2087 = vpop.f32.mrb[0].mxu0
    %v2088 = vadd.f32 0.0, %v2087
    %v2089 = vpop.f32.mrb[0].mxu0
    %2090 = vmatprep.mubr.f32.mxu0 0.0
    %2091 = vmatmul.mubr.f32.gmra.mrb[0].mxu0 %v1886
    %v2092 = vpop.f32.mrb[0].mxu0
    %v2093 = vadd.f32 0.0, %v2092
    %v2094 = vpop.f32.mrb[0].mxu0
    %2095 = vmatprep.mubr.f32.mxu0 0.0
    %2096 = vmatmul.mubr.f32.gmra.mrb[0].mxu0 %v1888
    %v2097 = vpop.f32.mrb[0].mxu0
    %v2098 = vadd.f32 0.0, %v2097
    %v2099 = vpop.f32.mrb[0].mxu0
    %2100 = vmatprep.mubr.f32.mxu0 0.0
    %2101 = vmatmul.mubr.f32.gmra.mrb[0].mxu0 %v1890
    %v2102 = vpop.f32.mrb[0].mxu0
    %v2103 = vadd.f32 0.0, %v2102
    %v2104 = vpop.f32.mrb[0].mxu0
    %2105 = vmatprep.mubr.f32.mxu0 0.0
    %2106 = vmatmul.mubr.f32.gmra.mrb[0].mxu0 %v1892
    %v2107 = vpop.f32.mrb[0].mxu0
    %v2108 = vadd.f32 0.0, %v2107
    %v2109 = vpop.f32.mrb[0].mxu0
    %2110 = vmatprep.mubr.f32.mxu0 0.0
    %2111 = vmatmul.mubr.f32.gmra.mrb[0].mxu0 %v1894
    %v2112 = vpop.f32.mrb[0].mxu0
    %v2113 = vadd.f32 0.0, %v2112
    %v2114 = vpop.f32.mrb[0].mxu0
    %2115 = vmatprep.mubr.f32.mxu0 0.0
    %2116 = vmatmul.mubr.f32.gmra.mrb[0].mxu0 %v1896
    %v2117 = vpop.f32.mrb[0].mxu0
    %v2118 = vadd.f32 0.0, %v2117
    %v2119 = vpop.f32.mrb[0].mxu0
    %2120 = vmatprep.mubr.f32.mxu0 0.0
    %2121 = vmatmul.mubr.f32.gmra.mrb[0].mxu0 %v1898
    %v2122 = vpop.f32.mrb[0].mxu0
    %v2123 = vadd.f32 0.0, %v2122
    %v2124 = vpop.f32.mrb[0].mxu0
    %2125 = vmatprep.mubr.f32.mxu0 0.0
    %2126 = vmatmul.mubr.f32.gmra.mrb[0].mxu0 %v1900
    %v2127 = vpop.f32.mrb[0].mxu0
    %v2128 = vadd.f32 0.0, %v2127
    %v2129 = vpop.f32.mrb[0].mxu0
    %2130 = vmatprep.mubr.f32.mxu0 0.0
    %2131 = vmatmul.mubr.f32.gmra.mrb[0].mxu0 %v1902
    %v2132 = vpop.f32.mrb[0].mxu0
    %v2133 = vadd.f32 0.0, %v2132
    %v2134 = vpop.f32.mrb[0].mxu0
    %2135 = vmatprep.mubr.f32.mxu0 0.0
    %2136 = vmatmul.mubr.f32.gmra.mrb[0].mxu0 %v1904
    %v2137 = vpop.f32.mrb[0].mxu0
    %v2138 = vadd.f32 0.0, %v2137
    %v2139 = vpop.f32.mrb[0].mxu0
    %2140 = vmatprep.mubr.f32.mxu0 0.0
    %2141 = vmatmul.mubr.f32.gmra.mrb[0].mxu0 %v1906
    %v2142 = vpop.f32.mrb[0].mxu0
    %v2143 = vadd.f32 0.0, %v2142
    %v2144 = vpop.f32.mrb[0].mxu0
    %2145 = vmatprep.mubr.f32.mxu0 0.0
    %2146 = vmatmul.mubr.f32.gmra.mrb[0].mxu0 %v1908
    %v2147 = vpop.f32.mrb[0].mxu0
    %v2148 = vadd.f32 0.0, %v2147
    %v2149 = vpop.f32.mrb[0].mxu0
    %2150 = vmatprep.mubr.f32.mxu0 0.0
    %2151 = vmatmul.mubr.f32.gmra.mrb[0].mxu0 %v1910
    %v2152 = vpop.f32.mrb[0].mxu0
    %v2153 = vadd.f32 0.0, %v2152
    %v2154 = vpop.f32.mrb[0].mxu0
    %2155 = vmatprep.mubr.f32.mxu0 0.0
    %2156 = vmatmul.mubr.f32.gmra.mrb[0].mxu0 %v1912
    %v2157 = vpop.f32.mrb[0].mxu0
    %v2158 = vadd.f32 0.0, %v2157
    %v2159 = vpop.f32.mrb[0].mxu0
    %2160 = vmatprep.mubr.f32.mxu0 0.0
    %2161 = vmatmul.mubr.f32.gmra.mrb[0].mxu0 %v1914
    %v2162 = vpop.f32.mrb[0].mxu0
    %v2163 = vadd.f32 0.0, %v2162
    %v2164 = vpop.f32.mrb[0].mxu0
    %2165 = vmatprep.mubr.f32.mxu0 0.0
    %2166 = vmatmul.mubr.f32.gmra.mrb[0].mxu0 %v1916
    %v2167 = vpop.f32.mrb[0].mxu0
    %v2168 = vadd.f32 0.0, %v2167
    %v2169 = vpop.f32.mrb[0].mxu0
    %2170 = vmatprep.mubr.f32.mxu0 0.0
    %2171 = vmatmul.mubr.f32.gmra.mrb[0].mxu0 %v1918
    %v2172 = vpop.f32.mrb[0].mxu0
    %v2173 = vadd.f32 0.0, %v2172
    %v2174 = vpop.f32.mrb[0].mxu0
    %2175 = vmatprep.mubr.f32.mxu0 0.0
    %2176 = vmatmul.mubr.f32.gmra.mrb[0].mxu0 %v1920
    %v2177 = vpop.f32.mrb[0].mxu0
    %v2178 = vadd.f32 0.0, %v2177
    %v2179 = vpop.f32.mrb[0].mxu0
    %2180 = vmatprep.mubr.f32.mxu0 0.0
    %2181 = vmatmul.mubr.f32.gmra.mrb[0].mxu0 %v1922
    %v2182 = vpop.f32.mrb[0].mxu0
    %v2183 = vadd.f32 0.0, %v2182
    %v2184 = vpop.f32.mrb[0].mxu0
    %2185 = vmatprep.mubr.f32.mxu0 0.0
    %2186 = vmatmul.mubr.f32.gmra.mrb[0].mxu0 %v1924
    %v2187 = vpop.f32.mrb[0].mxu0
    %v2188 = vadd.f32 0.0, %v2187
    %v2189 = vpop.f32.mrb[0].mxu0
    %2190 = vmatprep.mubr.f32.mxu0 0.0
    %2191 = vmatmul.mubr.f32.gmra.mrb[0].mxu0 %v1926
    %v2192 = vpop.f32.mrb[0].mxu0
    %v2193 = vadd.f32 0.0, %v2192
    %v2194 = vpop.f32.mrb[0].mxu0
    %2195 = vmatprep.mubr.f32.mxu0 0.0
    %2196 = vmatmul.mubr.f32.gmra.mrb[0].mxu0 %v1928
    %v2197 = vpop.f32.mrb[0].mxu0
    %v2198 = vadd.f32 0.0, %v2197
    %v2199 = vpop.f32.mrb[0].mxu0
    %2200 = vmatprep.mubr.f32.mxu0 0.0
    %2201 = vmatmul.mubr.f32.gmra.mrb[0].mxu0 %v1930
    %v2202 = vpop.f32.mrb[0].mxu0
    %v2203 = vadd.f32 0.0, %v2202
    %v2204 = vpop.f32.mrb[0].mxu0
    %2205 = vmatprep.mubr.f32.mxu0 0.0
    %2206 = vmatmul.mubr.f32.gmra.mrb[0].mxu0 %v1932
    %v2207 = vpop.f32.mrb[0].mxu0
    %v2208 = vadd.f32 0.0, %v2207
    %v2209 = vpop.f32.mrb[0].mxu0
    %2210 = vmatprep.mubr.f32.mxu0 0.0
    %2211 = vmatmul.mubr.f32.gmra.mrb[0].mxu0 %v1934
    %v2212 = vpop.f32.mrb[0].mxu0
    %v2213 = vadd.f32 0.0, %v2212
    %v2214 = vpop.f32.mrb[0].mxu0
    %2215 = vmatprep.mubr.f32.mxu0 0.0
    %2216 = vmatmul.mubr.f32.gmra.mrb[0].mxu0 %v1936
    %v2217 = vpop.f32.mrb[0].mxu0
    %v2218 = vadd.f32 0.0, %v2217
    %v2219 = vpop.f32.mrb[0].mxu0
    %2220 = vmatprep.mubr.f32.mxu0 0.0
    %2221 = vmatmul.mubr.f32.gmra.mrb[0].mxu0 %v1938
    %v2222 = vpop.f32.mrb[0].mxu0
    %v2223 = vadd.f32 0.0, %v2222
    %v2224 = vpop.f32.mrb[0].mxu0
    %2225 = vmatprep.mubr.f32.mxu0 0.0
    %2226 = vmatmul.mubr.f32.gmra.mrb[0].mxu0 %v1940
    %v2227 = vpop.f32.mrb[0].mxu0
    %v2228 = vadd.f32 0.0, %v2227
    %v2229 = vpop.f32.mrb[0].mxu0
    %2230 = vmatprep.mubr.f32.mxu0 0.0
    %2231 = vmatmul.mubr.f32.gmra.mrb[0].mxu0 %v1942
    %v2232 = vpop.f32.mrb[0].mxu0
    %v2233 = vadd.f32 0.0, %v2232
    %v2234 = vpop.f32.mrb[0].mxu0
    %2235 = vmatprep.mubr.f32.mxu0 0.0
    %2236 = vmatmul.mubr.f32.gmra.mrb[0].mxu0 %v1944
    %v2237 = vpop.f32.mrb[0].mxu0
    %v2238 = vadd.f32 0.0, %v2237
    %v2239 = vpop.f32.mrb[0].mxu0
    %2240 = vmatprep.mubr.f32.mxu0 0.0
    %2241 = vmatmul.mubr.f32.gmra.mrb[0].mxu0 %v1946
    %v2242 = vpop.f32.mrb[0].mxu0
    %v2243 = vadd.f32 0.0, %v2242
    %v2244 = vpop.f32.mrb[0].mxu0
    %2245 = vmatprep.mubr.f32.mxu0 0.0
    %2246 = vmatmul.mubr.f32.gmra.mrb[0].mxu0 %v1948
    %v2247 = vpop.f32.mrb[0].mxu0
    %v2248 = vadd.f32 0.0, %v2247
    %v2249 = vpop.f32.mrb[0].mxu0
    %2250 = vmatprep.mubr.f32.mxu0 0.0
    %2251 = vmatmul.mubr.f32.gmra.mrb[0].mxu0 %v1950
    %v2252 = vpop.f32.mrb[0].mxu0
    %v2253 = vadd.f32 0.0, %v2252
    %v2254 = vpop.f32.mrb[0].mxu0
    %2255 = vmatprep.mubr.f32.mxu0 0.0
    %2256 = vmatmul.mubr.f32.gmra.mrb[0].mxu0 %v1952
    %v2257 = vpop.f32.mrb[0].mxu0
    %v2258 = vadd.f32 0.0, %v2257
    %v2259 = vpop.f32.mrb[0].mxu0
    %2260 = vmatprep.mubr.f32.mxu0 0.0
    %2261 = vmatmul.mubr.f32.gmra.mrb[0].mxu0 %v1954
    %v2262 = vpop.f32.mrb[0].mxu0
    %v2263 = vadd.f32 0.0, %v2262
    %v2264 = vpop.f32.mrb[0].mxu0
    %2265 = vmatprep.mubr.f32.mxu0 0.0
    %2266 = vmatmul.mubr.f32.gmra.mrb[0].mxu0 %v1956
    %v2267 = vpop.f32.mrb[0].mxu0
    %v2268 = vadd.f32 0.0, %v2267
    %v2269 = vpop.f32.mrb[0].mxu0
    %2270 = vmatprep.mubr.f32.mxu0 0.0
    %2271 = vmatmul.mubr.f32.gmra.mrb[0].mxu0 %v1958
    %v2272 = vpop.f32.mrb[0].mxu0
    %v2273 = vadd.f32 0.0, %v2272
    %v2274 = vpop.f32.mrb[0].mxu0
    %2275 = vmatprep.mubr.f32.mxu0 0.0
    %2276 = vmatmul.mubr.f32.gmra.mrb[0].mxu0 %v1960
    %v2277 = vpop.f32.mrb[0].mxu0
    %v2278 = vadd.f32 0.0, %v2277
    %v2279 = vpop.f32.mrb[0].mxu0
    %2280 = vmatprep.mubr.f32.mxu0 0.0
    %2281 = vmatmul.mubr.f32.gmra.mrb[0].mxu0 %v1962
    %v2282 = vpop.f32.mrb[0].mxu0
    %v2283 = vadd.f32 0.0, %v2282
    %v2284 = vpop.f32.mrb[0].mxu0
    %2285 = vmatprep.mubr.f32.mxu0 0.0
    %2286 = vmatmul.mubr.f32.gmra.mrb[0].mxu0 %v1964
    %v2287 = vpop.f32.mrb[0].mxu0
    %v2288 = vadd.f32 0.0, %v2287
    %v2289 = vpop.f32.mrb[0].mxu0
    %2290 = vmatprep.mubr.f32.mxu0 0.0
    %2291 = vmatmul.mubr.f32.gmra.mrb[0].mxu0 %v1966
    %v2292 = vpop.f32.mrb[0].mxu0
    %v2293 = vadd.f32 0.0, %v2292
    %v2294 = vpop.f32.mrb[0].mxu0
    %2295 = vmatprep.mubr.f32.mxu0 0.0
    %2296 = vmatmul.mubr.f32.gmra.mrb[0].mxu0 %v1968
    %v2297 = vpop.f32.mrb[0].mxu0
    %v2298 = vadd.f32 0.0, %v2297
    %v2299 = vpop.f32.mrb[0].mxu0
    %2300 = vmatprep.mubr.f32.mxu0 0.0
    %2301 = vmatmul.mubr.f32.gmra.mrb[0].mxu0 %v1970
    %v2302 = vpop.f32.mrb[0].mxu0
    %v2303 = vadd.f32 0.0, %v2302
    %v2304 = vpop.f32.mrb[0].mxu0
    %2305 = vmatprep.mubr.f32.mxu0 0.0
    %2306 = vmatmul.mubr.f32.gmra.mrb[0].mxu0 %v1972
    %v2307 = vpop.f32.mrb[0].mxu0
    %v2308 = vadd.f32 0.0, %v2307
    %v2309 = vpop.f32.mrb[0].mxu0
    %2310 = vmatprep.mubr.f32.mxu0 0.0
    %2311 = vmatmul.mubr.f32.gmra.mrb[0].mxu0 %v1974
    %v2312 = vpop.f32.mrb[0].mxu0
    %v2313 = vadd.f32 0.0, %v2312
    %v2314 = vpop.f32.mrb[0].mxu0
    %2315 = vmatprep.mubr.f32.mxu0 0.0
    %2316 = vmatmul.mubr.f32.gmra.mrb[0].mxu0 %v1976
    %v2317 = vpop.f32.mrb[0].mxu0
    %v2318 = vadd.f32 0.0, %v2317
    %v2319 = vpop.f32.mrb[0].mxu0
    %2320 = vmatprep.mubr.f32.mxu0 0.0
    %2321 = vmatmul.mubr.f32.gmra.mrb[0].mxu0 %v1978
    %v2322 = vpop.f32.mrb[0].mxu0
    %v2323 = vadd.f32 0.0, %v2322
    %v2324 = vpop.f32.mrb[0].mxu0
    %2325 = vmatprep.mubr.f32.mxu0 0.0
    %2326 = vmatmul.mubr.f32.gmra.mrb[0].mxu0 %v1980
    %v2327 = vpop.f32.mrb[0].mxu0
    %v2328 = vadd.f32 0.0, %v2327
    %v2329 = vpop.f32.mrb[0].mxu0
    %2330 = vmatprep.mubr.f32.mxu0 0.0
    %2331 = vmatmul.mubr.f32.gmra.mrb[0].mxu0 %v1982
    %v2332 = vpop.f32.mrb[0].mxu0
    %v2333 = vadd.f32 0.0, %v2332
    %v2334 = vpop.f32.mrb[0].mxu0
    %2335 = vmatprep.mubr.f32.mxu0 0.0
    %2336 = vmatmul.mubr.f32.gmra.mrb[0].mxu0 %v1984
    %v2337 = vpop.f32.mrb[0].mxu0
    %v2338 = vadd.f32 0.0, %v2337
    %v2339 = vpop.f32.mrb[0].mxu0
    %2340 = vmatprep.mubr.f32.mxu0 0.0
    %2341 = vmatmul.mubr.f32.gmra.mrb[0].mxu0 %v1986
    %v2342 = vpop.f32.mrb[0].mxu0
    %v2343 = vadd.f32 0.0, %v2342
    %v2344 = vpop.f32.mrb[0].mxu0
    %2345 = vmatprep.mubr.f32.mxu0 0.0
    %2346 = vmatmul.mubr.f32.gmra.mrb[0].mxu0 %v1988
    %v2347 = vpop.f32.mrb[0].mxu0
    %v2348 = vadd.f32 0.0, %v2347
    %v2349 = vpop.f32.mrb[0].mxu0
    %2350 = vmatprep.mubr.f32.mxu0 0.0
    %2351 = vmatmul.mubr.f32.gmra.mrb[0].mxu0 %v1990
    %v2352 = vpop.f32.mrb[0].mxu0
    %v2353 = vadd.f32 0.0, %v2352
    %v2354 = vpop.f32.mrb[0].mxu0
    %2355 = vmatprep.mubr.f32.mxu0 0.0
    %2356 = vmatmul.mubr.f32.gmra.mrb[0].mxu0 %v1992
    %v2357 = vpop.f32.mrb[0].mxu0
    %v2358 = vadd.f32 0.0, %v2357
    %v2359 = vpop.f32.mrb[0].mxu0
    %2360 = vmatprep.mubr.f32.mxu0 0.0
    %2361 = vmatmul.mubr.f32.gmra.mrb[0].mxu0 %v1994
    %v2362 = vpop.f32.mrb[0].mxu0
    %v2363 = vadd.f32 0.0, %v2362
    %v2364 = vpop.f32.mrb[0].mxu0
    %2365 = vmatprep.mubr.f32.mxu0 0.0
    %2366 = vmatmul.mubr.f32.gmra.mrb[0].mxu0 %v1996
    %v2367 = vpop.f32.mrb[0].mxu0
    %v2368 = vadd.f32 0.0, %v2367
    %v2369 = vpop.f32.mrb[0].mxu0
    %2370 = vmatprep.mubr.f32.mxu0 0.0
    %2371 = vmatmul.mubr.f32.gmra.mrb[0].mxu0 %v1998
    %v2372 = vpop.f32.mrb[0].mxu0
    %v2373 = vadd.f32 0.0, %v2372
    %v2374 = vpop.f32.mrb[0].mxu0
    %2375 = vmatprep.mubr.f32.mxu0 0.0
    %2376 = vmatmul.mubr.f32.gmra.mrb[0].mxu0 %v2000
    %v2377 = vpop.f32.mrb[0].mxu0
    %v2378 = vadd.f32 0.0, %v2377
    %v2379 = vpop.f32.mrb[0].mxu0
    %2380 = vmatprep.mubr.f32.mxu0 0.0
    %2381 = vmatmul.mubr.f32.gmra.mrb[0].mxu0 %v2002
    %v2382 = vpop.f32.mrb[0].mxu0
    %v2383 = vadd.f32 0.0, %v2382
    %v2384 = vpop.f32.mrb[0].mxu0
    %2385 = vmatprep.mubr.f32.mxu0 0.0
    %2386 = vmatmul.mubr.f32.gmra.mrb[0].mxu0 %v2004
    %v2387 = vpop.f32.mrb[0].mxu0
    %v2388 = vadd.f32 0.0, %v2387
    %v2389 = vpop.f32.mrb[0].mxu0
    %2390 = vmatprep.mubr.f32.mxu0 0.0
    %2391 = vmatmul.mubr.f32.gmra.mrb[0].mxu0 %v2006
    %v2392 = vpop.f32.mrb[0].mxu0
    %v2393 = vadd.f32 0.0, %v2392
    %v2394 = vpop.f32.mrb[0].mxu0
    %2395 = vdwg.mxu0
    %v2396 = vsel %vm94, %v317, 0
    %v2398 = vsel %vm94, %v318, 0
    %v2400 = vsel %vm94, %v371, 0
    %v2402 = vsel %vm94, %v372, 0
    %v2405 = vsel %vm975, %v88, 0
    %2407 = vmatprep.subr.mxu0 0.0
    %2408 = vmatpush1.msra.mxu0 %v2405
    %2409 = vmatprep.subr.mxu0 0.0
    %2410 = vmatpush1.msra.mxu0 0.0
    %2411 = vmatprep.subr.mxu0 0.0
    %2412 = vmatpush1.msra.mxu0 0.0
    %2413 = vmatprep.subr.mxu0 0.0
    %2414 = vmatpush1.msra.mxu0 0.0
    %2415 = vmatprep.subr.mxu0 0.0
    %2416 = vmatpush1.msra.mxu0 0.0
    %2417 = vmatprep.subr.mxu0 0.0
    %2418 = vmatpush1.msra.mxu0 0.0
    %2419 = vmatprep.subr.mxu0 0.0
    %2420 = vmatpush1.msra.mxu0 0.0
    %2421 = vmatprep.subr.mxu0 0.0
    %2422 = vmatpush1.msra.mxu0 0.0
    %2423 = vmatprep.subr.mxu0 0.0
    %2424 = vmatpush1.msra.mxu0 0.0
    %2425 = vmatprep.subr.mxu0 0.0
    %2426 = vmatpush1.msra.mxu0 0.0
    %2427 = vmatprep.subr.mxu0 0.0
    %2428 = vmatpush1.msra.mxu0 0.0
    %2429 = vmatprep.subr.mxu0 0.0
    %2430 = vmatpush1.msra.mxu0 0.0
    %2431 = vmatprep.subr.mxu0 0.0
    %2432 = vmatpush1.msra.mxu0 0.0
    %2433 = vmatprep.subr.mxu0 0.0
    %2434 = vmatpush1.msra.mxu0 0.0
    %2435 = vmatprep.subr.mxu0 0.0
    %2436 = vmatpush1.msra.mxu0 0.0
    %2437 = vmatprep.subr.mxu0 0.0
    %2438 = vmatpush1.msra.mxu0 0.0
    %2439 = vmatprep.subr.mxu0 0.0
    %2440 = vmatpush1.msra.mxu0 0.0
    %2441 = vmatprep.subr.mxu0 0.0
    %2442 = vmatpush1.msra.mxu0 0.0
    %2443 = vmatprep.subr.mxu0 0.0
    %2444 = vmatpush1.msra.mxu0 0.0
    %2445 = vmatprep.subr.mxu0 0.0
    %2446 = vmatpush1.msra.mxu0 0.0
    %2447 = vmatprep.subr.mxu0 0.0
    %2448 = vmatpush1.msra.mxu0 0.0
    %2449 = vmatprep.subr.mxu0 0.0
    %2450 = vmatpush1.msra.mxu0 0.0
    %2451 = vmatprep.subr.mxu0 0.0
    %2452 = vmatpush1.msra.mxu0 0.0
    %2453 = vmatprep.subr.mxu0 0.0
    %2454 = vmatpush1.msra.mxu0 0.0
    %2455 = vmatprep.subr.mxu0 0.0
    %2456 = vmatpush1.msra.mxu0 0.0
    %2457 = vmatprep.subr.mxu0 0.0
    %2458 = vmatpush1.msra.mxu0 0.0
    %2459 = vmatprep.subr.mxu0 0.0
    %2460 = vmatpush1.msra.mxu0 0.0
    %2461 = vmatprep.subr.mxu0 0.0
    %2462 = vmatpush1.msra.mxu0 0.0
    %2463 = vmatprep.subr.mxu0 0.0
    %2464 = vmatpush1.msra.mxu0 0.0
    %2465 = vmatprep.subr.mxu0 0.0
    %2466 = vmatpush1.msra.mxu0 0.0
    %2467 = vmatprep.subr.mxu0 0.0
    %2468 = vmatpush1.msra.mxu0 0.0
    %2469 = vmatprep.subr.mxu0 0.0
    %2470 = vmatpush1.msra.mxu0 0.0
    %2471 = vmatprep.mubr.f32.mxu0 0.0
    %2472 = vmatmul.mubr.f32.gmra.mrb[0].mxu0 %v851
    %v2473 = vpop.f32.mrb[0].mxu0
    %v2474 = vadd.f32 0.0, %v2473
    %v2475 = vpop.f32.mrb[0].mxu0
    %2476 = vmatprep.mubr.f32.mxu0 0.0
    %2477 = vmatmul.mubr.f32.gmra.mrb[0].mxu0 %v853
    %v2478 = vpop.f32.mrb[0].mxu0
    %v2479 = vadd.f32 0.0, %v2478
    %v2480 = vpop.f32.mrb[0].mxu0
    %2481 = vmatprep.mubr.f32.mxu0 0.0
    %2482 = vmatmul.mubr.f32.gmra.mrb[0].mxu0 %v855
    %v2483 = vpop.f32.mrb[0].mxu0
    %v2484 = vadd.f32 0.0, %v2483
    %v2485 = vpop.f32.mrb[0].mxu0
    %2486 = vmatprep.mubr.f32.mxu0 0.0
    %2487 = vmatmul.mubr.f32.gmra.mrb[0].mxu0 %v857
    %v2488 = vpop.f32.mrb[0].mxu0
    %v2489 = vadd.f32 0.0, %v2488
    %v2490 = vpop.f32.mrb[0].mxu0
    %2491 = vmatprep.mubr.f32.mxu0 0.0
    %2492 = vmatmul.mubr.f32.gmra.mrb[0].mxu0 %v859
    %v2493 = vpop.f32.mrb[0].mxu0
    %v2494 = vadd.f32 0.0, %v2493
    %v2495 = vpop.f32.mrb[0].mxu0
    %2496 = vmatprep.mubr.f32.mxu0 0.0
    %2497 = vmatmul.mubr.f32.gmra.mrb[0].mxu0 %v861
    %v2498 = vpop.f32.mrb[0].mxu0
    %v2499 = vadd.f32 0.0, %v2498
    %v2500 = vpop.f32.mrb[0].mxu0
    %2501 = vmatprep.mubr.f32.mxu0 0.0
    %2502 = vmatmul.mubr.f32.gmra.mrb[0].mxu0 %v863
    %v2503 = vpop.f32.mrb[0].mxu0
    %v2504 = vadd.f32 0.0, %v2503
    %v2505 = vpop.f32.mrb[0].mxu0
    %2506 = vmatprep.mubr.f32.mxu0 0.0
    %2507 = vmatmul.mubr.f32.gmra.mrb[0].mxu0 %v865
    %v2508 = vpop.f32.mrb[0].mxu0
    %v2509 = vadd.f32 0.0, %v2508
    %v2510 = vpop.f32.mrb[0].mxu0
    %2511 = vmatprep.mubr.f32.mxu0 0.0
    %2512 = vmatmul.mubr.f32.gmra.mrb[0].mxu0 %v867
    %v2513 = vpop.f32.mrb[0].mxu0
    %v2514 = vadd.f32 0.0, %v2513
    %v2515 = vpop.f32.mrb[0].mxu0
    %2516 = vmatprep.mubr.f32.mxu0 0.0
    %2517 = vmatmul.mubr.f32.gmra.mrb[0].mxu0 %v869
    %v2518 = vpop.f32.mrb[0].mxu0
    %v2519 = vadd.f32 0.0, %v2518
    %v2520 = vpop.f32.mrb[0].mxu0
    %2521 = vmatprep.mubr.f32.mxu0 0.0
    %2522 = vmatmul.mubr.f32.gmra.mrb[0].mxu0 %v871
    %v2523 = vpop.f32.mrb[0].mxu0
    %v2524 = vadd.f32 0.0, %v2523
    %v2525 = vpop.f32.mrb[0].mxu0
    %2526 = vmatprep.mubr.f32.mxu0 0.0
    %2527 = vmatmul.mubr.f32.gmra.mrb[0].mxu0 %v873
    %v2528 = vpop.f32.mrb[0].mxu0
    %v2529 = vadd.f32 0.0, %v2528
    %v2530 = vpop.f32.mrb[0].mxu0
    %2531 = vmatprep.mubr.f32.mxu0 0.0
    %2532 = vmatmul.mubr.f32.gmra.mrb[0].mxu0 %v875
    %v2533 = vpop.f32.mrb[0].mxu0
    %v2534 = vadd.f32 0.0, %v2533
    %v2535 = vpop.f32.mrb[0].mxu0
    %2536 = vmatprep.mubr.f32.mxu0 0.0
    %2537 = vmatmul.mubr.f32.gmra.mrb[0].mxu0 %v877
    %v2538 = vpop.f32.mrb[0].mxu0
    %v2539 = vadd.f32 0.0, %v2538
    %v2540 = vpop.f32.mrb[0].mxu0
    %2541 = vmatprep.mubr.f32.mxu0 0.0
    %2542 = vmatmul.mubr.f32.gmra.mrb[0].mxu0 %v879
    %v2543 = vpop.f32.mrb[0].mxu0
    %v2544 = vadd.f32 0.0, %v2543
    %v2545 = vpop.f32.mrb[0].mxu0
    %2546 = vmatprep.mubr.f32.mxu0 0.0
    %2547 = vmatmul.mubr.f32.gmra.mrb[0].mxu0 %v881
    %v2548 = vpop.f32.mrb[0].mxu0
    %v2549 = vadd.f32 0.0, %v2548
    %v2550 = vpop.f32.mrb[0].mxu0
    %2551 = vmatprep.mubr.f32.mxu0 0.0
    %2552 = vmatmul.mubr.f32.gmra.mrb[0].mxu0 %v883
    %v2553 = vpop.f32.mrb[0].mxu0
    %v2554 = vadd.f32 0.0, %v2553
    %v2555 = vpop.f32.mrb[0].mxu0
    %2556 = vmatprep.mubr.f32.mxu0 0.0
    %2557 = vmatmul.mubr.f32.gmra.mrb[0].mxu0 %v885
    %v2558 = vpop.f32.mrb[0].mxu0
    %v2559 = vadd.f32 0.0, %v2558
    %v2560 = vpop.f32.mrb[0].mxu0
    %2561 = vmatprep.mubr.f32.mxu0 0.0
    %2562 = vmatmul.mubr.f32.gmra.mrb[0].mxu0 %v887
    %v2563 = vpop.f32.mrb[0].mxu0
    %v2564 = vadd.f32 0.0, %v2563
    %v2565 = vpop.f32.mrb[0].mxu0
    %2566 = vmatprep.mubr.f32.mxu0 0.0
    %2567 = vmatmul.mubr.f32.gmra.mrb[0].mxu0 %v889
    %v2568 = vpop.f32.mrb[0].mxu0
    %v2569 = vadd.f32 0.0, %v2568
    %v2570 = vpop.f32.mrb[0].mxu0
    %2571 = vmatprep.mubr.f32.mxu0 0.0
    %2572 = vmatmul.mubr.f32.gmra.mrb[0].mxu0 %v891
    %v2573 = vpop.f32.mrb[0].mxu0
    %v2574 = vadd.f32 0.0, %v2573
    %v2575 = vpop.f32.mrb[0].mxu0
    %2576 = vmatprep.mubr.f32.mxu0 0.0
    %2577 = vmatmul.mubr.f32.gmra.mrb[0].mxu0 %v893
    %v2578 = vpop.f32.mrb[0].mxu0
    %v2579 = vadd.f32 0.0, %v2578
    %v2580 = vpop.f32.mrb[0].mxu0
    %2581 = vmatprep.mubr.f32.mxu0 0.0
    %2582 = vmatmul.mubr.f32.gmra.mrb[0].mxu0 %v895
    %v2583 = vpop.f32.mrb[0].mxu0
    %v2584 = vadd.f32 0.0, %v2583
    %v2585 = vpop.f32.mrb[0].mxu0
    %2586 = vmatprep.mubr.f32.mxu0 0.0
    %2587 = vmatmul.mubr.f32.gmra.mrb[0].mxu0 %v897
    %v2588 = vpop.f32.mrb[0].mxu0
    %v2589 = vadd.f32 0.0, %v2588
    %v2590 = vpop.f32.mrb[0].mxu0
    %2591 = vmatprep.mubr.f32.mxu0 0.0
    %2592 = vmatmul.mubr.f32.gmra.mrb[0].mxu0 %v899
    %v2593 = vpop.f32.mrb[0].mxu0
    %v2594 = vadd.f32 0.0, %v2593
    %v2595 = vpop.f32.mrb[0].mxu0
    %2596 = vmatprep.mubr.f32.mxu0 0.0
    %2597 = vmatmul.mubr.f32.gmra.mrb[0].mxu0 %v901
    %v2598 = vpop.f32.mrb[0].mxu0
    %v2599 = vadd.f32 0.0, %v2598
    %v2600 = vpop.f32.mrb[0].mxu0
    %2601 = vmatprep.mubr.f32.mxu0 0.0
    %2602 = vmatmul.mubr.f32.gmra.mrb[0].mxu0 %v903
    %v2603 = vpop.f32.mrb[0].mxu0
    %v2604 = vadd.f32 0.0, %v2603
    %v2605 = vpop.f32.mrb[0].mxu0
    %2606 = vmatprep.mubr.f32.mxu0 0.0
    %2607 = vmatmul.mubr.f32.gmra.mrb[0].mxu0 %v905
    %v2608 = vpop.f32.mrb[0].mxu0
    %v2609 = vadd.f32 0.0, %v2608
    %v2610 = vpop.f32.mrb[0].mxu0
    %2611 = vmatprep.mubr.f32.mxu0 0.0
    %2612 = vmatmul.mubr.f32.gmra.mrb[0].mxu0 %v907
    %v2613 = vpop.f32.mrb[0].mxu0
    %v2614 = vadd.f32 0.0, %v2613
    %v2615 = vpop.f32.mrb[0].mxu0
    %2616 = vmatprep.mubr.f32.mxu0 0.0
    %2617 = vmatmul.mubr.f32.gmra.mrb[0].mxu0 %v909
    %v2618 = vpop.f32.mrb[0].mxu0
    %v2619 = vadd.f32 0.0, %v2618
    %v2620 = vpop.f32.mrb[0].mxu0
    %2621 = vmatprep.mubr.f32.mxu0 0.0
    %2622 = vmatmul.mubr.f32.gmra.mrb[0].mxu0 %v2396
    %v2623 = vpop.f32.mrb[0].mxu0
    %v2624 = vadd.f32 0.0, %v2623
    %v2625 = vpop.f32.mrb[0].mxu0
    %2626 = vmatprep.mubr.f32.mxu0 0.0
    %2627 = vmatmul.mubr.f32.gmra.mrb[0].mxu0 %v2398
    %v2628 = vpop.f32.mrb[0].mxu0
    %v2629 = vadd.f32 0.0, %v2628
    %v2630 = vpop.f32.mrb[0].mxu0
    %2631 = vmatprep.mubr.f32.mxu0 0.0
    %2632 = vmatmul.mubr.f32.gmra.mrb[0].mxu0 %v915
    %v2633 = vpop.f32.mrb[0].mxu0
    %v2634 = vadd.f32 0.0, %v2633
    %v2635 = vpop.f32.mrb[0].mxu0
    %2636 = vmatprep.mubr.f32.mxu0 0.0
    %2637 = vmatmul.mubr.f32.gmra.mrb[0].mxu0 %v917
    %v2638 = vpop.f32.mrb[0].mxu0
    %v2639 = vadd.f32 0.0, %v2638
    %v2640 = vpop.f32.mrb[0].mxu0
    %2641 = vmatprep.mubr.f32.mxu0 0.0
    %2642 = vmatmul.mubr.f32.gmra.mrb[0].mxu0 %v919
    %v2643 = vpop.f32.mrb[0].mxu0
    %v2644 = vadd.f32 0.0, %v2643
    %v2645 = vpop.f32.mrb[0].mxu0
    %2646 = vmatprep.mubr.f32.mxu0 0.0
    %2647 = vmatmul.mubr.f32.gmra.mrb[0].mxu0 %v921
    %v2648 = vpop.f32.mrb[0].mxu0
    %v2649 = vadd.f32 0.0, %v2648
    %v2650 = vpop.f32.mrb[0].mxu0
    %2651 = vmatprep.mubr.f32.mxu0 0.0
    %2652 = vmatmul.mubr.f32.gmra.mrb[0].mxu0 %v923
    %v2653 = vpop.f32.mrb[0].mxu0
    %v2654 = vadd.f32 0.0, %v2653
    %v2655 = vpop.f32.mrb[0].mxu0
    %2656 = vmatprep.mubr.f32.mxu0 0.0
    %2657 = vmatmul.mubr.f32.gmra.mrb[0].mxu0 %v925
    %v2658 = vpop.f32.mrb[0].mxu0
    %v2659 = vadd.f32 0.0, %v2658
    %v2660 = vpop.f32.mrb[0].mxu0
    %2661 = vmatprep.mubr.f32.mxu0 0.0
    %2662 = vmatmul.mubr.f32.gmra.mrb[0].mxu0 %v927
    %v2663 = vpop.f32.mrb[0].mxu0
    %v2664 = vadd.f32 0.0, %v2663
    %v2665 = vpop.f32.mrb[0].mxu0
    %2666 = vmatprep.mubr.f32.mxu0 0.0
    %2667 = vmatmul.mubr.f32.gmra.mrb[0].mxu0 %v929
    %v2668 = vpop.f32.mrb[0].mxu0
    %v2669 = vadd.f32 0.0, %v2668
    %v2670 = vpop.f32.mrb[0].mxu0
    %2671 = vmatprep.mubr.f32.mxu0 0.0
    %2672 = vmatmul.mubr.f32.gmra.mrb[0].mxu0 %v931
    %v2673 = vpop.f32.mrb[0].mxu0
    %v2674 = vadd.f32 0.0, %v2673
    %v2675 = vpop.f32.mrb[0].mxu0
    %2676 = vmatprep.mubr.f32.mxu0 0.0
    %2677 = vmatmul.mubr.f32.gmra.mrb[0].mxu0 %v933
    %v2678 = vpop.f32.mrb[0].mxu0
    %v2679 = vadd.f32 0.0, %v2678
    %v2680 = vpop.f32.mrb[0].mxu0
    %2681 = vmatprep.mubr.f32.mxu0 0.0
    %2682 = vmatmul.mubr.f32.gmra.mrb[0].mxu0 %v935
    %v2683 = vpop.f32.mrb[0].mxu0
    %v2684 = vadd.f32 0.0, %v2683
    %v2685 = vpop.f32.mrb[0].mxu0
    %2686 = vmatprep.mubr.f32.mxu0 0.0
    %2687 = vmatmul.mubr.f32.gmra.mrb[0].mxu0 %v937
    %v2688 = vpop.f32.mrb[0].mxu0
    %v2689 = vadd.f32 0.0, %v2688
    %v2690 = vpop.f32.mrb[0].mxu0
    %2691 = vmatprep.mubr.f32.mxu0 0.0
    %2692 = vmatmul.mubr.f32.gmra.mrb[0].mxu0 %v939
    %v2693 = vpop.f32.mrb[0].mxu0
    %v2694 = vadd.f32 0.0, %v2693
    %v2695 = vpop.f32.mrb[0].mxu0
    %2696 = vmatprep.mubr.f32.mxu0 0.0
    %2697 = vmatmul.mubr.f32.gmra.mrb[0].mxu0 %v941
    %v2698 = vpop.f32.mrb[0].mxu0
    %v2699 = vadd.f32 0.0, %v2698
    %v2700 = vpop.f32.mrb[0].mxu0
    %2701 = vmatprep.mubr.f32.mxu0 0.0
    %2702 = vmatmul.mubr.f32.gmra.mrb[0].mxu0 %v943
    %v2703 = vpop.f32.mrb[0].mxu0
    %v2704 = vadd.f32 0.0, %v2703
    %v2705 = vpop.f32.mrb[0].mxu0
    %2706 = vmatprep.mubr.f32.mxu0 0.0
    %2707 = vmatmul.mubr.f32.gmra.mrb[0].mxu0 %v945
    %v2708 = vpop.f32.mrb[0].mxu0
    %v2709 = vadd.f32 0.0, %v2708
    %v2710 = vpop.f32.mrb[0].mxu0
    %2711 = vmatprep.mubr.f32.mxu0 0.0
    %2712 = vmatmul.mubr.f32.gmra.mrb[0].mxu0 %v947
    %v2713 = vpop.f32.mrb[0].mxu0
    %v2714 = vadd.f32 0.0, %v2713
    %v2715 = vpop.f32.mrb[0].mxu0
    %2716 = vmatprep.mubr.f32.mxu0 0.0
    %2717 = vmatmul.mubr.f32.gmra.mrb[0].mxu0 %v949
    %v2718 = vpop.f32.mrb[0].mxu0
    %v2719 = vadd.f32 0.0, %v2718
    %v2720 = vpop.f32.mrb[0].mxu0
    %2721 = vmatprep.mubr.f32.mxu0 0.0
    %2722 = vmatmul.mubr.f32.gmra.mrb[0].mxu0 %v951
    %v2723 = vpop.f32.mrb[0].mxu0
    %v2724 = vadd.f32 0.0, %v2723
    %v2725 = vpop.f32.mrb[0].mxu0
    %2726 = vmatprep.mubr.f32.mxu0 0.0
    %2727 = vmatmul.mubr.f32.gmra.mrb[0].mxu0 %v953
    %v2728 = vpop.f32.mrb[0].mxu0
    %v2729 = vadd.f32 0.0, %v2728
    %v2730 = vpop.f32.mrb[0].mxu0
    %2731 = vmatprep.mubr.f32.mxu0 0.0
    %2732 = vmatmul.mubr.f32.gmra.mrb[0].mxu0 %v955
    %v2733 = vpop.f32.mrb[0].mxu0
    %v2734 = vadd.f32 0.0, %v2733
    %v2735 = vpop.f32.mrb[0].mxu0
    %2736 = vmatprep.mubr.f32.mxu0 0.0
    %2737 = vmatmul.mubr.f32.gmra.mrb[0].mxu0 %v957
    %v2738 = vpop.f32.mrb[0].mxu0
    %v2739 = vadd.f32 0.0, %v2738
    %v2740 = vpop.f32.mrb[0].mxu0
    %2741 = vmatprep.mubr.f32.mxu0 0.0
    %2742 = vmatmul.mubr.f32.gmra.mrb[0].mxu0 %v959
    %v2743 = vpop.f32.mrb[0].mxu0
    %v2744 = vadd.f32 0.0, %v2743
    %v2745 = vpop.f32.mrb[0].mxu0
    %2746 = vmatprep.mubr.f32.mxu0 0.0
    %2747 = vmatmul.mubr.f32.gmra.mrb[0].mxu0 %v961
    %v2748 = vpop.f32.mrb[0].mxu0
    %v2749 = vadd.f32 0.0, %v2748
    %v2750 = vpop.f32.mrb[0].mxu0
    %2751 = vmatprep.mubr.f32.mxu0 0.0
    %2752 = vmatmul.mubr.f32.gmra.mrb[0].mxu0 %v963
    %v2753 = vpop.f32.mrb[0].mxu0
    %v2754 = vadd.f32 0.0, %v2753
    %v2755 = vpop.f32.mrb[0].mxu0
    %2756 = vmatprep.mubr.f32.mxu0 0.0
    %2757 = vmatmul.mubr.f32.gmra.mrb[0].mxu0 %v965
    %v2758 = vpop.f32.mrb[0].mxu0
    %v2759 = vadd.f32 0.0, %v2758
    %v2760 = vpop.f32.mrb[0].mxu0
    %2761 = vmatprep.mubr.f32.mxu0 0.0
    %2762 = vmatmul.mubr.f32.gmra.mrb[0].mxu0 %v967
    %v2763 = vpop.f32.mrb[0].mxu0
    %v2764 = vadd.f32 0.0, %v2763
    %v2765 = vpop.f32.mrb[0].mxu0
    %2766 = vmatprep.mubr.f32.mxu0 0.0
    %2767 = vmatmul.mubr.f32.gmra.mrb[0].mxu0 %v969
    %v2768 = vpop.f32.mrb[0].mxu0
    %v2769 = vadd.f32 0.0, %v2768
    %v2770 = vpop.f32.mrb[0].mxu0
    %2771 = vmatprep.mubr.f32.mxu0 0.0
    %2772 = vmatmul.mubr.f32.gmra.mrb[0].mxu0 %v971
    %v2773 = vpop.f32.mrb[0].mxu0
    %v2774 = vadd.f32 0.0, %v2773
    %v2775 = vpop.f32.mrb[0].mxu0
    %2776 = vmatprep.mubr.f32.mxu0 0.0
    %2777 = vmatmul.mubr.f32.gmra.mrb[0].mxu0 %v973
    %v2778 = vpop.f32.mrb[0].mxu0
    %v2779 = vadd.f32 0.0, %v2778
    %v2780 = vpop.f32.mrb[0].mxu0
    %2781 = vmatprep.mubr.f32.mxu0 0.0
    %2782 = vmatmul.mubr.f32.gmra.mrb[0].mxu0 %v2400
    %v2783 = vpop.f32.mrb[0].mxu0
    %v2784 = vadd.f32 0.0, %v2783
    %v2785 = vpop.f32.mrb[0].mxu0
    %2786 = vmatprep.mubr.f32.mxu0 0.0
    %2787 = vmatmul.mubr.f32.gmra.mrb[0].mxu0 %v2402
    %v2788 = vpop.f32.mrb[0].mxu0
    %v2789 = vadd.f32 0.0, %v2788
    %v2790 = vpop.f32.mrb[0].mxu0
    %2791 = vdwg.mxu0
    %v2792 = vsel %vm94, %v803, 0
    %v2794 = vsel %vm94, %v805, 0
    %v2796 = vsel %vm94, %v808, 0
    %v2798 = vsel %vm94, %v810, 0
    %v2801 = vsel %vm975, %v89, 0
    %2803 = vmatprep.subr.mxu0 0.0
    %2804 = vmatpush1.msra.mxu0 %v2801
    %2805 = vmatprep.subr.mxu0 0.0
    %2806 = vmatpush1.msra.mxu0 0.0
    %2807 = vmatprep.subr.mxu0 0.0
    %2808 = vmatpush1.msra.mxu0 0.0
    %2809 = vmatprep.subr.mxu0 0.0
    %2810 = vmatpush1.msra.mxu0 0.0
    %2811 = vmatprep.subr.mxu0 0.0
    %2812 = vmatpush1.msra.mxu0 0.0
    %2813 = vmatprep.subr.mxu0 0.0
    %2814 = vmatpush1.msra.mxu0 0.0
    %2815 = vmatprep.subr.mxu0 0.0
    %2816 = vmatpush1.msra.mxu0 0.0
    %2817 = vmatprep.subr.mxu0 0.0
    %2818 = vmatpush1.msra.mxu0 0.0
    %2819 = vmatprep.subr.mxu0 0.0
    %2820 = vmatpush1.msra.mxu0 0.0
    %2821 = vmatprep.subr.mxu0 0.0
    %2822 = vmatpush1.msra.mxu0 0.0
    %2823 = vmatprep.subr.mxu0 0.0
    %2824 = vmatpush1.msra.mxu0 0.0
    %2825 = vmatprep.subr.mxu0 0.0
    %2826 = vmatpush1.msra.mxu0 0.0
    %2827 = vmatprep.subr.mxu0 0.0
    %2828 = vmatpush1.msra.mxu0 0.0
    %2829 = vmatprep.subr.mxu0 0.0
    %2830 = vmatpush1.msra.mxu0 0.0
    %2831 = vmatprep.subr.mxu0 0.0
    %2832 = vmatpush1.msra.mxu0 0.0
    %2833 = vmatprep.subr.mxu0 0.0
    %2834 = vmatpush1.msra.mxu0 0.0
    %2835 = vmatprep.subr.mxu0 0.0
    %2836 = vmatpush1.msra.mxu0 0.0
    %2837 = vmatprep.subr.mxu0 0.0
    %2838 = vmatpush1.msra.mxu0 0.0
    %2839 = vmatprep.subr.mxu0 0.0
    %2840 = vmatpush1.msra.mxu0 0.0
    %2841 = vmatprep.subr.mxu0 0.0
    %2842 = vmatpush1.msra.mxu0 0.0
    %2843 = vmatprep.subr.mxu0 0.0
    %2844 = vmatpush1.msra.mxu0 0.0
    %2845 = vmatprep.subr.mxu0 0.0
    %2846 = vmatpush1.msra.mxu0 0.0
    %2847 = vmatprep.subr.mxu0 0.0
    %2848 = vmatpush1.msra.mxu0 0.0
    %2849 = vmatprep.subr.mxu0 0.0
    %2850 = vmatpush1.msra.mxu0 0.0
    %2851 = vmatprep.subr.mxu0 0.0
    %2852 = vmatpush1.msra.mxu0 0.0
    %2853 = vmatprep.subr.mxu0 0.0
    %2854 = vmatpush1.msra.mxu0 0.0
    %2855 = vmatprep.subr.mxu0 0.0
    %2856 = vmatpush1.msra.mxu0 0.0
    %2857 = vmatprep.subr.mxu0 0.0
    %2858 = vmatpush1.msra.mxu0 0.0
    %2859 = vmatprep.subr.mxu0 0.0
    %2860 = vmatpush1.msra.mxu0 0.0
    %2861 = vmatprep.subr.mxu0 0.0
    %2862 = vmatpush1.msra.mxu0 0.0
    %2863 = vmatprep.subr.mxu0 0.0
    %2864 = vmatpush1.msra.mxu0 0.0
    %2865 = vmatprep.subr.mxu0 0.0
    %2866 = vmatpush1.msra.mxu0 0.0
    %2867 = vmatprep.mubr.f32.mxu0 0.0
    %2868 = vmatmul.mubr.f32.gmra.mrb[0].mxu0 %v1368
    %v2869 = vpop.f32.mrb[0].mxu0
    %v2870 = vadd.f32 0.0, %v2869
    %v2871 = vpop.f32.mrb[0].mxu0
    %2872 = vmatprep.mubr.f32.mxu0 0.0
    %2873 = vmatmul.mubr.f32.gmra.mrb[0].mxu0 %v1370
    %v2874 = vpop.f32.mrb[0].mxu0
    %v2875 = vadd.f32 0.0, %v2874
    %v2876 = vpop.f32.mrb[0].mxu0
    %2877 = vmatprep.mubr.f32.mxu0 0.0
    %2878 = vmatmul.mubr.f32.gmra.mrb[0].mxu0 %v1372
    %v2879 = vpop.f32.mrb[0].mxu0
    %v2880 = vadd.f32 0.0, %v2879
    %v2881 = vpop.f32.mrb[0].mxu0
    %2882 = vmatprep.mubr.f32.mxu0 0.0
    %2883 = vmatmul.mubr.f32.gmra.mrb[0].mxu0 %v1374
    %v2884 = vpop.f32.mrb[0].mxu0
    %v2885 = vadd.f32 0.0, %v2884
    %v2886 = vpop.f32.mrb[0].mxu0
    %2887 = vmatprep.mubr.f32.mxu0 0.0
    %2888 = vmatmul.mubr.f32.gmra.mrb[0].mxu0 %v1376
    %v2889 = vpop.f32.mrb[0].mxu0
    %v2890 = vadd.f32 0.0, %v2889
    %v2891 = vpop.f32.mrb[0].mxu0
    %2892 = vmatprep.mubr.f32.mxu0 0.0
    %2893 = vmatmul.mubr.f32.gmra.mrb[0].mxu0 %v1378
    %v2894 = vpop.f32.mrb[0].mxu0
    %v2895 = vadd.f32 0.0, %v2894
    %v2896 = vpop.f32.mrb[0].mxu0
    %2897 = vmatprep.mubr.f32.mxu0 0.0
    %2898 = vmatmul.mubr.f32.gmra.mrb[0].mxu0 %v1380
    %v2899 = vpop.f32.mrb[0].mxu0
    %v2900 = vadd.f32 0.0, %v2899
    %v2901 = vpop.f32.mrb[0].mxu0
    %2902 = vmatprep.mubr.f32.mxu0 0.0
    %2903 = vmatmul.mubr.f32.gmra.mrb[0].mxu0 %v1382
    %v2904 = vpop.f32.mrb[0].mxu0
    %v2905 = vadd.f32 0.0, %v2904
    %v2906 = vpop.f32.mrb[0].mxu0
    %2907 = vmatprep.mubr.f32.mxu0 0.0
    %2908 = vmatmul.mubr.f32.gmra.mrb[0].mxu0 %v1384
    %v2909 = vpop.f32.mrb[0].mxu0
    %v2910 = vadd.f32 0.0, %v2909
    %v2911 = vpop.f32.mrb[0].mxu0
    %2912 = vmatprep.mubr.f32.mxu0 0.0
    %2913 = vmatmul.mubr.f32.gmra.mrb[0].mxu0 %v1386
    %v2914 = vpop.f32.mrb[0].mxu0
    %v2915 = vadd.f32 0.0, %v2914
    %v2916 = vpop.f32.mrb[0].mxu0
    %2917 = vmatprep.mubr.f32.mxu0 0.0
    %2918 = vmatmul.mubr.f32.gmra.mrb[0].mxu0 %v1388
    %v2919 = vpop.f32.mrb[0].mxu0
    %v2920 = vadd.f32 0.0, %v2919
    %v2921 = vpop.f32.mrb[0].mxu0
    %2922 = vmatprep.mubr.f32.mxu0 0.0
    %2923 = vmatmul.mubr.f32.gmra.mrb[0].mxu0 %v1390
    %v2924 = vpop.f32.mrb[0].mxu0
    %v2925 = vadd.f32 0.0, %v2924
    %v2926 = vpop.f32.mrb[0].mxu0
    %2927 = vmatprep.mubr.f32.mxu0 0.0
    %2928 = vmatmul.mubr.f32.gmra.mrb[0].mxu0 %v1392
    %v2929 = vpop.f32.mrb[0].mxu0
    %v2930 = vadd.f32 0.0, %v2929
    %v2931 = vpop.f32.mrb[0].mxu0
    %2932 = vmatprep.mubr.f32.mxu0 0.0
    %2933 = vmatmul.mubr.f32.gmra.mrb[0].mxu0 %v1394
    %v2934 = vpop.f32.mrb[0].mxu0
    %v2935 = vadd.f32 0.0, %v2934
    %v2936 = vpop.f32.mrb[0].mxu0
    %2937 = vmatprep.mubr.f32.mxu0 0.0
    %2938 = vmatmul.mubr.f32.gmra.mrb[0].mxu0 %v1396
    %v2939 = vpop.f32.mrb[0].mxu0
    %v2940 = vadd.f32 0.0, %v2939
    %v2941 = vpop.f32.mrb[0].mxu0
    %2942 = vmatprep.mubr.f32.mxu0 0.0
    %2943 = vmatmul.mubr.f32.gmra.mrb[0].mxu0 %v1398
    %v2944 = vpop.f32.mrb[0].mxu0
    %v2945 = vadd.f32 0.0, %v2944
    %v2946 = vpop.f32.mrb[0].mxu0
    %2947 = vmatprep.mubr.f32.mxu0 0.0
    %2948 = vmatmul.mubr.f32.gmra.mrb[0].mxu0 %v1400
    %v2949 = vpop.f32.mrb[0].mxu0
    %v2950 = vadd.f32 0.0, %v2949
    %v2951 = vpop.f32.mrb[0].mxu0
    %2952 = vmatprep.mubr.f32.mxu0 0.0
    %2953 = vmatmul.mubr.f32.gmra.mrb[0].mxu0 %v1402
    %v2954 = vpop.f32.mrb[0].mxu0
    %v2955 = vadd.f32 0.0, %v2954
    %v2956 = vpop.f32.mrb[0].mxu0
    %2957 = vmatprep.mubr.f32.mxu0 0.0
    %2958 = vmatmul.mubr.f32.gmra.mrb[0].mxu0 %v1404
    %v2959 = vpop.f32.mrb[0].mxu0
    %v2960 = vadd.f32 0.0, %v2959
    %v2961 = vpop.f32.mrb[0].mxu0
    %2962 = vmatprep.mubr.f32.mxu0 0.0
    %2963 = vmatmul.mubr.f32.gmra.mrb[0].mxu0 %v1406
    %v2964 = vpop.f32.mrb[0].mxu0
    %v2965 = vadd.f32 0.0, %v2964
    %v2966 = vpop.f32.mrb[0].mxu0
    %2967 = vmatprep.mubr.f32.mxu0 0.0
    %2968 = vmatmul.mubr.f32.gmra.mrb[0].mxu0 %v1408
    %v2969 = vpop.f32.mrb[0].mxu0
    %v2970 = vadd.f32 0.0, %v2969
    %v2971 = vpop.f32.mrb[0].mxu0
    %2972 = vmatprep.mubr.f32.mxu0 0.0
    %2973 = vmatmul.mubr.f32.gmra.mrb[0].mxu0 %v1410
    %v2974 = vpop.f32.mrb[0].mxu0
    %v2975 = vadd.f32 0.0, %v2974
    %v2976 = vpop.f32.mrb[0].mxu0
    %2977 = vmatprep.mubr.f32.mxu0 0.0
    %2978 = vmatmul.mubr.f32.gmra.mrb[0].mxu0 %v1412
    %v2979 = vpop.f32.mrb[0].mxu0
    %v2980 = vadd.f32 0.0, %v2979
    %v2981 = vpop.f32.mrb[0].mxu0
    %2982 = vmatprep.mubr.f32.mxu0 0.0
    %2983 = vmatmul.mubr.f32.gmra.mrb[0].mxu0 %v1414
    %v2984 = vpop.f32.mrb[0].mxu0
    %v2985 = vadd.f32 0.0, %v2984
    %v2986 = vpop.f32.mrb[0].mxu0
    %2987 = vmatprep.mubr.f32.mxu0 0.0
    %2988 = vmatmul.mubr.f32.gmra.mrb[0].mxu0 %v1416
    %v2989 = vpop.f32.mrb[0].mxu0
    %v2990 = vadd.f32 0.0, %v2989
    %v2991 = vpop.f32.mrb[0].mxu0
    %2992 = vmatprep.mubr.f32.mxu0 0.0
    %2993 = vmatmul.mubr.f32.gmra.mrb[0].mxu0 %v1418
    %v2994 = vpop.f32.mrb[0].mxu0
    %v2995 = vadd.f32 0.0, %v2994
    %v2996 = vpop.f32.mrb[0].mxu0
    %2997 = vmatprep.mubr.f32.mxu0 0.0
    %2998 = vmatmul.mubr.f32.gmra.mrb[0].mxu0 %v1420
    %v2999 = vpop.f32.mrb[0].mxu0
    %v3000 = vadd.f32 0.0, %v2999
    %v3001 = vpop.f32.mrb[0].mxu0
    %3002 = vmatprep.mubr.f32.mxu0 0.0
    %3003 = vmatmul.mubr.f32.gmra.mrb[0].mxu0 %v1422
    %v3004 = vpop.f32.mrb[0].mxu0
    %v3005 = vadd.f32 0.0, %v3004
    %v3006 = vpop.f32.mrb[0].mxu0
    %3007 = vmatprep.mubr.f32.mxu0 0.0
    %3008 = vmatmul.mubr.f32.gmra.mrb[0].mxu0 %v1424
    %v3009 = vpop.f32.mrb[0].mxu0
    %v3010 = vadd.f32 0.0, %v3009
    %v3011 = vpop.f32.mrb[0].mxu0
    %3012 = vmatprep.mubr.f32.mxu0 0.0
    %3013 = vmatmul.mubr.f32.gmra.mrb[0].mxu0 %v1426
    %v3014 = vpop.f32.mrb[0].mxu0
    %v3015 = vadd.f32 0.0, %v3014
    %v3016 = vpop.f32.mrb[0].mxu0
    %3017 = vmatprep.mubr.f32.mxu0 0.0
    %3018 = vmatmul.mubr.f32.gmra.mrb[0].mxu0 %v2792
    %v3019 = vpop.f32.mrb[0].mxu0
    %v3020 = vadd.f32 0.0, %v3019
    %v3021 = vpop.f32.mrb[0].mxu0
    %3022 = vmatprep.mubr.f32.mxu0 0.0
    %3023 = vmatmul.mubr.f32.gmra.mrb[0].mxu0 %v2794
    %v3024 = vpop.f32.mrb[0].mxu0
    %v3025 = vadd.f32 0.0, %v3024
    %v3026 = vpop.f32.mrb[0].mxu0
    %3027 = vmatprep.mubr.f32.mxu0 0.0
    %3028 = vmatmul.mubr.f32.gmra.mrb[0].mxu0 %v1432
    %v3029 = vpop.f32.mrb[0].mxu0
    %v3030 = vadd.f32 0.0, %v3029
    %v3031 = vpop.f32.mrb[0].mxu0
    %3032 = vmatprep.mubr.f32.mxu0 0.0
    %3033 = vmatmul.mubr.f32.gmra.mrb[0].mxu0 %v1434
    %v3034 = vpop.f32.mrb[0].mxu0
    %v3035 = vadd.f32 0.0, %v3034
    %v3036 = vpop.f32.mrb[0].mxu0
    %3037 = vmatprep.mubr.f32.mxu0 0.0
    %3038 = vmatmul.mubr.f32.gmra.mrb[0].mxu0 %v1436
    %v3039 = vpop.f32.mrb[0].mxu0
    %v3040 = vadd.f32 0.0, %v3039
    %v3041 = vpop.f32.mrb[0].mxu0
    %3042 = vmatprep.mubr.f32.mxu0 0.0
    %3043 = vmatmul.mubr.f32.gmra.mrb[0].mxu0 %v1438
    %v3044 = vpop.f32.mrb[0].mxu0
    %v3045 = vadd.f32 0.0, %v3044
    %v3046 = vpop.f32.mrb[0].mxu0
    %3047 = vmatprep.mubr.f32.mxu0 0.0
    %3048 = vmatmul.mubr.f32.gmra.mrb[0].mxu0 %v1440
    %v3049 = vpop.f32.mrb[0].mxu0
    %v3050 = vadd.f32 0.0, %v3049
    %v3051 = vpop.f32.mrb[0].mxu0
    %3052 = vmatprep.mubr.f32.mxu0 0.0
    %3053 = vmatmul.mubr.f32.gmra.mrb[0].mxu0 %v1442
    %v3054 = vpop.f32.mrb[0].mxu0
    %v3055 = vadd.f32 0.0, %v3054
    %v3056 = vpop.f32.mrb[0].mxu0
    %3057 = vmatprep.mubr.f32.mxu0 0.0
    %3058 = vmatmul.mubr.f32.gmra.mrb[0].mxu0 %v1444
    %v3059 = vpop.f32.mrb[0].mxu0
    %v3060 = vadd.f32 0.0, %v3059
    %v3061 = vpop.f32.mrb[0].mxu0
    %3062 = vmatprep.mubr.f32.mxu0 0.0
    %3063 = vmatmul.mubr.f32.gmra.mrb[0].mxu0 %v1446
    %v3064 = vpop.f32.mrb[0].mxu0
    %v3065 = vadd.f32 0.0, %v3064
    %v3066 = vpop.f32.mrb[0].mxu0
    %3067 = vmatprep.mubr.f32.mxu0 0.0
    %3068 = vmatmul.mubr.f32.gmra.mrb[0].mxu0 %v1448
    %v3069 = vpop.f32.mrb[0].mxu0
    %v3070 = vadd.f32 0.0, %v3069
    %v3071 = vpop.f32.mrb[0].mxu0
    %3072 = vmatprep.mubr.f32.mxu0 0.0
    %3073 = vmatmul.mubr.f32.gmra.mrb[0].mxu0 %v1450
    %v3074 = vpop.f32.mrb[0].mxu0
    %v3075 = vadd.f32 0.0, %v3074
    %v3076 = vpop.f32.mrb[0].mxu0
    %3077 = vmatprep.mubr.f32.mxu0 0.0
    %3078 = vmatmul.mubr.f32.gmra.mrb[0].mxu0 %v1452
    %v3079 = vpop.f32.mrb[0].mxu0
    %v3080 = vadd.f32 0.0, %v3079
    %v3081 = vpop.f32.mrb[0].mxu0
    %3082 = vmatprep.mubr.f32.mxu0 0.0
    %3083 = vmatmul.mubr.f32.gmra.mrb[0].mxu0 %v1454
    %v3084 = vpop.f32.mrb[0].mxu0
    %v3085 = vadd.f32 0.0, %v3084
    %v3086 = vpop.f32.mrb[0].mxu0
    %3087 = vmatprep.mubr.f32.mxu0 0.0
    %3088 = vmatmul.mubr.f32.gmra.mrb[0].mxu0 %v1456
    %v3089 = vpop.f32.mrb[0].mxu0
    %v3090 = vadd.f32 0.0, %v3089
    %v3091 = vpop.f32.mrb[0].mxu0
    %3092 = vmatprep.mubr.f32.mxu0 0.0
    %3093 = vmatmul.mubr.f32.gmra.mrb[0].mxu0 %v1458
    %v3094 = vpop.f32.mrb[0].mxu0
    %v3095 = vadd.f32 0.0, %v3094
    %v3096 = vpop.f32.mrb[0].mxu0
    %3097 = vmatprep.mubr.f32.mxu0 0.0
    %3098 = vmatmul.mubr.f32.gmra.mrb[0].mxu0 %v1460
    %v3099 = vpop.f32.mrb[0].mxu0
    %v3100 = vadd.f32 0.0, %v3099
    %v3101 = vpop.f32.mrb[0].mxu0
    %3102 = vmatprep.mubr.f32.mxu0 0.0
    %3103 = vmatmul.mubr.f32.gmra.mrb[0].mxu0 %v1462
    %v3104 = vpop.f32.mrb[0].mxu0
    %v3105 = vadd.f32 0.0, %v3104
    %v3106 = vpop.f32.mrb[0].mxu0
    %3107 = vmatprep.mubr.f32.mxu0 0.0
    %3108 = vmatmul.mubr.f32.gmra.mrb[0].mxu0 %v1464
    %v3109 = vpop.f32.mrb[0].mxu0
    %v3110 = vadd.f32 0.0, %v3109
    %v3111 = vpop.f32.mrb[0].mxu0
    %3112 = vmatprep.mubr.f32.mxu0 0.0
    %3113 = vmatmul.mubr.f32.gmra.mrb[0].mxu0 %v1466
    %v3114 = vpop.f32.mrb[0].mxu0
    %v3115 = vadd.f32 0.0, %v3114
    %v3116 = vpop.f32.mrb[0].mxu0
    %3117 = vmatprep.mubr.f32.mxu0 0.0
    %3118 = vmatmul.mubr.f32.gmra.mrb[0].mxu0 %v1468
    %v3119 = vpop.f32.mrb[0].mxu0
    %v3120 = vadd.f32 0.0, %v3119
    %v3121 = vpop.f32.mrb[0].mxu0
    %3122 = vmatprep.mubr.f32.mxu0 0.0
    %3123 = vmatmul.mubr.f32.gmra.mrb[0].mxu0 %v1470
    %v3124 = vpop.f32.mrb[0].mxu0
    %v3125 = vadd.f32 0.0, %v3124
    %v3126 = vpop.f32.mrb[0].mxu0
    %3127 = vmatprep.mubr.f32.mxu0 0.0
    %3128 = vmatmul.mubr.f32.gmra.mrb[0].mxu0 %v1472
    %v3129 = vpop.f32.mrb[0].mxu0
    %v3130 = vadd.f32 0.0, %v3129
    %v3131 = vpop.f32.mrb[0].mxu0
    %3132 = vmatprep.mubr.f32.mxu0 0.0
    %3133 = vmatmul.mubr.f32.gmra.mrb[0].mxu0 %v1474
    %v3134 = vpop.f32.mrb[0].mxu0
    %v3135 = vadd.f32 0.0, %v3134
    %v3136 = vpop.f32.mrb[0].mxu0
    %3137 = vmatprep.mubr.f32.mxu0 0.0
    %3138 = vmatmul.mubr.f32.gmra.mrb[0].mxu0 %v1476
    %v3139 = vpop.f32.mrb[0].mxu0
    %v3140 = vadd.f32 0.0, %v3139
    %v3141 = vpop.f32.mrb[0].mxu0
    %3142 = vmatprep.mubr.f32.mxu0 0.0
    %3143 = vmatmul.mubr.f32.gmra.mrb[0].mxu0 %v1478
    %v3144 = vpop.f32.mrb[0].mxu0
    %v3145 = vadd.f32 0.0, %v3144
    %v3146 = vpop.f32.mrb[0].mxu0
    %3147 = vmatprep.mubr.f32.mxu0 0.0
    %3148 = vmatmul.mubr.f32.gmra.mrb[0].mxu0 %v1480
    %v3149 = vpop.f32.mrb[0].mxu0
    %v3150 = vadd.f32 0.0, %v3149
    %v3151 = vpop.f32.mrb[0].mxu0
    %3152 = vmatprep.mubr.f32.mxu0 0.0
    %3153 = vmatmul.mubr.f32.gmra.mrb[0].mxu0 %v1482
    %v3154 = vpop.f32.mrb[0].mxu0
    %v3155 = vadd.f32 0.0, %v3154
    %v3156 = vpop.f32.mrb[0].mxu0
    %3157 = vmatprep.mubr.f32.mxu0 0.0
    %3158 = vmatmul.mubr.f32.gmra.mrb[0].mxu0 %v1484
    %v3159 = vpop.f32.mrb[0].mxu0
    %v3160 = vadd.f32 0.0, %v3159
    %v3161 = vpop.f32.mrb[0].mxu0
    %3162 = vmatprep.mubr.f32.mxu0 0.0
    %3163 = vmatmul.mubr.f32.gmra.mrb[0].mxu0 %v1486
    %v3164 = vpop.f32.mrb[0].mxu0
    %v3165 = vadd.f32 0.0, %v3164
    %v3166 = vpop.f32.mrb[0].mxu0
    %3167 = vmatprep.mubr.f32.mxu0 0.0
    %3168 = vmatmul.mubr.f32.gmra.mrb[0].mxu0 %v1488
    %v3169 = vpop.f32.mrb[0].mxu0
    %v3170 = vadd.f32 0.0, %v3169
    %v3171 = vpop.f32.mrb[0].mxu0
    %3172 = vmatprep.mubr.f32.mxu0 0.0
    %3173 = vmatmul.mubr.f32.gmra.mrb[0].mxu0 %v1490
    %v3174 = vpop.f32.mrb[0].mxu0
    %v3175 = vadd.f32 0.0, %v3174
    %v3176 = vpop.f32.mrb[0].mxu0
    %3177 = vmatprep.mubr.f32.mxu0 0.0
    %3178 = vmatmul.mubr.f32.gmra.mrb[0].mxu0 %v2796
    %v3179 = vpop.f32.mrb[0].mxu0
    %v3180 = vadd.f32 0.0, %v3179
    %v3181 = vpop.f32.mrb[0].mxu0
    %3182 = vmatprep.mubr.f32.mxu0 0.0
    %3183 = vmatmul.mubr.f32.gmra.mrb[0].mxu0 %v2798
    %v3184 = vpop.f32.mrb[0].mxu0
    %v3185 = vadd.f32 0.0, %v3184
    %v3186 = vpop.f32.mrb[0].mxu0
    %3187 = vdwg.mxu0
    %v3188 = vsel %vm94, %v813, 0
    %v3190 = vsel %vm94, %v815, 0
    %v3192 = vsel %vm94, %v818, 0
    %v3194 = vsel %vm94, %v820, 0
    %v3197 = vsel %vm975, %v90, 0
    %3199 = vmatprep.subr.mxu0 0.0
    %3200 = vmatpush1.msra.mxu0 %v3197
    %3201 = vmatprep.subr.mxu0 0.0
    %3202 = vmatpush1.msra.mxu0 0.0
    %3203 = vmatprep.subr.mxu0 0.0
    %3204 = vmatpush1.msra.mxu0 0.0
    %3205 = vmatprep.subr.mxu0 0.0
    %3206 = vmatpush1.msra.mxu0 0.0
    %3207 = vmatprep.subr.mxu0 0.0
    %3208 = vmatpush1.msra.mxu0 0.0
    %3209 = vmatprep.subr.mxu0 0.0
    %3210 = vmatpush1.msra.mxu0 0.0
    %3211 = vmatprep.subr.mxu0 0.0
    %3212 = vmatpush1.msra.mxu0 0.0
    %3213 = vmatprep.subr.mxu0 0.0
    %3214 = vmatpush1.msra.mxu0 0.0
    %3215 = vmatprep.subr.mxu0 0.0
    %3216 = vmatpush1.msra.mxu0 0.0
    %3217 = vmatprep.subr.mxu0 0.0
    %3218 = vmatpush1.msra.mxu0 0.0
    %3219 = vmatprep.subr.mxu0 0.0
    %3220 = vmatpush1.msra.mxu0 0.0
    %3221 = vmatprep.subr.mxu0 0.0
    %3222 = vmatpush1.msra.mxu0 0.0
    %3223 = vmatprep.subr.mxu0 0.0
    %3224 = vmatpush1.msra.mxu0 0.0
    %3225 = vmatprep.subr.mxu0 0.0
    %3226 = vmatpush1.msra.mxu0 0.0
    %3227 = vmatprep.subr.mxu0 0.0
    %3228 = vmatpush1.msra.mxu0 0.0
    %3229 = vmatprep.subr.mxu0 0.0
    %3230 = vmatpush1.msra.mxu0 0.0
    %3231 = vmatprep.subr.mxu0 0.0
    %3232 = vmatpush1.msra.mxu0 0.0
    %3233 = vmatprep.subr.mxu0 0.0
    %3234 = vmatpush1.msra.mxu0 0.0
    %3235 = vmatprep.subr.mxu0 0.0
    %3236 = vmatpush1.msra.mxu0 0.0
    %3237 = vmatprep.subr.mxu0 0.0
    %3238 = vmatpush1.msra.mxu0 0.0
    %3239 = vmatprep.subr.mxu0 0.0
    %3240 = vmatpush1.msra.mxu0 0.0
    %3241 = vmatprep.subr.mxu0 0.0
    %3242 = vmatpush1.msra.mxu0 0.0
    %3243 = vmatprep.subr.mxu0 0.0
    %3244 = vmatpush1.msra.mxu0 0.0
    %3245 = vmatprep.subr.mxu0 0.0
    %3246 = vmatpush1.msra.mxu0 0.0
    %3247 = vmatprep.subr.mxu0 0.0
    %3248 = vmatpush1.msra.mxu0 0.0
    %3249 = vmatprep.subr.mxu0 0.0
    %3250 = vmatpush1.msra.mxu0 0.0
    %3251 = vmatprep.subr.mxu0 0.0
    %3252 = vmatpush1.msra.mxu0 0.0
    %3253 = vmatprep.subr.mxu0 0.0
    %3254 = vmatpush1.msra.mxu0 0.0
    %3255 = vmatprep.subr.mxu0 0.0
    %3256 = vmatpush1.msra.mxu0 0.0
    %3257 = vmatprep.subr.mxu0 0.0
    %3258 = vmatpush1.msra.mxu0 0.0
    %3259 = vmatprep.subr.mxu0 0.0
    %3260 = vmatpush1.msra.mxu0 0.0
    %3261 = vmatprep.subr.mxu0 0.0
    %3262 = vmatpush1.msra.mxu0 0.0
    %3263 = vmatprep.mubr.f32.mxu0 0.0
    %3264 = vmatmul.mubr.f32.gmra.mrb[0].mxu0 %v1884
    %v3265 = vpop.f32.mrb[0].mxu0
    %v3266 = vadd.f32 0.0, %v3265
    %v3267 = vpop.f32.mrb[0].mxu0
    %3268 = vmatprep.mubr.f32.mxu0 0.0
    %3269 = vmatmul.mubr.f32.gmra.mrb[0].mxu0 %v1886
    %v3270 = vpop.f32.mrb[0].mxu0
    %v3271 = vadd.f32 0.0, %v3270
    %v3272 = vpop.f32.mrb[0].mxu0
    %3273 = vmatprep.mubr.f32.mxu0 0.0
    %3274 = vmatmul.mubr.f32.gmra.mrb[0].mxu0 %v1888
    %v3275 = vpop.f32.mrb[0].mxu0
    %v3276 = vadd.f32 0.0, %v3275
    %v3277 = vpop.f32.mrb[0].mxu0
    %3278 = vmatprep.mubr.f32.mxu0 0.0
    %3279 = vmatmul.mubr.f32.gmra.mrb[0].mxu0 %v1890
    %v3280 = vpop.f32.mrb[0].mxu0
    %v3281 = vadd.f32 0.0, %v3280
    %v3282 = vpop.f32.mrb[0].mxu0
    %3283 = vmatprep.mubr.f32.mxu0 0.0
    %3284 = vmatmul.mubr.f32.gmra.mrb[0].mxu0 %v1892
    %v3285 = vpop.f32.mrb[0].mxu0
    %v3286 = vadd.f32 0.0, %v3285
    %v3287 = vpop.f32.mrb[0].mxu0
    %3288 = vmatprep.mubr.f32.mxu0 0.0
    %3289 = vmatmul.mubr.f32.gmra.mrb[0].mxu0 %v1894
    %v3290 = vpop.f32.mrb[0].mxu0
    %v3291 = vadd.f32 0.0, %v3290
    %v3292 = vpop.f32.mrb[0].mxu0
    %3293 = vmatprep.mubr.f32.mxu0 0.0
    %3294 = vmatmul.mubr.f32.gmra.mrb[0].mxu0 %v1896
    %v3295 = vpop.f32.mrb[0].mxu0
    %v3296 = vadd.f32 0.0, %v3295
    %v3297 = vpop.f32.mrb[0].mxu0
    %3298 = vmatprep.mubr.f32.mxu0 0.0
    %3299 = vmatmul.mubr.f32.gmra.mrb[0].mxu0 %v1898
    %v3300 = vpop.f32.mrb[0].mxu0
    %v3301 = vadd.f32 0.0, %v3300
    %v3302 = vpop.f32.mrb[0].mxu0
    %3303 = vmatprep.mubr.f32.mxu0 0.0
    %3304 = vmatmul.mubr.f32.gmra.mrb[0].mxu0 %v1900
    %v3305 = vpop.f32.mrb[0].mxu0
    %v3306 = vadd.f32 0.0, %v3305
    %v3307 = vpop.f32.mrb[0].mxu0
    %3308 = vmatprep.mubr.f32.mxu0 0.0
    %3309 = vmatmul.mubr.f32.gmra.mrb[0].mxu0 %v1902
    %v3310 = vpop.f32.mrb[0].mxu0
    %v3311 = vadd.f32 0.0, %v3310
    %v3312 = vpop.f32.mrb[0].mxu0
    %3313 = vmatprep.mubr.f32.mxu0 0.0
    %3314 = vmatmul.mubr.f32.gmra.mrb[0].mxu0 %v1904
    %v3315 = vpop.f32.mrb[0].mxu0
    %v3316 = vadd.f32 0.0, %v3315
    %v3317 = vpop.f32.mrb[0].mxu0
    %3318 = vmatprep.mubr.f32.mxu0 0.0
    %3319 = vmatmul.mubr.f32.gmra.mrb[0].mxu0 %v1906
    %v3320 = vpop.f32.mrb[0].mxu0
    %v3321 = vadd.f32 0.0, %v3320
    %v3322 = vpop.f32.mrb[0].mxu0
    %3323 = vmatprep.mubr.f32.mxu0 0.0
    %3324 = vmatmul.mubr.f32.gmra.mrb[0].mxu0 %v1908
    %v3325 = vpop.f32.mrb[0].mxu0
    %v3326 = vadd.f32 0.0, %v3325
    %v3327 = vpop.f32.mrb[0].mxu0
    %3328 = vmatprep.mubr.f32.mxu0 0.0
    %3329 = vmatmul.mubr.f32.gmra.mrb[0].mxu0 %v1910
    %v3330 = vpop.f32.mrb[0].mxu0
    %v3331 = vadd.f32 0.0, %v3330
    %v3332 = vpop.f32.mrb[0].mxu0
    %3333 = vmatprep.mubr.f32.mxu0 0.0
    %3334 = vmatmul.mubr.f32.gmra.mrb[0].mxu0 %v1912
    %v3335 = vpop.f32.mrb[0].mxu0
    %v3336 = vadd.f32 0.0, %v3335
    %v3337 = vpop.f32.mrb[0].mxu0
    %3338 = vmatprep.mubr.f32.mxu0 0.0
    %3339 = vmatmul.mubr.f32.gmra.mrb[0].mxu0 %v1914
    %v3340 = vpop.f32.mrb[0].mxu0
    %v3341 = vadd.f32 0.0, %v3340
    %v3342 = vpop.f32.mrb[0].mxu0
    %3343 = vmatprep.mubr.f32.mxu0 0.0
    %3344 = vmatmul.mubr.f32.gmra.mrb[0].mxu0 %v1916
    %v3345 = vpop.f32.mrb[0].mxu0
    %v3346 = vadd.f32 0.0, %v3345
    %v3347 = vpop.f32.mrb[0].mxu0
    %3348 = vmatprep.mubr.f32.mxu0 0.0
    %3349 = vmatmul.mubr.f32.gmra.mrb[0].mxu0 %v1918
    %v3350 = vpop.f32.mrb[0].mxu0
    %v3351 = vadd.f32 0.0, %v3350
    %v3352 = vpop.f32.mrb[0].mxu0
    %3353 = vmatprep.mubr.f32.mxu0 0.0
    %3354 = vmatmul.mubr.f32.gmra.mrb[0].mxu0 %v1920
    %v3355 = vpop.f32.mrb[0].mxu0
    %v3356 = vadd.f32 0.0, %v3355
    %v3357 = vpop.f32.mrb[0].mxu0
    %3358 = vmatprep.mubr.f32.mxu0 0.0
    %3359 = vmatmul.mubr.f32.gmra.mrb[0].mxu0 %v1922
    %v3360 = vpop.f32.mrb[0].mxu0
    %v3361 = vadd.f32 0.0, %v3360
    %v3362 = vpop.f32.mrb[0].mxu0
    %3363 = vmatprep.mubr.f32.mxu0 0.0
    %3364 = vmatmul.mubr.f32.gmra.mrb[0].mxu0 %v1924
    %v3365 = vpop.f32.mrb[0].mxu0
    %v3366 = vadd.f32 0.0, %v3365
    %v3367 = vpop.f32.mrb[0].mxu0
    %3368 = vmatprep.mubr.f32.mxu0 0.0
    %3369 = vmatmul.mubr.f32.gmra.mrb[0].mxu0 %v1926
    %v3370 = vpop.f32.mrb[0].mxu0
    %v3371 = vadd.f32 0.0, %v3370
    %v3372 = vpop.f32.mrb[0].mxu0
    %3373 = vmatprep.mubr.f32.mxu0 0.0
    %3374 = vmatmul.mubr.f32.gmra.mrb[0].mxu0 %v1928
    %v3375 = vpop.f32.mrb[0].mxu0
    %v3376 = vadd.f32 0.0, %v3375
    %v3377 = vpop.f32.mrb[0].mxu0
    %3378 = vmatprep.mubr.f32.mxu0 0.0
    %3379 = vmatmul.mubr.f32.gmra.mrb[0].mxu0 %v1930
    %v3380 = vpop.f32.mrb[0].mxu0
    %v3381 = vadd.f32 0.0, %v3380
    %v3382 = vpop.f32.mrb[0].mxu0
    %3383 = vmatprep.mubr.f32.mxu0 0.0
    %3384 = vmatmul.mubr.f32.gmra.mrb[0].mxu0 %v1932
    %v3385 = vpop.f32.mrb[0].mxu0
    %v3386 = vadd.f32 0.0, %v3385
    %v3387 = vpop.f32.mrb[0].mxu0
    %3388 = vmatprep.mubr.f32.mxu0 0.0
    %3389 = vmatmul.mubr.f32.gmra.mrb[0].mxu0 %v1934
    %v3390 = vpop.f32.mrb[0].mxu0
    %v3391 = vadd.f32 0.0, %v3390
    %v3392 = vpop.f32.mrb[0].mxu0
    %3393 = vmatprep.mubr.f32.mxu0 0.0
    %3394 = vmatmul.mubr.f32.gmra.mrb[0].mxu0 %v1936
    %v3395 = vpop.f32.mrb[0].mxu0
    %v3396 = vadd.f32 0.0, %v3395
    %v3397 = vpop.f32.mrb[0].mxu0
    %3398 = vmatprep.mubr.f32.mxu0 0.0
    %3399 = vmatmul.mubr.f32.gmra.mrb[0].mxu0 %v1938
    %v3400 = vpop.f32.mrb[0].mxu0
    %v3401 = vadd.f32 0.0, %v3400
    %v3402 = vpop.f32.mrb[0].mxu0
    %3403 = vmatprep.mubr.f32.mxu0 0.0
    %3404 = vmatmul.mubr.f32.gmra.mrb[0].mxu0 %v1940
    %v3405 = vpop.f32.mrb[0].mxu0
    %v3406 = vadd.f32 0.0, %v3405
    %v3407 = vpop.f32.mrb[0].mxu0
    %3408 = vmatprep.mubr.f32.mxu0 0.0
    %3409 = vmatmul.mubr.f32.gmra.mrb[0].mxu0 %v1942
    %v3410 = vpop.f32.mrb[0].mxu0
    %v3411 = vadd.f32 0.0, %v3410
    %v3412 = vpop.f32.mrb[0].mxu0
    %3413 = vmatprep.mubr.f32.mxu0 0.0
    %3414 = vmatmul.mubr.f32.gmra.mrb[0].mxu0 %v3188
    %v3415 = vpop.f32.mrb[0].mxu0
    %v3416 = vadd.f32 0.0, %v3415
    %v3417 = vpop.f32.mrb[0].mxu0
    %3418 = vmatprep.mubr.f32.mxu0 0.0
    %3419 = vmatmul.mubr.f32.gmra.mrb[0].mxu0 %v3190
    %v3420 = vpop.f32.mrb[0].mxu0
    %v3421 = vadd.f32 0.0, %v3420
    %v3422 = vpop.f32.mrb[0].mxu0
    %3423 = vmatprep.mubr.f32.mxu0 0.0
    %3424 = vmatmul.mubr.f32.gmra.mrb[0].mxu0 %v1948
    %v3425 = vpop.f32.mrb[0].mxu0
    %v3426 = vadd.f32 0.0, %v3425
    %v3427 = vpop.f32.mrb[0].mxu0
    %3428 = vmatprep.mubr.f32.mxu0 0.0
    %3429 = vmatmul.mubr.f32.gmra.mrb[0].mxu0 %v1950
    %v3430 = vpop.f32.mrb[0].mxu0
    %v3431 = vadd.f32 0.0, %v3430
    %v3432 = vpop.f32.mrb[0].mxu0
    %3433 = vmatprep.mubr.f32.mxu0 0.0
    %3434 = vmatmul.mubr.f32.gmra.mrb[0].mxu0 %v1952
    %v3435 = vpop.f32.mrb[0].mxu0
    %v3436 = vadd.f32 0.0, %v3435
    %v3437 = vpop.f32.mrb[0].mxu0
    %3438 = vmatprep.mubr.f32.mxu0 0.0
    %3439 = vmatmul.mubr.f32.gmra.mrb[0].mxu0 %v1954
    %v3440 = vpop.f32.mrb[0].mxu0
    %v3441 = vadd.f32 0.0, %v3440
    %v3442 = vpop.f32.mrb[0].mxu0
    %3443 = vmatprep.mubr.f32.mxu0 0.0
    %3444 = vmatmul.mubr.f32.gmra.mrb[0].mxu0 %v1956
    %v3445 = vpop.f32.mrb[0].mxu0
    %v3446 = vadd.f32 0.0, %v3445
    %v3447 = vpop.f32.mrb[0].mxu0
    %3448 = vmatprep.mubr.f32.mxu0 0.0
    %3449 = vmatmul.mubr.f32.gmra.mrb[0].mxu0 %v1958
    %v3450 = vpop.f32.mrb[0].mxu0
    %v3451 = vadd.f32 0.0, %v3450
    %v3452 = vpop.f32.mrb[0].mxu0
    %3453 = vmatprep.mubr.f32.mxu0 0.0
    %3454 = vmatmul.mubr.f32.gmra.mrb[0].mxu0 %v1960
    %v3455 = vpop.f32.mrb[0].mxu0
    %v3456 = vadd.f32 0.0, %v3455
    %v3457 = vpop.f32.mrb[0].mxu0
    %3458 = vmatprep.mubr.f32.mxu0 0.0
    %3459 = vmatmul.mubr.f32.gmra.mrb[0].mxu0 %v1962
    %v3460 = vpop.f32.mrb[0].mxu0
    %v3461 = vadd.f32 0.0, %v3460
    %v3462 = vpop.f32.mrb[0].mxu0
    %3463 = vmatprep.mubr.f32.mxu0 0.0
    %3464 = vmatmul.mubr.f32.gmra.mrb[0].mxu0 %v1964
    %v3465 = vpop.f32.mrb[0].mxu0
    %v3466 = vadd.f32 0.0, %v3465
    %v3467 = vpop.f32.mrb[0].mxu0
    %3468 = vmatprep.mubr.f32.mxu0 0.0
    %3469 = vmatmul.mubr.f32.gmra.mrb[0].mxu0 %v1966
    %v3470 = vpop.f32.mrb[0].mxu0
    %v3471 = vadd.f32 0.0, %v3470
    %v3472 = vpop.f32.mrb[0].mxu0
    %3473 = vmatprep.mubr.f32.mxu0 0.0
    %3474 = vmatmul.mubr.f32.gmra.mrb[0].mxu0 %v1968
    %v3475 = vpop.f32.mrb[0].mxu0
    %v3476 = vadd.f32 0.0, %v3475
    %v3477 = vpop.f32.mrb[0].mxu0
    %3478 = vmatprep.mubr.f32.mxu0 0.0
    %3479 = vmatmul.mubr.f32.gmra.mrb[0].mxu0 %v1970
    %v3480 = vpop.f32.mrb[0].mxu0
    %v3481 = vadd.f32 0.0, %v3480
    %v3482 = vpop.f32.mrb[0].mxu0
    %3483 = vmatprep.mubr.f32.mxu0 0.0
    %3484 = vmatmul.mubr.f32.gmra.mrb[0].mxu0 %v1972
    %v3485 = vpop.f32.mrb[0].mxu0
    %v3486 = vadd.f32 0.0, %v3485
    %v3487 = vpop.f32.mrb[0].mxu0
    %3488 = vmatprep.mubr.f32.mxu0 0.0
    %3489 = vmatmul.mubr.f32.gmra.mrb[0].mxu0 %v1974
    %v3490 = vpop.f32.mrb[0].mxu0
    %v3491 = vadd.f32 0.0, %v3490
    %v3492 = vpop.f32.mrb[0].mxu0
    %3493 = vmatprep.mubr.f32.mxu0 0.0
    %3494 = vmatmul.mubr.f32.gmra.mrb[0].mxu0 %v1976
    %v3495 = vpop.f32.mrb[0].mxu0
    %v3496 = vadd.f32 0.0, %v3495
    %v3497 = vpop.f32.mrb[0].mxu0
    %3498 = vmatprep.mubr.f32.mxu0 0.0
    %3499 = vmatmul.mubr.f32.gmra.mrb[0].mxu0 %v1978
    %v3500 = vpop.f32.mrb[0].mxu0
    %v3501 = vadd.f32 0.0, %v3500
    %v3502 = vpop.f32.mrb[0].mxu0
    %3503 = vmatprep.mubr.f32.mxu0 0.0
    %3504 = vmatmul.mubr.f32.gmra.mrb[0].mxu0 %v1980
    %v3505 = vpop.f32.mrb[0].mxu0
    %v3506 = vadd.f32 0.0, %v3505
    %v3507 = vpop.f32.mrb[0].mxu0
    %3508 = vmatprep.mubr.f32.mxu0 0.0
    %3509 = vmatmul.mubr.f32.gmra.mrb[0].mxu0 %v1982
    %v3510 = vpop.f32.mrb[0].mxu0
    %v3511 = vadd.f32 0.0, %v3510
    %v3512 = vpop.f32.mrb[0].mxu0
    %3513 = vmatprep.mubr.f32.mxu0 0.0
    %3514 = vmatmul.mubr.f32.gmra.mrb[0].mxu0 %v1984
    %v3515 = vpop.f32.mrb[0].mxu0
    %v3516 = vadd.f32 0.0, %v3515
    %v3517 = vpop.f32.mrb[0].mxu0
    %3518 = vmatprep.mubr.f32.mxu0 0.0
    %3519 = vmatmul.mubr.f32.gmra.mrb[0].mxu0 %v1986
    %v3520 = vpop.f32.mrb[0].mxu0
    %v3521 = vadd.f32 0.0, %v3520
    %v3522 = vpop.f32.mrb[0].mxu0
    %3523 = vmatprep.mubr.f32.mxu0 0.0
    %3524 = vmatmul.mubr.f32.gmra.mrb[0].mxu0 %v1988
    %v3525 = vpop.f32.mrb[0].mxu0
    %v3526 = vadd.f32 0.0, %v3525
    %v3527 = vpop.f32.mrb[0].mxu0
    %3528 = vmatprep.mubr.f32.mxu0 0.0
    %3529 = vmatmul.mubr.f32.gmra.mrb[0].mxu0 %v1990
    %v3530 = vpop.f32.mrb[0].mxu0
    %v3531 = vadd.f32 0.0, %v3530
    %v3532 = vpop.f32.mrb[0].mxu0
    %3533 = vmatprep.mubr.f32.mxu0 0.0
    %3534 = vmatmul.mubr.f32.gmra.mrb[0].mxu0 %v1992
    %v3535 = vpop.f32.mrb[0].mxu0
    %v3536 = vadd.f32 0.0, %v3535
    %v3537 = vpop.f32.mrb[0].mxu0
    %3538 = vmatprep.mubr.f32.mxu0 0.0
    %3539 = vmatmul.mubr.f32.gmra.mrb[0].mxu0 %v1994
    %v3540 = vpop.f32.mrb[0].mxu0
    %v3541 = vadd.f32 0.0, %v3540
    %v3542 = vpop.f32.mrb[0].mxu0
    %3543 = vmatprep.mubr.f32.mxu0 0.0
    %3544 = vmatmul.mubr.f32.gmra.mrb[0].mxu0 %v1996
    %v3545 = vpop.f32.mrb[0].mxu0
    %v3546 = vadd.f32 0.0, %v3545
    %v3547 = vpop.f32.mrb[0].mxu0
    %3548 = vmatprep.mubr.f32.mxu0 0.0
    %3549 = vmatmul.mubr.f32.gmra.mrb[0].mxu0 %v1998
    %v3550 = vpop.f32.mrb[0].mxu0
    %v3551 = vadd.f32 0.0, %v3550
    %v3552 = vpop.f32.mrb[0].mxu0
    %3553 = vmatprep.mubr.f32.mxu0 0.0
    %3554 = vmatmul.mubr.f32.gmra.mrb[0].mxu0 %v2000
    %v3555 = vpop.f32.mrb[0].mxu0
    %v3556 = vadd.f32 0.0, %v3555
    %v3557 = vpop.f32.mrb[0].mxu0
    %3558 = vmatprep.mubr.f32.mxu0 0.0
    %3559 = vmatmul.mubr.f32.gmra.mrb[0].mxu0 %v2002
    %v3560 = vpop.f32.mrb[0].mxu0
    %v3561 = vadd.f32 0.0, %v3560
    %v3562 = vpop.f32.mrb[0].mxu0
    %3563 = vmatprep.mubr.f32.mxu0 0.0
    %3564 = vmatmul.mubr.f32.gmra.mrb[0].mxu0 %v2004
    %v3565 = vpop.f32.mrb[0].mxu0
    %v3566 = vadd.f32 0.0, %v3565
    %v3567 = vpop.f32.mrb[0].mxu0
    %3568 = vmatprep.mubr.f32.mxu0 0.0
    %3569 = vmatmul.mubr.f32.gmra.mrb[0].mxu0 %v2006
    %v3570 = vpop.f32.mrb[0].mxu0
    %v3571 = vadd.f32 0.0, %v3570
    %v3572 = vpop.f32.mrb[0].mxu0
    %3573 = vmatprep.mubr.f32.mxu0 0.0
    %3574 = vmatmul.mubr.f32.gmra.mrb[0].mxu0 %v3192
    %v3575 = vpop.f32.mrb[0].mxu0
    %v3576 = vadd.f32 0.0, %v3575
    %v3577 = vpop.f32.mrb[0].mxu0
    %3578 = vmatprep.mubr.f32.mxu0 0.0
    %3579 = vmatmul.mubr.f32.gmra.mrb[0].mxu0 %v3194
    %v3580 = vpop.f32.mrb[0].mxu0
    %v3581 = vadd.f32 0.0, %v3580
    %v3582 = vpop.f32.mrb[0].mxu0
    %3583 = vdwg.mxu0
    %v3584 = vsel %vm94, %v320, 0
    %v3586 = vsel %vm94, %v321, 0
    %v3588 = vsel %vm94, %v374, 0
    %v3590 = vsel %vm94, %v375, 0
    %v3593 = vsel %vm975, %v91, 0
    %3595 = vmatprep.subr.mxu0 0.0
    %3596 = vmatpush1.msra.mxu0 %v3593
    %3597 = vmatprep.subr.mxu0 0.0
    %3598 = vmatpush1.msra.mxu0 0.0
    %3599 = vmatprep.subr.mxu0 0.0
    %3600 = vmatpush1.msra.mxu0 0.0
    %3601 = vmatprep.subr.mxu0 0.0
    %3602 = vmatpush1.msra.mxu0 0.0
    %3603 = vmatprep.subr.mxu0 0.0
    %3604 = vmatpush1.msra.mxu0 0.0
    %3605 = vmatprep.subr.mxu0 0.0
    %3606 = vmatpush1.msra.mxu0 0.0
    %3607 = vmatprep.subr.mxu0 0.0
    %3608 = vmatpush1.msra.mxu0 0.0
    %3609 = vmatprep.subr.mxu0 0.0
    %3610 = vmatpush1.msra.mxu0 0.0
    %3611 = vmatprep.subr.mxu0 0.0
    %3612 = vmatpush1.msra.mxu0 0.0
    %3613 = vmatprep.subr.mxu0 0.0
    %3614 = vmatpush1.msra.mxu0 0.0
    %3615 = vmatprep.subr.mxu0 0.0
    %3616 = vmatpush1.msra.mxu0 0.0
    %3617 = vmatprep.subr.mxu0 0.0
    %3618 = vmatpush1.msra.mxu0 0.0
    %3619 = vmatprep.subr.mxu0 0.0
    %3620 = vmatpush1.msra.mxu0 0.0
    %3621 = vmatprep.subr.mxu0 0.0
    %3622 = vmatpush1.msra.mxu0 0.0
    %3623 = vmatprep.subr.mxu0 0.0
    %3624 = vmatpush1.msra.mxu0 0.0
    %3625 = vmatprep.subr.mxu0 0.0
    %3626 = vmatpush1.msra.mxu0 0.0
    %3627 = vmatprep.subr.mxu0 0.0
    %3628 = vmatpush1.msra.mxu0 0.0
    %3629 = vmatprep.subr.mxu0 0.0
    %3630 = vmatpush1.msra.mxu0 0.0
    %3631 = vmatprep.subr.mxu0 0.0
    %3632 = vmatpush1.msra.mxu0 0.0
    %3633 = vmatprep.subr.mxu0 0.0
    %3634 = vmatpush1.msra.mxu0 0.0
    %3635 = vmatprep.subr.mxu0 0.0
    %3636 = vmatpush1.msra.mxu0 0.0
    %3637 = vmatprep.subr.mxu0 0.0
    %3638 = vmatpush1.msra.mxu0 0.0
    %3639 = vmatprep.subr.mxu0 0.0
    %3640 = vmatpush1.msra.mxu0 0.0
    %3641 = vmatprep.subr.mxu0 0.0
    %3642 = vmatpush1.msra.mxu0 0.0
    %3643 = vmatprep.subr.mxu0 0.0
    %3644 = vmatpush1.msra.mxu0 0.0
    %3645 = vmatprep.subr.mxu0 0.0
    %3646 = vmatpush1.msra.mxu0 0.0
    %3647 = vmatprep.subr.mxu0 0.0
    %3648 = vmatpush1.msra.mxu0 0.0
    %3649 = vmatprep.subr.mxu0 0.0
    %3650 = vmatpush1.msra.mxu0 0.0
    %3651 = vmatprep.subr.mxu0 0.0
    %3652 = vmatpush1.msra.mxu0 0.0
    %3653 = vmatprep.subr.mxu0 0.0
    %3654 = vmatpush1.msra.mxu0 0.0
    %3655 = vmatprep.subr.mxu0 0.0
    %3656 = vmatpush1.msra.mxu0 0.0
    %3657 = vmatprep.subr.mxu0 0.0
    %3658 = vmatpush1.msra.mxu0 0.0
    %3659 = vmatprep.mubr.f32.mxu0 0.0
    %3660 = vmatmul.mubr.f32.gmra.mrb[0].mxu0 %v855
    %v3661 = vpop.f32.mrb[0].mxu0
    %v3662 = vadd.f32 0.0, %v3661
    %v3663 = vpop.f32.mrb[0].mxu0
    %3664 = vmatprep.mubr.f32.mxu0 0.0
    %3665 = vmatmul.mubr.f32.gmra.mrb[0].mxu0 %v857
    %v3666 = vpop.f32.mrb[0].mxu0
    %v3667 = vadd.f32 0.0, %v3666
    %v3668 = vpop.f32.mrb[0].mxu0
    %3669 = vmatprep.mubr.f32.mxu0 0.0
    %3670 = vmatmul.mubr.f32.gmra.mrb[0].mxu0 %v859
    %v3671 = vpop.f32.mrb[0].mxu0
    %v3672 = vadd.f32 0.0, %v3671
    %v3673 = vpop.f32.mrb[0].mxu0
    %3674 = vmatprep.mubr.f32.mxu0 0.0
    %3675 = vmatmul.mubr.f32.gmra.mrb[0].mxu0 %v861
    %v3676 = vpop.f32.mrb[0].mxu0
    %v3677 = vadd.f32 0.0, %v3676
    %v3678 = vpop.f32.mrb[0].mxu0
    %3679 = vmatprep.mubr.f32.mxu0 0.0
    %3680 = vmatmul.mubr.f32.gmra.mrb[0].mxu0 %v863
    %v3681 = vpop.f32.mrb[0].mxu0
    %v3682 = vadd.f32 0.0, %v3681
    %v3683 = vpop.f32.mrb[0].mxu0
    %3684 = vmatprep.mubr.f32.mxu0 0.0
    %3685 = vmatmul.mubr.f32.gmra.mrb[0].mxu0 %v865
    %v3686 = vpop.f32.mrb[0].mxu0
    %v3687 = vadd.f32 0.0, %v3686
    %v3688 = vpop.f32.mrb[0].mxu0
    %3689 = vmatprep.mubr.f32.mxu0 0.0
    %3690 = vmatmul.mubr.f32.gmra.mrb[0].mxu0 %v867
    %v3691 = vpop.f32.mrb[0].mxu0
    %v3692 = vadd.f32 0.0, %v3691
    %v3693 = vpop.f32.mrb[0].mxu0
    %3694 = vmatprep.mubr.f32.mxu0 0.0
    %3695 = vmatmul.mubr.f32.gmra.mrb[0].mxu0 %v869
    %v3696 = vpop.f32.mrb[0].mxu0
    %v3697 = vadd.f32 0.0, %v3696
    %v3698 = vpop.f32.mrb[0].mxu0
    %3699 = vmatprep.mubr.f32.mxu0 0.0
    %3700 = vmatmul.mubr.f32.gmra.mrb[0].mxu0 %v871
    %v3701 = vpop.f32.mrb[0].mxu0
    %v3702 = vadd.f32 0.0, %v3701
    %v3703 = vpop.f32.mrb[0].mxu0
    %3704 = vmatprep.mubr.f32.mxu0 0.0
    %3705 = vmatmul.mubr.f32.gmra.mrb[0].mxu0 %v873
    %v3706 = vpop.f32.mrb[0].mxu0
    %v3707 = vadd.f32 0.0, %v3706
    %v3708 = vpop.f32.mrb[0].mxu0
    %3709 = vmatprep.mubr.f32.mxu0 0.0
    %3710 = vmatmul.mubr.f32.gmra.mrb[0].mxu0 %v875
    %v3711 = vpop.f32.mrb[0].mxu0
    %v3712 = vadd.f32 0.0, %v3711
    %v3713 = vpop.f32.mrb[0].mxu0
    %3714 = vmatprep.mubr.f32.mxu0 0.0
    %3715 = vmatmul.mubr.f32.gmra.mrb[0].mxu0 %v877
    %v3716 = vpop.f32.mrb[0].mxu0
    %v3717 = vadd.f32 0.0, %v3716
    %v3718 = vpop.f32.mrb[0].mxu0
    %3719 = vmatprep.mubr.f32.mxu0 0.0
    %3720 = vmatmul.mubr.f32.gmra.mrb[0].mxu0 %v879
    %v3721 = vpop.f32.mrb[0].mxu0
    %v3722 = vadd.f32 0.0, %v3721
    %v3723 = vpop.f32.mrb[0].mxu0
    %3724 = vmatprep.mubr.f32.mxu0 0.0
    %3725 = vmatmul.mubr.f32.gmra.mrb[0].mxu0 %v881
    %v3726 = vpop.f32.mrb[0].mxu0
    %v3727 = vadd.f32 0.0, %v3726
    %v3728 = vpop.f32.mrb[0].mxu0
    %3729 = vmatprep.mubr.f32.mxu0 0.0
    %3730 = vmatmul.mubr.f32.gmra.mrb[0].mxu0 %v883
    %v3731 = vpop.f32.mrb[0].mxu0
    %v3732 = vadd.f32 0.0, %v3731
    %v3733 = vpop.f32.mrb[0].mxu0
    %3734 = vmatprep.mubr.f32.mxu0 0.0
    %3735 = vmatmul.mubr.f32.gmra.mrb[0].mxu0 %v885
    %v3736 = vpop.f32.mrb[0].mxu0
    %v3737 = vadd.f32 0.0, %v3736
    %v3738 = vpop.f32.mrb[0].mxu0
    %3739 = vmatprep.mubr.f32.mxu0 0.0
    %3740 = vmatmul.mubr.f32.gmra.mrb[0].mxu0 %v887
    %v3741 = vpop.f32.mrb[0].mxu0
    %v3742 = vadd.f32 0.0, %v3741
    %v3743 = vpop.f32.mrb[0].mxu0
    %3744 = vmatprep.mubr.f32.mxu0 0.0
    %3745 = vmatmul.mubr.f32.gmra.mrb[0].mxu0 %v889
    %v3746 = vpop.f32.mrb[0].mxu0
    %v3747 = vadd.f32 0.0, %v3746
    %v3748 = vpop.f32.mrb[0].mxu0
    %3749 = vmatprep.mubr.f32.mxu0 0.0
    %3750 = vmatmul.mubr.f32.gmra.mrb[0].mxu0 %v891
    %v3751 = vpop.f32.mrb[0].mxu0
    %v3752 = vadd.f32 0.0, %v3751
    %v3753 = vpop.f32.mrb[0].mxu0
    %3754 = vmatprep.mubr.f32.mxu0 0.0
    %3755 = vmatmul.mubr.f32.gmra.mrb[0].mxu0 %v893
    %v3756 = vpop.f32.mrb[0].mxu0
    %v3757 = vadd.f32 0.0, %v3756
    %v3758 = vpop.f32.mrb[0].mxu0
    %3759 = vmatprep.mubr.f32.mxu0 0.0
    %3760 = vmatmul.mubr.f32.gmra.mrb[0].mxu0 %v895
    %v3761 = vpop.f32.mrb[0].mxu0
    %v3762 = vadd.f32 0.0, %v3761
    %v3763 = vpop.f32.mrb[0].mxu0
    %3764 = vmatprep.mubr.f32.mxu0 0.0
    %3765 = vmatmul.mubr.f32.gmra.mrb[0].mxu0 %v897
    %v3766 = vpop.f32.mrb[0].mxu0
    %v3767 = vadd.f32 0.0, %v3766
    %v3768 = vpop.f32.mrb[0].mxu0
    %3769 = vmatprep.mubr.f32.mxu0 0.0
    %3770 = vmatmul.mubr.f32.gmra.mrb[0].mxu0 %v899
    %v3771 = vpop.f32.mrb[0].mxu0
    %v3772 = vadd.f32 0.0, %v3771
    %v3773 = vpop.f32.mrb[0].mxu0
    %3774 = vmatprep.mubr.f32.mxu0 0.0
    %3775 = vmatmul.mubr.f32.gmra.mrb[0].mxu0 %v901
    %v3776 = vpop.f32.mrb[0].mxu0
    %v3777 = vadd.f32 0.0, %v3776
    %v3778 = vpop.f32.mrb[0].mxu0
    %3779 = vmatprep.mubr.f32.mxu0 0.0
    %3780 = vmatmul.mubr.f32.gmra.mrb[0].mxu0 %v903
    %v3781 = vpop.f32.mrb[0].mxu0
    %v3782 = vadd.f32 0.0, %v3781
    %v3783 = vpop.f32.mrb[0].mxu0
    %3784 = vmatprep.mubr.f32.mxu0 0.0
    %3785 = vmatmul.mubr.f32.gmra.mrb[0].mxu0 %v905
    %v3786 = vpop.f32.mrb[0].mxu0
    %v3787 = vadd.f32 0.0, %v3786
    %v3788 = vpop.f32.mrb[0].mxu0
    %3789 = vmatprep.mubr.f32.mxu0 0.0
    %3790 = vmatmul.mubr.f32.gmra.mrb[0].mxu0 %v907
    %v3791 = vpop.f32.mrb[0].mxu0
    %v3792 = vadd.f32 0.0, %v3791
    %v3793 = vpop.f32.mrb[0].mxu0
    %3794 = vmatprep.mubr.f32.mxu0 0.0
    %3795 = vmatmul.mubr.f32.gmra.mrb[0].mxu0 %v909
    %v3796 = vpop.f32.mrb[0].mxu0
    %v3797 = vadd.f32 0.0, %v3796
    %v3798 = vpop.f32.mrb[0].mxu0
    %3799 = vmatprep.mubr.f32.mxu0 0.0
    %3800 = vmatmul.mubr.f32.gmra.mrb[0].mxu0 %v2396
    %v3801 = vpop.f32.mrb[0].mxu0
    %v3802 = vadd.f32 0.0, %v3801
    %v3803 = vpop.f32.mrb[0].mxu0
    %3804 = vmatprep.mubr.f32.mxu0 0.0
    %3805 = vmatmul.mubr.f32.gmra.mrb[0].mxu0 %v2398
    %v3806 = vpop.f32.mrb[0].mxu0
    %v3807 = vadd.f32 0.0, %v3806
    %v3808 = vpop.f32.mrb[0].mxu0
    %3809 = vmatprep.mubr.f32.mxu0 0.0
    %3810 = vmatmul.mubr.f32.gmra.mrb[0].mxu0 %v3584
    %v3811 = vpop.f32.mrb[0].mxu0
    %v3812 = vadd.f32 0.0, %v3811
    %v3813 = vpop.f32.mrb[0].mxu0
    %3814 = vmatprep.mubr.f32.mxu0 0.0
    %3815 = vmatmul.mubr.f32.gmra.mrb[0].mxu0 %v3586
    %v3816 = vpop.f32.mrb[0].mxu0
    %v3817 = vadd.f32 0.0, %v3816
    %v3818 = vpop.f32.mrb[0].mxu0
    %3819 = vmatprep.mubr.f32.mxu0 0.0
    %3820 = vmatmul.mubr.f32.gmra.mrb[0].mxu0 %v919
    %v3821 = vpop.f32.mrb[0].mxu0
    %v3822 = vadd.f32 0.0, %v3821
    %v3823 = vpop.f32.mrb[0].mxu0
    %3824 = vmatprep.mubr.f32.mxu0 0.0
    %3825 = vmatmul.mubr.f32.gmra.mrb[0].mxu0 %v921
    %v3826 = vpop.f32.mrb[0].mxu0
    %v3827 = vadd.f32 0.0, %v3826
    %v3828 = vpop.f32.mrb[0].mxu0
    %3829 = vmatprep.mubr.f32.mxu0 0.0
    %3830 = vmatmul.mubr.f32.gmra.mrb[0].mxu0 %v923
    %v3831 = vpop.f32.mrb[0].mxu0
    %v3832 = vadd.f32 0.0, %v3831
    %v3833 = vpop.f32.mrb[0].mxu0
    %3834 = vmatprep.mubr.f32.mxu0 0.0
    %3835 = vmatmul.mubr.f32.gmra.mrb[0].mxu0 %v925
    %v3836 = vpop.f32.mrb[0].mxu0
    %v3837 = vadd.f32 0.0, %v3836
    %v3838 = vpop.f32.mrb[0].mxu0
    %3839 = vmatprep.mubr.f32.mxu0 0.0
    %3840 = vmatmul.mubr.f32.gmra.mrb[0].mxu0 %v927
    %v3841 = vpop.f32.mrb[0].mxu0
    %v3842 = vadd.f32 0.0, %v3841
    %v3843 = vpop.f32.mrb[0].mxu0
    %3844 = vmatprep.mubr.f32.mxu0 0.0
    %3845 = vmatmul.mubr.f32.gmra.mrb[0].mxu0 %v929
    %v3846 = vpop.f32.mrb[0].mxu0
    %v3847 = vadd.f32 0.0, %v3846
    %v3848 = vpop.f32.mrb[0].mxu0
    %3849 = vmatprep.mubr.f32.mxu0 0.0
    %3850 = vmatmul.mubr.f32.gmra.mrb[0].mxu0 %v931
    %v3851 = vpop.f32.mrb[0].mxu0
    %v3852 = vadd.f32 0.0, %v3851
    %v3853 = vpop.f32.mrb[0].mxu0
    %3854 = vmatprep.mubr.f32.mxu0 0.0
    %3855 = vmatmul.mubr.f32.gmra.mrb[0].mxu0 %v933
    %v3856 = vpop.f32.mrb[0].mxu0
    %v3857 = vadd.f32 0.0, %v3856
    %v3858 = vpop.f32.mrb[0].mxu0
    %3859 = vmatprep.mubr.f32.mxu0 0.0
    %3860 = vmatmul.mubr.f32.gmra.mrb[0].mxu0 %v935
    %v3861 = vpop.f32.mrb[0].mxu0
    %v3862 = vadd.f32 0.0, %v3861
    %v3863 = vpop.f32.mrb[0].mxu0
    %3864 = vmatprep.mubr.f32.mxu0 0.0
    %3865 = vmatmul.mubr.f32.gmra.mrb[0].mxu0 %v937
    %v3866 = vpop.f32.mrb[0].mxu0
    %v3867 = vadd.f32 0.0, %v3866
    %v3868 = vpop.f32.mrb[0].mxu0
    %3869 = vmatprep.mubr.f32.mxu0 0.0
    %3870 = vmatmul.mubr.f32.gmra.mrb[0].mxu0 %v939
    %v3871 = vpop.f32.mrb[0].mxu0
    %v3872 = vadd.f32 0.0, %v3871
    %v3873 = vpop.f32.mrb[0].mxu0
    %3874 = vmatprep.mubr.f32.mxu0 0.0
    %3875 = vmatmul.mubr.f32.gmra.mrb[0].mxu0 %v941
    %v3876 = vpop.f32.mrb[0].mxu0
    %v3877 = vadd.f32 0.0, %v3876
    %v3878 = vpop.f32.mrb[0].mxu0
    %3879 = vmatprep.mubr.f32.mxu0 0.0
    %3880 = vmatmul.mubr.f32.gmra.mrb[0].mxu0 %v943
    %v3881 = vpop.f32.mrb[0].mxu0
    %v3882 = vadd.f32 0.0, %v3881
    %v3883 = vpop.f32.mrb[0].mxu0
    %3884 = vmatprep.mubr.f32.mxu0 0.0
    %3885 = vmatmul.mubr.f32.gmra.mrb[0].mxu0 %v945
    %v3886 = vpop.f32.mrb[0].mxu0
    %v3887 = vadd.f32 0.0, %v3886
    %v3888 = vpop.f32.mrb[0].mxu0
    %3889 = vmatprep.mubr.f32.mxu0 0.0
    %3890 = vmatmul.mubr.f32.gmra.mrb[0].mxu0 %v947
    %v3891 = vpop.f32.mrb[0].mxu0
    %v3892 = vadd.f32 0.0, %v3891
    %v3893 = vpop.f32.mrb[0].mxu0
    %3894 = vmatprep.mubr.f32.mxu0 0.0
    %3895 = vmatmul.mubr.f32.gmra.mrb[0].mxu0 %v949
    %v3896 = vpop.f32.mrb[0].mxu0
    %v3897 = vadd.f32 0.0, %v3896
    %v3898 = vpop.f32.mrb[0].mxu0
    %3899 = vmatprep.mubr.f32.mxu0 0.0
    %3900 = vmatmul.mubr.f32.gmra.mrb[0].mxu0 %v951
    %v3901 = vpop.f32.mrb[0].mxu0
    %v3902 = vadd.f32 0.0, %v3901
    %v3903 = vpop.f32.mrb[0].mxu0
    %3904 = vmatprep.mubr.f32.mxu0 0.0
    %3905 = vmatmul.mubr.f32.gmra.mrb[0].mxu0 %v953
    %v3906 = vpop.f32.mrb[0].mxu0
    %v3907 = vadd.f32 0.0, %v3906
    %v3908 = vpop.f32.mrb[0].mxu0
    %3909 = vmatprep.mubr.f32.mxu0 0.0
    %3910 = vmatmul.mubr.f32.gmra.mrb[0].mxu0 %v955
    %v3911 = vpop.f32.mrb[0].mxu0
    %v3912 = vadd.f32 0.0, %v3911
    %v3913 = vpop.f32.mrb[0].mxu0
    %3914 = vmatprep.mubr.f32.mxu0 0.0
    %3915 = vmatmul.mubr.f32.gmra.mrb[0].mxu0 %v957
    %v3916 = vpop.f32.mrb[0].mxu0
    %v3917 = vadd.f32 0.0, %v3916
    %v3918 = vpop.f32.mrb[0].mxu0
    %3919 = vmatprep.mubr.f32.mxu0 0.0
    %3920 = vmatmul.mubr.f32.gmra.mrb[0].mxu0 %v959
    %v3921 = vpop.f32.mrb[0].mxu0
    %v3922 = vadd.f32 0.0, %v3921
    %v3923 = vpop.f32.mrb[0].mxu0
    %3924 = vmatprep.mubr.f32.mxu0 0.0
    %3925 = vmatmul.mubr.f32.gmra.mrb[0].mxu0 %v961
    %v3926 = vpop.f32.mrb[0].mxu0
    %v3927 = vadd.f32 0.0, %v3926
    %v3928 = vpop.f32.mrb[0].mxu0
    %3929 = vmatprep.mubr.f32.mxu0 0.0
    %3930 = vmatmul.mubr.f32.gmra.mrb[0].mxu0 %v963
    %v3931 = vpop.f32.mrb[0].mxu0
    %v3932 = vadd.f32 0.0, %v3931
    %v3933 = vpop.f32.mrb[0].mxu0
    %3934 = vmatprep.mubr.f32.mxu0 0.0
    %3935 = vmatmul.mubr.f32.gmra.mrb[0].mxu0 %v965
    %v3936 = vpop.f32.mrb[0].mxu0
    %v3937 = vadd.f32 0.0, %v3936
    %v3938 = vpop.f32.mrb[0].mxu0
    %3939 = vmatprep.mubr.f32.mxu0 0.0
    %3940 = vmatmul.mubr.f32.gmra.mrb[0].mxu0 %v967
    %v3941 = vpop.f32.mrb[0].mxu0
    %v3942 = vadd.f32 0.0, %v3941
    %v3943 = vpop.f32.mrb[0].mxu0
    %3944 = vmatprep.mubr.f32.mxu0 0.0
    %3945 = vmatmul.mubr.f32.gmra.mrb[0].mxu0 %v969
    %v3946 = vpop.f32.mrb[0].mxu0
    %v3947 = vadd.f32 0.0, %v3946
    %v3948 = vpop.f32.mrb[0].mxu0
    %3949 = vmatprep.mubr.f32.mxu0 0.0
    %3950 = vmatmul.mubr.f32.gmra.mrb[0].mxu0 %v971
    %v3951 = vpop.f32.mrb[0].mxu0
    %v3952 = vadd.f32 0.0, %v3951
    %v3953 = vpop.f32.mrb[0].mxu0
    %3954 = vmatprep.mubr.f32.mxu0 0.0
    %3955 = vmatmul.mubr.f32.gmra.mrb[0].mxu0 %v973
    %v3956 = vpop.f32.mrb[0].mxu0
    %v3957 = vadd.f32 0.0, %v3956
    %v3958 = vpop.f32.mrb[0].mxu0
    %3959 = vmatprep.mubr.f32.mxu0 0.0
    %3960 = vmatmul.mubr.f32.gmra.mrb[0].mxu0 %v2400
    %v3961 = vpop.f32.mrb[0].mxu0
    %v3962 = vadd.f32 0.0, %v3961
    %v3963 = vpop.f32.mrb[0].mxu0
    %3964 = vmatprep.mubr.f32.mxu0 0.0
    %3965 = vmatmul.mubr.f32.gmra.mrb[0].mxu0 %v2402
    %v3966 = vpop.f32.mrb[0].mxu0
    %v3967 = vadd.f32 0.0, %v3966
    %v3968 = vpop.f32.mrb[0].mxu0
    %3969 = vmatprep.mubr.f32.mxu0 0.0
    %3970 = vmatmul.mubr.f32.gmra.mrb[0].mxu0 %v3588
    %v3971 = vpop.f32.mrb[0].mxu0
    %v3972 = vadd.f32 0.0, %v3971
    %v3973 = vpop.f32.mrb[0].mxu0
    %3974 = vmatprep.mubr.f32.mxu0 0.0
    %3975 = vmatmul.mubr.f32.gmra.mrb[0].mxu0 %v3590
    %v3976 = vpop.f32.mrb[0].mxu0
    %v3977 = vadd.f32 0.0, %v3976
    %v3978 = vpop.f32.mrb[0].mxu0
    %3979 = vdwg.mxu0
    %v3980 = vsel %vm94, %v829, 0
    %v3982 = vsel %vm94, %v831, 0
    %v3984 = vsel %vm94, %v834, 0
    %v3986 = vsel %vm94, %v836, 0
    %v3989 = vsel %vm975, %v92, 0
    %3991 = vmatprep.subr.mxu0 0.0
    %3992 = vmatpush1.msra.mxu0 %v3989
    %3993 = vmatprep.subr.mxu0 0.0
    %3994 = vmatpush1.msra.mxu0 0.0
    %3995 = vmatprep.subr.mxu0 0.0
    %3996 = vmatpush1.msra.mxu0 0.0
    %3997 = vmatprep.subr.mxu0 0.0
    %3998 = vmatpush1.msra.mxu0 0.0
    %3999 = vmatprep.subr.mxu0 0.0
    %4000 = vmatpush1.msra.mxu0 0.0
    %4001 = vmatprep.subr.mxu0 0.0
    %4002 = vmatpush1.msra.mxu0 0.0
    %4003 = vmatprep.subr.mxu0 0.0
    %4004 = vmatpush1.msra.mxu0 0.0
    %4005 = vmatprep.subr.mxu0 0.0
    %4006 = vmatpush1.msra.mxu0 0.0
    %4007 = vmatprep.subr.mxu0 0.0
    %4008 = vmatpush1.msra.mxu0 0.0
    %4009 = vmatprep.subr.mxu0 0.0
    %4010 = vmatpush1.msra.mxu0 0.0
    %4011 = vmatprep.subr.mxu0 0.0
    %4012 = vmatpush1.msra.mxu0 0.0
    %4013 = vmatprep.subr.mxu0 0.0
    %4014 = vmatpush1.msra.mxu0 0.0
    %4015 = vmatprep.subr.mxu0 0.0
    %4016 = vmatpush1.msra.mxu0 0.0
    %4017 = vmatprep.subr.mxu0 0.0
    %4018 = vmatpush1.msra.mxu0 0.0
    %4019 = vmatprep.subr.mxu0 0.0
    %4020 = vmatpush1.msra.mxu0 0.0
    %4021 = vmatprep.subr.mxu0 0.0
    %4022 = vmatpush1.msra.mxu0 0.0
    %4023 = vmatprep.subr.mxu0 0.0
    %4024 = vmatpush1.msra.mxu0 0.0
    %4025 = vmatprep.subr.mxu0 0.0
    %4026 = vmatpush1.msra.mxu0 0.0
    %4027 = vmatprep.subr.mxu0 0.0
    %4028 = vmatpush1.msra.mxu0 0.0
    %4029 = vmatprep.subr.mxu0 0.0
    %4030 = vmatpush1.msra.mxu0 0.0
    %4031 = vmatprep.subr.mxu0 0.0
    %4032 = vmatpush1.msra.mxu0 0.0
    %4033 = vmatprep.subr.mxu0 0.0
    %4034 = vmatpush1.msra.mxu0 0.0
    %4035 = vmatprep.subr.mxu0 0.0
    %4036 = vmatpush1.msra.mxu0 0.0
    %4037 = vmatprep.subr.mxu0 0.0
    %4038 = vmatpush1.msra.mxu0 0.0
    %4039 = vmatprep.subr.mxu0 0.0
    %4040 = vmatpush1.msra.mxu0 0.0
    %4041 = vmatprep.subr.mxu0 0.0
    %4042 = vmatpush1.msra.mxu0 0.0
    %4043 = vmatprep.subr.mxu0 0.0
    %4044 = vmatpush1.msra.mxu0 0.0
    %4045 = vmatprep.subr.mxu0 0.0
    %4046 = vmatpush1.msra.mxu0 0.0
    %4047 = vmatprep.subr.mxu0 0.0
    %4048 = vmatpush1.msra.mxu0 0.0
    %4049 = vmatprep.subr.mxu0 0.0
    %4050 = vmatpush1.msra.mxu0 0.0
    %4051 = vmatprep.subr.mxu0 0.0
    %4052 = vmatpush1.msra.mxu0 0.0
    %4053 = vmatprep.subr.mxu0 0.0
    %4054 = vmatpush1.msra.mxu0 0.0
    %4055 = vmatprep.mubr.f32.mxu0 0.0
    %4056 = vmatmul.mubr.f32.gmra.mrb[0].mxu0 %v1372
    %v4057 = vpop.f32.mrb[0].mxu0
    %v4058 = vadd.f32 0.0, %v4057
    %v4059 = vpop.f32.mrb[0].mxu0
    %4060 = vmatprep.mubr.f32.mxu0 0.0
    %4061 = vmatmul.mubr.f32.gmra.mrb[0].mxu0 %v1374
    %v4062 = vpop.f32.mrb[0].mxu0
    %v4063 = vadd.f32 0.0, %v4062
    %v4064 = vpop.f32.mrb[0].mxu0
    %4065 = vmatprep.mubr.f32.mxu0 0.0
    %4066 = vmatmul.mubr.f32.gmra.mrb[0].mxu0 %v1376
    %v4067 = vpop.f32.mrb[0].mxu0
    %v4068 = vadd.f32 0.0, %v4067
    %v4069 = vpop.f32.mrb[0].mxu0
    %4070 = vmatprep.mubr.f32.mxu0 0.0
    %4071 = vmatmul.mubr.f32.gmra.mrb[0].mxu0 %v1378
    %v4072 = vpop.f32.mrb[0].mxu0
    %v4073 = vadd.f32 0.0, %v4072
    %v4074 = vpop.f32.mrb[0].mxu0
    %4075 = vmatprep.mubr.f32.mxu0 0.0
    %4076 = vmatmul.mubr.f32.gmra.mrb[0].mxu0 %v1380
    %v4077 = vpop.f32.mrb[0].mxu0
    %v4078 = vadd.f32 0.0, %v4077
    %v4079 = vpop.f32.mrb[0].mxu0
    %4080 = vmatprep.mubr.f32.mxu0 0.0
    %4081 = vmatmul.mubr.f32.gmra.mrb[0].mxu0 %v1382
    %v4082 = vpop.f32.mrb[0].mxu0
    %v4083 = vadd.f32 0.0, %v4082
    %v4084 = vpop.f32.mrb[0].mxu0
    %4085 = vmatprep.mubr.f32.mxu0 0.0
    %4086 = vmatmul.mubr.f32.gmra.mrb[0].mxu0 %v1384
    %v4087 = vpop.f32.mrb[0].mxu0
    %v4088 = vadd.f32 0.0, %v4087
    %v4089 = vpop.f32.mrb[0].mxu0
    %4090 = vmatprep.mubr.f32.mxu0 0.0
    %4091 = vmatmul.mubr.f32.gmra.mrb[0].mxu0 %v1386
    %v4092 = vpop.f32.mrb[0].mxu0
    %v4093 = vadd.f32 0.0, %v4092
    %v4094 = vpop.f32.mrb[0].mxu0
    %4095 = vmatprep.mubr.f32.mxu0 0.0
    %4096 = vmatmul.mubr.f32.gmra.mrb[0].mxu0 %v1388
    %v4097 = vpop.f32.mrb[0].mxu0
    %v4098 = vadd.f32 0.0, %v4097
    %v4099 = vpop.f32.mrb[0].mxu0
    %4100 = vmatprep.mubr.f32.mxu0 0.0
    %4101 = vmatmul.mubr.f32.gmra.mrb[0].mxu0 %v1390
    %v4102 = vpop.f32.mrb[0].mxu0
    %v4103 = vadd.f32 0.0, %v4102
    %v4104 = vpop.f32.mrb[0].mxu0
    %4105 = vmatprep.mubr.f32.mxu0 0.0
    %4106 = vmatmul.mubr.f32.gmra.mrb[0].mxu0 %v1392
    %v4107 = vpop.f32.mrb[0].mxu0
    %v4108 = vadd.f32 0.0, %v4107
    %v4109 = vpop.f32.mrb[0].mxu0
    %4110 = vmatprep.mubr.f32.mxu0 0.0
    %4111 = vmatmul.mubr.f32.gmra.mrb[0].mxu0 %v1394
    %v4112 = vpop.f32.mrb[0].mxu0
    %v4113 = vadd.f32 0.0, %v4112
    %v4114 = vpop.f32.mrb[0].mxu0
    %4115 = vmatprep.mubr.f32.mxu0 0.0
    %4116 = vmatmul.mubr.f32.gmra.mrb[0].mxu0 %v1396
    %v4117 = vpop.f32.mrb[0].mxu0
    %v4118 = vadd.f32 0.0, %v4117
    %v4119 = vpop.f32.mrb[0].mxu0
    %4120 = vmatprep.mubr.f32.mxu0 0.0
    %4121 = vmatmul.mubr.f32.gmra.mrb[0].mxu0 %v1398
    %v4122 = vpop.f32.mrb[0].mxu0
    %v4123 = vadd.f32 0.0, %v4122
    %v4124 = vpop.f32.mrb[0].mxu0
    %4125 = vmatprep.mubr.f32.mxu0 0.0
    %4126 = vmatmul.mubr.f32.gmra.mrb[0].mxu0 %v1400
    %v4127 = vpop.f32.mrb[0].mxu0
    %v4128 = vadd.f32 0.0, %v4127
    %v4129 = vpop.f32.mrb[0].mxu0
    %4130 = vmatprep.mubr.f32.mxu0 0.0
    %4131 = vmatmul.mubr.f32.gmra.mrb[0].mxu0 %v1402
    %v4132 = vpop.f32.mrb[0].mxu0
    %v4133 = vadd.f32 0.0, %v4132
    %v4134 = vpop.f32.mrb[0].mxu0
    %4135 = vmatprep.mubr.f32.mxu0 0.0
    %4136 = vmatmul.mubr.f32.gmra.mrb[0].mxu0 %v1404
    %v4137 = vpop.f32.mrb[0].mxu0
    %v4138 = vadd.f32 0.0, %v4137
    %v4139 = vpop.f32.mrb[0].mxu0
    %4140 = vmatprep.mubr.f32.mxu0 0.0
    %4141 = vmatmul.mubr.f32.gmra.mrb[0].mxu0 %v1406
    %v4142 = vpop.f32.mrb[0].mxu0
    %v4143 = vadd.f32 0.0, %v4142
    %v4144 = vpop.f32.mrb[0].mxu0
    %4145 = vmatprep.mubr.f32.mxu0 0.0
    %4146 = vmatmul.mubr.f32.gmra.mrb[0].mxu0 %v1408
    %v4147 = vpop.f32.mrb[0].mxu0
    %v4148 = vadd.f32 0.0, %v4147
    %v4149 = vpop.f32.mrb[0].mxu0
    %4150 = vmatprep.mubr.f32.mxu0 0.0
    %4151 = vmatmul.mubr.f32.gmra.mrb[0].mxu0 %v1410
    %v4152 = vpop.f32.mrb[0].mxu0
    %v4153 = vadd.f32 0.0, %v4152
    %v4154 = vpop.f32.mrb[0].mxu0
    %4155 = vmatprep.mubr.f32.mxu0 0.0
    %4156 = vmatmul.mubr.f32.gmra.mrb[0].mxu0 %v1412
    %v4157 = vpop.f32.mrb[0].mxu0
    %v4158 = vadd.f32 0.0, %v4157
    %v4159 = vpop.f32.mrb[0].mxu0
    %4160 = vmatprep.mubr.f32.mxu0 0.0
    %4161 = vmatmul.mubr.f32.gmra.mrb[0].mxu0 %v1414
    %v4162 = vpop.f32.mrb[0].mxu0
    %v4163 = vadd.f32 0.0, %v4162
    %v4164 = vpop.f32.mrb[0].mxu0
    %4165 = vmatprep.mubr.f32.mxu0 0.0
    %4166 = vmatmul.mubr.f32.gmra.mrb[0].mxu0 %v1416
    %v4167 = vpop.f32.mrb[0].mxu0
    %v4168 = vadd.f32 0.0, %v4167
    %v4169 = vpop.f32.mrb[0].mxu0
    %4170 = vmatprep.mubr.f32.mxu0 0.0
    %4171 = vmatmul.mubr.f32.gmra.mrb[0].mxu0 %v1418
    %v4172 = vpop.f32.mrb[0].mxu0
    %v4173 = vadd.f32 0.0, %v4172
    %v4174 = vpop.f32.mrb[0].mxu0
    %4175 = vmatprep.mubr.f32.mxu0 0.0
    %4176 = vmatmul.mubr.f32.gmra.mrb[0].mxu0 %v1420
    %v4177 = vpop.f32.mrb[0].mxu0
    %v4178 = vadd.f32 0.0, %v4177
    %v4179 = vpop.f32.mrb[0].mxu0
    %4180 = vmatprep.mubr.f32.mxu0 0.0
    %4181 = vmatmul.mubr.f32.gmra.mrb[0].mxu0 %v1422
    %v4182 = vpop.f32.mrb[0].mxu0
    %v4183 = vadd.f32 0.0, %v4182
    %v4184 = vpop.f32.mrb[0].mxu0
    %4185 = vmatprep.mubr.f32.mxu0 0.0
    %4186 = vmatmul.mubr.f32.gmra.mrb[0].mxu0 %v1424
    %v4187 = vpop.f32.mrb[0].mxu0
    %v4188 = vadd.f32 0.0, %v4187
    %v4189 = vpop.f32.mrb[0].mxu0
    %4190 = vmatprep.mubr.f32.mxu0 0.0
    %4191 = vmatmul.mubr.f32.gmra.mrb[0].mxu0 %v1426
    %v4192 = vpop.f32.mrb[0].mxu0
    %v4193 = vadd.f32 0.0, %v4192
    %v4194 = vpop.f32.mrb[0].mxu0
    %4195 = vmatprep.mubr.f32.mxu0 0.0
    %4196 = vmatmul.mubr.f32.gmra.mrb[0].mxu0 %v2792
    %v4197 = vpop.f32.mrb[0].mxu0
    %v4198 = vadd.f32 0.0, %v4197
    %v4199 = vpop.f32.mrb[0].mxu0
    %4200 = vmatprep.mubr.f32.mxu0 0.0
    %4201 = vmatmul.mubr.f32.gmra.mrb[0].mxu0 %v2794
    %v4202 = vpop.f32.mrb[0].mxu0
    %v4203 = vadd.f32 0.0, %v4202
    %v4204 = vpop.f32.mrb[0].mxu0
    %4205 = vmatprep.mubr.f32.mxu0 0.0
    %4206 = vmatmul.mubr.f32.gmra.mrb[0].mxu0 %v3980
    %v4207 = vpop.f32.mrb[0].mxu0
    %v4208 = vadd.f32 0.0, %v4207
    %v4209 = vpop.f32.mrb[0].mxu0
    %4210 = vmatprep.mubr.f32.mxu0 0.0
    %4211 = vmatmul.mubr.f32.gmra.mrb[0].mxu0 %v3982
    %v4212 = vpop.f32.mrb[0].mxu0
    %v4213 = vadd.f32 0.0, %v4212
    %v4214 = vpop.f32.mrb[0].mxu0
    %4215 = vmatprep.mubr.f32.mxu0 0.0
    %4216 = vmatmul.mubr.f32.gmra.mrb[0].mxu0 %v1436
    %v4217 = vpop.f32.mrb[0].mxu0
    %v4218 = vadd.f32 0.0, %v4217
    %v4219 = vpop.f32.mrb[0].mxu0
    %4220 = vmatprep.mubr.f32.mxu0 0.0
    %4221 = vmatmul.mubr.f32.gmra.mrb[0].mxu0 %v1438
    %v4222 = vpop.f32.mrb[0].mxu0
    %v4223 = vadd.f32 0.0, %v4222
    %v4224 = vpop.f32.mrb[0].mxu0
    %4225 = vmatprep.mubr.f32.mxu0 0.0
    %4226 = vmatmul.mubr.f32.gmra.mrb[0].mxu0 %v1440
    %v4227 = vpop.f32.mrb[0].mxu0
    %v4228 = vadd.f32 0.0, %v4227
    %v4229 = vpop.f32.mrb[0].mxu0
    %4230 = vmatprep.mubr.f32.mxu0 0.0
    %4231 = vmatmul.mubr.f32.gmra.mrb[0].mxu0 %v1442
    %v4232 = vpop.f32.mrb[0].mxu0
    %v4233 = vadd.f32 0.0, %v4232
    %v4234 = vpop.f32.mrb[0].mxu0
    %4235 = vmatprep.mubr.f32.mxu0 0.0
    %4236 = vmatmul.mubr.f32.gmra.mrb[0].mxu0 %v1444
    %v4237 = vpop.f32.mrb[0].mxu0
    %v4238 = vadd.f32 0.0, %v4237
    %v4239 = vpop.f32.mrb[0].mxu0
    %4240 = vmatprep.mubr.f32.mxu0 0.0
    %4241 = vmatmul.mubr.f32.gmra.mrb[0].mxu0 %v1446
    %v4242 = vpop.f32.mrb[0].mxu0
    %v4243 = vadd.f32 0.0, %v4242
    %v4244 = vpop.f32.mrb[0].mxu0
    %4245 = vmatprep.mubr.f32.mxu0 0.0
    %4246 = vmatmul.mubr.f32.gmra.mrb[0].mxu0 %v1448
    %v4247 = vpop.f32.mrb[0].mxu0
    %v4248 = vadd.f32 0.0, %v4247
    %v4249 = vpop.f32.mrb[0].mxu0
    %4250 = vmatprep.mubr.f32.mxu0 0.0
    %4251 = vmatmul.mubr.f32.gmra.mrb[0].mxu0 %v1450
    %v4252 = vpop.f32.mrb[0].mxu0
    %v4253 = vadd.f32 0.0, %v4252
    %v4254 = vpop.f32.mrb[0].mxu0
    %4255 = vmatprep.mubr.f32.mxu0 0.0
    %4256 = vmatmul.mubr.f32.gmra.mrb[0].mxu0 %v1452
    %v4257 = vpop.f32.mrb[0].mxu0
    %v4258 = vadd.f32 0.0, %v4257
    %v4259 = vpop.f32.mrb[0].mxu0
    %4260 = vmatprep.mubr.f32.mxu0 0.0
    %4261 = vmatmul.mubr.f32.gmra.mrb[0].mxu0 %v1454
    %v4262 = vpop.f32.mrb[0].mxu0
    %v4263 = vadd.f32 0.0, %v4262
    %v4264 = vpop.f32.mrb[0].mxu0
    %4265 = vmatprep.mubr.f32.mxu0 0.0
    %4266 = vmatmul.mubr.f32.gmra.mrb[0].mxu0 %v1456
    %v4267 = vpop.f32.mrb[0].mxu0
    %v4268 = vadd.f32 0.0, %v4267
    %v4269 = vpop.f32.mrb[0].mxu0
    %4270 = vmatprep.mubr.f32.mxu0 0.0
    %4271 = vmatmul.mubr.f32.gmra.mrb[0].mxu0 %v1458
    %v4272 = vpop.f32.mrb[0].mxu0
    %v4273 = vadd.f32 0.0, %v4272
    %v4274 = vpop.f32.mrb[0].mxu0
    %4275 = vmatprep.mubr.f32.mxu0 0.0
    %4276 = vmatmul.mubr.f32.gmra.mrb[0].mxu0 %v1460
    %v4277 = vpop.f32.mrb[0].mxu0
    %v4278 = vadd.f32 0.0, %v4277
    %v4279 = vpop.f32.mrb[0].mxu0
    %4280 = vmatprep.mubr.f32.mxu0 0.0
    %4281 = vmatmul.mubr.f32.gmra.mrb[0].mxu0 %v1462
    %v4282 = vpop.f32.mrb[0].mxu0
    %v4283 = vadd.f32 0.0, %v4282
    %v4284 = vpop.f32.mrb[0].mxu0
    %4285 = vmatprep.mubr.f32.mxu0 0.0
    %4286 = vmatmul.mubr.f32.gmra.mrb[0].mxu0 %v1464
    %v4287 = vpop.f32.mrb[0].mxu0
    %v4288 = vadd.f32 0.0, %v4287
    %v4289 = vpop.f32.mrb[0].mxu0
    %4290 = vmatprep.mubr.f32.mxu0 0.0
    %4291 = vmatmul.mubr.f32.gmra.mrb[0].mxu0 %v1466
    %v4292 = vpop.f32.mrb[0].mxu0
    %v4293 = vadd.f32 0.0, %v4292
    %v4294 = vpop.f32.mrb[0].mxu0
    %4295 = vmatprep.mubr.f32.mxu0 0.0
    %4296 = vmatmul.mubr.f32.gmra.mrb[0].mxu0 %v1468
    %v4297 = vpop.f32.mrb[0].mxu0
    %v4298 = vadd.f32 0.0, %v4297
    %v4299 = vpop.f32.mrb[0].mxu0
    %4300 = vmatprep.mubr.f32.mxu0 0.0
    %4301 = vmatmul.mubr.f32.gmra.mrb[0].mxu0 %v1470
    %v4302 = vpop.f32.mrb[0].mxu0
    %v4303 = vadd.f32 0.0, %v4302
    %v4304 = vpop.f32.mrb[0].mxu0
    %4305 = vmatprep.mubr.f32.mxu0 0.0
    %4306 = vmatmul.mubr.f32.gmra.mrb[0].mxu0 %v1472
    %v4307 = vpop.f32.mrb[0].mxu0
    %v4308 = vadd.f32 0.0, %v4307
    %v4309 = vpop.f32.mrb[0].mxu0
    %4310 = vmatprep.mubr.f32.mxu0 0.0
    %4311 = vmatmul.mubr.f32.gmra.mrb[0].mxu0 %v1474
    %v4312 = vpop.f32.mrb[0].mxu0
    %v4313 = vadd.f32 0.0, %v4312
    %v4314 = vpop.f32.mrb[0].mxu0
    %4315 = vmatprep.mubr.f32.mxu0 0.0
    %4316 = vmatmul.mubr.f32.gmra.mrb[0].mxu0 %v1476
    %v4317 = vpop.f32.mrb[0].mxu0
    %v4318 = vadd.f32 0.0, %v4317
    %v4319 = vpop.f32.mrb[0].mxu0
    %4320 = vmatprep.mubr.f32.mxu0 0.0
    %4321 = vmatmul.mubr.f32.gmra.mrb[0].mxu0 %v1478
    %v4322 = vpop.f32.mrb[0].mxu0
    %v4323 = vadd.f32 0.0, %v4322
    %v4324 = vpop.f32.mrb[0].mxu0
    %4325 = vmatprep.mubr.f32.mxu0 0.0
    %4326 = vmatmul.mubr.f32.gmra.mrb[0].mxu0 %v1480
    %v4327 = vpop.f32.mrb[0].mxu0
    %v4328 = vadd.f32 0.0, %v4327
    %v4329 = vpop.f32.mrb[0].mxu0
    %4330 = vmatprep.mubr.f32.mxu0 0.0
    %4331 = vmatmul.mubr.f32.gmra.mrb[0].mxu0 %v1482
    %v4332 = vpop.f32.mrb[0].mxu0
    %v4333 = vadd.f32 0.0, %v4332
    %v4334 = vpop.f32.mrb[0].mxu0
    %4335 = vmatprep.mubr.f32.mxu0 0.0
    %4336 = vmatmul.mubr.f32.gmra.mrb[0].mxu0 %v1484
    %v4337 = vpop.f32.mrb[0].mxu0
    %v4338 = vadd.f32 0.0, %v4337
    %v4339 = vpop.f32.mrb[0].mxu0
    %4340 = vmatprep.mubr.f32.mxu0 0.0
    %4341 = vmatmul.mubr.f32.gmra.mrb[0].mxu0 %v1486
    %v4342 = vpop.f32.mrb[0].mxu0
    %v4343 = vadd.f32 0.0, %v4342
    %v4344 = vpop.f32.mrb[0].mxu0
    %4345 = vmatprep.mubr.f32.mxu0 0.0
    %4346 = vmatmul.mubr.f32.gmra.mrb[0].mxu0 %v1488
    %v4347 = vpop.f32.mrb[0].mxu0
    %v4348 = vadd.f32 0.0, %v4347
    %v4349 = vpop.f32.mrb[0].mxu0
    %4350 = vmatprep.mubr.f32.mxu0 0.0
    %4351 = vmatmul.mubr.f32.gmra.mrb[0].mxu0 %v1490
    %v4352 = vpop.f32.mrb[0].mxu0
    %v4353 = vadd.f32 0.0, %v4352
    %v4354 = vpop.f32.mrb[0].mxu0
    %4355 = vmatprep.mubr.f32.mxu0 0.0
    %4356 = vmatmul.mubr.f32.gmra.mrb[0].mxu0 %v2796
    %v4357 = vpop.f32.mrb[0].mxu0
    %v4358 = vadd.f32 0.0, %v4357
    %v4359 = vpop.f32.mrb[0].mxu0
    %4360 = vmatprep.mubr.f32.mxu0 0.0
    %4361 = vmatmul.mubr.f32.gmra.mrb[0].mxu0 %v2798
    %v4362 = vpop.f32.mrb[0].mxu0
    %v4363 = vadd.f32 0.0, %v4362
    %v4364 = vpop.f32.mrb[0].mxu0
    %4365 = vmatprep.mubr.f32.mxu0 0.0
    %4366 = vmatmul.mubr.f32.gmra.mrb[0].mxu0 %v3984
    %v4367 = vpop.f32.mrb[0].mxu0
    %v4368 = vadd.f32 0.0, %v4367
    %v4369 = vpop.f32.mrb[0].mxu0
    %4370 = vmatprep.mubr.f32.mxu0 0.0
    %4371 = vmatmul.mubr.f32.gmra.mrb[0].mxu0 %v3986
    %v4372 = vpop.f32.mrb[0].mxu0
    %v4373 = vadd.f32 0.0, %v4372
    %v4374 = vpop.f32.mrb[0].mxu0
    %4375 = vdwg.mxu0
    %v4376 = vsel %vm94, %v839, 0
    %v4378 = vsel %vm94, %v841, 0
    %v4380 = vsel %vm94, %v844, 0
    %v4382 = vsel %vm94, %v846, 0
    %v4385 = vsel %vm975, %v93, 0
    %4387 = vmatprep.subr.mxu0 0.0
    %4388 = vmatpush1.msra.mxu0 %v4385
    %4389 = vmatprep.subr.mxu0 0.0
    %4390 = vmatpush1.msra.mxu0 0.0
    %4391 = vmatprep.subr.mxu0 0.0
    %4392 = vmatpush1.msra.mxu0 0.0
    %4393 = vmatprep.subr.mxu0 0.0
    %4394 = vmatpush1.msra.mxu0 0.0
    %4395 = vmatprep.subr.mxu0 0.0
    %4396 = vmatpush1.msra.mxu0 0.0
    %4397 = vmatprep.subr.mxu0 0.0
    %4398 = vmatpush1.msra.mxu0 0.0
    %4399 = vmatprep.subr.mxu0 0.0
    %4400 = vmatpush1.msra.mxu0 0.0
    %4401 = vmatprep.subr.mxu0 0.0
    %4402 = vmatpush1.msra.mxu0 0.0
    %4403 = vmatprep.subr.mxu0 0.0
    %4404 = vmatpush1.msra.mxu0 0.0
    %4405 = vmatprep.subr.mxu0 0.0
    %4406 = vmatpush1.msra.mxu0 0.0
    %4407 = vmatprep.subr.mxu0 0.0
    %4408 = vmatpush1.msra.mxu0 0.0
    %4409 = vmatprep.subr.mxu0 0.0
    %4410 = vmatpush1.msra.mxu0 0.0
    %4411 = vmatprep.subr.mxu0 0.0
    %4412 = vmatpush1.msra.mxu0 0.0
    %4413 = vmatprep.subr.mxu0 0.0
    %4414 = vmatpush1.msra.mxu0 0.0
    %4415 = vmatprep.subr.mxu0 0.0
    %4416 = vmatpush1.msra.mxu0 0.0
    %4417 = vmatprep.subr.mxu0 0.0
    %4418 = vmatpush1.msra.mxu0 0.0
    %4419 = vmatprep.subr.mxu0 0.0
    %4420 = vmatpush1.msra.mxu0 0.0
    %4421 = vmatprep.subr.mxu0 0.0
    %4422 = vmatpush1.msra.mxu0 0.0
    %4423 = vmatprep.subr.mxu0 0.0
    %4424 = vmatpush1.msra.mxu0 0.0
    %4425 = vmatprep.subr.mxu0 0.0
    %4426 = vmatpush1.msra.mxu0 0.0
    %4427 = vmatprep.subr.mxu0 0.0
    %4428 = vmatpush1.msra.mxu0 0.0
    %4429 = vmatprep.subr.mxu0 0.0
    %4430 = vmatpush1.msra.mxu0 0.0
    %4431 = vmatprep.subr.mxu0 0.0
    %4432 = vmatpush1.msra.mxu0 0.0
    %4433 = vmatprep.subr.mxu0 0.0
    %4434 = vmatpush1.msra.mxu0 0.0
    %4435 = vmatprep.subr.mxu0 0.0
    %4436 = vmatpush1.msra.mxu0 0.0
    %4437 = vmatprep.subr.mxu0 0.0
    %4438 = vmatpush1.msra.mxu0 0.0
    %4439 = vmatprep.subr.mxu0 0.0
    %4440 = vmatpush1.msra.mxu0 0.0
    %4441 = vmatprep.subr.mxu0 0.0
    %4442 = vmatpush1.msra.mxu0 0.0
    %4443 = vmatprep.subr.mxu0 0.0
    %4444 = vmatpush1.msra.mxu0 0.0
    %4445 = vmatprep.subr.mxu0 0.0
    %4446 = vmatpush1.msra.mxu0 0.0
    %4447 = vmatprep.subr.mxu0 0.0
    %4448 = vmatpush1.msra.mxu0 0.0
    %4449 = vmatprep.subr.mxu0 0.0
    %4450 = vmatpush1.msra.mxu0 0.0
    %4451 = vmatprep.mubr.f32.mxu0 0.0
    %4452 = vmatmul.mubr.f32.gmra.mrb[0].mxu0 %v1888
    %v4453 = vpop.f32.mrb[0].mxu0
    %v4454 = vadd.f32 0.0, %v4453
    %v4455 = vpop.f32.mrb[0].mxu0
    %4456 = vmatprep.mubr.f32.mxu0 0.0
    %4457 = vmatmul.mubr.f32.gmra.mrb[0].mxu0 %v1890
    %v4458 = vpop.f32.mrb[0].mxu0
    %v4459 = vadd.f32 0.0, %v4458
    %v4460 = vpop.f32.mrb[0].mxu0
    %4461 = vmatprep.mubr.f32.mxu0 0.0
    %4462 = vmatmul.mubr.f32.gmra.mrb[0].mxu0 %v1892
    %v4463 = vpop.f32.mrb[0].mxu0
    %v4464 = vadd.f32 0.0, %v4463
    %v4465 = vpop.f32.mrb[0].mxu0
    %4466 = vmatprep.mubr.f32.mxu0 0.0
    %4467 = vmatmul.mubr.f32.gmra.mrb[0].mxu0 %v1894
    %v4468 = vpop.f32.mrb[0].mxu0
    %v4469 = vadd.f32 0.0, %v4468
    %v4470 = vpop.f32.mrb[0].mxu0
    %4471 = vmatprep.mubr.f32.mxu0 0.0
    %4472 = vmatmul.mubr.f32.gmra.mrb[0].mxu0 %v1896
    %v4473 = vpop.f32.mrb[0].mxu0
    %v4474 = vadd.f32 0.0, %v4473
    %v4475 = vpop.f32.mrb[0].mxu0
    %4476 = vmatprep.mubr.f32.mxu0 0.0
    %4477 = vmatmul.mubr.f32.gmra.mrb[0].mxu0 %v1898
    %v4478 = vpop.f32.mrb[0].mxu0
    %v4479 = vadd.f32 0.0, %v4478
    %v4480 = vpop.f32.mrb[0].mxu0
    %4481 = vmatprep.mubr.f32.mxu0 0.0
    %4482 = vmatmul.mubr.f32.gmra.mrb[0].mxu0 %v1900
    %v4483 = vpop.f32.mrb[0].mxu0
    %v4484 = vadd.f32 0.0, %v4483
    %v4485 = vpop.f32.mrb[0].mxu0
    %4486 = vmatprep.mubr.f32.mxu0 0.0
    %4487 = vmatmul.mubr.f32.gmra.mrb[0].mxu0 %v1902
    %v4488 = vpop.f32.mrb[0].mxu0
    %v4489 = vadd.f32 0.0, %v4488
    %v4490 = vpop.f32.mrb[0].mxu0
    %4491 = vmatprep.mubr.f32.mxu0 0.0
    %4492 = vmatmul.mubr.f32.gmra.mrb[0].mxu0 %v1904
    %v4493 = vpop.f32.mrb[0].mxu0
    %v4494 = vadd.f32 0.0, %v4493
    %v4495 = vpop.f32.mrb[0].mxu0
    %4496 = vmatprep.mubr.f32.mxu0 0.0
    %4497 = vmatmul.mubr.f32.gmra.mrb[0].mxu0 %v1906
    %v4498 = vpop.f32.mrb[0].mxu0
    %v4499 = vadd.f32 0.0, %v4498
    %v4500 = vpop.f32.mrb[0].mxu0
    %4501 = vmatprep.mubr.f32.mxu0 0.0
    %4502 = vmatmul.mubr.f32.gmra.mrb[0].mxu0 %v1908
    %v4503 = vpop.f32.mrb[0].mxu0
    %v4504 = vadd.f32 0.0, %v4503
    %v4505 = vpop.f32.mrb[0].mxu0
    %4506 = vmatprep.mubr.f32.mxu0 0.0
    %4507 = vmatmul.mubr.f32.gmra.mrb[0].mxu0 %v1910
    %v4508 = vpop.f32.mrb[0].mxu0
    %v4509 = vadd.f32 0.0, %v4508
    %v4510 = vpop.f32.mrb[0].mxu0
    %4511 = vmatprep.mubr.f32.mxu0 0.0
    %4512 = vmatmul.mubr.f32.gmra.mrb[0].mxu0 %v1912
    %v4513 = vpop.f32.mrb[0].mxu0
    %v4514 = vadd.f32 0.0, %v4513
    %v4515 = vpop.f32.mrb[0].mxu0
    %4516 = vmatprep.mubr.f32.mxu0 0.0
    %4517 = vmatmul.mubr.f32.gmra.mrb[0].mxu0 %v1914
    %v4518 = vpop.f32.mrb[0].mxu0
    %v4519 = vadd.f32 0.0, %v4518
    %v4520 = vpop.f32.mrb[0].mxu0
    %4521 = vmatprep.mubr.f32.mxu0 0.0
    %4522 = vmatmul.mubr.f32.gmra.mrb[0].mxu0 %v1916
    %v4523 = vpop.f32.mrb[0].mxu0
    %v4524 = vadd.f32 0.0, %v4523
    %v4525 = vpop.f32.mrb[0].mxu0
    %4526 = vmatprep.mubr.f32.mxu0 0.0
    %4527 = vmatmul.mubr.f32.gmra.mrb[0].mxu0 %v1918
    %v4528 = vpop.f32.mrb[0].mxu0
    %v4529 = vadd.f32 0.0, %v4528
    %v4530 = vpop.f32.mrb[0].mxu0
    %4531 = vmatprep.mubr.f32.mxu0 0.0
    %4532 = vmatmul.mubr.f32.gmra.mrb[0].mxu0 %v1920
    %v4533 = vpop.f32.mrb[0].mxu0
    %v4534 = vadd.f32 0.0, %v4533
    %v4535 = vpop.f32.mrb[0].mxu0
    %4536 = vmatprep.mubr.f32.mxu0 0.0
    %4537 = vmatmul.mubr.f32.gmra.mrb[0].mxu0 %v1922
    %v4538 = vpop.f32.mrb[0].mxu0
    %v4539 = vadd.f32 0.0, %v4538
    %v4540 = vpop.f32.mrb[0].mxu0
    %4541 = vmatprep.mubr.f32.mxu0 0.0
    %4542 = vmatmul.mubr.f32.gmra.mrb[0].mxu0 %v1924
    %v4543 = vpop.f32.mrb[0].mxu0
    %v4544 = vadd.f32 0.0, %v4543
    %v4545 = vpop.f32.mrb[0].mxu0
    %4546 = vmatprep.mubr.f32.mxu0 0.0
    %4547 = vmatmul.mubr.f32.gmra.mrb[0].mxu0 %v1926
    %v4548 = vpop.f32.mrb[0].mxu0
    %v4549 = vadd.f32 0.0, %v4548
    %v4550 = vpop.f32.mrb[0].mxu0
    %4551 = vmatprep.mubr.f32.mxu0 0.0
    %4552 = vmatmul.mubr.f32.gmra.mrb[0].mxu0 %v1928
    %v4553 = vpop.f32.mrb[0].mxu0
    %v4554 = vadd.f32 0.0, %v4553
    %v4555 = vpop.f32.mrb[0].mxu0
    %4556 = vmatprep.mubr.f32.mxu0 0.0
    %4557 = vmatmul.mubr.f32.gmra.mrb[0].mxu0 %v1930
    %v4558 = vpop.f32.mrb[0].mxu0
    %v4559 = vadd.f32 0.0, %v4558
    %v4560 = vpop.f32.mrb[0].mxu0
    %4561 = vmatprep.mubr.f32.mxu0 0.0
    %4562 = vmatmul.mubr.f32.gmra.mrb[0].mxu0 %v1932
    %v4563 = vpop.f32.mrb[0].mxu0
    %v4564 = vadd.f32 0.0, %v4563
    %v4565 = vpop.f32.mrb[0].mxu0
    %4566 = vmatprep.mubr.f32.mxu0 0.0
    %4567 = vmatmul.mubr.f32.gmra.mrb[0].mxu0 %v1934
    %v4568 = vpop.f32.mrb[0].mxu0
    %v4569 = vadd.f32 0.0, %v4568
    %v4570 = vpop.f32.mrb[0].mxu0
    %4571 = vmatprep.mubr.f32.mxu0 0.0
    %4572 = vmatmul.mubr.f32.gmra.mrb[0].mxu0 %v1936
    %v4573 = vpop.f32.mrb[0].mxu0
    %v4574 = vadd.f32 0.0, %v4573
    %v4575 = vpop.f32.mrb[0].mxu0
    %4576 = vmatprep.mubr.f32.mxu0 0.0
    %4577 = vmatmul.mubr.f32.gmra.mrb[0].mxu0 %v1938
    %v4578 = vpop.f32.mrb[0].mxu0
    %v4579 = vadd.f32 0.0, %v4578
    %v4580 = vpop.f32.mrb[0].mxu0
    %4581 = vmatprep.mubr.f32.mxu0 0.0
    %4582 = vmatmul.mubr.f32.gmra.mrb[0].mxu0 %v1940
    %v4583 = vpop.f32.mrb[0].mxu0
    %v4584 = vadd.f32 0.0, %v4583
    %v4585 = vpop.f32.mrb[0].mxu0
    %4586 = vmatprep.mubr.f32.mxu0 0.0
    %4587 = vmatmul.mubr.f32.gmra.mrb[0].mxu0 %v1942
    %v4588 = vpop.f32.mrb[0].mxu0
    %v4589 = vadd.f32 0.0, %v4588
    %v4590 = vpop.f32.mrb[0].mxu0
    %4591 = vmatprep.mubr.f32.mxu0 0.0
    %4592 = vmatmul.mubr.f32.gmra.mrb[0].mxu0 %v3188
    %v4593 = vpop.f32.mrb[0].mxu0
    %v4594 = vadd.f32 0.0, %v4593
    %v4595 = vpop.f32.mrb[0].mxu0
    %4596 = vmatprep.mubr.f32.mxu0 0.0
    %4597 = vmatmul.mubr.f32.gmra.mrb[0].mxu0 %v3190
    %v4598 = vpop.f32.mrb[0].mxu0
    %v4599 = vadd.f32 0.0, %v4598
    %v4600 = vpop.f32.mrb[0].mxu0
    %4601 = vmatprep.mubr.f32.mxu0 0.0
    %4602 = vmatmul.mubr.f32.gmra.mrb[0].mxu0 %v4376
    %v4603 = vpop.f32.mrb[0].mxu0
    %v4604 = vadd.f32 0.0, %v4603
    %v4605 = vpop.f32.mrb[0].mxu0
    %4606 = vmatprep.mubr.f32.mxu0 0.0
    %4607 = vmatmul.mubr.f32.gmra.mrb[0].mxu0 %v4378
    %v4608 = vpop.f32.mrb[0].mxu0
    %v4609 = vadd.f32 0.0, %v4608
    %v4610 = vpop.f32.mrb[0].mxu0
    %4611 = vmatprep.mubr.f32.mxu0 0.0
    %4612 = vmatmul.mubr.f32.gmra.mrb[0].mxu0 %v1952
    %v4613 = vpop.f32.mrb[0].mxu0
    %v4614 = vadd.f32 0.0, %v4613
    %v4615 = vpop.f32.mrb[0].mxu0
    %4616 = vmatprep.mubr.f32.mxu0 0.0
    %4617 = vmatmul.mubr.f32.gmra.mrb[0].mxu0 %v1954
    %v4618 = vpop.f32.mrb[0].mxu0
    %v4619 = vadd.f32 0.0, %v4618
    %v4620 = vpop.f32.mrb[0].mxu0
    %4621 = vmatprep.mubr.f32.mxu0 0.0
    %4622 = vmatmul.mubr.f32.gmra.mrb[0].mxu0 %v1956
    %v4623 = vpop.f32.mrb[0].mxu0
    %v4624 = vadd.f32 0.0, %v4623
    %v4625 = vpop.f32.mrb[0].mxu0
    %4626 = vmatprep.mubr.f32.mxu0 0.0
    %4627 = vmatmul.mubr.f32.gmra.mrb[0].mxu0 %v1958
    %v4628 = vpop.f32.mrb[0].mxu0
    %v4629 = vadd.f32 0.0, %v4628
    %v4630 = vpop.f32.mrb[0].mxu0
    %4631 = vmatprep.mubr.f32.mxu0 0.0
    %4632 = vmatmul.mubr.f32.gmra.mrb[0].mxu0 %v1960
    %v4633 = vpop.f32.mrb[0].mxu0
    %v4634 = vadd.f32 0.0, %v4633
    %v4635 = vpop.f32.mrb[0].mxu0
    %4636 = vmatprep.mubr.f32.mxu0 0.0
    %4637 = vmatmul.mubr.f32.gmra.mrb[0].mxu0 %v1962
    %v4638 = vpop.f32.mrb[0].mxu0
    %v4639 = vadd.f32 0.0, %v4638
    %v4640 = vpop.f32.mrb[0].mxu0
    %4641 = vmatprep.mubr.f32.mxu0 0.0
    %4642 = vmatmul.mubr.f32.gmra.mrb[0].mxu0 %v1964
    %v4643 = vpop.f32.mrb[0].mxu0
    %v4644 = vadd.f32 0.0, %v4643
    %v4645 = vpop.f32.mrb[0].mxu0
    %4646 = vmatprep.mubr.f32.mxu0 0.0
    %4647 = vmatmul.mubr.f32.gmra.mrb[0].mxu0 %v1966
    %v4648 = vpop.f32.mrb[0].mxu0
    %v4649 = vadd.f32 0.0, %v4648
    %v4650 = vpop.f32.mrb[0].mxu0
    %4651 = vmatprep.mubr.f32.mxu0 0.0
    %4652 = vmatmul.mubr.f32.gmra.mrb[0].mxu0 %v1968
    %v4653 = vpop.f32.mrb[0].mxu0
    %v4654 = vadd.f32 0.0, %v4653
    %v4655 = vpop.f32.mrb[0].mxu0
    %4656 = vmatprep.mubr.f32.mxu0 0.0
    %4657 = vmatmul.mubr.f32.gmra.mrb[0].mxu0 %v1970
    %v4658 = vpop.f32.mrb[0].mxu0
    %v4659 = vadd.f32 0.0, %v4658
    %v4660 = vpop.f32.mrb[0].mxu0
    %4661 = vmatprep.mubr.f32.mxu0 0.0
    %4662 = vmatmul.mubr.f32.gmra.mrb[0].mxu0 %v1972
    %v4663 = vpop.f32.mrb[0].mxu0
    %v4664 = vadd.f32 0.0, %v4663
    %v4665 = vpop.f32.mrb[0].mxu0
    %4666 = vmatprep.mubr.f32.mxu0 0.0
    %4667 = vmatmul.mubr.f32.gmra.mrb[0].mxu0 %v1974
    %v4668 = vpop.f32.mrb[0].mxu0
    %v4669 = vadd.f32 0.0, %v4668
    %v4670 = vpop.f32.mrb[0].mxu0
    %4671 = vmatprep.mubr.f32.mxu0 0.0
    %4672 = vmatmul.mubr.f32.gmra.mrb[0].mxu0 %v1976
    %v4673 = vpop.f32.mrb[0].mxu0
    %v4674 = vadd.f32 0.0, %v4673
    %v4675 = vpop.f32.mrb[0].mxu0
    %4676 = vmatprep.mubr.f32.mxu0 0.0
    %4677 = vmatmul.mubr.f32.gmra.mrb[0].mxu0 %v1978
    %v4678 = vpop.f32.mrb[0].mxu0
    %v4679 = vadd.f32 0.0, %v4678
    %v4680 = vpop.f32.mrb[0].mxu0
    %4681 = vmatprep.mubr.f32.mxu0 0.0
    %4682 = vmatmul.mubr.f32.gmra.mrb[0].mxu0 %v1980
    %v4683 = vpop.f32.mrb[0].mxu0
    %v4684 = vadd.f32 0.0, %v4683
    %v4685 = vpop.f32.mrb[0].mxu0
    %4686 = vmatprep.mubr.f32.mxu0 0.0
    %4687 = vmatmul.mubr.f32.gmra.mrb[0].mxu0 %v1982
    %v4688 = vpop.f32.mrb[0].mxu0
    %v4689 = vadd.f32 0.0, %v4688
    %v4690 = vpop.f32.mrb[0].mxu0
    %4691 = vmatprep.mubr.f32.mxu0 0.0
    %4692 = vmatmul.mubr.f32.gmra.mrb[0].mxu0 %v1984
    %v4693 = vpop.f32.mrb[0].mxu0
    %v4694 = vadd.f32 0.0, %v4693
    %v4695 = vpop.f32.mrb[0].mxu0
    %4696 = vmatprep.mubr.f32.mxu0 0.0
    %4697 = vmatmul.mubr.f32.gmra.mrb[0].mxu0 %v1986
    %v4698 = vpop.f32.mrb[0].mxu0
    %v4699 = vadd.f32 0.0, %v4698
    %v4700 = vpop.f32.mrb[0].mxu0
    %4701 = vmatprep.mubr.f32.mxu0 0.0
    %4702 = vmatmul.mubr.f32.gmra.mrb[0].mxu0 %v1988
    %v4703 = vpop.f32.mrb[0].mxu0
    %v4704 = vadd.f32 0.0, %v4703
    %v4705 = vpop.f32.mrb[0].mxu0
    %4706 = vmatprep.mubr.f32.mxu0 0.0
    %4707 = vmatmul.mubr.f32.gmra.mrb[0].mxu0 %v1990
    %v4708 = vpop.f32.mrb[0].mxu0
    %v4709 = vadd.f32 0.0, %v4708
    %v4710 = vpop.f32.mrb[0].mxu0
    %4711 = vmatprep.mubr.f32.mxu0 0.0
    %4712 = vmatmul.mubr.f32.gmra.mrb[0].mxu0 %v1992
    %v4713 = vpop.f32.mrb[0].mxu0
    %v4714 = vadd.f32 0.0, %v4713
    %v4715 = vpop.f32.mrb[0].mxu0
    %4716 = vmatprep.mubr.f32.mxu0 0.0
    %4717 = vmatmul.mubr.f32.gmra.mrb[0].mxu0 %v1994
    %v4718 = vpop.f32.mrb[0].mxu0
    %v4719 = vadd.f32 0.0, %v4718
    %v4720 = vpop.f32.mrb[0].mxu0
    %4721 = vmatprep.mubr.f32.mxu0 0.0
    %4722 = vmatmul.mubr.f32.gmra.mrb[0].mxu0 %v1996
    %v4723 = vpop.f32.mrb[0].mxu0
    %v4724 = vadd.f32 0.0, %v4723
    %v4725 = vpop.f32.mrb[0].mxu0
    %4726 = vmatprep.mubr.f32.mxu0 0.0
    %4727 = vmatmul.mubr.f32.gmra.mrb[0].mxu0 %v1998
    %v4728 = vpop.f32.mrb[0].mxu0
    %v4729 = vadd.f32 0.0, %v4728
    %v4730 = vpop.f32.mrb[0].mxu0
    %4731 = vmatprep.mubr.f32.mxu0 0.0
    %4732 = vmatmul.mubr.f32.gmra.mrb[0].mxu0 %v2000
    %v4733 = vpop.f32.mrb[0].mxu0
    %v4734 = vadd.f32 0.0, %v4733
    %v4735 = vpop.f32.mrb[0].mxu0
    %4736 = vmatprep.mubr.f32.mxu0 0.0
    %4737 = vmatmul.mubr.f32.gmra.mrb[0].mxu0 %v2002
    %v4738 = vpop.f32.mrb[0].mxu0
    %v4739 = vadd.f32 0.0, %v4738
    %v4740 = vpop.f32.mrb[0].mxu0
    %4741 = vmatprep.mubr.f32.mxu0 0.0
    %4742 = vmatmul.mubr.f32.gmra.mrb[0].mxu0 %v2004
    %v4743 = vpop.f32.mrb[0].mxu0
    %v4744 = vadd.f32 0.0, %v4743
    %v4745 = vpop.f32.mrb[0].mxu0
    %4746 = vmatprep.mubr.f32.mxu0 0.0
    %4747 = vmatmul.mubr.f32.gmra.mrb[0].mxu0 %v2006
    %v4748 = vpop.f32.mrb[0].mxu0
    %v4749 = vadd.f32 0.0, %v4748
    %v4750 = vpop.f32.mrb[0].mxu0
    %4751 = vmatprep.mubr.f32.mxu0 0.0
    %4752 = vmatmul.mubr.f32.gmra.mrb[0].mxu0 %v3192
    %v4753 = vpop.f32.mrb[0].mxu0
    %v4754 = vadd.f32 0.0, %v4753
    %v4755 = vpop.f32.mrb[0].mxu0
    %4756 = vmatprep.mubr.f32.mxu0 0.0
    %4757 = vmatmul.mubr.f32.gmra.mrb[0].mxu0 %v3194
    %v4758 = vpop.f32.mrb[0].mxu0
    %v4759 = vadd.f32 0.0, %v4758
    %v4760 = vpop.f32.mrb[0].mxu0
    %4761 = vmatprep.mubr.f32.mxu0 0.0
    %4762 = vmatmul.mubr.f32.gmra.mrb[0].mxu0 %v4380
    %v4763 = vpop.f32.mrb[0].mxu0
    %v4764 = vadd.f32 0.0, %v4763
    %v4765 = vpop.f32.mrb[0].mxu0
    %4766 = vmatprep.mubr.f32.mxu0 0.0
    %4767 = vmatmul.mubr.f32.gmra.mrb[0].mxu0 %v4382
    %v4768 = vpop.f32.mrb[0].mxu0
    %v4769 = vadd.f32 0.0, %v4768
    %v4770 = vpop.f32.mrb[0].mxu0
    %4771 = vdwg.mxu0
    %vm4772 = vcmask 64512
    %v4773 = vsel %vm4772, %v1046, 0.0
    %v4774 = vsel %vm4772, %v1562, 0.0
    %v4775 = vadd.f32 %v4773, %v4774
    %v4776 = vsel %vm4772, %v2078, 0.0
    %v4777 = vadd.f32 %v4775, %v4776
    %v4778 = vsel %vm4772, %v2474, 0.0
    %v4779 = vadd.f32 %v4777, %v4778
    %v4780 = vsel %vm4772, %v2870, 0.0
    %v4781 = vadd.f32 %v4779, %v4780
    %v4782 = vsel %vm4772, %v3266, 0.0
    %v4783 = vadd.f32 %v4781, %v4782
    %v4784 = vsel %vm4772, %v3662, 0.0
    %v4785 = vadd.f32 %v4783, %v4784
    %v4786 = vsel %vm4772, %v4058, 0.0
    %v4787 = vadd.f32 %v4785, %v4786
    %v4788 = vsel %vm4772, %v4454, 0.0
    %v4789 = vadd.f32 %v4787, %v4788
    %v4790 = vsel %vm4772, %v1051, 0.0
    %v4791 = vsel %vm4772, %v1567, 0.0
    %v4792 = vadd.f32 %v4790, %v4791
    %v4793 = vsel %vm4772, %v2083, 0.0
    %v4794 = vadd.f32 %v4792, %v4793
    %v4795 = vsel %vm4772, %v2479, 0.0
    %v4796 = vadd.f32 %v4794, %v4795
    %v4797 = vsel %vm4772, %v2875, 0.0
    %v4798 = vadd.f32 %v4796, %v4797
    %v4799 = vsel %vm4772, %v3271, 0.0
    %v4800 = vadd.f32 %v4798, %v4799
    %v4801 = vsel %vm4772, %v3667, 0.0
    %v4802 = vadd.f32 %v4800, %v4801
    %v4803 = vsel %vm4772, %v4063, 0.0
    %v4804 = vadd.f32 %v4802, %v4803
    %v4805 = vsel %vm4772, %v4459, 0.0
    %v4806 = vadd.f32 %v4804, %v4805
    %v4807 = vsel %vm4772, %v1056, 0.0
    %v4808 = vsel %vm4772, %v1572, 0.0
    %v4809 = vadd.f32 %v4807, %v4808
    %v4810 = vsel %vm4772, %v2088, 0.0
    %v4811 = vadd.f32 %v4809, %v4810
    %v4812 = vsel %vm4772, %v2484, 0.0
    %v4813 = vadd.f32 %v4811, %v4812
    %v4814 = vsel %vm4772, %v2880, 0.0
    %v4815 = vadd.f32 %v4813, %v4814
    %v4816 = vsel %vm4772, %v3276, 0.0
    %v4817 = vadd.f32 %v4815, %v4816
    %v4818 = vsel %vm4772, %v3672, 0.0
    %v4819 = vadd.f32 %v4817, %v4818
    %v4820 = vsel %vm4772, %v4068, 0.0
    %v4821 = vadd.f32 %v4819, %v4820
    %v4822 = vsel %vm4772, %v4464, 0.0
    %v4823 = vadd.f32 %v4821, %v4822
    %v4824 = vsel %vm4772, %v1061, 0.0
    %v4825 = vsel %vm4772, %v1577, 0.0
    %v4826 = vadd.f32 %v4824, %v4825
    %v4827 = vsel %vm4772, %v2093, 0.0
    %v4828 = vadd.f32 %v4826, %v4827
    %v4829 = vsel %vm4772, %v2489, 0.0
    %v4830 = vadd.f32 %v4828, %v4829
    %v4831 = vsel %vm4772, %v2885, 0.0
    %v4832 = vadd.f32 %v4830, %v4831
    %v4833 = vsel %vm4772, %v3281, 0.0
    %v4834 = vadd.f32 %v4832, %v4833
    %v4835 = vsel %vm4772, %v3677, 0.0
    %v4836 = vadd.f32 %v4834, %v4835
    %v4837 = vsel %vm4772, %v4073, 0.0
    %v4838 = vadd.f32 %v4836, %v4837
    %v4839 = vsel %vm4772, %v4469, 0.0
    %v4840 = vadd.f32 %v4838, %v4839
    %v4841 = vsel %vm4772, %v1066, 0.0
    %v4842 = vsel %vm4772, %v1582, 0.0
    %v4843 = vadd.f32 %v4841, %v4842
    %v4844 = vsel %vm4772, %v2098, 0.0
    %v4845 = vadd.f32 %v4843, %v4844
    %v4846 = vsel %vm4772, %v2494, 0.0
    %v4847 = vadd.f32 %v4845, %v4846
    %v4848 = vsel %vm4772, %v2890, 0.0
    %v4849 = vadd.f32 %v4847, %v4848
    %v4850 = vsel %vm4772, %v3286, 0.0
    %v4851 = vadd.f32 %v4849, %v4850
    %v4852 = vsel %vm4772, %v3682, 0.0
    %v4853 = vadd.f32 %v4851, %v4852
    %v4854 = vsel %vm4772, %v4078, 0.0
    %v4855 = vadd.f32 %v4853, %v4854
    %v4856 = vsel %vm4772, %v4474, 0.0
    %v4857 = vadd.f32 %v4855, %v4856
    %v4858 = vsel %vm4772, %v1071, 0.0
    %v4859 = vsel %vm4772, %v1587, 0.0
    %v4860 = vadd.f32 %v4858, %v4859
    %v4861 = vsel %vm4772, %v2103, 0.0
    %v4862 = vadd.f32 %v4860, %v4861
    %v4863 = vsel %vm4772, %v2499, 0.0
    %v4864 = vadd.f32 %v4862, %v4863
    %v4865 = vsel %vm4772, %v2895, 0.0
    %v4866 = vadd.f32 %v4864, %v4865
    %v4867 = vsel %vm4772, %v3291, 0.0
    %v4868 = vadd.f32 %v4866, %v4867
    %v4869 = vsel %vm4772, %v3687, 0.0
    %v4870 = vadd.f32 %v4868, %v4869
    %v4871 = vsel %vm4772, %v4083, 0.0
    %v4872 = vadd.f32 %v4870, %v4871
    %v4873 = vsel %vm4772, %v4479, 0.0
    %v4874 = vadd.f32 %v4872, %v4873
    %v4875 = vsel %vm4772, %v1076, 0.0
    %v4876 = vsel %vm4772, %v1592, 0.0
    %v4877 = vadd.f32 %v4875, %v4876
    %v4878 = vsel %vm4772, %v2108, 0.0
    %v4879 = vadd.f32 %v4877, %v4878
    %v4880 = vsel %vm4772, %v2504, 0.0
    %v4881 = vadd.f32 %v4879, %v4880
    %v4882 = vsel %vm4772, %v2900, 0.0
    %v4883 = vadd.f32 %v4881, %v4882
    %v4884 = vsel %vm4772, %v3296, 0.0
    %v4885 = vadd.f32 %v4883, %v4884
    %v4886 = vsel %vm4772, %v3692, 0.0
    %v4887 = vadd.f32 %v4885, %v4886
    %v4888 = vsel %vm4772, %v4088, 0.0
    %v4889 = vadd.f32 %v4887, %v4888
    %v4890 = vsel %vm4772, %v4484, 0.0
    %v4891 = vadd.f32 %v4889, %v4890
    %v4892 = vsel %vm4772, %v1081, 0.0
    %v4893 = vsel %vm4772, %v1597, 0.0
    %v4894 = vadd.f32 %v4892, %v4893
    %v4895 = vsel %vm4772, %v2113, 0.0
    %v4896 = vadd.f32 %v4894, %v4895
    %v4897 = vsel %vm4772, %v2509, 0.0
    %v4898 = vadd.f32 %v4896, %v4897
    %v4899 = vsel %vm4772, %v2905, 0.0
    %v4900 = vadd.f32 %v4898, %v4899
    %v4901 = vsel %vm4772, %v3301, 0.0
    %v4902 = vadd.f32 %v4900, %v4901
    %v4903 = vsel %vm4772, %v3697, 0.0
    %v4904 = vadd.f32 %v4902, %v4903
    %v4905 = vsel %vm4772, %v4093, 0.0
    %v4906 = vadd.f32 %v4904, %v4905
    %v4907 = vsel %vm4772, %v4489, 0.0
    %v4908 = vadd.f32 %v4906, %v4907
    %v4909 = vsel %vm4772, %v1086, 0.0
    %v4910 = vsel %vm4772, %v1602, 0.0
    %v4911 = vadd.f32 %v4909, %v4910
    %v4912 = vsel %vm4772, %v2118, 0.0
    %v4913 = vadd.f32 %v4911, %v4912
    %v4914 = vsel %vm4772, %v2514, 0.0
    %v4915 = vadd.f32 %v4913, %v4914
    %v4916 = vsel %vm4772, %v2910, 0.0
    %v4917 = vadd.f32 %v4915, %v4916
    %v4918 = vsel %vm4772, %v3306, 0.0
    %v4919 = vadd.f32 %v4917, %v4918
    %v4920 = vsel %vm4772, %v3702, 0.0
    %v4921 = vadd.f32 %v4919, %v4920
    %v4922 = vsel %vm4772, %v4098, 0.0
    %v4923 = vadd.f32 %v4921, %v4922
    %v4924 = vsel %vm4772, %v4494, 0.0
    %v4925 = vadd.f32 %v4923, %v4924
    %v4926 = vsel %vm4772, %v1091, 0.0
    %v4927 = vsel %vm4772, %v1607, 0.0
    %v4928 = vadd.f32 %v4926, %v4927
    %v4929 = vsel %vm4772, %v2123, 0.0
    %v4930 = vadd.f32 %v4928, %v4929
    %v4931 = vsel %vm4772, %v2519, 0.0
    %v4932 = vadd.f32 %v4930, %v4931
    %v4933 = vsel %vm4772, %v2915, 0.0
    %v4934 = vadd.f32 %v4932, %v4933
    %v4935 = vsel %vm4772, %v3311, 0.0
    %v4936 = vadd.f32 %v4934, %v4935
    %v4937 = vsel %vm4772, %v3707, 0.0
    %v4938 = vadd.f32 %v4936, %v4937
    %v4939 = vsel %vm4772, %v4103, 0.0
    %v4940 = vadd.f32 %v4938, %v4939
    %v4941 = vsel %vm4772, %v4499, 0.0
    %v4942 = vadd.f32 %v4940, %v4941
    %v4943 = vsel %vm4772, %v1096, 0.0
    %v4944 = vsel %vm4772, %v1612, 0.0
    %v4945 = vadd.f32 %v4943, %v4944
    %v4946 = vsel %vm4772, %v2128, 0.0
    %v4947 = vadd.f32 %v4945, %v4946
    %v4948 = vsel %vm4772, %v2524, 0.0
    %v4949 = vadd.f32 %v4947, %v4948
    %v4950 = vsel %vm4772, %v2920, 0.0
    %v4951 = vadd.f32 %v4949, %v4950
    %v4952 = vsel %vm4772, %v3316, 0.0
    %v4953 = vadd.f32 %v4951, %v4952
    %v4954 = vsel %vm4772, %v3712, 0.0
    %v4955 = vadd.f32 %v4953, %v4954
    %v4956 = vsel %vm4772, %v4108, 0.0
    %v4957 = vadd.f32 %v4955, %v4956
    %v4958 = vsel %vm4772, %v4504, 0.0
    %v4959 = vadd.f32 %v4957, %v4958
    %v4960 = vsel %vm4772, %v1101, 0.0
    %v4961 = vsel %vm4772, %v1617, 0.0
    %v4962 = vadd.f32 %v4960, %v4961
    %v4963 = vsel %vm4772, %v2133, 0.0
    %v4964 = vadd.f32 %v4962, %v4963
    %v4965 = vsel %vm4772, %v2529, 0.0
    %v4966 = vadd.f32 %v4964, %v4965
    %v4967 = vsel %vm4772, %v2925, 0.0
    %v4968 = vadd.f32 %v4966, %v4967
    %v4969 = vsel %vm4772, %v3321, 0.0
    %v4970 = vadd.f32 %v4968, %v4969
    %v4971 = vsel %vm4772, %v3717, 0.0
    %v4972 = vadd.f32 %v4970, %v4971
    %v4973 = vsel %vm4772, %v4113, 0.0
    %v4974 = vadd.f32 %v4972, %v4973
    %v4975 = vsel %vm4772, %v4509, 0.0
    %v4976 = vadd.f32 %v4974, %v4975
    %v4977 = vsel %vm4772, %v1106, 0.0
    %v4978 = vsel %vm4772, %v1622, 0.0
    %v4979 = vadd.f32 %v4977, %v4978
    %v4980 = vsel %vm4772, %v2138, 0.0
    %v4981 = vadd.f32 %v4979, %v4980
    %v4982 = vsel %vm4772, %v2534, 0.0
    %v4983 = vadd.f32 %v4981, %v4982
    %v4984 = vsel %vm4772, %v2930, 0.0
    %v4985 = vadd.f32 %v4983, %v4984
    %v4986 = vsel %vm4772, %v3326, 0.0
    %v4987 = vadd.f32 %v4985, %v4986
    %v4988 = vsel %vm4772, %v3722, 0.0
    %v4989 = vadd.f32 %v4987, %v4988
    %v4990 = vsel %vm4772, %v4118, 0.0
    %v4991 = vadd.f32 %v4989, %v4990
    %v4992 = vsel %vm4772, %v4514, 0.0
    %v4993 = vadd.f32 %v4991, %v4992
    %v4994 = vsel %vm4772, %v1111, 0.0
    %v4995 = vsel %vm4772, %v1627, 0.0
    %v4996 = vadd.f32 %v4994, %v4995
    %v4997 = vsel %vm4772, %v2143, 0.0
    %v4998 = vadd.f32 %v4996, %v4997
    %v4999 = vsel %vm4772, %v2539, 0.0
    %v5000 = vadd.f32 %v4998, %v4999
    %v5001 = vsel %vm4772, %v2935, 0.0
    %v5002 = vadd.f32 %v5000, %v5001
    %v5003 = vsel %vm4772, %v3331, 0.0
    %v5004 = vadd.f32 %v5002, %v5003
    %v5005 = vsel %vm4772, %v3727, 0.0
    %v5006 = vadd.f32 %v5004, %v5005
    %v5007 = vsel %vm4772, %v4123, 0.0
    %v5008 = vadd.f32 %v5006, %v5007
    %v5009 = vsel %vm4772, %v4519, 0.0
    %v5010 = vadd.f32 %v5008, %v5009
    %v5011 = vsel %vm4772, %v1116, 0.0
    %v5012 = vsel %vm4772, %v1632, 0.0
    %v5013 = vadd.f32 %v5011, %v5012
    %v5014 = vsel %vm4772, %v2148, 0.0
    %v5015 = vadd.f32 %v5013, %v5014
    %v5016 = vsel %vm4772, %v2544, 0.0
    %v5017 = vadd.f32 %v5015, %v5016
    %v5018 = vsel %vm4772, %v2940, 0.0
    %v5019 = vadd.f32 %v5017, %v5018
    %v5020 = vsel %vm4772, %v3336, 0.0
    %v5021 = vadd.f32 %v5019, %v5020
    %v5022 = vsel %vm4772, %v3732, 0.0
    %v5023 = vadd.f32 %v5021, %v5022
    %v5024 = vsel %vm4772, %v4128, 0.0
    %v5025 = vadd.f32 %v5023, %v5024
    %v5026 = vsel %vm4772, %v4524, 0.0
    %v5027 = vadd.f32 %v5025, %v5026
    %v5028 = vsel %vm4772, %v1121, 0.0
    %v5029 = vsel %vm4772, %v1637, 0.0
    %v5030 = vadd.f32 %v5028, %v5029
    %v5031 = vsel %vm4772, %v2153, 0.0
    %v5032 = vadd.f32 %v5030, %v5031
    %v5033 = vsel %vm4772, %v2549, 0.0
    %v5034 = vadd.f32 %v5032, %v5033
    %v5035 = vsel %vm4772, %v2945, 0.0
    %v5036 = vadd.f32 %v5034, %v5035
    %v5037 = vsel %vm4772, %v3341, 0.0
    %v5038 = vadd.f32 %v5036, %v5037
    %v5039 = vsel %vm4772, %v3737, 0.0
    %v5040 = vadd.f32 %v5038, %v5039
    %v5041 = vsel %vm4772, %v4133, 0.0
    %v5042 = vadd.f32 %v5040, %v5041
    %v5043 = vsel %vm4772, %v4529, 0.0
    %v5044 = vadd.f32 %v5042, %v5043
    %v5045 = vsel %vm4772, %v1126, 0.0
    %v5046 = vsel %vm4772, %v1642, 0.0
    %v5047 = vadd.f32 %v5045, %v5046
    %v5048 = vsel %vm4772, %v2158, 0.0
    %v5049 = vadd.f32 %v5047, %v5048
    %v5050 = vsel %vm4772, %v2554, 0.0
    %v5051 = vadd.f32 %v5049, %v5050
    %v5052 = vsel %vm4772, %v2950, 0.0
    %v5053 = vadd.f32 %v5051, %v5052
    %v5054 = vsel %vm4772, %v3346, 0.0
    %v5055 = vadd.f32 %v5053, %v5054
    %v5056 = vsel %vm4772, %v3742, 0.0
    %v5057 = vadd.f32 %v5055, %v5056
    %v5058 = vsel %vm4772, %v4138, 0.0
    %v5059 = vadd.f32 %v5057, %v5058
    %v5060 = vsel %vm4772, %v4534, 0.0
    %v5061 = vadd.f32 %v5059, %v5060
    %v5062 = vsel %vm4772, %v1131, 0.0
    %v5063 = vsel %vm4772, %v1647, 0.0
    %v5064 = vadd.f32 %v5062, %v5063
    %v5065 = vsel %vm4772, %v2163, 0.0
    %v5066 = vadd.f32 %v5064, %v5065
    %v5067 = vsel %vm4772, %v2559, 0.0
    %v5068 = vadd.f32 %v5066, %v5067
    %v5069 = vsel %vm4772, %v2955, 0.0
    %v5070 = vadd.f32 %v5068, %v5069
    %v5071 = vsel %vm4772, %v3351, 0.0
    %v5072 = vadd.f32 %v5070, %v5071
    %v5073 = vsel %vm4772, %v3747, 0.0
    %v5074 = vadd.f32 %v5072, %v5073
    %v5075 = vsel %vm4772, %v4143, 0.0
    %v5076 = vadd.f32 %v5074, %v5075
    %v5077 = vsel %vm4772, %v4539, 0.0
    %v5078 = vadd.f32 %v5076, %v5077
    %v5079 = vsel %vm4772, %v1136, 0.0
    %v5080 = vsel %vm4772, %v1652, 0.0
    %v5081 = vadd.f32 %v5079, %v5080
    %v5082 = vsel %vm4772, %v2168, 0.0
    %v5083 = vadd.f32 %v5081, %v5082
    %v5084 = vsel %vm4772, %v2564, 0.0
    %v5085 = vadd.f32 %v5083, %v5084
    %v5086 = vsel %vm4772, %v2960, 0.0
    %v5087 = vadd.f32 %v5085, %v5086
    %v5088 = vsel %vm4772, %v3356, 0.0
    %v5089 = vadd.f32 %v5087, %v5088
    %v5090 = vsel %vm4772, %v3752, 0.0
    %v5091 = vadd.f32 %v5089, %v5090
    %v5092 = vsel %vm4772, %v4148, 0.0
    %v5093 = vadd.f32 %v5091, %v5092
    %v5094 = vsel %vm4772, %v4544, 0.0
    %v5095 = vadd.f32 %v5093, %v5094
    %v5096 = vsel %vm4772, %v1141, 0.0
    %v5097 = vsel %vm4772, %v1657, 0.0
    %v5098 = vadd.f32 %v5096, %v5097
    %v5099 = vsel %vm4772, %v2173, 0.0
    %v5100 = vadd.f32 %v5098, %v5099
    %v5101 = vsel %vm4772, %v2569, 0.0
    %v5102 = vadd.f32 %v5100, %v5101
    %v5103 = vsel %vm4772, %v2965, 0.0
    %v5104 = vadd.f32 %v5102, %v5103
    %v5105 = vsel %vm4772, %v3361, 0.0
    %v5106 = vadd.f32 %v5104, %v5105
    %v5107 = vsel %vm4772, %v3757, 0.0
    %v5108 = vadd.f32 %v5106, %v5107
    %v5109 = vsel %vm4772, %v4153, 0.0
    %v5110 = vadd.f32 %v5108, %v5109
    %v5111 = vsel %vm4772, %v4549, 0.0
    %v5112 = vadd.f32 %v5110, %v5111
    %v5113 = vsel %vm4772, %v1146, 0.0
    %v5114 = vsel %vm4772, %v1662, 0.0
    %v5115 = vadd.f32 %v5113, %v5114
    %v5116 = vsel %vm4772, %v2178, 0.0
    %v5117 = vadd.f32 %v5115, %v5116
    %v5118 = vsel %vm4772, %v2574, 0.0
    %v5119 = vadd.f32 %v5117, %v5118
    %v5120 = vsel %vm4772, %v2970, 0.0
    %v5121 = vadd.f32 %v5119, %v5120
    %v5122 = vsel %vm4772, %v3366, 0.0
    %v5123 = vadd.f32 %v5121, %v5122
    %v5124 = vsel %vm4772, %v3762, 0.0
    %v5125 = vadd.f32 %v5123, %v5124
    %v5126 = vsel %vm4772, %v4158, 0.0
    %v5127 = vadd.f32 %v5125, %v5126
    %v5128 = vsel %vm4772, %v4554, 0.0
    %v5129 = vadd.f32 %v5127, %v5128
    %v5130 = vsel %vm4772, %v1151, 0.0
    %v5131 = vsel %vm4772, %v1667, 0.0
    %v5132 = vadd.f32 %v5130, %v5131
    %v5133 = vsel %vm4772, %v2183, 0.0
    %v5134 = vadd.f32 %v5132, %v5133
    %v5135 = vsel %vm4772, %v2579, 0.0
    %v5136 = vadd.f32 %v5134, %v5135
    %v5137 = vsel %vm4772, %v2975, 0.0
    %v5138 = vadd.f32 %v5136, %v5137
    %v5139 = vsel %vm4772, %v3371, 0.0
    %v5140 = vadd.f32 %v5138, %v5139
    %v5141 = vsel %vm4772, %v3767, 0.0
    %v5142 = vadd.f32 %v5140, %v5141
    %v5143 = vsel %vm4772, %v4163, 0.0
    %v5144 = vadd.f32 %v5142, %v5143
    %v5145 = vsel %vm4772, %v4559, 0.0
    %v5146 = vadd.f32 %v5144, %v5145
    %v5147 = vsel %vm4772, %v1156, 0.0
    %v5148 = vsel %vm4772, %v1672, 0.0
    %v5149 = vadd.f32 %v5147, %v5148
    %v5150 = vsel %vm4772, %v2188, 0.0
    %v5151 = vadd.f32 %v5149, %v5150
    %v5152 = vsel %vm4772, %v2584, 0.0
    %v5153 = vadd.f32 %v5151, %v5152
    %v5154 = vsel %vm4772, %v2980, 0.0
    %v5155 = vadd.f32 %v5153, %v5154
    %v5156 = vsel %vm4772, %v3376, 0.0
    %v5157 = vadd.f32 %v5155, %v5156
    %v5158 = vsel %vm4772, %v3772, 0.0
    %v5159 = vadd.f32 %v5157, %v5158
    %v5160 = vsel %vm4772, %v4168, 0.0
    %v5161 = vadd.f32 %v5159, %v5160
    %v5162 = vsel %vm4772, %v4564, 0.0
    %v5163 = vadd.f32 %v5161, %v5162
    %v5164 = vsel %vm4772, %v1161, 0.0
    %v5165 = vsel %vm4772, %v1677, 0.0
    %v5166 = vadd.f32 %v5164, %v5165
    %v5167 = vsel %vm4772, %v2193, 0.0
    %v5168 = vadd.f32 %v5166, %v5167
    %v5169 = vsel %vm4772, %v2589, 0.0
    %v5170 = vadd.f32 %v5168, %v5169
    %v5171 = vsel %vm4772, %v2985, 0.0
    %v5172 = vadd.f32 %v5170, %v5171
    %v5173 = vsel %vm4772, %v3381, 0.0
    %v5174 = vadd.f32 %v5172, %v5173
    %v5175 = vsel %vm4772, %v3777, 0.0
    %v5176 = vadd.f32 %v5174, %v5175
    %v5177 = vsel %vm4772, %v4173, 0.0
    %v5178 = vadd.f32 %v5176, %v5177
    %v5179 = vsel %vm4772, %v4569, 0.0
    %v5180 = vadd.f32 %v5178, %v5179
    %v5181 = vsel %vm4772, %v1166, 0.0
    %v5182 = vsel %vm4772, %v1682, 0.0
    %v5183 = vadd.f32 %v5181, %v5182
    %v5184 = vsel %vm4772, %v2198, 0.0
    %v5185 = vadd.f32 %v5183, %v5184
    %v5186 = vsel %vm4772, %v2594, 0.0
    %v5187 = vadd.f32 %v5185, %v5186
    %v5188 = vsel %vm4772, %v2990, 0.0
    %v5189 = vadd.f32 %v5187, %v5188
    %v5190 = vsel %vm4772, %v3386, 0.0
    %v5191 = vadd.f32 %v5189, %v5190
    %v5192 = vsel %vm4772, %v3782, 0.0
    %v5193 = vadd.f32 %v5191, %v5192
    %v5194 = vsel %vm4772, %v4178, 0.0
    %v5195 = vadd.f32 %v5193, %v5194
    %v5196 = vsel %vm4772, %v4574, 0.0
    %v5197 = vadd.f32 %v5195, %v5196
    %v5198 = vsel %vm4772, %v1171, 0.0
    %v5199 = vsel %vm4772, %v1687, 0.0
    %v5200 = vadd.f32 %v5198, %v5199
    %v5201 = vsel %vm4772, %v2203, 0.0
    %v5202 = vadd.f32 %v5200, %v5201
    %v5203 = vsel %vm4772, %v2599, 0.0
    %v5204 = vadd.f32 %v5202, %v5203
    %v5205 = vsel %vm4772, %v2995, 0.0
    %v5206 = vadd.f32 %v5204, %v5205
    %v5207 = vsel %vm4772, %v3391, 0.0
    %v5208 = vadd.f32 %v5206, %v5207
    %v5209 = vsel %vm4772, %v3787, 0.0
    %v5210 = vadd.f32 %v5208, %v5209
    %v5211 = vsel %vm4772, %v4183, 0.0
    %v5212 = vadd.f32 %v5210, %v5211
    %v5213 = vsel %vm4772, %v4579, 0.0
    %v5214 = vadd.f32 %v5212, %v5213
    %v5215 = vsel %vm4772, %v1176, 0.0
    %v5216 = vsel %vm4772, %v1692, 0.0
    %v5217 = vadd.f32 %v5215, %v5216
    %v5218 = vsel %vm4772, %v2208, 0.0
    %v5219 = vadd.f32 %v5217, %v5218
    %v5220 = vsel %vm4772, %v2604, 0.0
    %v5221 = vadd.f32 %v5219, %v5220
    %v5222 = vsel %vm4772, %v3000, 0.0
    %v5223 = vadd.f32 %v5221, %v5222
    %v5224 = vsel %vm4772, %v3396, 0.0
    %v5225 = vadd.f32 %v5223, %v5224
    %v5226 = vsel %vm4772, %v3792, 0.0
    %v5227 = vadd.f32 %v5225, %v5226
    %v5228 = vsel %vm4772, %v4188, 0.0
    %v5229 = vadd.f32 %v5227, %v5228
    %v5230 = vsel %vm4772, %v4584, 0.0
    %v5231 = vadd.f32 %v5229, %v5230
    %v5232 = vsel %vm4772, %v1181, 0.0
    %v5233 = vsel %vm4772, %v1697, 0.0
    %v5234 = vadd.f32 %v5232, %v5233
    %v5235 = vsel %vm4772, %v2213, 0.0
    %v5236 = vadd.f32 %v5234, %v5235
    %v5237 = vsel %vm4772, %v2609, 0.0
    %v5238 = vadd.f32 %v5236, %v5237
    %v5239 = vsel %vm4772, %v3005, 0.0
    %v5240 = vadd.f32 %v5238, %v5239
    %v5241 = vsel %vm4772, %v3401, 0.0
    %v5242 = vadd.f32 %v5240, %v5241
    %v5243 = vsel %vm4772, %v3797, 0.0
    %v5244 = vadd.f32 %v5242, %v5243
    %v5245 = vsel %vm4772, %v4193, 0.0
    %v5246 = vadd.f32 %v5244, %v5245
    %v5247 = vsel %vm4772, %v4589, 0.0
    %v5248 = vadd.f32 %v5246, %v5247
    %v5249 = vsel %vm4772, %v1186, 0.0
    %v5250 = vsel %vm4772, %v1702, 0.0
    %v5251 = vadd.f32 %v5249, %v5250
    %v5252 = vsel %vm4772, %v2218, 0.0
    %v5253 = vadd.f32 %v5251, %v5252
    %v5254 = vsel %vm4772, %v2614, 0.0
    %v5255 = vadd.f32 %v5253, %v5254
    %v5256 = vsel %vm4772, %v3010, 0.0
    %v5257 = vadd.f32 %v5255, %v5256
    %v5258 = vsel %vm4772, %v3406, 0.0
    %v5259 = vadd.f32 %v5257, %v5258
    %v5260 = vsel %vm4772, %v3802, 0.0
    %v5261 = vadd.f32 %v5259, %v5260
    %v5262 = vsel %vm4772, %v4198, 0.0
    %v5263 = vadd.f32 %v5261, %v5262
    %v5264 = vsel %vm4772, %v4594, 0.0
    %v5265 = vadd.f32 %v5263, %v5264
    %v5266 = vsel %vm4772, %v1191, 0.0
    %v5267 = vsel %vm4772, %v1707, 0.0
    %v5268 = vadd.f32 %v5266, %v5267
    %v5269 = vsel %vm4772, %v2223, 0.0
    %v5270 = vadd.f32 %v5268, %v5269
    %v5271 = vsel %vm4772, %v2619, 0.0
    %v5272 = vadd.f32 %v5270, %v5271
    %v5273 = vsel %vm4772, %v3015, 0.0
    %v5274 = vadd.f32 %v5272, %v5273
    %v5275 = vsel %vm4772, %v3411, 0.0
    %v5276 = vadd.f32 %v5274, %v5275
    %v5277 = vsel %vm4772, %v3807, 0.0
    %v5278 = vadd.f32 %v5276, %v5277
    %v5279 = vsel %vm4772, %v4203, 0.0
    %v5280 = vadd.f32 %v5278, %v5279
    %v5281 = vsel %vm4772, %v4599, 0.0
    %v5282 = vadd.f32 %v5280, %v5281
    %v5283 = vsel %vm4772, %v1196, 0.0
    %v5284 = vsel %vm4772, %v1712, 0.0
    %v5285 = vadd.f32 %v5283, %v5284
    %v5286 = vsel %vm4772, %v2228, 0.0
    %v5287 = vadd.f32 %v5285, %v5286
    %v5288 = vsel %vm4772, %v2624, 0.0
    %v5289 = vadd.f32 %v5287, %v5288
    %v5290 = vsel %vm4772, %v3020, 0.0
    %v5291 = vadd.f32 %v5289, %v5290
    %v5292 = vsel %vm4772, %v3416, 0.0
    %v5293 = vadd.f32 %v5291, %v5292
    %v5294 = vsel %vm4772, %v3812, 0.0
    %v5295 = vadd.f32 %v5293, %v5294
    %v5296 = vsel %vm4772, %v4208, 0.0
    %v5297 = vadd.f32 %v5295, %v5296
    %v5298 = vsel %vm4772, %v4604, 0.0
    %v5299 = vadd.f32 %v5297, %v5298
    %v5300 = vsel %vm4772, %v1201, 0.0
    %v5301 = vsel %vm4772, %v1717, 0.0
    %v5302 = vadd.f32 %v5300, %v5301
    %v5303 = vsel %vm4772, %v2233, 0.0
    %v5304 = vadd.f32 %v5302, %v5303
    %v5305 = vsel %vm4772, %v2629, 0.0
    %v5306 = vadd.f32 %v5304, %v5305
    %v5307 = vsel %vm4772, %v3025, 0.0
    %v5308 = vadd.f32 %v5306, %v5307
    %v5309 = vsel %vm4772, %v3421, 0.0
    %v5310 = vadd.f32 %v5308, %v5309
    %v5311 = vsel %vm4772, %v3817, 0.0
    %v5312 = vadd.f32 %v5310, %v5311
    %v5313 = vsel %vm4772, %v4213, 0.0
    %v5314 = vadd.f32 %v5312, %v5313
    %v5315 = vsel %vm4772, %v4609, 0.0
    %v5316 = vadd.f32 %v5314, %v5315
    %v5317 = vsel %vm4772, %v1206, 0.0
    %v5318 = vsel %vm4772, %v1722, 0.0
    %v5319 = vadd.f32 %v5317, %v5318
    %v5320 = vsel %vm4772, %v2238, 0.0
    %v5321 = vadd.f32 %v5319, %v5320
    %v5322 = vsel %vm4772, %v2634, 0.0
    %v5323 = vadd.f32 %v5321, %v5322
    %v5324 = vsel %vm4772, %v3030, 0.0
    %v5325 = vadd.f32 %v5323, %v5324
    %v5326 = vsel %vm4772, %v3426, 0.0
    %v5327 = vadd.f32 %v5325, %v5326
    %v5328 = vsel %vm4772, %v3822, 0.0
    %v5329 = vadd.f32 %v5327, %v5328
    %v5330 = vsel %vm4772, %v4218, 0.0
    %v5331 = vadd.f32 %v5329, %v5330
    %v5332 = vsel %vm4772, %v4614, 0.0
    %v5333 = vadd.f32 %v5331, %v5332
    %v5334 = vsel %vm4772, %v1211, 0.0
    %v5335 = vsel %vm4772, %v1727, 0.0
    %v5336 = vadd.f32 %v5334, %v5335
    %v5337 = vsel %vm4772, %v2243, 0.0
    %v5338 = vadd.f32 %v5336, %v5337
    %v5339 = vsel %vm4772, %v2639, 0.0
    %v5340 = vadd.f32 %v5338, %v5339
    %v5341 = vsel %vm4772, %v3035, 0.0
    %v5342 = vadd.f32 %v5340, %v5341
    %v5343 = vsel %vm4772, %v3431, 0.0
    %v5344 = vadd.f32 %v5342, %v5343
    %v5345 = vsel %vm4772, %v3827, 0.0
    %v5346 = vadd.f32 %v5344, %v5345
    %v5347 = vsel %vm4772, %v4223, 0.0
    %v5348 = vadd.f32 %v5346, %v5347
    %v5349 = vsel %vm4772, %v4619, 0.0
    %v5350 = vadd.f32 %v5348, %v5349
    %v5351 = vsel %vm4772, %v1216, 0.0
    %v5352 = vsel %vm4772, %v1732, 0.0
    %v5353 = vadd.f32 %v5351, %v5352
    %v5354 = vsel %vm4772, %v2248, 0.0
    %v5355 = vadd.f32 %v5353, %v5354
    %v5356 = vsel %vm4772, %v2644, 0.0
    %v5357 = vadd.f32 %v5355, %v5356
    %v5358 = vsel %vm4772, %v3040, 0.0
    %v5359 = vadd.f32 %v5357, %v5358
    %v5360 = vsel %vm4772, %v3436, 0.0
    %v5361 = vadd.f32 %v5359, %v5360
    %v5362 = vsel %vm4772, %v3832, 0.0
    %v5363 = vadd.f32 %v5361, %v5362
    %v5364 = vsel %vm4772, %v4228, 0.0
    %v5365 = vadd.f32 %v5363, %v5364
    %v5366 = vsel %vm4772, %v4624, 0.0
    %v5367 = vadd.f32 %v5365, %v5366
    %v5368 = vsel %vm4772, %v1221, 0.0
    %v5369 = vsel %vm4772, %v1737, 0.0
    %v5370 = vadd.f32 %v5368, %v5369
    %v5371 = vsel %vm4772, %v2253, 0.0
    %v5372 = vadd.f32 %v5370, %v5371
    %v5373 = vsel %vm4772, %v2649, 0.0
    %v5374 = vadd.f32 %v5372, %v5373
    %v5375 = vsel %vm4772, %v3045, 0.0
    %v5376 = vadd.f32 %v5374, %v5375
    %v5377 = vsel %vm4772, %v3441, 0.0
    %v5378 = vadd.f32 %v5376, %v5377
    %v5379 = vsel %vm4772, %v3837, 0.0
    %v5380 = vadd.f32 %v5378, %v5379
    %v5381 = vsel %vm4772, %v4233, 0.0
    %v5382 = vadd.f32 %v5380, %v5381
    %v5383 = vsel %vm4772, %v4629, 0.0
    %v5384 = vadd.f32 %v5382, %v5383
    %v5385 = vsel %vm4772, %v1226, 0.0
    %v5386 = vsel %vm4772, %v1742, 0.0
    %v5387 = vadd.f32 %v5385, %v5386
    %v5388 = vsel %vm4772, %v2258, 0.0
    %v5389 = vadd.f32 %v5387, %v5388
    %v5390 = vsel %vm4772, %v2654, 0.0
    %v5391 = vadd.f32 %v5389, %v5390
    %v5392 = vsel %vm4772, %v3050, 0.0
    %v5393 = vadd.f32 %v5391, %v5392
    %v5394 = vsel %vm4772, %v3446, 0.0
    %v5395 = vadd.f32 %v5393, %v5394
    %v5396 = vsel %vm4772, %v3842, 0.0
    %v5397 = vadd.f32 %v5395, %v5396
    %v5398 = vsel %vm4772, %v4238, 0.0
    %v5399 = vadd.f32 %v5397, %v5398
    %v5400 = vsel %vm4772, %v4634, 0.0
    %v5401 = vadd.f32 %v5399, %v5400
    %v5402 = vsel %vm4772, %v1231, 0.0
    %v5403 = vsel %vm4772, %v1747, 0.0
    %v5404 = vadd.f32 %v5402, %v5403
    %v5405 = vsel %vm4772, %v2263, 0.0
    %v5406 = vadd.f32 %v5404, %v5405
    %v5407 = vsel %vm4772, %v2659, 0.0
    %v5408 = vadd.f32 %v5406, %v5407
    %v5409 = vsel %vm4772, %v3055, 0.0
    %v5410 = vadd.f32 %v5408, %v5409
    %v5411 = vsel %vm4772, %v3451, 0.0
    %v5412 = vadd.f32 %v5410, %v5411
    %v5413 = vsel %vm4772, %v3847, 0.0
    %v5414 = vadd.f32 %v5412, %v5413
    %v5415 = vsel %vm4772, %v4243, 0.0
    %v5416 = vadd.f32 %v5414, %v5415
    %v5417 = vsel %vm4772, %v4639, 0.0
    %v5418 = vadd.f32 %v5416, %v5417
    %v5419 = vsel %vm4772, %v1236, 0.0
    %v5420 = vsel %vm4772, %v1752, 0.0
    %v5421 = vadd.f32 %v5419, %v5420
    %v5422 = vsel %vm4772, %v2268, 0.0
    %v5423 = vadd.f32 %v5421, %v5422
    %v5424 = vsel %vm4772, %v2664, 0.0
    %v5425 = vadd.f32 %v5423, %v5424
    %v5426 = vsel %vm4772, %v3060, 0.0
    %v5427 = vadd.f32 %v5425, %v5426
    %v5428 = vsel %vm4772, %v3456, 0.0
    %v5429 = vadd.f32 %v5427, %v5428
    %v5430 = vsel %vm4772, %v3852, 0.0
    %v5431 = vadd.f32 %v5429, %v5430
    %v5432 = vsel %vm4772, %v4248, 0.0
    %v5433 = vadd.f32 %v5431, %v5432
    %v5434 = vsel %vm4772, %v4644, 0.0
    %v5435 = vadd.f32 %v5433, %v5434
    %v5436 = vsel %vm4772, %v1241, 0.0
    %v5437 = vsel %vm4772, %v1757, 0.0
    %v5438 = vadd.f32 %v5436, %v5437
    %v5439 = vsel %vm4772, %v2273, 0.0
    %v5440 = vadd.f32 %v5438, %v5439
    %v5441 = vsel %vm4772, %v2669, 0.0
    %v5442 = vadd.f32 %v5440, %v5441
    %v5443 = vsel %vm4772, %v3065, 0.0
    %v5444 = vadd.f32 %v5442, %v5443
    %v5445 = vsel %vm4772, %v3461, 0.0
    %v5446 = vadd.f32 %v5444, %v5445
    %v5447 = vsel %vm4772, %v3857, 0.0
    %v5448 = vadd.f32 %v5446, %v5447
    %v5449 = vsel %vm4772, %v4253, 0.0
    %v5450 = vadd.f32 %v5448, %v5449
    %v5451 = vsel %vm4772, %v4649, 0.0
    %v5452 = vadd.f32 %v5450, %v5451
    %v5453 = vsel %vm4772, %v1246, 0.0
    %v5454 = vsel %vm4772, %v1762, 0.0
    %v5455 = vadd.f32 %v5453, %v5454
    %v5456 = vsel %vm4772, %v2278, 0.0
    %v5457 = vadd.f32 %v5455, %v5456
    %v5458 = vsel %vm4772, %v2674, 0.0
    %v5459 = vadd.f32 %v5457, %v5458
    %v5460 = vsel %vm4772, %v3070, 0.0
    %v5461 = vadd.f32 %v5459, %v5460
    %v5462 = vsel %vm4772, %v3466, 0.0
    %v5463 = vadd.f32 %v5461, %v5462
    %v5464 = vsel %vm4772, %v3862, 0.0
    %v5465 = vadd.f32 %v5463, %v5464
    %v5466 = vsel %vm4772, %v4258, 0.0
    %v5467 = vadd.f32 %v5465, %v5466
    %v5468 = vsel %vm4772, %v4654, 0.0
    %v5469 = vadd.f32 %v5467, %v5468
    %v5470 = vsel %vm4772, %v1251, 0.0
    %v5471 = vsel %vm4772, %v1767, 0.0
    %v5472 = vadd.f32 %v5470, %v5471
    %v5473 = vsel %vm4772, %v2283, 0.0
    %v5474 = vadd.f32 %v5472, %v5473
    %v5475 = vsel %vm4772, %v2679, 0.0
    %v5476 = vadd.f32 %v5474, %v5475
    %v5477 = vsel %vm4772, %v3075, 0.0
    %v5478 = vadd.f32 %v5476, %v5477
    %v5479 = vsel %vm4772, %v3471, 0.0
    %v5480 = vadd.f32 %v5478, %v5479
    %v5481 = vsel %vm4772, %v3867, 0.0
    %v5482 = vadd.f32 %v5480, %v5481
    %v5483 = vsel %vm4772, %v4263, 0.0
    %v5484 = vadd.f32 %v5482, %v5483
    %v5485 = vsel %vm4772, %v4659, 0.0
    %v5486 = vadd.f32 %v5484, %v5485
    %v5487 = vsel %vm4772, %v1256, 0.0
    %v5488 = vsel %vm4772, %v1772, 0.0
    %v5489 = vadd.f32 %v5487, %v5488
    %v5490 = vsel %vm4772, %v2288, 0.0
    %v5491 = vadd.f32 %v5489, %v5490
    %v5492 = vsel %vm4772, %v2684, 0.0
    %v5493 = vadd.f32 %v5491, %v5492
    %v5494 = vsel %vm4772, %v3080, 0.0
    %v5495 = vadd.f32 %v5493, %v5494
    %v5496 = vsel %vm4772, %v3476, 0.0
    %v5497 = vadd.f32 %v5495, %v5496
    %v5498 = vsel %vm4772, %v3872, 0.0
    %v5499 = vadd.f32 %v5497, %v5498
    %v5500 = vsel %vm4772, %v4268, 0.0
    %v5501 = vadd.f32 %v5499, %v5500
    %v5502 = vsel %vm4772, %v4664, 0.0
    %v5503 = vadd.f32 %v5501, %v5502
    %v5504 = vsel %vm4772, %v1261, 0.0
    %v5505 = vsel %vm4772, %v1777, 0.0
    %v5506 = vadd.f32 %v5504, %v5505
    %v5507 = vsel %vm4772, %v2293, 0.0
    %v5508 = vadd.f32 %v5506, %v5507
    %v5509 = vsel %vm4772, %v2689, 0.0
    %v5510 = vadd.f32 %v5508, %v5509
    %v5511 = vsel %vm4772, %v3085, 0.0
    %v5512 = vadd.f32 %v5510, %v5511
    %v5513 = vsel %vm4772, %v3481, 0.0
    %v5514 = vadd.f32 %v5512, %v5513
    %v5515 = vsel %vm4772, %v3877, 0.0
    %v5516 = vadd.f32 %v5514, %v5515
    %v5517 = vsel %vm4772, %v4273, 0.0
    %v5518 = vadd.f32 %v5516, %v5517
    %v5519 = vsel %vm4772, %v4669, 0.0
    %v5520 = vadd.f32 %v5518, %v5519
    %v5521 = vsel %vm4772, %v1266, 0.0
    %v5522 = vsel %vm4772, %v1782, 0.0
    %v5523 = vadd.f32 %v5521, %v5522
    %v5524 = vsel %vm4772, %v2298, 0.0
    %v5525 = vadd.f32 %v5523, %v5524
    %v5526 = vsel %vm4772, %v2694, 0.0
    %v5527 = vadd.f32 %v5525, %v5526
    %v5528 = vsel %vm4772, %v3090, 0.0
    %v5529 = vadd.f32 %v5527, %v5528
    %v5530 = vsel %vm4772, %v3486, 0.0
    %v5531 = vadd.f32 %v5529, %v5530
    %v5532 = vsel %vm4772, %v3882, 0.0
    %v5533 = vadd.f32 %v5531, %v5532
    %v5534 = vsel %vm4772, %v4278, 0.0
    %v5535 = vadd.f32 %v5533, %v5534
    %v5536 = vsel %vm4772, %v4674, 0.0
    %v5537 = vadd.f32 %v5535, %v5536
    %v5538 = vsel %vm4772, %v1271, 0.0
    %v5539 = vsel %vm4772, %v1787, 0.0
    %v5540 = vadd.f32 %v5538, %v5539
    %v5541 = vsel %vm4772, %v2303, 0.0
    %v5542 = vadd.f32 %v5540, %v5541
    %v5543 = vsel %vm4772, %v2699, 0.0
    %v5544 = vadd.f32 %v5542, %v5543
    %v5545 = vsel %vm4772, %v3095, 0.0
    %v5546 = vadd.f32 %v5544, %v5545
    %v5547 = vsel %vm4772, %v3491, 0.0
    %v5548 = vadd.f32 %v5546, %v5547
    %v5549 = vsel %vm4772, %v3887, 0.0
    %v5550 = vadd.f32 %v5548, %v5549
    %v5551 = vsel %vm4772, %v4283, 0.0
    %v5552 = vadd.f32 %v5550, %v5551
    %v5553 = vsel %vm4772, %v4679, 0.0
    %v5554 = vadd.f32 %v5552, %v5553
    %v5555 = vsel %vm4772, %v1276, 0.0
    %v5556 = vsel %vm4772, %v1792, 0.0
    %v5557 = vadd.f32 %v5555, %v5556
    %v5558 = vsel %vm4772, %v2308, 0.0
    %v5559 = vadd.f32 %v5557, %v5558
    %v5560 = vsel %vm4772, %v2704, 0.0
    %v5561 = vadd.f32 %v5559, %v5560
    %v5562 = vsel %vm4772, %v3100, 0.0
    %v5563 = vadd.f32 %v5561, %v5562
    %v5564 = vsel %vm4772, %v3496, 0.0
    %v5565 = vadd.f32 %v5563, %v5564
    %v5566 = vsel %vm4772, %v3892, 0.0
    %v5567 = vadd.f32 %v5565, %v5566
    %v5568 = vsel %vm4772, %v4288, 0.0
    %v5569 = vadd.f32 %v5567, %v5568
    %v5570 = vsel %vm4772, %v4684, 0.0
    %v5571 = vadd.f32 %v5569, %v5570
    %v5572 = vsel %vm4772, %v1281, 0.0
    %v5573 = vsel %vm4772, %v1797, 0.0
    %v5574 = vadd.f32 %v5572, %v5573
    %v5575 = vsel %vm4772, %v2313, 0.0
    %v5576 = vadd.f32 %v5574, %v5575
    %v5577 = vsel %vm4772, %v2709, 0.0
    %v5578 = vadd.f32 %v5576, %v5577
    %v5579 = vsel %vm4772, %v3105, 0.0
    %v5580 = vadd.f32 %v5578, %v5579
    %v5581 = vsel %vm4772, %v3501, 0.0
    %v5582 = vadd.f32 %v5580, %v5581
    %v5583 = vsel %vm4772, %v3897, 0.0
    %v5584 = vadd.f32 %v5582, %v5583
    %v5585 = vsel %vm4772, %v4293, 0.0
    %v5586 = vadd.f32 %v5584, %v5585
    %v5587 = vsel %vm4772, %v4689, 0.0
    %v5588 = vadd.f32 %v5586, %v5587
    %v5589 = vsel %vm4772, %v1286, 0.0
    %v5590 = vsel %vm4772, %v1802, 0.0
    %v5591 = vadd.f32 %v5589, %v5590
    %v5592 = vsel %vm4772, %v2318, 0.0
    %v5593 = vadd.f32 %v5591, %v5592
    %v5594 = vsel %vm4772, %v2714, 0.0
    %v5595 = vadd.f32 %v5593, %v5594
    %v5596 = vsel %vm4772, %v3110, 0.0
    %v5597 = vadd.f32 %v5595, %v5596
    %v5598 = vsel %vm4772, %v3506, 0.0
    %v5599 = vadd.f32 %v5597, %v5598
    %v5600 = vsel %vm4772, %v3902, 0.0
    %v5601 = vadd.f32 %v5599, %v5600
    %v5602 = vsel %vm4772, %v4298, 0.0
    %v5603 = vadd.f32 %v5601, %v5602
    %v5604 = vsel %vm4772, %v4694, 0.0
    %v5605 = vadd.f32 %v5603, %v5604
    %v5606 = vsel %vm4772, %v1291, 0.0
    %v5607 = vsel %vm4772, %v1807, 0.0
    %v5608 = vadd.f32 %v5606, %v5607
    %v5609 = vsel %vm4772, %v2323, 0.0
    %v5610 = vadd.f32 %v5608, %v5609
    %v5611 = vsel %vm4772, %v2719, 0.0
    %v5612 = vadd.f32 %v5610, %v5611
    %v5613 = vsel %vm4772, %v3115, 0.0
    %v5614 = vadd.f32 %v5612, %v5613
    %v5615 = vsel %vm4772, %v3511, 0.0
    %v5616 = vadd.f32 %v5614, %v5615
    %v5617 = vsel %vm4772, %v3907, 0.0
    %v5618 = vadd.f32 %v5616, %v5617
    %v5619 = vsel %vm4772, %v4303, 0.0
    %v5620 = vadd.f32 %v5618, %v5619
    %v5621 = vsel %vm4772, %v4699, 0.0
    %v5622 = vadd.f32 %v5620, %v5621
    %v5623 = vsel %vm4772, %v1296, 0.0
    %v5624 = vsel %vm4772, %v1812, 0.0
    %v5625 = vadd.f32 %v5623, %v5624
    %v5626 = vsel %vm4772, %v2328, 0.0
    %v5627 = vadd.f32 %v5625, %v5626
    %v5628 = vsel %vm4772, %v2724, 0.0
    %v5629 = vadd.f32 %v5627, %v5628
    %v5630 = vsel %vm4772, %v3120, 0.0
    %v5631 = vadd.f32 %v5629, %v5630
    %v5632 = vsel %vm4772, %v3516, 0.0
    %v5633 = vadd.f32 %v5631, %v5632
    %v5634 = vsel %vm4772, %v3912, 0.0
    %v5635 = vadd.f32 %v5633, %v5634
    %v5636 = vsel %vm4772, %v4308, 0.0
    %v5637 = vadd.f32 %v5635, %v5636
    %v5638 = vsel %vm4772, %v4704, 0.0
    %v5639 = vadd.f32 %v5637, %v5638
    %v5640 = vsel %vm4772, %v1301, 0.0
    %v5641 = vsel %vm4772, %v1817, 0.0
    %v5642 = vadd.f32 %v5640, %v5641
    %v5643 = vsel %vm4772, %v2333, 0.0
    %v5644 = vadd.f32 %v5642, %v5643
    %v5645 = vsel %vm4772, %v2729, 0.0
    %v5646 = vadd.f32 %v5644, %v5645
    %v5647 = vsel %vm4772, %v3125, 0.0
    %v5648 = vadd.f32 %v5646, %v5647
    %v5649 = vsel %vm4772, %v3521, 0.0
    %v5650 = vadd.f32 %v5648, %v5649
    %v5651 = vsel %vm4772, %v3917, 0.0
    %v5652 = vadd.f32 %v5650, %v5651
    %v5653 = vsel %vm4772, %v4313, 0.0
    %v5654 = vadd.f32 %v5652, %v5653
    %v5655 = vsel %vm4772, %v4709, 0.0
    %v5656 = vadd.f32 %v5654, %v5655
    %v5657 = vsel %vm4772, %v1306, 0.0
    %v5658 = vsel %vm4772, %v1822, 0.0
    %v5659 = vadd.f32 %v5657, %v5658
    %v5660 = vsel %vm4772, %v2338, 0.0
    %v5661 = vadd.f32 %v5659, %v5660
    %v5662 = vsel %vm4772, %v2734, 0.0
    %v5663 = vadd.f32 %v5661, %v5662
    %v5664 = vsel %vm4772, %v3130, 0.0
    %v5665 = vadd.f32 %v5663, %v5664
    %v5666 = vsel %vm4772, %v3526, 0.0
    %v5667 = vadd.f32 %v5665, %v5666
    %v5668 = vsel %vm4772, %v3922, 0.0
    %v5669 = vadd.f32 %v5667, %v5668
    %v5670 = vsel %vm4772, %v4318, 0.0
    %v5671 = vadd.f32 %v5669, %v5670
    %v5672 = vsel %vm4772, %v4714, 0.0
    %v5673 = vadd.f32 %v5671, %v5672
    %v5674 = vsel %vm4772, %v1311, 0.0
    %v5675 = vsel %vm4772, %v1827, 0.0
    %v5676 = vadd.f32 %v5674, %v5675
    %v5677 = vsel %vm4772, %v2343, 0.0
    %v5678 = vadd.f32 %v5676, %v5677
    %v5679 = vsel %vm4772, %v2739, 0.0
    %v5680 = vadd.f32 %v5678, %v5679
    %v5681 = vsel %vm4772, %v3135, 0.0
    %v5682 = vadd.f32 %v5680, %v5681
    %v5683 = vsel %vm4772, %v3531, 0.0
    %v5684 = vadd.f32 %v5682, %v5683
    %v5685 = vsel %vm4772, %v3927, 0.0
    %v5686 = vadd.f32 %v5684, %v5685
    %v5687 = vsel %vm4772, %v4323, 0.0
    %v5688 = vadd.f32 %v5686, %v5687
    %v5689 = vsel %vm4772, %v4719, 0.0
    %v5690 = vadd.f32 %v5688, %v5689
    %v5691 = vsel %vm4772, %v1316, 0.0
    %v5692 = vsel %vm4772, %v1832, 0.0
    %v5693 = vadd.f32 %v5691, %v5692
    %v5694 = vsel %vm4772, %v2348, 0.0
    %v5695 = vadd.f32 %v5693, %v5694
    %v5696 = vsel %vm4772, %v2744, 0.0
    %v5697 = vadd.f32 %v5695, %v5696
    %v5698 = vsel %vm4772, %v3140, 0.0
    %v5699 = vadd.f32 %v5697, %v5698
    %v5700 = vsel %vm4772, %v3536, 0.0
    %v5701 = vadd.f32 %v5699, %v5700
    %v5702 = vsel %vm4772, %v3932, 0.0
    %v5703 = vadd.f32 %v5701, %v5702
    %v5704 = vsel %vm4772, %v4328, 0.0
    %v5705 = vadd.f32 %v5703, %v5704
    %v5706 = vsel %vm4772, %v4724, 0.0
    %v5707 = vadd.f32 %v5705, %v5706
    %v5708 = vsel %vm4772, %v1321, 0.0
    %v5709 = vsel %vm4772, %v1837, 0.0
    %v5710 = vadd.f32 %v5708, %v5709
    %v5711 = vsel %vm4772, %v2353, 0.0
    %v5712 = vadd.f32 %v5710, %v5711
    %v5713 = vsel %vm4772, %v2749, 0.0
    %v5714 = vadd.f32 %v5712, %v5713
    %v5715 = vsel %vm4772, %v3145, 0.0
    %v5716 = vadd.f32 %v5714, %v5715
    %v5717 = vsel %vm4772, %v3541, 0.0
    %v5718 = vadd.f32 %v5716, %v5717
    %v5719 = vsel %vm4772, %v3937, 0.0
    %v5720 = vadd.f32 %v5718, %v5719
    %v5721 = vsel %vm4772, %v4333, 0.0
    %v5722 = vadd.f32 %v5720, %v5721
    %v5723 = vsel %vm4772, %v4729, 0.0
    %v5724 = vadd.f32 %v5722, %v5723
    %v5725 = vsel %vm4772, %v1326, 0.0
    %v5726 = vsel %vm4772, %v1842, 0.0
    %v5727 = vadd.f32 %v5725, %v5726
    %v5728 = vsel %vm4772, %v2358, 0.0
    %v5729 = vadd.f32 %v5727, %v5728
    %v5730 = vsel %vm4772, %v2754, 0.0
    %v5731 = vadd.f32 %v5729, %v5730
    %v5732 = vsel %vm4772, %v3150, 0.0
    %v5733 = vadd.f32 %v5731, %v5732
    %v5734 = vsel %vm4772, %v3546, 0.0
    %v5735 = vadd.f32 %v5733, %v5734
    %v5736 = vsel %vm4772, %v3942, 0.0
    %v5737 = vadd.f32 %v5735, %v5736
    %v5738 = vsel %vm4772, %v4338, 0.0
    %v5739 = vadd.f32 %v5737, %v5738
    %v5740 = vsel %vm4772, %v4734, 0.0
    %v5741 = vadd.f32 %v5739, %v5740
    %v5742 = vsel %vm4772, %v1331, 0.0
    %v5743 = vsel %vm4772, %v1847, 0.0
    %v5744 = vadd.f32 %v5742, %v5743
    %v5745 = vsel %vm4772, %v2363, 0.0
    %v5746 = vadd.f32 %v5744, %v5745
    %v5747 = vsel %vm4772, %v2759, 0.0
    %v5748 = vadd.f32 %v5746, %v5747
    %v5749 = vsel %vm4772, %v3155, 0.0
    %v5750 = vadd.f32 %v5748, %v5749
    %v5751 = vsel %vm4772, %v3551, 0.0
    %v5752 = vadd.f32 %v5750, %v5751
    %v5753 = vsel %vm4772, %v3947, 0.0
    %v5754 = vadd.f32 %v5752, %v5753
    %v5755 = vsel %vm4772, %v4343, 0.0
    %v5756 = vadd.f32 %v5754, %v5755
    %v5757 = vsel %vm4772, %v4739, 0.0
    %v5758 = vadd.f32 %v5756, %v5757
    %v5759 = vsel %vm4772, %v1336, 0.0
    %v5760 = vsel %vm4772, %v1852, 0.0
    %v5761 = vadd.f32 %v5759, %v5760
    %v5762 = vsel %vm4772, %v2368, 0.0
    %v5763 = vadd.f32 %v5761, %v5762
    %v5764 = vsel %vm4772, %v2764, 0.0
    %v5765 = vadd.f32 %v5763, %v5764
    %v5766 = vsel %vm4772, %v3160, 0.0
    %v5767 = vadd.f32 %v5765, %v5766
    %v5768 = vsel %vm4772, %v3556, 0.0
    %v5769 = vadd.f32 %v5767, %v5768
    %v5770 = vsel %vm4772, %v3952, 0.0
    %v5771 = vadd.f32 %v5769, %v5770
    %v5772 = vsel %vm4772, %v4348, 0.0
    %v5773 = vadd.f32 %v5771, %v5772
    %v5774 = vsel %vm4772, %v4744, 0.0
    %v5775 = vadd.f32 %v5773, %v5774
    %v5776 = vsel %vm4772, %v1341, 0.0
    %v5777 = vsel %vm4772, %v1857, 0.0
    %v5778 = vadd.f32 %v5776, %v5777
    %v5779 = vsel %vm4772, %v2373, 0.0
    %v5780 = vadd.f32 %v5778, %v5779
    %v5781 = vsel %vm4772, %v2769, 0.0
    %v5782 = vadd.f32 %v5780, %v5781
    %v5783 = vsel %vm4772, %v3165, 0.0
    %v5784 = vadd.f32 %v5782, %v5783
    %v5785 = vsel %vm4772, %v3561, 0.0
    %v5786 = vadd.f32 %v5784, %v5785
    %v5787 = vsel %vm4772, %v3957, 0.0
    %v5788 = vadd.f32 %v5786, %v5787
    %v5789 = vsel %vm4772, %v4353, 0.0
    %v5790 = vadd.f32 %v5788, %v5789
    %v5791 = vsel %vm4772, %v4749, 0.0
    %v5792 = vadd.f32 %v5790, %v5791
    %v5793 = vsel %vm4772, %v1346, 0.0
    %v5794 = vsel %vm4772, %v1862, 0.0
    %v5795 = vadd.f32 %v5793, %v5794
    %v5796 = vsel %vm4772, %v2378, 0.0
    %v5797 = vadd.f32 %v5795, %v5796
    %v5798 = vsel %vm4772, %v2774, 0.0
    %v5799 = vadd.f32 %v5797, %v5798
    %v5800 = vsel %vm4772, %v3170, 0.0
    %v5801 = vadd.f32 %v5799, %v5800
    %v5802 = vsel %vm4772, %v3566, 0.0
    %v5803 = vadd.f32 %v5801, %v5802
    %v5804 = vsel %vm4772, %v3962, 0.0
    %v5805 = vadd.f32 %v5803, %v5804
    %v5806 = vsel %vm4772, %v4358, 0.0
    %v5807 = vadd.f32 %v5805, %v5806
    %v5808 = vsel %vm4772, %v4754, 0.0
    %v5809 = vadd.f32 %v5807, %v5808
    %v5810 = vsel %vm4772, %v1351, 0.0
    %v5811 = vsel %vm4772, %v1867, 0.0
    %v5812 = vadd.f32 %v5810, %v5811
    %v5813 = vsel %vm4772, %v2383, 0.0
    %v5814 = vadd.f32 %v5812, %v5813
    %v5815 = vsel %vm4772, %v2779, 0.0
    %v5816 = vadd.f32 %v5814, %v5815
    %v5817 = vsel %vm4772, %v3175, 0.0
    %v5818 = vadd.f32 %v5816, %v5817
    %v5819 = vsel %vm4772, %v3571, 0.0
    %v5820 = vadd.f32 %v5818, %v5819
    %v5821 = vsel %vm4772, %v3967, 0.0
    %v5822 = vadd.f32 %v5820, %v5821
    %v5823 = vsel %vm4772, %v4363, 0.0
    %v5824 = vadd.f32 %v5822, %v5823
    %v5825 = vsel %vm4772, %v4759, 0.0
    %v5826 = vadd.f32 %v5824, %v5825
    %v5827 = vsel %vm4772, %v1356, 0.0
    %v5828 = vsel %vm4772, %v1872, 0.0
    %v5829 = vadd.f32 %v5827, %v5828
    %v5830 = vsel %vm4772, %v2388, 0.0
    %v5831 = vadd.f32 %v5829, %v5830
    %v5832 = vsel %vm4772, %v2784, 0.0
    %v5833 = vadd.f32 %v5831, %v5832
    %v5834 = vsel %vm4772, %v3180, 0.0
    %v5835 = vadd.f32 %v5833, %v5834
    %v5836 = vsel %vm4772, %v3576, 0.0
    %v5837 = vadd.f32 %v5835, %v5836
    %v5838 = vsel %vm4772, %v3972, 0.0
    %v5839 = vadd.f32 %v5837, %v5838
    %v5840 = vsel %vm4772, %v4368, 0.0
    %v5841 = vadd.f32 %v5839, %v5840
    %v5842 = vsel %vm4772, %v4764, 0.0
    %v5843 = vadd.f32 %v5841, %v5842
    %v5844 = vsel %vm4772, %v1361, 0.0
    %v5845 = vsel %vm4772, %v1877, 0.0
    %v5846 = vadd.f32 %v5844, %v5845
    %v5847 = vsel %vm4772, %v2393, 0.0
    %v5848 = vadd.f32 %v5846, %v5847
    %v5849 = vsel %vm4772, %v2789, 0.0
    %v5850 = vadd.f32 %v5848, %v5849
    %v5851 = vsel %vm4772, %v3185, 0.0
    %v5852 = vadd.f32 %v5850, %v5851
    %v5853 = vsel %vm4772, %v3581, 0.0
    %v5854 = vadd.f32 %v5852, %v5853
    %v5855 = vsel %vm4772, %v3977, 0.0
    %v5856 = vadd.f32 %v5854, %v5855
    %v5857 = vsel %vm4772, %v4373, 0.0
    %v5858 = vadd.f32 %v5856, %v5857
    %v5859 = vsel %vm4772, %v4769, 0.0
    %v5860 = vadd.f32 %v5858, %v5859
    %v5861 = vmax.f32 %v4789, 0.0
    %v5862 = vmax.f32 %v4806, 0.0
    %v5863 = vmax.f32 %v4823, 0.0
    %v5864 = vmax.f32 %v4840, 0.0
    %v5865 = vmax.f32 %v4857, 0.0
    %v5866 = vmax.f32 %v4874, 0.0
    %v5867 = vmax.f32 %v4891, 0.0
    %v5868 = vmax.f32 %v4908, 0.0
    %v5869 = vmax.f32 %v4925, 0.0
    %v5870 = vmax.f32 %v4942, 0.0
    %v5871 = vmax.f32 %v4959, 0.0
    %v5872 = vmax.f32 %v4976, 0.0
    %v5873 = vmax.f32 %v4993, 0.0
    %v5874 = vmax.f32 %v5010, 0.0
    %v5875 = vmax.f32 %v5027, 0.0
    %v5876 = vmax.f32 %v5044, 0.0
    %v5877 = vmax.f32 %v5061, 0.0
    %v5878 = vmax.f32 %v5078, 0.0
    %v5879 = vmax.f32 %v5095, 0.0
    %v5880 = vmax.f32 %v5112, 0.0
    %v5881 = vmax.f32 %v5129, 0.0
    %v5882 = vmax.f32 %v5146, 0.0
    %v5883 = vmax.f32 %v5163, 0.0
    %v5884 = vmax.f32 %v5180, 0.0
    %v5885 = vmax.f32 %v5197, 0.0
    %v5886 = vmax.f32 %v5214, 0.0
    %v5887 = vmax.f32 %v5231, 0.0
    %v5888 = vmax.f32 %v5248, 0.0
    %v5889 = vmax.f32 %v5265, 0.0
    %v5890 = vmax.f32 %v5282, 0.0
    %v5891 = vmax.f32 %v5299, 0.0
    %v5892 = vmax.f32 %v5316, 0.0
    %v5893 = vmax.f32 %v5333, 0.0
    %v5894 = vmax.f32 %v5350, 0.0
    %v5895 = vmax.f32 %v5367, 0.0
    %v5896 = vmax.f32 %v5384, 0.0
    %v5897 = vmax.f32 %v5401, 0.0
    %v5898 = vmax.f32 %v5418, 0.0
    %v5899 = vmax.f32 %v5435, 0.0
    %v5900 = vmax.f32 %v5452, 0.0
    %v5901 = vmax.f32 %v5469, 0.0
    %v5902 = vmax.f32 %v5486, 0.0
    %v5903 = vmax.f32 %v5503, 0.0
    %v5904 = vmax.f32 %v5520, 0.0
    %v5905 = vmax.f32 %v5537, 0.0
    %v5906 = vmax.f32 %v5554, 0.0
    %v5907 = vmax.f32 %v5571, 0.0
    %v5908 = vmax.f32 %v5588, 0.0
    %v5909 = vmax.f32 %v5605, 0.0
    %v5910 = vmax.f32 %v5622, 0.0
    %v5911 = vmax.f32 %v5639, 0.0
    %v5912 = vmax.f32 %v5656, 0.0
    %v5913 = vmax.f32 %v5673, 0.0
    %v5914 = vmax.f32 %v5690, 0.0
    %v5915 = vmax.f32 %v5707, 0.0
    %v5916 = vmax.f32 %v5724, 0.0
    %v5917 = vmax.f32 %v5741, 0.0
    %v5918 = vmax.f32 %v5758, 0.0
    %v5919 = vmax.f32 %v5775, 0.0
    %v5920 = vmax.f32 %v5792, 0.0
    %v5921 = vmax.f32 %v5809, 0.0
    %v5922 = vmax.f32 %v5826, 0.0
    %v5923 = vmax.f32 %v5843, 0.0
    %v5924 = vmax.f32 %v5860, 0.0
    %v5989 = vcombine.high %v5861, %v5861
    %v5991 = vunpack.c.l.s4 1983009808
    %v5992 = vunpack.c.0.s8 %v5991
    %v5993 = vlaneseq
    %v5994 = vshrl.u32 %v5993, 7
    %v5995 = vsub.s32 %v5992, %v5994
    %v5996 = vrot.slane %v5861, %v5995
    %v5998 = vunpack.c.l.s4 1983009808
    %v5999 = vunpack.c.0.s8 %v5998
    %v6000 = vlaneseq
    %v6001 = vshrl.u32 %v6000, 7
    %v6002 = vsub.s32 %v5999, %v6001
    %v6003 = vrot.slane %v5989, %v6002
    %v6004 = vcombine.high %v5996, %v5996
    %v6005 = vcombine.high %v6003, %v6003
    %v6006 = vcombine.high %v5862, %v5862
    %v6008 = vunpack.c.l.s4 1983009808
    %v6009 = vunpack.c.0.s8 %v6008
    %v6010 = vlaneseq
    %v6011 = vshrl.u32 %v6010, 7
    %v6012 = vsub.s32 %v6009, %v6011
    %v6013 = vrot.slane %v5862, %v6012
    %v6015 = vunpack.c.l.s4 1983009808
    %v6016 = vunpack.c.0.s8 %v6015
    %v6017 = vlaneseq
    %v6018 = vshrl.u32 %v6017, 7
    %v6019 = vsub.s32 %v6016, %v6018
    %v6020 = vrot.slane %v6006, %v6019
    %v6021 = vcombine.high %v6013, %v6013
    %v6022 = vcombine.high %v6020, %v6020
    %v6023 = vcombine.high %v5863, %v5863
    %v6025 = vunpack.c.l.s4 1983009808
    %v6026 = vunpack.c.0.s8 %v6025
    %v6027 = vlaneseq
    %v6028 = vshrl.u32 %v6027, 7
    %v6029 = vsub.s32 %v6026, %v6028
    %v6030 = vrot.slane %v5863, %v6029
    %v6032 = vunpack.c.l.s4 1983009808
    %v6033 = vunpack.c.0.s8 %v6032
    %v6034 = vlaneseq
    %v6035 = vshrl.u32 %v6034, 7
    %v6036 = vsub.s32 %v6033, %v6035
    %v6037 = vrot.slane %v6023, %v6036
    %v6038 = vcombine.high %v6030, %v6030
    %v6039 = vcombine.high %v6037, %v6037
    %v6040 = vcombine.high %v5864, %v5864
    %v6042 = vunpack.c.l.s4 1983009808
    %v6043 = vunpack.c.0.s8 %v6042
    %v6044 = vlaneseq
    %v6045 = vshrl.u32 %v6044, 7
    %v6046 = vsub.s32 %v6043, %v6045
    %v6047 = vrot.slane %v5864, %v6046
    %v6049 = vunpack.c.l.s4 1983009808
    %v6050 = vunpack.c.0.s8 %v6049
    %v6051 = vlaneseq
    %v6052 = vshrl.u32 %v6051, 7
    %v6053 = vsub.s32 %v6050, %v6052
    %v6054 = vrot.slane %v6040, %v6053
    %v6055 = vcombine.high %v6047, %v6047
    %v6056 = vcombine.high %v6054, %v6054
    %v6057 = vcombine.high %v5865, %v5865
    %v6059 = vunpack.c.l.s4 1983009808
    %v6060 = vunpack.c.0.s8 %v6059
    %v6061 = vlaneseq
    %v6062 = vshrl.u32 %v6061, 7
    %v6063 = vsub.s32 %v6060, %v6062
    %v6064 = vrot.slane %v5865, %v6063
    %v6066 = vunpack.c.l.s4 1983009808
    %v6067 = vunpack.c.0.s8 %v6066
    %v6068 = vlaneseq
    %v6069 = vshrl.u32 %v6068, 7
    %v6070 = vsub.s32 %v6067, %v6069
    %v6071 = vrot.slane %v6057, %v6070
    %v6072 = vcombine.high %v6064, %v6064
    %v6073 = vcombine.high %v6071, %v6071
    %v6074 = vcombine.high %v5866, %v5866
    %v6076 = vunpack.c.l.s4 1983009808
    %v6077 = vunpack.c.0.s8 %v6076
    %v6078 = vlaneseq
    %v6079 = vshrl.u32 %v6078, 7
    %v6080 = vsub.s32 %v6077, %v6079
    %v6081 = vrot.slane %v5866, %v6080
    %v6083 = vunpack.c.l.s4 1983009808
    %v6084 = vunpack.c.0.s8 %v6083
    %v6085 = vlaneseq
    %v6086 = vshrl.u32 %v6085, 7
    %v6087 = vsub.s32 %v6084, %v6086
    %v6088 = vrot.slane %v6074, %v6087
    %v6089 = vcombine.high %v6081, %v6081
    %v6090 = vcombine.high %v6088, %v6088
    %v6091 = vcombine.high %v5867, %v5867
    %v6093 = vunpack.c.l.s4 1983009808
    %v6094 = vunpack.c.0.s8 %v6093
    %v6095 = vlaneseq
    %v6096 = vshrl.u32 %v6095, 7
    %v6097 = vsub.s32 %v6094, %v6096
    %v6098 = vrot.slane %v5867, %v6097
    %v6100 = vunpack.c.l.s4 1983009808
    %v6101 = vunpack.c.0.s8 %v6100
    %v6102 = vlaneseq
    %v6103 = vshrl.u32 %v6102, 7
    %v6104 = vsub.s32 %v6101, %v6103
    %v6105 = vrot.slane %v6091, %v6104
    %v6106 = vcombine.high %v6098, %v6098
    %v6107 = vcombine.high %v6105, %v6105
    %v6108 = vcombine.high %v5868, %v5868
    %v6110 = vunpack.c.l.s4 1983009808
    %v6111 = vunpack.c.0.s8 %v6110
    %v6112 = vlaneseq
    %v6113 = vshrl.u32 %v6112, 7
    %v6114 = vsub.s32 %v6111, %v6113
    %v6115 = vrot.slane %v5868, %v6114
    %v6117 = vunpack.c.l.s4 1983009808
    %v6118 = vunpack.c.0.s8 %v6117
    %v6119 = vlaneseq
    %v6120 = vshrl.u32 %v6119, 7
    %v6121 = vsub.s32 %v6118, %v6120
    %v6122 = vrot.slane %v6108, %v6121
    %v6123 = vcombine.high %v6115, %v6115
    %v6124 = vcombine.high %v6122, %v6122
    %v6125 = vcombine.high %v5869, %v5869
    %v6127 = vunpack.c.l.s4 1983009808
    %v6128 = vunpack.c.0.s8 %v6127
    %v6129 = vlaneseq
    %v6130 = vshrl.u32 %v6129, 7
    %v6131 = vsub.s32 %v6128, %v6130
    %v6132 = vrot.slane %v5869, %v6131
    %v6134 = vunpack.c.l.s4 1983009808
    %v6135 = vunpack.c.0.s8 %v6134
    %v6136 = vlaneseq
    %v6137 = vshrl.u32 %v6136, 7
    %v6138 = vsub.s32 %v6135, %v6137
    %v6139 = vrot.slane %v6125, %v6138
    %v6140 = vcombine.high %v6132, %v6132
    %v6141 = vcombine.high %v6139, %v6139
    %v6142 = vcombine.high %v5870, %v5870
    %v6144 = vunpack.c.l.s4 1983009808
    %v6145 = vunpack.c.0.s8 %v6144
    %v6146 = vlaneseq
    %v6147 = vshrl.u32 %v6146, 7
    %v6148 = vsub.s32 %v6145, %v6147
    %v6149 = vrot.slane %v5870, %v6148
    %v6151 = vunpack.c.l.s4 1983009808
    %v6152 = vunpack.c.0.s8 %v6151
    %v6153 = vlaneseq
    %v6154 = vshrl.u32 %v6153, 7
    %v6155 = vsub.s32 %v6152, %v6154
    %v6156 = vrot.slane %v6142, %v6155
    %v6157 = vcombine.high %v6149, %v6149
    %v6158 = vcombine.high %v6156, %v6156
    %v6159 = vcombine.high %v5871, %v5871
    %v6161 = vunpack.c.l.s4 1983009808
    %v6162 = vunpack.c.0.s8 %v6161
    %v6163 = vlaneseq
    %v6164 = vshrl.u32 %v6163, 7
    %v6165 = vsub.s32 %v6162, %v6164
    %v6166 = vrot.slane %v5871, %v6165
    %v6168 = vunpack.c.l.s4 1983009808
    %v6169 = vunpack.c.0.s8 %v6168
    %v6170 = vlaneseq
    %v6171 = vshrl.u32 %v6170, 7
    %v6172 = vsub.s32 %v6169, %v6171
    %v6173 = vrot.slane %v6159, %v6172
    %v6174 = vcombine.high %v6166, %v6166
    %v6175 = vcombine.high %v6173, %v6173
    %v6176 = vcombine.high %v5872, %v5872
    %v6178 = vunpack.c.l.s4 1983009808
    %v6179 = vunpack.c.0.s8 %v6178
    %v6180 = vlaneseq
    %v6181 = vshrl.u32 %v6180, 7
    %v6182 = vsub.s32 %v6179, %v6181
    %v6183 = vrot.slane %v5872, %v6182
    %v6185 = vunpack.c.l.s4 1983009808
    %v6186 = vunpack.c.0.s8 %v6185
    %v6187 = vlaneseq
    %v6188 = vshrl.u32 %v6187, 7
    %v6189 = vsub.s32 %v6186, %v6188
    %v6190 = vrot.slane %v6176, %v6189
    %v6191 = vcombine.high %v6183, %v6183
    %v6192 = vcombine.high %v6190, %v6190
    %v6193 = vcombine.high %v5873, %v5873
    %v6195 = vunpack.c.l.s4 1983009808
    %v6196 = vunpack.c.0.s8 %v6195
    %v6197 = vlaneseq
    %v6198 = vshrl.u32 %v6197, 7
    %v6199 = vsub.s32 %v6196, %v6198
    %v6200 = vrot.slane %v5873, %v6199
    %v6202 = vunpack.c.l.s4 1983009808
    %v6203 = vunpack.c.0.s8 %v6202
    %v6204 = vlaneseq
    %v6205 = vshrl.u32 %v6204, 7
    %v6206 = vsub.s32 %v6203, %v6205
    %v6207 = vrot.slane %v6193, %v6206
    %v6208 = vcombine.high %v6200, %v6200
    %v6209 = vcombine.high %v6207, %v6207
    %v6210 = vcombine.high %v5874, %v5874
    %v6212 = vunpack.c.l.s4 1983009808
    %v6213 = vunpack.c.0.s8 %v6212
    %v6214 = vlaneseq
    %v6215 = vshrl.u32 %v6214, 7
    %v6216 = vsub.s32 %v6213, %v6215
    %v6217 = vrot.slane %v5874, %v6216
    %v6219 = vunpack.c.l.s4 1983009808
    %v6220 = vunpack.c.0.s8 %v6219
    %v6221 = vlaneseq
    %v6222 = vshrl.u32 %v6221, 7
    %v6223 = vsub.s32 %v6220, %v6222
    %v6224 = vrot.slane %v6210, %v6223
    %v6225 = vcombine.high %v6217, %v6217
    %v6226 = vcombine.high %v6224, %v6224
    %v6227 = vcombine.high %v5875, %v5875
    %v6229 = vunpack.c.l.s4 1983009808
    %v6230 = vunpack.c.0.s8 %v6229
    %v6231 = vlaneseq
    %v6232 = vshrl.u32 %v6231, 7
    %v6233 = vsub.s32 %v6230, %v6232
    %v6234 = vrot.slane %v5875, %v6233
    %v6236 = vunpack.c.l.s4 1983009808
    %v6237 = vunpack.c.0.s8 %v6236
    %v6238 = vlaneseq
    %v6239 = vshrl.u32 %v6238, 7
    %v6240 = vsub.s32 %v6237, %v6239
    %v6241 = vrot.slane %v6227, %v6240
    %v6242 = vcombine.high %v6234, %v6234
    %v6243 = vcombine.high %v6241, %v6241
    %v6244 = vcombine.high %v5876, %v5876
    %v6246 = vunpack.c.l.s4 1983009808
    %v6247 = vunpack.c.0.s8 %v6246
    %v6248 = vlaneseq
    %v6249 = vshrl.u32 %v6248, 7
    %v6250 = vsub.s32 %v6247, %v6249
    %v6251 = vrot.slane %v5876, %v6250
    %v6253 = vunpack.c.l.s4 1983009808
    %v6254 = vunpack.c.0.s8 %v6253
    %v6255 = vlaneseq
    %v6256 = vshrl.u32 %v6255, 7
    %v6257 = vsub.s32 %v6254, %v6256
    %v6258 = vrot.slane %v6244, %v6257
    %v6259 = vcombine.high %v6251, %v6251
    %v6260 = vcombine.high %v6258, %v6258
    %v6261 = vcombine.high %v5877, %v5877
    %v6263 = vunpack.c.l.s4 1983009808
    %v6264 = vunpack.c.0.s8 %v6263
    %v6265 = vlaneseq
    %v6266 = vshrl.u32 %v6265, 7
    %v6267 = vsub.s32 %v6264, %v6266
    %v6268 = vrot.slane %v5877, %v6267
    %v6270 = vunpack.c.l.s4 1983009808
    %v6271 = vunpack.c.0.s8 %v6270
    %v6272 = vlaneseq
    %v6273 = vshrl.u32 %v6272, 7
    %v6274 = vsub.s32 %v6271, %v6273
    %v6275 = vrot.slane %v6261, %v6274
    %v6276 = vcombine.high %v6268, %v6268
    %v6277 = vcombine.high %v6275, %v6275
    %v6278 = vcombine.high %v5878, %v5878
    %v6280 = vunpack.c.l.s4 1983009808
    %v6281 = vunpack.c.0.s8 %v6280
    %v6282 = vlaneseq
    %v6283 = vshrl.u32 %v6282, 7
    %v6284 = vsub.s32 %v6281, %v6283
    %v6285 = vrot.slane %v5878, %v6284
    %v6287 = vunpack.c.l.s4 1983009808
    %v6288 = vunpack.c.0.s8 %v6287
    %v6289 = vlaneseq
    %v6290 = vshrl.u32 %v6289, 7
    %v6291 = vsub.s32 %v6288, %v6290
    %v6292 = vrot.slane %v6278, %v6291
    %v6293 = vcombine.high %v6285, %v6285
    %v6294 = vcombine.high %v6292, %v6292
    %v6295 = vcombine.high %v5879, %v5879
    %v6297 = vunpack.c.l.s4 1983009808
    %v6298 = vunpack.c.0.s8 %v6297
    %v6299 = vlaneseq
    %v6300 = vshrl.u32 %v6299, 7
    %v6301 = vsub.s32 %v6298, %v6300
    %v6302 = vrot.slane %v5879, %v6301
    %v6304 = vunpack.c.l.s4 1983009808
    %v6305 = vunpack.c.0.s8 %v6304
    %v6306 = vlaneseq
    %v6307 = vshrl.u32 %v6306, 7
    %v6308 = vsub.s32 %v6305, %v6307
    %v6309 = vrot.slane %v6295, %v6308
    %v6310 = vcombine.high %v6302, %v6302
    %v6311 = vcombine.high %v6309, %v6309
    %v6312 = vcombine.high %v5880, %v5880
    %v6314 = vunpack.c.l.s4 1983009808
    %v6315 = vunpack.c.0.s8 %v6314
    %v6316 = vlaneseq
    %v6317 = vshrl.u32 %v6316, 7
    %v6318 = vsub.s32 %v6315, %v6317
    %v6319 = vrot.slane %v5880, %v6318
    %v6321 = vunpack.c.l.s4 1983009808
    %v6322 = vunpack.c.0.s8 %v6321
    %v6323 = vlaneseq
    %v6324 = vshrl.u32 %v6323, 7
    %v6325 = vsub.s32 %v6322, %v6324
    %v6326 = vrot.slane %v6312, %v6325
    %v6327 = vcombine.high %v6319, %v6319
    %v6328 = vcombine.high %v6326, %v6326
    %v6329 = vcombine.high %v5881, %v5881
    %v6331 = vunpack.c.l.s4 1983009808
    %v6332 = vunpack.c.0.s8 %v6331
    %v6333 = vlaneseq
    %v6334 = vshrl.u32 %v6333, 7
    %v6335 = vsub.s32 %v6332, %v6334
    %v6336 = vrot.slane %v5881, %v6335
    %v6338 = vunpack.c.l.s4 1983009808
    %v6339 = vunpack.c.0.s8 %v6338
    %v6340 = vlaneseq
    %v6341 = vshrl.u32 %v6340, 7
    %v6342 = vsub.s32 %v6339, %v6341
    %v6343 = vrot.slane %v6329, %v6342
    %v6344 = vcombine.high %v6336, %v6336
    %v6345 = vcombine.high %v6343, %v6343
    %v6346 = vcombine.high %v5882, %v5882
    %v6348 = vunpack.c.l.s4 1983009808
    %v6349 = vunpack.c.0.s8 %v6348
    %v6350 = vlaneseq
    %v6351 = vshrl.u32 %v6350, 7
    %v6352 = vsub.s32 %v6349, %v6351
    %v6353 = vrot.slane %v5882, %v6352
    %v6355 = vunpack.c.l.s4 1983009808
    %v6356 = vunpack.c.0.s8 %v6355
    %v6357 = vlaneseq
    %v6358 = vshrl.u32 %v6357, 7
    %v6359 = vsub.s32 %v6356, %v6358
    %v6360 = vrot.slane %v6346, %v6359
    %v6361 = vcombine.high %v6353, %v6353
    %v6362 = vcombine.high %v6360, %v6360
    %v6363 = vcombine.high %v5883, %v5883
    %v6365 = vunpack.c.l.s4 1983009808
    %v6366 = vunpack.c.0.s8 %v6365
    %v6367 = vlaneseq
    %v6368 = vshrl.u32 %v6367, 7
    %v6369 = vsub.s32 %v6366, %v6368
    %v6370 = vrot.slane %v5883, %v6369
    %v6372 = vunpack.c.l.s4 1983009808
    %v6373 = vunpack.c.0.s8 %v6372
    %v6374 = vlaneseq
    %v6375 = vshrl.u32 %v6374, 7
    %v6376 = vsub.s32 %v6373, %v6375
    %v6377 = vrot.slane %v6363, %v6376
    %v6378 = vcombine.high %v6370, %v6370
    %v6379 = vcombine.high %v6377, %v6377
    %v6380 = vcombine.high %v5884, %v5884
    %v6382 = vunpack.c.l.s4 1983009808
    %v6383 = vunpack.c.0.s8 %v6382
    %v6384 = vlaneseq
    %v6385 = vshrl.u32 %v6384, 7
    %v6386 = vsub.s32 %v6383, %v6385
    %v6387 = vrot.slane %v5884, %v6386
    %v6389 = vunpack.c.l.s4 1983009808
    %v6390 = vunpack.c.0.s8 %v6389
    %v6391 = vlaneseq
    %v6392 = vshrl.u32 %v6391, 7
    %v6393 = vsub.s32 %v6390, %v6392
    %v6394 = vrot.slane %v6380, %v6393
    %v6395 = vcombine.high %v6387, %v6387
    %v6396 = vcombine.high %v6394, %v6394
    %v6397 = vcombine.high %v5885, %v5885
    %v6399 = vunpack.c.l.s4 1983009808
    %v6400 = vunpack.c.0.s8 %v6399
    %v6401 = vlaneseq
    %v6402 = vshrl.u32 %v6401, 7
    %v6403 = vsub.s32 %v6400, %v6402
    %v6404 = vrot.slane %v5885, %v6403
    %v6406 = vunpack.c.l.s4 1983009808
    %v6407 = vunpack.c.0.s8 %v6406
    %v6408 = vlaneseq
    %v6409 = vshrl.u32 %v6408, 7
    %v6410 = vsub.s32 %v6407, %v6409
    %v6411 = vrot.slane %v6397, %v6410
    %v6412 = vcombine.high %v6404, %v6404
    %v6413 = vcombine.high %v6411, %v6411
    %v6414 = vcombine.high %v5886, %v5886
    %v6416 = vunpack.c.l.s4 1983009808
    %v6417 = vunpack.c.0.s8 %v6416
    %v6418 = vlaneseq
    %v6419 = vshrl.u32 %v6418, 7
    %v6420 = vsub.s32 %v6417, %v6419
    %v6421 = vrot.slane %v5886, %v6420
    %v6423 = vunpack.c.l.s4 1983009808
    %v6424 = vunpack.c.0.s8 %v6423
    %v6425 = vlaneseq
    %v6426 = vshrl.u32 %v6425, 7
    %v6427 = vsub.s32 %v6424, %v6426
    %v6428 = vrot.slane %v6414, %v6427
    %v6429 = vcombine.high %v6421, %v6421
    %v6430 = vcombine.high %v6428, %v6428
    %v6431 = vcombine.high %v5887, %v5887
    %v6433 = vunpack.c.l.s4 1983009808
    %v6434 = vunpack.c.0.s8 %v6433
    %v6435 = vlaneseq
    %v6436 = vshrl.u32 %v6435, 7
    %v6437 = vsub.s32 %v6434, %v6436
    %v6438 = vrot.slane %v5887, %v6437
    %v6440 = vunpack.c.l.s4 1983009808
    %v6441 = vunpack.c.0.s8 %v6440
    %v6442 = vlaneseq
    %v6443 = vshrl.u32 %v6442, 7
    %v6444 = vsub.s32 %v6441, %v6443
    %v6445 = vrot.slane %v6431, %v6444
    %v6446 = vcombine.high %v6438, %v6438
    %v6447 = vcombine.high %v6445, %v6445
    %v6448 = vcombine.high %v5888, %v5888
    %v6450 = vunpack.c.l.s4 1983009808
    %v6451 = vunpack.c.0.s8 %v6450
    %v6452 = vlaneseq
    %v6453 = vshrl.u32 %v6452, 7
    %v6454 = vsub.s32 %v6451, %v6453
    %v6455 = vrot.slane %v5888, %v6454
    %v6457 = vunpack.c.l.s4 1983009808
    %v6458 = vunpack.c.0.s8 %v6457
    %v6459 = vlaneseq
    %v6460 = vshrl.u32 %v6459, 7
    %v6461 = vsub.s32 %v6458, %v6460
    %v6462 = vrot.slane %v6448, %v6461
    %v6463 = vcombine.high %v6455, %v6455
    %v6464 = vcombine.high %v6462, %v6462
    %v6465 = vcombine.high %v5889, %v5889
    %v6467 = vunpack.c.l.s4 1983009808
    %v6468 = vunpack.c.0.s8 %v6467
    %v6469 = vlaneseq
    %v6470 = vshrl.u32 %v6469, 7
    %v6471 = vsub.s32 %v6468, %v6470
    %v6472 = vrot.slane %v5889, %v6471
    %v6474 = vunpack.c.l.s4 1983009808
    %v6475 = vunpack.c.0.s8 %v6474
    %v6476 = vlaneseq
    %v6477 = vshrl.u32 %v6476, 7
    %v6478 = vsub.s32 %v6475, %v6477
    %v6479 = vrot.slane %v6465, %v6478
    %v6480 = vcombine.high %v6472, %v6472
    %v6481 = vcombine.high %v6479, %v6479
    %v6482 = vcombine.high %v5890, %v5890
    %v6484 = vunpack.c.l.s4 1983009808
    %v6485 = vunpack.c.0.s8 %v6484
    %v6486 = vlaneseq
    %v6487 = vshrl.u32 %v6486, 7
    %v6488 = vsub.s32 %v6485, %v6487
    %v6489 = vrot.slane %v5890, %v6488
    %v6491 = vunpack.c.l.s4 1983009808
    %v6492 = vunpack.c.0.s8 %v6491
    %v6493 = vlaneseq
    %v6494 = vshrl.u32 %v6493, 7
    %v6495 = vsub.s32 %v6492, %v6494
    %v6496 = vrot.slane %v6482, %v6495
    %v6497 = vcombine.high %v6489, %v6489
    %v6498 = vcombine.high %v6496, %v6496
    %v6499 = vcombine.high %v5891, %v5891
    %v6501 = vunpack.c.l.s4 1983009808
    %v6502 = vunpack.c.0.s8 %v6501
    %v6503 = vlaneseq
    %v6504 = vshrl.u32 %v6503, 7
    %v6505 = vsub.s32 %v6502, %v6504
    %v6506 = vrot.slane %v5891, %v6505
    %v6508 = vunpack.c.l.s4 1983009808
    %v6509 = vunpack.c.0.s8 %v6508
    %v6510 = vlaneseq
    %v6511 = vshrl.u32 %v6510, 7
    %v6512 = vsub.s32 %v6509, %v6511
    %v6513 = vrot.slane %v6499, %v6512
    %v6514 = vcombine.high %v6506, %v6506
    %v6515 = vcombine.high %v6513, %v6513
    %v6516 = vcombine.high %v5892, %v5892
    %v6518 = vunpack.c.l.s4 1983009808
    %v6519 = vunpack.c.0.s8 %v6518
    %v6520 = vlaneseq
    %v6521 = vshrl.u32 %v6520, 7
    %v6522 = vsub.s32 %v6519, %v6521
    %v6523 = vrot.slane %v5892, %v6522
    %v6525 = vunpack.c.l.s4 1983009808
    %v6526 = vunpack.c.0.s8 %v6525
    %v6527 = vlaneseq
    %v6528 = vshrl.u32 %v6527, 7
    %v6529 = vsub.s32 %v6526, %v6528
    %v6530 = vrot.slane %v6516, %v6529
    %v6531 = vcombine.high %v6523, %v6523
    %v6532 = vcombine.high %v6530, %v6530
    %v6533 = vcombine.high %v5893, %v5893
    %v6535 = vunpack.c.l.s4 1983009808
    %v6536 = vunpack.c.0.s8 %v6535
    %v6537 = vlaneseq
    %v6538 = vshrl.u32 %v6537, 7
    %v6539 = vsub.s32 %v6536, %v6538
    %v6540 = vrot.slane %v5893, %v6539
    %v6542 = vunpack.c.l.s4 1983009808
    %v6543 = vunpack.c.0.s8 %v6542
    %v6544 = vlaneseq
    %v6545 = vshrl.u32 %v6544, 7
    %v6546 = vsub.s32 %v6543, %v6545
    %v6547 = vrot.slane %v6533, %v6546
    %v6548 = vcombine.high %v6540, %v6540
    %v6549 = vcombine.high %v6547, %v6547
    %v6550 = vcombine.high %v5894, %v5894
    %v6552 = vunpack.c.l.s4 1983009808
    %v6553 = vunpack.c.0.s8 %v6552
    %v6554 = vlaneseq
    %v6555 = vshrl.u32 %v6554, 7
    %v6556 = vsub.s32 %v6553, %v6555
    %v6557 = vrot.slane %v5894, %v6556
    %v6559 = vunpack.c.l.s4 1983009808
    %v6560 = vunpack.c.0.s8 %v6559
    %v6561 = vlaneseq
    %v6562 = vshrl.u32 %v6561, 7
    %v6563 = vsub.s32 %v6560, %v6562
    %v6564 = vrot.slane %v6550, %v6563
    %v6565 = vcombine.high %v6557, %v6557
    %v6566 = vcombine.high %v6564, %v6564
    %v6567 = vcombine.high %v5895, %v5895
    %v6569 = vunpack.c.l.s4 1983009808
    %v6570 = vunpack.c.0.s8 %v6569
    %v6571 = vlaneseq
    %v6572 = vshrl.u32 %v6571, 7
    %v6573 = vsub.s32 %v6570, %v6572
    %v6574 = vrot.slane %v5895, %v6573
    %v6576 = vunpack.c.l.s4 1983009808
    %v6577 = vunpack.c.0.s8 %v6576
    %v6578 = vlaneseq
    %v6579 = vshrl.u32 %v6578, 7
    %v6580 = vsub.s32 %v6577, %v6579
    %v6581 = vrot.slane %v6567, %v6580
    %v6582 = vcombine.high %v6574, %v6574
    %v6583 = vcombine.high %v6581, %v6581
    %v6584 = vcombine.high %v5896, %v5896
    %v6586 = vunpack.c.l.s4 1983009808
    %v6587 = vunpack.c.0.s8 %v6586
    %v6588 = vlaneseq
    %v6589 = vshrl.u32 %v6588, 7
    %v6590 = vsub.s32 %v6587, %v6589
    %v6591 = vrot.slane %v5896, %v6590
    %v6593 = vunpack.c.l.s4 1983009808
    %v6594 = vunpack.c.0.s8 %v6593
    %v6595 = vlaneseq
    %v6596 = vshrl.u32 %v6595, 7
    %v6597 = vsub.s32 %v6594, %v6596
    %v6598 = vrot.slane %v6584, %v6597
    %v6599 = vcombine.high %v6591, %v6591
    %v6600 = vcombine.high %v6598, %v6598
    %v6601 = vcombine.high %v5897, %v5897
    %v6603 = vunpack.c.l.s4 1983009808
    %v6604 = vunpack.c.0.s8 %v6603
    %v6605 = vlaneseq
    %v6606 = vshrl.u32 %v6605, 7
    %v6607 = vsub.s32 %v6604, %v6606
    %v6608 = vrot.slane %v5897, %v6607
    %v6610 = vunpack.c.l.s4 1983009808
    %v6611 = vunpack.c.0.s8 %v6610
    %v6612 = vlaneseq
    %v6613 = vshrl.u32 %v6612, 7
    %v6614 = vsub.s32 %v6611, %v6613
    %v6615 = vrot.slane %v6601, %v6614
    %v6616 = vcombine.high %v6608, %v6608
    %v6617 = vcombine.high %v6615, %v6615
    %v6618 = vcombine.high %v5898, %v5898
    %v6620 = vunpack.c.l.s4 1983009808
    %v6621 = vunpack.c.0.s8 %v6620
    %v6622 = vlaneseq
    %v6623 = vshrl.u32 %v6622, 7
    %v6624 = vsub.s32 %v6621, %v6623
    %v6625 = vrot.slane %v5898, %v6624
    %v6627 = vunpack.c.l.s4 1983009808
    %v6628 = vunpack.c.0.s8 %v6627
    %v6629 = vlaneseq
    %v6630 = vshrl.u32 %v6629, 7
    %v6631 = vsub.s32 %v6628, %v6630
    %v6632 = vrot.slane %v6618, %v6631
    %v6633 = vcombine.high %v6625, %v6625
    %v6634 = vcombine.high %v6632, %v6632
    %v6635 = vcombine.high %v5899, %v5899
    %v6637 = vunpack.c.l.s4 1983009808
    %v6638 = vunpack.c.0.s8 %v6637
    %v6639 = vlaneseq
    %v6640 = vshrl.u32 %v6639, 7
    %v6641 = vsub.s32 %v6638, %v6640
    %v6642 = vrot.slane %v5899, %v6641
    %v6644 = vunpack.c.l.s4 1983009808
    %v6645 = vunpack.c.0.s8 %v6644
    %v6646 = vlaneseq
    %v6647 = vshrl.u32 %v6646, 7
    %v6648 = vsub.s32 %v6645, %v6647
    %v6649 = vrot.slane %v6635, %v6648
    %v6650 = vcombine.high %v6642, %v6642
    %v6651 = vcombine.high %v6649, %v6649
    %v6652 = vcombine.high %v5900, %v5900
    %v6654 = vunpack.c.l.s4 1983009808
    %v6655 = vunpack.c.0.s8 %v6654
    %v6656 = vlaneseq
    %v6657 = vshrl.u32 %v6656, 7
    %v6658 = vsub.s32 %v6655, %v6657
    %v6659 = vrot.slane %v5900, %v6658
    %v6661 = vunpack.c.l.s4 1983009808
    %v6662 = vunpack.c.0.s8 %v6661
    %v6663 = vlaneseq
    %v6664 = vshrl.u32 %v6663, 7
    %v6665 = vsub.s32 %v6662, %v6664
    %v6666 = vrot.slane %v6652, %v6665
    %v6667 = vcombine.high %v6659, %v6659
    %v6668 = vcombine.high %v6666, %v6666
    %v6669 = vcombine.high %v5901, %v5901
    %v6671 = vunpack.c.l.s4 1983009808
    %v6672 = vunpack.c.0.s8 %v6671
    %v6673 = vlaneseq
    %v6674 = vshrl.u32 %v6673, 7
    %v6675 = vsub.s32 %v6672, %v6674
    %v6676 = vrot.slane %v5901, %v6675
    %v6678 = vunpack.c.l.s4 1983009808
    %v6679 = vunpack.c.0.s8 %v6678
    %v6680 = vlaneseq
    %v6681 = vshrl.u32 %v6680, 7
    %v6682 = vsub.s32 %v6679, %v6681
    %v6683 = vrot.slane %v6669, %v6682
    %v6684 = vcombine.high %v6676, %v6676
    %v6685 = vcombine.high %v6683, %v6683
    %v6686 = vcombine.high %v5902, %v5902
    %v6688 = vunpack.c.l.s4 1983009808
    %v6689 = vunpack.c.0.s8 %v6688
    %v6690 = vlaneseq
    %v6691 = vshrl.u32 %v6690, 7
    %v6692 = vsub.s32 %v6689, %v6691
    %v6693 = vrot.slane %v5902, %v6692
    %v6695 = vunpack.c.l.s4 1983009808
    %v6696 = vunpack.c.0.s8 %v6695
    %v6697 = vlaneseq
    %v6698 = vshrl.u32 %v6697, 7
    %v6699 = vsub.s32 %v6696, %v6698
    %v6700 = vrot.slane %v6686, %v6699
    %v6701 = vcombine.high %v6693, %v6693
    %v6702 = vcombine.high %v6700, %v6700
    %v6703 = vcombine.high %v5903, %v5903
    %v6705 = vunpack.c.l.s4 1983009808
    %v6706 = vunpack.c.0.s8 %v6705
    %v6707 = vlaneseq
    %v6708 = vshrl.u32 %v6707, 7
    %v6709 = vsub.s32 %v6706, %v6708
    %v6710 = vrot.slane %v5903, %v6709
    %v6712 = vunpack.c.l.s4 1983009808
    %v6713 = vunpack.c.0.s8 %v6712
    %v6714 = vlaneseq
    %v6715 = vshrl.u32 %v6714, 7
    %v6716 = vsub.s32 %v6713, %v6715
    %v6717 = vrot.slane %v6703, %v6716
    %v6718 = vcombine.high %v6710, %v6710
    %v6719 = vcombine.high %v6717, %v6717
    %v6720 = vcombine.high %v5904, %v5904
    %v6722 = vunpack.c.l.s4 1983009808
    %v6723 = vunpack.c.0.s8 %v6722
    %v6724 = vlaneseq
    %v6725 = vshrl.u32 %v6724, 7
    %v6726 = vsub.s32 %v6723, %v6725
    %v6727 = vrot.slane %v5904, %v6726
    %v6729 = vunpack.c.l.s4 1983009808
    %v6730 = vunpack.c.0.s8 %v6729
    %v6731 = vlaneseq
    %v6732 = vshrl.u32 %v6731, 7
    %v6733 = vsub.s32 %v6730, %v6732
    %v6734 = vrot.slane %v6720, %v6733
    %v6735 = vcombine.high %v6727, %v6727
    %v6736 = vcombine.high %v6734, %v6734
    %v6737 = vcombine.high %v5905, %v5905
    %v6739 = vunpack.c.l.s4 1983009808
    %v6740 = vunpack.c.0.s8 %v6739
    %v6741 = vlaneseq
    %v6742 = vshrl.u32 %v6741, 7
    %v6743 = vsub.s32 %v6740, %v6742
    %v6744 = vrot.slane %v5905, %v6743
    %v6746 = vunpack.c.l.s4 1983009808
    %v6747 = vunpack.c.0.s8 %v6746
    %v6748 = vlaneseq
    %v6749 = vshrl.u32 %v6748, 7
    %v6750 = vsub.s32 %v6747, %v6749
    %v6751 = vrot.slane %v6737, %v6750
    %v6752 = vcombine.high %v6744, %v6744
    %v6753 = vcombine.high %v6751, %v6751
    %v6754 = vcombine.high %v5906, %v5906
    %v6756 = vunpack.c.l.s4 1983009808
    %v6757 = vunpack.c.0.s8 %v6756
    %v6758 = vlaneseq
    %v6759 = vshrl.u32 %v6758, 7
    %v6760 = vsub.s32 %v6757, %v6759
    %v6761 = vrot.slane %v5906, %v6760
    %v6763 = vunpack.c.l.s4 1983009808
    %v6764 = vunpack.c.0.s8 %v6763
    %v6765 = vlaneseq
    %v6766 = vshrl.u32 %v6765, 7
    %v6767 = vsub.s32 %v6764, %v6766
    %v6768 = vrot.slane %v6754, %v6767
    %v6769 = vcombine.high %v6761, %v6761
    %v6770 = vcombine.high %v6768, %v6768
    %v6771 = vcombine.high %v5907, %v5907
    %v6773 = vunpack.c.l.s4 1983009808
    %v6774 = vunpack.c.0.s8 %v6773
    %v6775 = vlaneseq
    %v6776 = vshrl.u32 %v6775, 7
    %v6777 = vsub.s32 %v6774, %v6776
    %v6778 = vrot.slane %v5907, %v6777
    %v6780 = vunpack.c.l.s4 1983009808
    %v6781 = vunpack.c.0.s8 %v6780
    %v6782 = vlaneseq
    %v6783 = vshrl.u32 %v6782, 7
    %v6784 = vsub.s32 %v6781, %v6783
    %v6785 = vrot.slane %v6771, %v6784
    %v6786 = vcombine.high %v6778, %v6778
    %v6787 = vcombine.high %v6785, %v6785
    %v6788 = vcombine.high %v5908, %v5908
    %v6790 = vunpack.c.l.s4 1983009808
    %v6791 = vunpack.c.0.s8 %v6790
    %v6792 = vlaneseq
    %v6793 = vshrl.u32 %v6792, 7
    %v6794 = vsub.s32 %v6791, %v6793
    %v6795 = vrot.slane %v5908, %v6794
    %v6797 = vunpack.c.l.s4 1983009808
    %v6798 = vunpack.c.0.s8 %v6797
    %v6799 = vlaneseq
    %v6800 = vshrl.u32 %v6799, 7
    %v6801 = vsub.s32 %v6798, %v6800
    %v6802 = vrot.slane %v6788, %v6801
    %v6803 = vcombine.high %v6795, %v6795
    %v6804 = vcombine.high %v6802, %v6802
    %v6805 = vcombine.high %v5909, %v5909
    %v6807 = vunpack.c.l.s4 1983009808
    %v6808 = vunpack.c.0.s8 %v6807
    %v6809 = vlaneseq
    %v6810 = vshrl.u32 %v6809, 7
    %v6811 = vsub.s32 %v6808, %v6810
    %v6812 = vrot.slane %v5909, %v6811
    %v6814 = vunpack.c.l.s4 1983009808
    %v6815 = vunpack.c.0.s8 %v6814
    %v6816 = vlaneseq
    %v6817 = vshrl.u32 %v6816, 7
    %v6818 = vsub.s32 %v6815, %v6817
    %v6819 = vrot.slane %v6805, %v6818
    %v6820 = vcombine.high %v6812, %v6812
    %v6821 = vcombine.high %v6819, %v6819
    %v6822 = vcombine.high %v5910, %v5910
    %v6824 = vunpack.c.l.s4 1983009808
    %v6825 = vunpack.c.0.s8 %v6824
    %v6826 = vlaneseq
    %v6827 = vshrl.u32 %v6826, 7
    %v6828 = vsub.s32 %v6825, %v6827
    %v6829 = vrot.slane %v5910, %v6828
    %v6831 = vunpack.c.l.s4 1983009808
    %v6832 = vunpack.c.0.s8 %v6831
    %v6833 = vlaneseq
    %v6834 = vshrl.u32 %v6833, 7
    %v6835 = vsub.s32 %v6832, %v6834
    %v6836 = vrot.slane %v6822, %v6835
    %v6837 = vcombine.high %v6829, %v6829
    %v6838 = vcombine.high %v6836, %v6836
    %v6839 = vcombine.high %v5911, %v5911
    %v6841 = vunpack.c.l.s4 1983009808
    %v6842 = vunpack.c.0.s8 %v6841
    %v6843 = vlaneseq
    %v6844 = vshrl.u32 %v6843, 7
    %v6845 = vsub.s32 %v6842, %v6844
    %v6846 = vrot.slane %v5911, %v6845
    %v6848 = vunpack.c.l.s4 1983009808
    %v6849 = vunpack.c.0.s8 %v6848
    %v6850 = vlaneseq
    %v6851 = vshrl.u32 %v6850, 7
    %v6852 = vsub.s32 %v6849, %v6851
    %v6853 = vrot.slane %v6839, %v6852
    %v6854 = vcombine.high %v6846, %v6846
    %v6855 = vcombine.high %v6853, %v6853
    %v6856 = vcombine.high %v5912, %v5912
    %v6858 = vunpack.c.l.s4 1983009808
    %v6859 = vunpack.c.0.s8 %v6858
    %v6860 = vlaneseq
    %v6861 = vshrl.u32 %v6860, 7
    %v6862 = vsub.s32 %v6859, %v6861
    %v6863 = vrot.slane %v5912, %v6862
    %v6865 = vunpack.c.l.s4 1983009808
    %v6866 = vunpack.c.0.s8 %v6865
    %v6867 = vlaneseq
    %v6868 = vshrl.u32 %v6867, 7
    %v6869 = vsub.s32 %v6866, %v6868
    %v6870 = vrot.slane %v6856, %v6869
    %v6871 = vcombine.high %v6863, %v6863
    %v6872 = vcombine.high %v6870, %v6870
    %v6873 = vcombine.high %v5913, %v5913
    %v6875 = vunpack.c.l.s4 1983009808
    %v6876 = vunpack.c.0.s8 %v6875
    %v6877 = vlaneseq
    %v6878 = vshrl.u32 %v6877, 7
    %v6879 = vsub.s32 %v6876, %v6878
    %v6880 = vrot.slane %v5913, %v6879
    %v6882 = vunpack.c.l.s4 1983009808
    %v6883 = vunpack.c.0.s8 %v6882
    %v6884 = vlaneseq
    %v6885 = vshrl.u32 %v6884, 7
    %v6886 = vsub.s32 %v6883, %v6885
    %v6887 = vrot.slane %v6873, %v6886
    %v6888 = vcombine.high %v6880, %v6880
    %v6889 = vcombine.high %v6887, %v6887
    %v6890 = vcombine.high %v5914, %v5914
    %v6892 = vunpack.c.l.s4 1983009808
    %v6893 = vunpack.c.0.s8 %v6892
    %v6894 = vlaneseq
    %v6895 = vshrl.u32 %v6894, 7
    %v6896 = vsub.s32 %v6893, %v6895
    %v6897 = vrot.slane %v5914, %v6896
    %v6899 = vunpack.c.l.s4 1983009808
    %v6900 = vunpack.c.0.s8 %v6899
    %v6901 = vlaneseq
    %v6902 = vshrl.u32 %v6901, 7
    %v6903 = vsub.s32 %v6900, %v6902
    %v6904 = vrot.slane %v6890, %v6903
    %v6905 = vcombine.high %v6897, %v6897
    %v6906 = vcombine.high %v6904, %v6904
    %v6907 = vcombine.high %v5915, %v5915
    %v6909 = vunpack.c.l.s4 1983009808
    %v6910 = vunpack.c.0.s8 %v6909
    %v6911 = vlaneseq
    %v6912 = vshrl.u32 %v6911, 7
    %v6913 = vsub.s32 %v6910, %v6912
    %v6914 = vrot.slane %v5915, %v6913
    %v6916 = vunpack.c.l.s4 1983009808
    %v6917 = vunpack.c.0.s8 %v6916
    %v6918 = vlaneseq
    %v6919 = vshrl.u32 %v6918, 7
    %v6920 = vsub.s32 %v6917, %v6919
    %v6921 = vrot.slane %v6907, %v6920
    %v6922 = vcombine.high %v6914, %v6914
    %v6923 = vcombine.high %v6921, %v6921
    %v6924 = vcombine.high %v5916, %v5916
    %v6926 = vunpack.c.l.s4 1983009808
    %v6927 = vunpack.c.0.s8 %v6926
    %v6928 = vlaneseq
    %v6929 = vshrl.u32 %v6928, 7
    %v6930 = vsub.s32 %v6927, %v6929
    %v6931 = vrot.slane %v5916, %v6930
    %v6933 = vunpack.c.l.s4 1983009808
    %v6934 = vunpack.c.0.s8 %v6933
    %v6935 = vlaneseq
    %v6936 = vshrl.u32 %v6935, 7
    %v6937 = vsub.s32 %v6934, %v6936
    %v6938 = vrot.slane %v6924, %v6937
    %v6939 = vcombine.high %v6931, %v6931
    %v6940 = vcombine.high %v6938, %v6938
    %v6941 = vcombine.high %v5917, %v5917
    %v6943 = vunpack.c.l.s4 1983009808
    %v6944 = vunpack.c.0.s8 %v6943
    %v6945 = vlaneseq
    %v6946 = vshrl.u32 %v6945, 7
    %v6947 = vsub.s32 %v6944, %v6946
    %v6948 = vrot.slane %v5917, %v6947
    %v6950 = vunpack.c.l.s4 1983009808
    %v6951 = vunpack.c.0.s8 %v6950
    %v6952 = vlaneseq
    %v6953 = vshrl.u32 %v6952, 7
    %v6954 = vsub.s32 %v6951, %v6953
    %v6955 = vrot.slane %v6941, %v6954
    %v6956 = vcombine.high %v6948, %v6948
    %v6957 = vcombine.high %v6955, %v6955
    %v6958 = vcombine.high %v5918, %v5918
    %v6960 = vunpack.c.l.s4 1983009808
    %v6961 = vunpack.c.0.s8 %v6960
    %v6962 = vlaneseq
    %v6963 = vshrl.u32 %v6962, 7
    %v6964 = vsub.s32 %v6961, %v6963
    %v6965 = vrot.slane %v5918, %v6964
    %v6967 = vunpack.c.l.s4 1983009808
    %v6968 = vunpack.c.0.s8 %v6967
    %v6969 = vlaneseq
    %v6970 = vshrl.u32 %v6969, 7
    %v6971 = vsub.s32 %v6968, %v6970
    %v6972 = vrot.slane %v6958, %v6971
    %v6973 = vcombine.high %v6965, %v6965
    %v6974 = vcombine.high %v6972, %v6972
    %v6975 = vcombine.high %v5919, %v5919
    %v6977 = vunpack.c.l.s4 1983009808
    %v6978 = vunpack.c.0.s8 %v6977
    %v6979 = vlaneseq
    %v6980 = vshrl.u32 %v6979, 7
    %v6981 = vsub.s32 %v6978, %v6980
    %v6982 = vrot.slane %v5919, %v6981
    %v6984 = vunpack.c.l.s4 1983009808
    %v6985 = vunpack.c.0.s8 %v6984
    %v6986 = vlaneseq
    %v6987 = vshrl.u32 %v6986, 7
    %v6988 = vsub.s32 %v6985, %v6987
    %v6989 = vrot.slane %v6975, %v6988
    %v6990 = vcombine.high %v6982, %v6982
    %v6991 = vcombine.high %v6989, %v6989
    %v6992 = vcombine.high %v5920, %v5920
    %v6994 = vunpack.c.l.s4 1983009808
    %v6995 = vunpack.c.0.s8 %v6994
    %v6996 = vlaneseq
    %v6997 = vshrl.u32 %v6996, 7
    %v6998 = vsub.s32 %v6995, %v6997
    %v6999 = vrot.slane %v5920, %v6998
    %v7001 = vunpack.c.l.s4 1983009808
    %v7002 = vunpack.c.0.s8 %v7001
    %v7003 = vlaneseq
    %v7004 = vshrl.u32 %v7003, 7
    %v7005 = vsub.s32 %v7002, %v7004
    %v7006 = vrot.slane %v6992, %v7005
    %v7007 = vcombine.high %v6999, %v6999
    %v7008 = vcombine.high %v7006, %v7006
    %v7009 = vcombine.high %v5921, %v5921
    %v7011 = vunpack.c.l.s4 1983009808
    %v7012 = vunpack.c.0.s8 %v7011
    %v7013 = vlaneseq
    %v7014 = vshrl.u32 %v7013, 7
    %v7015 = vsub.s32 %v7012, %v7014
    %v7016 = vrot.slane %v5921, %v7015
    %v7018 = vunpack.c.l.s4 1983009808
    %v7019 = vunpack.c.0.s8 %v7018
    %v7020 = vlaneseq
    %v7021 = vshrl.u32 %v7020, 7
    %v7022 = vsub.s32 %v7019, %v7021
    %v7023 = vrot.slane %v7009, %v7022
    %v7024 = vcombine.high %v7016, %v7016
    %v7025 = vcombine.high %v7023, %v7023
    %v7026 = vcombine.high %v5922, %v5922
    %v7028 = vunpack.c.l.s4 1983009808
    %v7029 = vunpack.c.0.s8 %v7028
    %v7030 = vlaneseq
    %v7031 = vshrl.u32 %v7030, 7
    %v7032 = vsub.s32 %v7029, %v7031
    %v7033 = vrot.slane %v5922, %v7032
    %v7035 = vunpack.c.l.s4 1983009808
    %v7036 = vunpack.c.0.s8 %v7035
    %v7037 = vlaneseq
    %v7038 = vshrl.u32 %v7037, 7
    %v7039 = vsub.s32 %v7036, %v7038
    %v7040 = vrot.slane %v7026, %v7039
    %v7041 = vcombine.high %v7033, %v7033
    %v7042 = vcombine.high %v7040, %v7040
    %v7043 = vcombine.high %v5923, %v5923
    %v7045 = vunpack.c.l.s4 1983009808
    %v7046 = vunpack.c.0.s8 %v7045
    %v7047 = vlaneseq
    %v7048 = vshrl.u32 %v7047, 7
    %v7049 = vsub.s32 %v7046, %v7048
    %v7050 = vrot.slane %v5923, %v7049
    %v7052 = vunpack.c.l.s4 1983009808
    %v7053 = vunpack.c.0.s8 %v7052
    %v7054 = vlaneseq
    %v7055 = vshrl.u32 %v7054, 7
    %v7056 = vsub.s32 %v7053, %v7055
    %v7057 = vrot.slane %v7043, %v7056
    %v7058 = vcombine.high %v7050, %v7050
    %v7059 = vcombine.high %v7057, %v7057
    %v7060 = vcombine.high %v5924, %v5924
    %v7062 = vunpack.c.l.s4 1983009808
    %v7063 = vunpack.c.0.s8 %v7062
    %v7064 = vlaneseq
    %v7065 = vshrl.u32 %v7064, 7
    %v7066 = vsub.s32 %v7063, %v7065
    %v7067 = vrot.slane %v5924, %v7066
    %v7069 = vunpack.c.l.s4 1983009808
    %v7070 = vunpack.c.0.s8 %v7069
    %v7071 = vlaneseq
    %v7072 = vshrl.u32 %v7071, 7
    %v7073 = vsub.s32 %v7070, %v7072
    %v7074 = vrot.slane %v7060, %v7073
    %v7075 = vcombine.high %v7067, %v7067
    %v7076 = vcombine.high %v7074, %v7074
    %v7333 = vrot.slane %v5996, 7
    %v7334 = vrot.slane %v7333, 2
    %v7335 = vrot.slane %v6004, 7
    %v7336 = vrot.slane %v7335, 2
    %v7337 = vrot.slane %v6003, 7
    %v7338 = vrot.slane %v7337, 2
    %v7339 = vrot.slane %v6005, 7
    %v7340 = vrot.slane %v7339, 2
    %v7341 = vrot.slane %v6013, 7
    %v7342 = vrot.slane %v7341, 2
    %v7343 = vrot.slane %v6021, 7
    %v7344 = vrot.slane %v7343, 2
    %v7345 = vrot.slane %v6020, 7
    %v7346 = vrot.slane %v7345, 2
    %v7347 = vrot.slane %v6022, 7
    %v7348 = vrot.slane %v7347, 2
    %v7349 = vrot.slane %v6064, 7
    %v7350 = vrot.slane %v7349, 2
    %v7351 = vrot.slane %v6072, 7
    %v7352 = vrot.slane %v7351, 2
    %v7353 = vrot.slane %v6071, 7
    %v7354 = vrot.slane %v7353, 2
    %v7355 = vrot.slane %v6073, 7
    %v7356 = vrot.slane %v7355, 2
    %v7357 = vrot.slane %v6081, 7
    %v7358 = vrot.slane %v7357, 2
    %v7359 = vrot.slane %v6089, 7
    %v7360 = vrot.slane %v7359, 2
    %v7361 = vrot.slane %v6088, 7
    %v7362 = vrot.slane %v7361, 2
    %v7363 = vrot.slane %v6090, 7
    %v7364 = vrot.slane %v7363, 2
    %v7365 = vrot.slane %v6132, 7
    %v7366 = vrot.slane %v7365, 2
    %v7367 = vrot.slane %v6140, 7
    %v7368 = vrot.slane %v7367, 2
    %v7369 = vrot.slane %v6139, 7
    %v7370 = vrot.slane %v7369, 2
    %v7371 = vrot.slane %v6141, 7
    %v7372 = vrot.slane %v7371, 2
    %v7373 = vrot.slane %v6149, 7
    %v7374 = vrot.slane %v7373, 2
    %v7375 = vrot.slane %v6157, 7
    %v7376 = vrot.slane %v7375, 2
    %v7377 = vrot.slane %v6156, 7
    %v7378 = vrot.slane %v7377, 2
    %v7379 = vrot.slane %v6158, 7
    %v7380 = vrot.slane %v7379, 2
    %v7381 = vrot.slane %v6200, 7
    %v7382 = vrot.slane %v7381, 2
    %v7383 = vrot.slane %v6208, 7
    %v7384 = vrot.slane %v7383, 2
    %v7385 = vrot.slane %v6207, 7
    %v7386 = vrot.slane %v7385, 2
    %v7387 = vrot.slane %v6209, 7
    %v7388 = vrot.slane %v7387, 2
    %v7389 = vrot.slane %v6217, 7
    %v7390 = vrot.slane %v7389, 2
    %v7391 = vrot.slane %v6225, 7
    %v7392 = vrot.slane %v7391, 2
    %v7393 = vrot.slane %v6224, 7
    %v7394 = vrot.slane %v7393, 2
    %v7395 = vrot.slane %v6226, 7
    %v7396 = vrot.slane %v7395, 2
    %v7397 = vrot.slane %v6268, 7
    %v7398 = vrot.slane %v7397, 2
    %v7399 = vrot.slane %v6276, 7
    %v7400 = vrot.slane %v7399, 2
    %v7401 = vrot.slane %v6275, 7
    %v7402 = vrot.slane %v7401, 2
    %v7403 = vrot.slane %v6277, 7
    %v7404 = vrot.slane %v7403, 2
    %v7405 = vrot.slane %v6285, 7
    %v7406 = vrot.slane %v7405, 2
    %v7407 = vrot.slane %v6293, 7
    %v7408 = vrot.slane %v7407, 2
    %v7409 = vrot.slane %v6292, 7
    %v7410 = vrot.slane %v7409, 2
    %v7411 = vrot.slane %v6294, 7
    %v7412 = vrot.slane %v7411, 2
    %v7413 = vrot.slane %v6336, 7
    %v7414 = vrot.slane %v7413, 2
    %v7415 = vrot.slane %v6344, 7
    %v7416 = vrot.slane %v7415, 2
    %v7417 = vrot.slane %v6343, 7
    %v7418 = vrot.slane %v7417, 2
    %v7419 = vrot.slane %v6345, 7
    %v7420 = vrot.slane %v7419, 2
    %v7421 = vrot.slane %v6353, 7
    %v7422 = vrot.slane %v7421, 2
    %v7423 = vrot.slane %v6361, 7
    %v7424 = vrot.slane %v7423, 2
    %v7425 = vrot.slane %v6360, 7
    %v7426 = vrot.slane %v7425, 2
    %v7427 = vrot.slane %v6362, 7
    %v7428 = vrot.slane %v7427, 2
    %v7429 = vrot.slane %v6404, 7
    %v7430 = vrot.slane %v7429, 2
    %v7431 = vrot.slane %v6412, 7
    %v7432 = vrot.slane %v7431, 2
    %v7433 = vrot.slane %v6411, 7
    %v7434 = vrot.slane %v7433, 2
    %v7435 = vrot.slane %v6413, 7
    %v7436 = vrot.slane %v7435, 2
    %v7437 = vrot.slane %v6421, 7
    %v7438 = vrot.slane %v7437, 2
    %v7439 = vrot.slane %v6429, 7
    %v7440 = vrot.slane %v7439, 2
    %v7441 = vrot.slane %v6428, 7
    %v7442 = vrot.slane %v7441, 2
    %v7443 = vrot.slane %v6430, 7
    %v7444 = vrot.slane %v7443, 2
    %v7445 = vrot.slane %v6472, 7
    %v7446 = vrot.slane %v7445, 2
    %v7447 = vrot.slane %v6480, 7
    %v7448 = vrot.slane %v7447, 2
    %v7449 = vrot.slane %v6479, 7
    %v7450 = vrot.slane %v7449, 2
    %v7451 = vrot.slane %v6481, 7
    %v7452 = vrot.slane %v7451, 2
    %v7453 = vrot.slane %v6489, 7
    %v7454 = vrot.slane %v7453, 2
    %v7455 = vrot.slane %v6497, 7
    %v7456 = vrot.slane %v7455, 2
    %v7457 = vrot.slane %v6496, 7
    %v7458 = vrot.slane %v7457, 2
    %v7459 = vrot.slane %v6498, 7
    %v7460 = vrot.slane %v7459, 2
    %v7461 = vrot.slane %v6540, 7
    %v7462 = vrot.slane %v7461, 2
    %v7463 = vrot.slane %v6548, 7
    %v7464 = vrot.slane %v7463, 2
    %v7465 = vrot.slane %v6547, 7
    %v7466 = vrot.slane %v7465, 2
    %v7467 = vrot.slane %v6549, 7
    %v7468 = vrot.slane %v7467, 2
    %v7469 = vrot.slane %v6557, 7
    %v7470 = vrot.slane %v7469, 2
    %v7471 = vrot.slane %v6565, 7
    %v7472 = vrot.slane %v7471, 2
    %v7473 = vrot.slane %v6564, 7
    %v7474 = vrot.slane %v7473, 2
    %v7475 = vrot.slane %v6566, 7
    %v7476 = vrot.slane %v7475, 2
    %v7477 = vrot.slane %v6608, 7
    %v7478 = vrot.slane %v7477, 2
    %v7479 = vrot.slane %v6616, 7
    %v7480 = vrot.slane %v7479, 2
    %v7481 = vrot.slane %v6615, 7
    %v7482 = vrot.slane %v7481, 2
    %v7483 = vrot.slane %v6617, 7
    %v7484 = vrot.slane %v7483, 2
    %v7485 = vrot.slane %v6625, 7
    %v7486 = vrot.slane %v7485, 2
    %v7487 = vrot.slane %v6633, 7
    %v7488 = vrot.slane %v7487, 2
    %v7489 = vrot.slane %v6632, 7
    %v7490 = vrot.slane %v7489, 2
    %v7491 = vrot.slane %v6634, 7
    %v7492 = vrot.slane %v7491, 2
    %v7493 = vrot.slane %v6676, 7
    %v7494 = vrot.slane %v7493, 2
    %v7495 = vrot.slane %v6684, 7
    %v7496 = vrot.slane %v7495, 2
    %v7497 = vrot.slane %v6683, 7
    %v7498 = vrot.slane %v7497, 2
    %v7499 = vrot.slane %v6685, 7
    %v7500 = vrot.slane %v7499, 2
    %v7501 = vrot.slane %v6693, 7
    %v7502 = vrot.slane %v7501, 2
    %v7503 = vrot.slane %v6701, 7
    %v7504 = vrot.slane %v7503, 2
    %v7505 = vrot.slane %v6700, 7
    %v7506 = vrot.slane %v7505, 2
    %v7507 = vrot.slane %v6702, 7
    %v7508 = vrot.slane %v7507, 2
    %v7509 = vrot.slane %v6744, 7
    %v7510 = vrot.slane %v7509, 2
    %v7511 = vrot.slane %v6752, 7
    %v7512 = vrot.slane %v7511, 2
    %v7513 = vrot.slane %v6751, 7
    %v7514 = vrot.slane %v7513, 2
    %v7515 = vrot.slane %v6753, 7
    %v7516 = vrot.slane %v7515, 2
    %v7517 = vrot.slane %v6761, 7
    %v7518 = vrot.slane %v7517, 2
    %v7519 = vrot.slane %v6769, 7
    %v7520 = vrot.slane %v7519, 2
    %v7521 = vrot.slane %v6768, 7
    %v7522 = vrot.slane %v7521, 2
    %v7523 = vrot.slane %v6770, 7
    %v7524 = vrot.slane %v7523, 2
    %v7525 = vrot.slane %v6812, 7
    %v7526 = vrot.slane %v7525, 2
    %v7527 = vrot.slane %v6820, 7
    %v7528 = vrot.slane %v7527, 2
    %v7529 = vrot.slane %v6819, 7
    %v7530 = vrot.slane %v7529, 2
    %v7531 = vrot.slane %v6821, 7
    %v7532 = vrot.slane %v7531, 2
    %v7533 = vrot.slane %v6829, 7
    %v7534 = vrot.slane %v7533, 2
    %v7535 = vrot.slane %v6837, 7
    %v7536 = vrot.slane %v7535, 2
    %v7537 = vrot.slane %v6836, 7
    %v7538 = vrot.slane %v7537, 2
    %v7539 = vrot.slane %v6838, 7
    %v7540 = vrot.slane %v7539, 2
    %v7541 = vrot.slane %v6880, 7
    %v7542 = vrot.slane %v7541, 2
    %v7543 = vrot.slane %v6888, 7
    %v7544 = vrot.slane %v7543, 2
    %v7545 = vrot.slane %v6887, 7
    %v7546 = vrot.slane %v7545, 2
    %v7547 = vrot.slane %v6889, 7
    %v7548 = vrot.slane %v7547, 2
    %v7549 = vrot.slane %v6897, 7
    %v7550 = vrot.slane %v7549, 2
    %v7551 = vrot.slane %v6905, 7
    %v7552 = vrot.slane %v7551, 2
    %v7553 = vrot.slane %v6904, 7
    %v7554 = vrot.slane %v7553, 2
    %v7555 = vrot.slane %v6906, 7
    %v7556 = vrot.slane %v7555, 2
    %v7557 = vrot.slane %v6948, 7
    %v7558 = vrot.slane %v7557, 2
    %v7559 = vrot.slane %v6956, 7
    %v7560 = vrot.slane %v7559, 2
    %v7561 = vrot.slane %v6955, 7
    %v7562 = vrot.slane %v7561, 2
    %v7563 = vrot.slane %v6957, 7
    %v7564 = vrot.slane %v7563, 2
    %v7565 = vrot.slane %v6965, 7
    %v7566 = vrot.slane %v7565, 2
    %v7567 = vrot.slane %v6973, 7
    %v7568 = vrot.slane %v7567, 2
    %v7569 = vrot.slane %v6972, 7
    %v7570 = vrot.slane %v7569, 2
    %v7571 = vrot.slane %v6974, 7
    %v7572 = vrot.slane %v7571, 2
    %v7573 = vrot.slane %v7016, 7
    %v7574 = vrot.slane %v7573, 2
    %v7575 = vrot.slane %v7024, 7
    %v7576 = vrot.slane %v7575, 2
    %v7577 = vrot.slane %v7023, 7
    %v7578 = vrot.slane %v7577, 2
    %v7579 = vrot.slane %v7025, 7
    %v7580 = vrot.slane %v7579, 2
    %v7581 = vrot.slane %v7033, 7
    %v7582 = vrot.slane %v7581, 2
    %v7583 = vrot.slane %v7041, 7
    %v7584 = vrot.slane %v7583, 2
    %v7585 = vrot.slane %v7040, 7
    %v7586 = vrot.slane %v7585, 2
    %v7587 = vrot.slane %v7042, 7
    %v7588 = vrot.slane %v7587, 2
    %v7717 = vmax.f32 %v5996, %v7334
    %v7718 = vmax.f32 %v6004, %v7336
    %v7719 = vmax.f32 %v6003, %v7338
    %v7720 = vmax.f32 %v6005, %v7340
    %v7721 = vmax.f32 %v6013, %v7342
    %v7722 = vmax.f32 %v6021, %v7344
    %v7723 = vmax.f32 %v6020, %v7346
    %v7724 = vmax.f32 %v6022, %v7348
    %v7725 = vmax.f32 %v6064, %v7350
    %v7726 = vmax.f32 %v6072, %v7352
    %v7727 = vmax.f32 %v6071, %v7354
    %v7728 = vmax.f32 %v6073, %v7356
    %v7729 = vmax.f32 %v6081, %v7358
    %v7730 = vmax.f32 %v6089, %v7360
    %v7731 = vmax.f32 %v6088, %v7362
    %v7732 = vmax.f32 %v6090, %v7364
    %v7733 = vmax.f32 %v6132, %v7366
    %v7734 = vmax.f32 %v6140, %v7368
    %v7735 = vmax.f32 %v6139, %v7370
    %v7736 = vmax.f32 %v6141, %v7372
    %v7737 = vmax.f32 %v6149, %v7374
    %v7738 = vmax.f32 %v6157, %v7376
    %v7739 = vmax.f32 %v6156, %v7378
    %v7740 = vmax.f32 %v6158, %v7380
    %v7741 = vmax.f32 %v6200, %v7382
    %v7742 = vmax.f32 %v6208, %v7384
    %v7743 = vmax.f32 %v6207, %v7386
    %v7744 = vmax.f32 %v6209, %v7388
    %v7745 = vmax.f32 %v6217, %v7390
    %v7746 = vmax.f32 %v6225, %v7392
    %v7747 = vmax.f32 %v6224, %v7394
    %v7748 = vmax.f32 %v6226, %v7396
    %v7749 = vmax.f32 %v6268, %v7398
    %v7750 = vmax.f32 %v6276, %v7400
    %v7751 = vmax.f32 %v6275, %v7402
    %v7752 = vmax.f32 %v6277, %v7404
    %v7753 = vmax.f32 %v6285, %v7406
    %v7754 = vmax.f32 %v6293, %v7408
    %v7755 = vmax.f32 %v6292, %v7410
    %v7756 = vmax.f32 %v6294, %v7412
    %v7757 = vmax.f32 %v6336, %v7414
    %v7758 = vmax.f32 %v6344, %v7416
    %v7759 = vmax.f32 %v6343, %v7418
    %v7760 = vmax.f32 %v6345, %v7420
    %v7761 = vmax.f32 %v6353, %v7422
    %v7762 = vmax.f32 %v6361, %v7424
    %v7763 = vmax.f32 %v6360, %v7426
    %v7764 = vmax.f32 %v6362, %v7428
    %v7765 = vmax.f32 %v6404, %v7430
    %v7766 = vmax.f32 %v6412, %v7432
    %v7767 = vmax.f32 %v6411, %v7434
    %v7768 = vmax.f32 %v6413, %v7436
    %v7769 = vmax.f32 %v6421, %v7438
    %v7770 = vmax.f32 %v6429, %v7440
    %v7771 = vmax.f32 %v6428, %v7442
    %v7772 = vmax.f32 %v6430, %v7444
    %v7773 = vmax.f32 %v6472, %v7446
    %v7774 = vmax.f32 %v6480, %v7448
    %v7775 = vmax.f32 %v6479, %v7450
    %v7776 = vmax.f32 %v6481, %v7452
    %v7777 = vmax.f32 %v6489, %v7454
    %v7778 = vmax.f32 %v6497, %v7456
    %v7779 = vmax.f32 %v6496, %v7458
    %v7780 = vmax.f32 %v6498, %v7460
    %v7781 = vmax.f32 %v6540, %v7462
    %v7782 = vmax.f32 %v6548, %v7464
    %v7783 = vmax.f32 %v6547, %v7466
    %v7784 = vmax.f32 %v6549, %v7468
    %v7785 = vmax.f32 %v6557, %v7470
    %v7786 = vmax.f32 %v6565, %v7472
    %v7787 = vmax.f32 %v6564, %v7474
    %v7788 = vmax.f32 %v6566, %v7476
    %v7789 = vmax.f32 %v6608, %v7478
    %v7790 = vmax.f32 %v6616, %v7480
    %v7791 = vmax.f32 %v6615, %v7482
    %v7792 = vmax.f32 %v6617, %v7484
    %v7793 = vmax.f32 %v6625, %v7486
    %v7794 = vmax.f32 %v6633, %v7488
    %v7795 = vmax.f32 %v6632, %v7490
    %v7796 = vmax.f32 %v6634, %v7492
    %v7797 = vmax.f32 %v6676, %v7494
    %v7798 = vmax.f32 %v6684, %v7496
    %v7799 = vmax.f32 %v6683, %v7498
    %v7800 = vmax.f32 %v6685, %v7500
    %v7801 = vmax.f32 %v6693, %v7502
    %v7802 = vmax.f32 %v6701, %v7504
    %v7803 = vmax.f32 %v6700, %v7506
    %v7804 = vmax.f32 %v6702, %v7508
    %v7805 = vmax.f32 %v6744, %v7510
    %v7806 = vmax.f32 %v6752, %v7512
    %v7807 = vmax.f32 %v6751, %v7514
    %v7808 = vmax.f32 %v6753, %v7516
    %v7809 = vmax.f32 %v6761, %v7518
    %v7810 = vmax.f32 %v6769, %v7520
    %v7811 = vmax.f32 %v6768, %v7522
    %v7812 = vmax.f32 %v6770, %v7524
    %v7813 = vmax.f32 %v6812, %v7526
    %v7814 = vmax.f32 %v6820, %v7528
    %v7815 = vmax.f32 %v6819, %v7530
    %v7816 = vmax.f32 %v6821, %v7532
    %v7817 = vmax.f32 %v6829, %v7534
    %v7818 = vmax.f32 %v6837, %v7536
    %v7819 = vmax.f32 %v6836, %v7538
    %v7820 = vmax.f32 %v6838, %v7540
    %v7821 = vmax.f32 %v6880, %v7542
    %v7822 = vmax.f32 %v6888, %v7544
    %v7823 = vmax.f32 %v6887, %v7546
    %v7824 = vmax.f32 %v6889, %v7548
    %v7825 = vmax.f32 %v6897, %v7550
    %v7826 = vmax.f32 %v6905, %v7552
    %v7827 = vmax.f32 %v6904, %v7554
    %v7828 = vmax.f32 %v6906, %v7556
    %v7829 = vmax.f32 %v6948, %v7558
    %v7830 = vmax.f32 %v6956, %v7560
    %v7831 = vmax.f32 %v6955, %v7562
    %v7832 = vmax.f32 %v6957, %v7564
    %v7833 = vmax.f32 %v6965, %v7566
    %v7834 = vmax.f32 %v6973, %v7568
    %v7835 = vmax.f32 %v6972, %v7570
    %v7836 = vmax.f32 %v6974, %v7572
    %v7837 = vmax.f32 %v7016, %v7574
    %v7838 = vmax.f32 %v7024, %v7576
    %v7839 = vmax.f32 %v7023, %v7578
    %v7840 = vmax.f32 %v7025, %v7580
    %v7841 = vmax.f32 %v7033, %v7582
    %v7842 = vmax.f32 %v7041, %v7584
    %v7843 = vmax.f32 %v7040, %v7586
    %v7844 = vmax.f32 %v7042, %v7588
    %v7845 = vrot.slane %v6030, 7
    %v7846 = vrot.slane %v7845, 2
    %v7847 = vrot.slane %v6038, 7
    %v7848 = vrot.slane %v7847, 2
    %v7849 = vrot.slane %v6037, 7
    %v7850 = vrot.slane %v7849, 2
    %v7851 = vrot.slane %v6039, 7
    %v7852 = vrot.slane %v7851, 2
    %v7853 = vrot.slane %v6047, 7
    %v7854 = vrot.slane %v7853, 2
    %v7855 = vrot.slane %v6055, 7
    %v7856 = vrot.slane %v7855, 2
    %v7857 = vrot.slane %v6054, 7
    %v7858 = vrot.slane %v7857, 2
    %v7859 = vrot.slane %v6056, 7
    %v7860 = vrot.slane %v7859, 2
    %v7861 = vrot.slane %v6098, 7
    %v7862 = vrot.slane %v7861, 2
    %v7863 = vrot.slane %v6106, 7
    %v7864 = vrot.slane %v7863, 2
    %v7865 = vrot.slane %v6105, 7
    %v7866 = vrot.slane %v7865, 2
    %v7867 = vrot.slane %v6107, 7
    %v7868 = vrot.slane %v7867, 2
    %v7869 = vrot.slane %v6115, 7
    %v7870 = vrot.slane %v7869, 2
    %v7871 = vrot.slane %v6123, 7
    %v7872 = vrot.slane %v7871, 2
    %v7873 = vrot.slane %v6122, 7
    %v7874 = vrot.slane %v7873, 2
    %v7875 = vrot.slane %v6124, 7
    %v7876 = vrot.slane %v7875, 2
    %v7877 = vrot.slane %v6166, 7
    %v7878 = vrot.slane %v7877, 2
    %v7879 = vrot.slane %v6174, 7
    %v7880 = vrot.slane %v7879, 2
    %v7881 = vrot.slane %v6173, 7
    %v7882 = vrot.slane %v7881, 2
    %v7883 = vrot.slane %v6175, 7
    %v7884 = vrot.slane %v7883, 2
    %v7885 = vrot.slane %v6183, 7
    %v7886 = vrot.slane %v7885, 2
    %v7887 = vrot.slane %v6191, 7
    %v7888 = vrot.slane %v7887, 2
    %v7889 = vrot.slane %v6190, 7
    %v7890 = vrot.slane %v7889, 2
    %v7891 = vrot.slane %v6192, 7
    %v7892 = vrot.slane %v7891, 2
    %v7893 = vrot.slane %v6234, 7
    %v7894 = vrot.slane %v7893, 2
    %v7895 = vrot.slane %v6242, 7
    %v7896 = vrot.slane %v7895, 2
    %v7897 = vrot.slane %v6241, 7
    %v7898 = vrot.slane %v7897, 2
    %v7899 = vrot.slane %v6243, 7
    %v7900 = vrot.slane %v7899, 2
    %v7901 = vrot.slane %v6251, 7
    %v7902 = vrot.slane %v7901, 2
    %v7903 = vrot.slane %v6259, 7
    %v7904 = vrot.slane %v7903, 2
    %v7905 = vrot.slane %v6258, 7
    %v7906 = vrot.slane %v7905, 2
    %v7907 = vrot.slane %v6260, 7
    %v7908 = vrot.slane %v7907, 2
    %v7909 = vrot.slane %v6302, 7
    %v7910 = vrot.slane %v7909, 2
    %v7911 = vrot.slane %v6310, 7
    %v7912 = vrot.slane %v7911, 2
    %v7913 = vrot.slane %v6309, 7
    %v7914 = vrot.slane %v7913, 2
    %v7915 = vrot.slane %v6311, 7
    %v7916 = vrot.slane %v7915, 2
    %v7917 = vrot.slane %v6319, 7
    %v7918 = vrot.slane %v7917, 2
    %v7919 = vrot.slane %v6327, 7
    %v7920 = vrot.slane %v7919, 2
    %v7921 = vrot.slane %v6326, 7
    %v7922 = vrot.slane %v7921, 2
    %v7923 = vrot.slane %v6328, 7
    %v7924 = vrot.slane %v7923, 2
    %v7925 = vrot.slane %v6370, 7
    %v7926 = vrot.slane %v7925, 2
    %v7927 = vrot.slane %v6378, 7
    %v7928 = vrot.slane %v7927, 2
    %v7929 = vrot.slane %v6377, 7
    %v7930 = vrot.slane %v7929, 2
    %v7931 = vrot.slane %v6379, 7
    %v7932 = vrot.slane %v7931, 2
    %v7933 = vrot.slane %v6387, 7
    %v7934 = vrot.slane %v7933, 2
    %v7935 = vrot.slane %v6395, 7
    %v7936 = vrot.slane %v7935, 2
    %v7937 = vrot.slane %v6394, 7
    %v7938 = vrot.slane %v7937, 2
    %v7939 = vrot.slane %v6396, 7
    %v7940 = vrot.slane %v7939, 2
    %v7941 = vrot.slane %v6438, 7
    %v7942 = vrot.slane %v7941, 2
    %v7943 = vrot.slane %v6446, 7
    %v7944 = vrot.slane %v7943, 2
    %v7945 = vrot.slane %v6445, 7
    %v7946 = vrot.slane %v7945, 2
    %v7947 = vrot.slane %v6447, 7
    %v7948 = vrot.slane %v7947, 2
    %v7949 = vrot.slane %v6455, 7
    %v7950 = vrot.slane %v7949, 2
    %v7951 = vrot.slane %v6463, 7
    %v7952 = vrot.slane %v7951, 2
    %v7953 = vrot.slane %v6462, 7
    %v7954 = vrot.slane %v7953, 2
    %v7955 = vrot.slane %v6464, 7
    %v7956 = vrot.slane %v7955, 2
    %v7957 = vrot.slane %v6506, 7
    %v7958 = vrot.slane %v7957, 2
    %v7959 = vrot.slane %v6514, 7
    %v7960 = vrot.slane %v7959, 2
    %v7961 = vrot.slane %v6513, 7
    %v7962 = vrot.slane %v7961, 2
    %v7963 = vrot.slane %v6515, 7
    %v7964 = vrot.slane %v7963, 2
    %v7965 = vrot.slane %v6523, 7
    %v7966 = vrot.slane %v7965, 2
    %v7967 = vrot.slane %v6531, 7
    %v7968 = vrot.slane %v7967, 2
    %v7969 = vrot.slane %v6530, 7
    %v7970 = vrot.slane %v7969, 2
    %v7971 = vrot.slane %v6532, 7
    %v7972 = vrot.slane %v7971, 2
    %v7973 = vrot.slane %v6574, 7
    %v7974 = vrot.slane %v7973, 2
    %v7975 = vrot.slane %v6582, 7
    %v7976 = vrot.slane %v7975, 2
    %v7977 = vrot.slane %v6581, 7
    %v7978 = vrot.slane %v7977, 2
    %v7979 = vrot.slane %v6583, 7
    %v7980 = vrot.slane %v7979, 2
    %v7981 = vrot.slane %v6591, 7
    %v7982 = vrot.slane %v7981, 2
    %v7983 = vrot.slane %v6599, 7
    %v7984 = vrot.slane %v7983, 2
    %v7985 = vrot.slane %v6598, 7
    %v7986 = vrot.slane %v7985, 2
    %v7987 = vrot.slane %v6600, 7
    %v7988 = vrot.slane %v7987, 2
    %v7989 = vrot.slane %v6642, 7
    %v7990 = vrot.slane %v7989, 2
    %v7991 = vrot.slane %v6650, 7
    %v7992 = vrot.slane %v7991, 2
    %v7993 = vrot.slane %v6649, 7
    %v7994 = vrot.slane %v7993, 2
    %v7995 = vrot.slane %v6651, 7
    %v7996 = vrot.slane %v7995, 2
    %v7997 = vrot.slane %v6659, 7
    %v7998 = vrot.slane %v7997, 2
    %v7999 = vrot.slane %v6667, 7
    %v8000 = vrot.slane %v7999, 2
    %v8001 = vrot.slane %v6666, 7
    %v8002 = vrot.slane %v8001, 2
    %v8003 = vrot.slane %v6668, 7
    %v8004 = vrot.slane %v8003, 2
    %v8005 = vrot.slane %v6710, 7
    %v8006 = vrot.slane %v8005, 2
    %v8007 = vrot.slane %v6718, 7
    %v8008 = vrot.slane %v8007, 2
    %v8009 = vrot.slane %v6717, 7
    %v8010 = vrot.slane %v8009, 2
    %v8011 = vrot.slane %v6719, 7
    %v8012 = vrot.slane %v8011, 2
    %v8013 = vrot.slane %v6727, 7
    %v8014 = vrot.slane %v8013, 2
    %v8015 = vrot.slane %v6735, 7
    %v8016 = vrot.slane %v8015, 2
    %v8017 = vrot.slane %v6734, 7
    %v8018 = vrot.slane %v8017, 2
    %v8019 = vrot.slane %v6736, 7
    %v8020 = vrot.slane %v8019, 2
    %v8021 = vrot.slane %v6778, 7
    %v8022 = vrot.slane %v8021, 2
    %v8023 = vrot.slane %v6786, 7
    %v8024 = vrot.slane %v8023, 2
    %v8025 = vrot.slane %v6785, 7
    %v8026 = vrot.slane %v8025, 2
    %v8027 = vrot.slane %v6787, 7
    %v8028 = vrot.slane %v8027, 2
    %v8029 = vrot.slane %v6795, 7
    %v8030 = vrot.slane %v8029, 2
    %v8031 = vrot.slane %v6803, 7
    %v8032 = vrot.slane %v8031, 2
    %v8033 = vrot.slane %v6802, 7
    %v8034 = vrot.slane %v8033, 2
    %v8035 = vrot.slane %v6804, 7
    %v8036 = vrot.slane %v8035, 2
    %v8037 = vrot.slane %v6846, 7
    %v8038 = vrot.slane %v8037, 2
    %v8039 = vrot.slane %v6854, 7
    %v8040 = vrot.slane %v8039, 2
    %v8041 = vrot.slane %v6853, 7
    %v8042 = vrot.slane %v8041, 2
    %v8043 = vrot.slane %v6855, 7
    %v8044 = vrot.slane %v8043, 2
    %v8045 = vrot.slane %v6863, 7
    %v8046 = vrot.slane %v8045, 2
    %v8047 = vrot.slane %v6871, 7
    %v8048 = vrot.slane %v8047, 2
    %v8049 = vrot.slane %v6870, 7
    %v8050 = vrot.slane %v8049, 2
    %v8051 = vrot.slane %v6872, 7
    %v8052 = vrot.slane %v8051, 2
    %v8053 = vrot.slane %v6914, 7
    %v8054 = vrot.slane %v8053, 2
    %v8055 = vrot.slane %v6922, 7
    %v8056 = vrot.slane %v8055, 2
    %v8057 = vrot.slane %v6921, 7
    %v8058 = vrot.slane %v8057, 2
    %v8059 = vrot.slane %v6923, 7
    %v8060 = vrot.slane %v8059, 2
    %v8061 = vrot.slane %v6931, 7
    %v8062 = vrot.slane %v8061, 2
    %v8063 = vrot.slane %v6939, 7
    %v8064 = vrot.slane %v8063, 2
    %v8065 = vrot.slane %v6938, 7
    %v8066 = vrot.slane %v8065, 2
    %v8067 = vrot.slane %v6940, 7
    %v8068 = vrot.slane %v8067, 2
    %v8069 = vrot.slane %v6982, 7
    %v8070 = vrot.slane %v8069, 2
    %v8071 = vrot.slane %v6990, 7
    %v8072 = vrot.slane %v8071, 2
    %v8073 = vrot.slane %v6989, 7
    %v8074 = vrot.slane %v8073, 2
    %v8075 = vrot.slane %v6991, 7
    %v8076 = vrot.slane %v8075, 2
    %v8077 = vrot.slane %v6999, 7
    %v8078 = vrot.slane %v8077, 2
    %v8079 = vrot.slane %v7007, 7
    %v8080 = vrot.slane %v8079, 2
    %v8081 = vrot.slane %v7006, 7
    %v8082 = vrot.slane %v8081, 2
    %v8083 = vrot.slane %v7008, 7
    %v8084 = vrot.slane %v8083, 2
    %v8085 = vrot.slane %v7050, 7
    %v8086 = vrot.slane %v8085, 2
    %v8087 = vrot.slane %v7058, 7
    %v8088 = vrot.slane %v8087, 2
    %v8089 = vrot.slane %v7057, 7
    %v8090 = vrot.slane %v8089, 2
    %v8091 = vrot.slane %v7059, 7
    %v8092 = vrot.slane %v8091, 2
    %v8093 = vrot.slane %v7067, 7
    %v8094 = vrot.slane %v8093, 2
    %v8095 = vrot.slane %v7075, 7
    %v8096 = vrot.slane %v8095, 2
    %v8097 = vrot.slane %v7074, 7
    %v8098 = vrot.slane %v8097, 2
    %v8099 = vrot.slane %v7076, 7
    %v8100 = vrot.slane %v8099, 2
    %v8229 = vmax.f32 %v6030, %v7846
    %v8230 = vmax.f32 %v6038, %v7848
    %v8231 = vmax.f32 %v6037, %v7850
    %v8232 = vmax.f32 %v6039, %v7852
    %v8233 = vmax.f32 %v6047, %v7854
    %v8234 = vmax.f32 %v6055, %v7856
    %v8235 = vmax.f32 %v6054, %v7858
    %v8236 = vmax.f32 %v6056, %v7860
    %v8237 = vmax.f32 %v6098, %v7862
    %v8238 = vmax.f32 %v6106, %v7864
    %v8239 = vmax.f32 %v6105, %v7866
    %v8240 = vmax.f32 %v6107, %v7868
    %v8241 = vmax.f32 %v6115, %v7870
    %v8242 = vmax.f32 %v6123, %v7872
    %v8243 = vmax.f32 %v6122, %v7874
    %v8244 = vmax.f32 %v6124, %v7876
    %v8245 = vmax.f32 %v6166, %v7878
    %v8246 = vmax.f32 %v6174, %v7880
    %v8247 = vmax.f32 %v6173, %v7882
    %v8248 = vmax.f32 %v6175, %v7884
    %v8249 = vmax.f32 %v6183, %v7886
    %v8250 = vmax.f32 %v6191, %v7888
    %v8251 = vmax.f32 %v6190, %v7890
    %v8252 = vmax.f32 %v6192, %v7892
    %v8253 = vmax.f32 %v6234, %v7894
    %v8254 = vmax.f32 %v6242, %v7896
    %v8255 = vmax.f32 %v6241, %v7898
    %v8256 = vmax.f32 %v6243, %v7900
    %v8257 = vmax.f32 %v6251, %v7902
    %v8258 = vmax.f32 %v6259, %v7904
    %v8259 = vmax.f32 %v6258, %v7906
    %v8260 = vmax.f32 %v6260, %v7908
    %v8261 = vmax.f32 %v6302, %v7910
    %v8262 = vmax.f32 %v6310, %v7912
    %v8263 = vmax.f32 %v6309, %v7914
    %v8264 = vmax.f32 %v6311, %v7916
    %v8265 = vmax.f32 %v6319, %v7918
    %v8266 = vmax.f32 %v6327, %v7920
    %v8267 = vmax.f32 %v6326, %v7922
    %v8268 = vmax.f32 %v6328, %v7924
    %v8269 = vmax.f32 %v6370, %v7926
    %v8270 = vmax.f32 %v6378, %v7928
    %v8271 = vmax.f32 %v6377, %v7930
    %v8272 = vmax.f32 %v6379, %v7932
    %v8273 = vmax.f32 %v6387, %v7934
    %v8274 = vmax.f32 %v6395, %v7936
    %v8275 = vmax.f32 %v6394, %v7938
    %v8276 = vmax.f32 %v6396, %v7940
    %v8277 = vmax.f32 %v6438, %v7942
    %v8278 = vmax.f32 %v6446, %v7944
    %v8279 = vmax.f32 %v6445, %v7946
    %v8280 = vmax.f32 %v6447, %v7948
    %v8281 = vmax.f32 %v6455, %v7950
    %v8282 = vmax.f32 %v6463, %v7952
    %v8283 = vmax.f32 %v6462, %v7954
    %v8284 = vmax.f32 %v6464, %v7956
    %v8285 = vmax.f32 %v6506, %v7958
    %v8286 = vmax.f32 %v6514, %v7960
    %v8287 = vmax.f32 %v6513, %v7962
    %v8288 = vmax.f32 %v6515, %v7964
    %v8289 = vmax.f32 %v6523, %v7966
    %v8290 = vmax.f32 %v6531, %v7968
    %v8291 = vmax.f32 %v6530, %v7970
    %v8292 = vmax.f32 %v6532, %v7972
    %v8293 = vmax.f32 %v6574, %v7974
    %v8294 = vmax.f32 %v6582, %v7976
    %v8295 = vmax.f32 %v6581, %v7978
    %v8296 = vmax.f32 %v6583, %v7980
    %v8297 = vmax.f32 %v6591, %v7982
    %v8298 = vmax.f32 %v6599, %v7984
    %v8299 = vmax.f32 %v6598, %v7986
    %v8300 = vmax.f32 %v6600, %v7988
    %v8301 = vmax.f32 %v6642, %v7990
    %v8302 = vmax.f32 %v6650, %v7992
    %v8303 = vmax.f32 %v6649, %v7994
    %v8304 = vmax.f32 %v6651, %v7996
    %v8305 = vmax.f32 %v6659, %v7998
    %v8306 = vmax.f32 %v6667, %v8000
    %v8307 = vmax.f32 %v6666, %v8002
    %v8308 = vmax.f32 %v6668, %v8004
    %v8309 = vmax.f32 %v6710, %v8006
    %v8310 = vmax.f32 %v6718, %v8008
    %v8311 = vmax.f32 %v6717, %v8010
    %v8312 = vmax.f32 %v6719, %v8012
    %v8313 = vmax.f32 %v6727, %v8014
    %v8314 = vmax.f32 %v6735, %v8016
    %v8315 = vmax.f32 %v6734, %v8018
    %v8316 = vmax.f32 %v6736, %v8020
    %v8317 = vmax.f32 %v6778, %v8022
    %v8318 = vmax.f32 %v6786, %v8024
    %v8319 = vmax.f32 %v6785, %v8026
    %v8320 = vmax.f32 %v6787, %v8028
    %v8321 = vmax.f32 %v6795, %v8030
    %v8322 = vmax.f32 %v6803, %v8032
    %v8323 = vmax.f32 %v6802, %v8034
    %v8324 = vmax.f32 %v6804, %v8036
    %v8325 = vmax.f32 %v6846, %v8038
    %v8326 = vmax.f32 %v6854, %v8040
    %v8327 = vmax.f32 %v6853, %v8042
    %v8328 = vmax.f32 %v6855, %v8044
    %v8329 = vmax.f32 %v6863, %v8046
    %v8330 = vmax.f32 %v6871, %v8048
    %v8331 = vmax.f32 %v6870, %v8050
    %v8332 = vmax.f32 %v6872, %v8052
    %v8333 = vmax.f32 %v6914, %v8054
    %v8334 = vmax.f32 %v6922, %v8056
    %v8335 = vmax.f32 %v6921, %v8058
    %v8336 = vmax.f32 %v6923, %v8060
    %v8337 = vmax.f32 %v6931, %v8062
    %v8338 = vmax.f32 %v6939, %v8064
    %v8339 = vmax.f32 %v6938, %v8066
    %v8340 = vmax.f32 %v6940, %v8068
    %v8341 = vmax.f32 %v6982, %v8070
    %v8342 = vmax.f32 %v6990, %v8072
    %v8343 = vmax.f32 %v6989, %v8074
    %v8344 = vmax.f32 %v6991, %v8076
    %v8345 = vmax.f32 %v6999, %v8078
    %v8346 = vmax.f32 %v7007, %v8080
    %v8347 = vmax.f32 %v7006, %v8082
    %v8348 = vmax.f32 %v7008, %v8084
    %v8349 = vmax.f32 %v7050, %v8086
    %v8350 = vmax.f32 %v7058, %v8088
    %v8351 = vmax.f32 %v7057, %v8090
    %v8352 = vmax.f32 %v7059, %v8092
    %v8353 = vmax.f32 %v7067, %v8094
    %v8354 = vmax.f32 %v7075, %v8096
    %v8355 = vmax.f32 %v7074, %v8098
    %v8356 = vmax.f32 %v7076, %v8100
    %v8357 = vmax.f32 %v7717, %v8229
    %v8358 = vmax.f32 %v7718, %v8230
    %v8359 = vmax.f32 %v7719, %v8231
    %v8360 = vmax.f32 %v7720, %v8232
    %v8361 = vmax.f32 %v7721, %v8233
    %v8362 = vmax.f32 %v7722, %v8234
    %v8363 = vmax.f32 %v7723, %v8235
    %v8364 = vmax.f32 %v7724, %v8236
    %v8365 = vmax.f32 %v7725, %v8237
    %v8366 = vmax.f32 %v7726, %v8238
    %v8367 = vmax.f32 %v7727, %v8239
    %v8368 = vmax.f32 %v7728, %v8240
    %v8369 = vmax.f32 %v7729, %v8241
    %v8370 = vmax.f32 %v7730, %v8242
    %v8371 = vmax.f32 %v7731, %v8243
    %v8372 = vmax.f32 %v7732, %v8244
    %v8373 = vmax.f32 %v7733, %v8245
    %v8374 = vmax.f32 %v7734, %v8246
    %v8375 = vmax.f32 %v7735, %v8247
    %v8376 = vmax.f32 %v7736, %v8248
    %v8377 = vmax.f32 %v7737, %v8249
    %v8378 = vmax.f32 %v7738, %v8250
    %v8379 = vmax.f32 %v7739, %v8251
    %v8380 = vmax.f32 %v7740, %v8252
    %v8381 = vmax.f32 %v7741, %v8253
    %v8382 = vmax.f32 %v7742, %v8254
    %v8383 = vmax.f32 %v7743, %v8255
    %v8384 = vmax.f32 %v7744, %v8256
    %v8385 = vmax.f32 %v7745, %v8257
    %v8386 = vmax.f32 %v7746, %v8258
    %v8387 = vmax.f32 %v7747, %v8259
    %v8388 = vmax.f32 %v7748, %v8260
    %v8389 = vmax.f32 %v7749, %v8261
    %v8390 = vmax.f32 %v7750, %v8262
    %v8391 = vmax.f32 %v7751, %v8263
    %v8392 = vmax.f32 %v7752, %v8264
    %v8393 = vmax.f32 %v7753, %v8265
    %v8394 = vmax.f32 %v7754, %v8266
    %v8395 = vmax.f32 %v7755, %v8267
    %v8396 = vmax.f32 %v7756, %v8268
    %v8397 = vmax.f32 %v7757, %v8269
    %v8398 = vmax.f32 %v7758, %v8270
    %v8399 = vmax.f32 %v7759, %v8271
    %v8400 = vmax.f32 %v7760, %v8272
    %v8401 = vmax.f32 %v7761, %v8273
    %v8402 = vmax.f32 %v7762, %v8274
    %v8403 = vmax.f32 %v7763, %v8275
    %v8404 = vmax.f32 %v7764, %v8276
    %v8405 = vmax.f32 %v7765, %v8277
    %v8406 = vmax.f32 %v7766, %v8278
    %v8407 = vmax.f32 %v7767, %v8279
    %v8408 = vmax.f32 %v7768, %v8280
    %v8409 = vmax.f32 %v7769, %v8281
    %v8410 = vmax.f32 %v7770, %v8282
    %v8411 = vmax.f32 %v7771, %v8283
    %v8412 = vmax.f32 %v7772, %v8284
    %v8413 = vmax.f32 %v7773, %v8285
    %v8414 = vmax.f32 %v7774, %v8286
    %v8415 = vmax.f32 %v7775, %v8287
    %v8416 = vmax.f32 %v7776, %v8288
    %v8417 = vmax.f32 %v7777, %v8289
    %v8418 = vmax.f32 %v7778, %v8290
    %v8419 = vmax.f32 %v7779, %v8291
    %v8420 = vmax.f32 %v7780, %v8292
    %v8421 = vmax.f32 %v7781, %v8293
    %v8422 = vmax.f32 %v7782, %v8294
    %v8423 = vmax.f32 %v7783, %v8295
    %v8424 = vmax.f32 %v7784, %v8296
    %v8425 = vmax.f32 %v7785, %v8297
    %v8426 = vmax.f32 %v7786, %v8298
    %v8427 = vmax.f32 %v7787, %v8299
    %v8428 = vmax.f32 %v7788, %v8300
    %v8429 = vmax.f32 %v7789, %v8301
    %v8430 = vmax.f32 %v7790, %v8302
    %v8431 = vmax.f32 %v7791, %v8303
    %v8432 = vmax.f32 %v7792, %v8304
    %v8433 = vmax.f32 %v7793, %v8305
    %v8434 = vmax.f32 %v7794, %v8306
    %v8435 = vmax.f32 %v7795, %v8307
    %v8436 = vmax.f32 %v7796, %v8308
    %v8437 = vmax.f32 %v7797, %v8309
    %v8438 = vmax.f32 %v7798, %v8310
    %v8439 = vmax.f32 %v7799, %v8311
    %v8440 = vmax.f32 %v7800, %v8312
    %v8441 = vmax.f32 %v7801, %v8313
    %v8442 = vmax.f32 %v7802, %v8314
    %v8443 = vmax.f32 %v7803, %v8315
    %v8444 = vmax.f32 %v7804, %v8316
    %v8445 = vmax.f32 %v7805, %v8317
    %v8446 = vmax.f32 %v7806, %v8318
    %v8447 = vmax.f32 %v7807, %v8319
    %v8448 = vmax.f32 %v7808, %v8320
    %v8449 = vmax.f32 %v7809, %v8321
    %v8450 = vmax.f32 %v7810, %v8322
    %v8451 = vmax.f32 %v7811, %v8323
    %v8452 = vmax.f32 %v7812, %v8324
    %v8453 = vmax.f32 %v7813, %v8325
    %v8454 = vmax.f32 %v7814, %v8326
    %v8455 = vmax.f32 %v7815, %v8327
    %v8456 = vmax.f32 %v7816, %v8328
    %v8457 = vmax.f32 %v7817, %v8329
    %v8458 = vmax.f32 %v7818, %v8330
    %v8459 = vmax.f32 %v7819, %v8331
    %v8460 = vmax.f32 %v7820, %v8332
    %v8461 = vmax.f32 %v7821, %v8333
    %v8462 = vmax.f32 %v7822, %v8334
    %v8463 = vmax.f32 %v7823, %v8335
    %v8464 = vmax.f32 %v7824, %v8336
    %v8465 = vmax.f32 %v7825, %v8337
    %v8466 = vmax.f32 %v7826, %v8338
    %v8467 = vmax.f32 %v7827, %v8339
    %v8468 = vmax.f32 %v7828, %v8340
    %v8469 = vmax.f32 %v7829, %v8341
    %v8470 = vmax.f32 %v7830, %v8342
    %v8471 = vmax.f32 %v7831, %v8343
    %v8472 = vmax.f32 %v7832, %v8344
    %v8473 = vmax.f32 %v7833, %v8345
    %v8474 = vmax.f32 %v7834, %v8346
    %v8475 = vmax.f32 %v7835, %v8347
    %v8476 = vmax.f32 %v7836, %v8348
    %v8477 = vmax.f32 %v7837, %v8349
    %v8478 = vmax.f32 %v7838, %v8350
    %v8479 = vmax.f32 %v7839, %v8351
    %v8480 = vmax.f32 %v7840, %v8352
    %v8481 = vmax.f32 %v7841, %v8353
    %v8482 = vmax.f32 %v7842, %v8354
    %v8483 = vmax.f32 %v7843, %v8355
    %v8484 = vmax.f32 %v7844, %v8356
    %v8485 = vld [vmem:[%s2] sm:$0xff]
    %v8486 = vld [vmem:[%s2 + $0x8] sm:$0xff]
    %v8487 = vld [vmem:[%s2 + $0x10] sm:$0xff]
    %v8488 = vld [vmem:[%s2 + $0x18] sm:$0xff]
    %v8489 = vld [vmem:[%s2 + $0x20] sm:$0xff]
    %v8490 = vld [vmem:[%s2 + $0x28] sm:$0xff]
    %v8491 = vld [vmem:[%s2 + $0x30] sm:$0xff]
    %v8492 = vld [vmem:[%s2 + $0x38] sm:$0xff]
    %v8493 = vld [vmem:[%s2 + $0x40] sm:$0xff]
    %8494 = vst.msk [vmem:[#allocation3] sm:$0xff] %vm4772, 0.0
    %vm8495 = vcmask 58368
    %8496 = vst.msk [vmem:[#allocation3 + $0x8] sm:$0x3] %vm8495, 0.0
    %8497 = vst.msk [vmem:[#allocation3 + $0x10] sm:$0xff] %vm4772, 0.0
    %8498 = vst.msk [vmem:[#allocation3 + $0x18] sm:$0x3] %vm8495, 0.0
    %8499 = vst.msk [vmem:[#allocation3 + $0x20] sm:$0xff] %vm4772, 0.0
    %8500 = vst.msk [vmem:[#allocation3 + $0x28] sm:$0x3] %vm8495, 0.0
    %8501 = vst.msk [vmem:[#allocation3 + $0x30] sm:$0xff] %vm4772, 0.0
    %8502 = vst.msk [vmem:[#allocation3 + $0x38] sm:$0x3] %vm8495, 0.0
    %8503 = vst.msk [vmem:[#allocation3 + $0x40] sm:$0xff] %vm4772, 0.0
    %8504 = vst.msk [vmem:[#allocation3 + $0x48] sm:$0x3] %vm8495, 0.0
    %8505 = vst.msk [vmem:[#allocation3 + $0x50] sm:$0xff] %vm4772, 0.0
    %8506 = vst.msk [vmem:[#allocation3 + $0x58] sm:$0x3] %vm8495, 0.0
    %8507 = vst.msk [vmem:[#allocation3 + $0x60] sm:$0xff] %vm4772, 0.0
    %8508 = vst.msk [vmem:[#allocation3 + $0x68] sm:$0x3] %vm8495, 0.0
    %8509 = vst.msk [vmem:[#allocation3 + $0x70] sm:$0xff] %vm4772, 0.0
    %8510 = vst.msk [vmem:[#allocation3 + $0x78] sm:$0x3] %vm8495, 0.0
    %8511 = vst.msk [vmem:[#allocation3 + $0x80] sm:$0xff] %vm4772, 0.0
    %8512 = vst.msk [vmem:[#allocation3 + $0x88] sm:$0x3] %vm8495, 0.0
    %8513 = vst.msk [vmem:[#allocation3 + $0x90] sm:$0xff] %vm4772, 0.0
    %8514 = vst.msk [vmem:[#allocation3 + $0x98] sm:$0x3] %vm8495, 0.0
    %8515 = vst.msk [vmem:[#allocation3 + $0xa0] sm:$0xff] %vm4772, 0.0
    %8516 = vst.msk [vmem:[#allocation3 + $0xa8] sm:$0x3] %vm8495, 0.0
    %8517 = vst.msk [vmem:[#allocation3 + $0xb0] sm:$0xff] %vm4772, 0.0
    %8518 = vst.msk [vmem:[#allocation3 + $0xb8] sm:$0x3] %vm8495, 0.0
    %8519 = vst.msk [vmem:[#allocation3 + $0xc0] sm:$0xff] %vm4772, 0.0
    %8520 = vst.msk [vmem:[#allocation3 + $0xc8] sm:$0x3] %vm8495, 0.0
    %8521 = vst.msk [vmem:[#allocation3 + $0xd0] sm:$0xff] %vm4772, 0.0
    %8522 = vst.msk [vmem:[#allocation3 + $0xd8] sm:$0x3] %vm8495, 0.0
    %8523 = vst.msk [vmem:[#allocation3 + $0xe0] sm:$0xff] %vm4772, 0.0
    %8524 = vst.msk [vmem:[#allocation3 + $0xe8] sm:$0x3] %vm8495, 0.0
    %8525 = vst.msk [vmem:[#allocation3 + $0xf0] sm:$0xff] %vm4772, 0.0
    %8526 = vst.msk [vmem:[#allocation3 + $0xf8] sm:$0x3] %vm8495, 0.0
    %8527 = vst.msk [vmem:[#allocation3 + $0x100] sm:$0xff] %vm4772, 0.0
    %8528 = vst.msk [vmem:[#allocation3 + $0x108] sm:$0x3] %vm8495, 0.0
    %8529 = vst.msk [vmem:[#allocation3 + $0x110] sm:$0xff] %vm4772, 0.0
    %8530 = vst.msk [vmem:[#allocation3 + $0x118] sm:$0x3] %vm8495, 0.0
    %8531 = vst.msk [vmem:[#allocation3 + $0x120] sm:$0xff] %vm4772, 0.0
    %8532 = vst.msk [vmem:[#allocation3 + $0x128] sm:$0x3] %vm8495, 0.0
    %8533 = vst.msk [vmem:[#allocation3 + $0x130] sm:$0xff] %vm4772, 0.0
    %8534 = vst.msk [vmem:[#allocation3 + $0x138] sm:$0x3] %vm8495, 0.0
    %v8663 = vlaneseq
    %v8664 = vshrl.u32 %v8663, 7
    %v8665 = vsub.s32 0, %v8664
    %v8666 = vrot.slane %v8357, %v8665
    %v8667 = vlaneseq
    %v8668 = vshrl.u32 %v8667, 7
    %v8669 = vsub.s32 0, %v8668
    %v8670 = vrot.slane %v8358, %v8669
    %v8671 = vlaneseq
    %v8672 = vshrl.u32 %v8671, 7
    %v8673 = vsub.s32 0, %v8672
    %v8674 = vrot.slane %v8359, %v8673
    %v8675 = vlaneseq
    %v8676 = vshrl.u32 %v8675, 7
    %v8677 = vsub.s32 0, %v8676
    %v8678 = vrot.slane %v8360, %v8677
    %v8679 = vlaneseq
    %v8680 = vshrl.u32 %v8679, 7
    %v8681 = vsub.s32 0, %v8680
    %v8682 = vrot.slane %v8361, %v8681
    %v8683 = vlaneseq
    %v8684 = vshrl.u32 %v8683, 7
    %v8685 = vsub.s32 0, %v8684
    %v8686 = vrot.slane %v8362, %v8685
    %v8687 = vlaneseq
    %v8688 = vshrl.u32 %v8687, 7
    %v8689 = vsub.s32 0, %v8688
    %v8690 = vrot.slane %v8363, %v8689
    %v8691 = vlaneseq
    %v8692 = vshrl.u32 %v8691, 7
    %v8693 = vsub.s32 0, %v8692
    %v8694 = vrot.slane %v8364, %v8693
    %v8695 = vlaneseq
    %v8696 = vshrl.u32 %v8695, 7
    %v8697 = vsub.s32 0, %v8696
    %v8698 = vrot.slane %v8365, %v8697
    %v8699 = vlaneseq
    %v8700 = vshrl.u32 %v8699, 7
    %v8701 = vsub.s32 0, %v8700
    %v8702 = vrot.slane %v8366, %v8701
    %v8703 = vlaneseq
    %v8704 = vshrl.u32 %v8703, 7
    %v8705 = vsub.s32 0, %v8704
    %v8706 = vrot.slane %v8367, %v8705
    %v8707 = vlaneseq
    %v8708 = vshrl.u32 %v8707, 7
    %v8709 = vsub.s32 0, %v8708
    %v8710 = vrot.slane %v8368, %v8709
    %v8711 = vlaneseq
    %v8712 = vshrl.u32 %v8711, 7
    %v8713 = vsub.s32 0, %v8712
    %v8714 = vrot.slane %v8369, %v8713
    %v8715 = vlaneseq
    %v8716 = vshrl.u32 %v8715, 7
    %v8717 = vsub.s32 0, %v8716
    %v8718 = vrot.slane %v8370, %v8717
    %v8719 = vlaneseq
    %v8720 = vshrl.u32 %v8719, 7
    %v8721 = vsub.s32 0, %v8720
    %v8722 = vrot.slane %v8371, %v8721
    %v8723 = vlaneseq
    %v8724 = vshrl.u32 %v8723, 7
    %v8725 = vsub.s32 0, %v8724
    %v8726 = vrot.slane %v8372, %v8725
    %v8727 = vlaneseq
    %v8728 = vshrl.u32 %v8727, 7
    %v8729 = vsub.s32 0, %v8728
    %v8730 = vrot.slane %v8373, %v8729
    %v8731 = vlaneseq
    %v8732 = vshrl.u32 %v8731, 7
    %v8733 = vsub.s32 0, %v8732
    %v8734 = vrot.slane %v8374, %v8733
    %v8735 = vlaneseq
    %v8736 = vshrl.u32 %v8735, 7
    %v8737 = vsub.s32 0, %v8736
    %v8738 = vrot.slane %v8375, %v8737
    %v8739 = vlaneseq
    %v8740 = vshrl.u32 %v8739, 7
    %v8741 = vsub.s32 0, %v8740
    %v8742 = vrot.slane %v8376, %v8741
    %v8743 = vlaneseq
    %v8744 = vshrl.u32 %v8743, 7
    %v8745 = vsub.s32 0, %v8744
    %v8746 = vrot.slane %v8377, %v8745
    %v8747 = vlaneseq
    %v8748 = vshrl.u32 %v8747, 7
    %v8749 = vsub.s32 0, %v8748
    %v8750 = vrot.slane %v8378, %v8749
    %v8751 = vlaneseq
    %v8752 = vshrl.u32 %v8751, 7
    %v8753 = vsub.s32 0, %v8752
    %v8754 = vrot.slane %v8379, %v8753
    %v8755 = vlaneseq
    %v8756 = vshrl.u32 %v8755, 7
    %v8757 = vsub.s32 0, %v8756
    %v8758 = vrot.slane %v8380, %v8757
    %v8759 = vlaneseq
    %v8760 = vshrl.u32 %v8759, 7
    %v8761 = vsub.s32 0, %v8760
    %v8762 = vrot.slane %v8381, %v8761
    %v8763 = vlaneseq
    %v8764 = vshrl.u32 %v8763, 7
    %v8765 = vsub.s32 0, %v8764
    %v8766 = vrot.slane %v8382, %v8765
    %v8767 = vlaneseq
    %v8768 = vshrl.u32 %v8767, 7
    %v8769 = vsub.s32 0, %v8768
    %v8770 = vrot.slane %v8383, %v8769
    %v8771 = vlaneseq
    %v8772 = vshrl.u32 %v8771, 7
    %v8773 = vsub.s32 0, %v8772
    %v8774 = vrot.slane %v8384, %v8773
    %v8775 = vlaneseq
    %v8776 = vshrl.u32 %v8775, 7
    %v8777 = vsub.s32 0, %v8776
    %v8778 = vrot.slane %v8385, %v8777
    %v8779 = vlaneseq
    %v8780 = vshrl.u32 %v8779, 7
    %v8781 = vsub.s32 0, %v8780
    %v8782 = vrot.slane %v8386, %v8781
    %v8783 = vlaneseq
    %v8784 = vshrl.u32 %v8783, 7
    %v8785 = vsub.s32 0, %v8784
    %v8786 = vrot.slane %v8387, %v8785
    %v8787 = vlaneseq
    %v8788 = vshrl.u32 %v8787, 7
    %v8789 = vsub.s32 0, %v8788
    %v8790 = vrot.slane %v8388, %v8789
    %v8791 = vlaneseq
    %v8792 = vshrl.u32 %v8791, 7
    %v8793 = vsub.s32 0, %v8792
    %v8794 = vrot.slane %v8389, %v8793
    %v8795 = vlaneseq
    %v8796 = vshrl.u32 %v8795, 7
    %v8797 = vsub.s32 0, %v8796
    %v8798 = vrot.slane %v8390, %v8797
    %v8799 = vlaneseq
    %v8800 = vshrl.u32 %v8799, 7
    %v8801 = vsub.s32 0, %v8800
    %v8802 = vrot.slane %v8391, %v8801
    %v8803 = vlaneseq
    %v8804 = vshrl.u32 %v8803, 7
    %v8805 = vsub.s32 0, %v8804
    %v8806 = vrot.slane %v8392, %v8805
    %v8807 = vlaneseq
    %v8808 = vshrl.u32 %v8807, 7
    %v8809 = vsub.s32 0, %v8808
    %v8810 = vrot.slane %v8393, %v8809
    %v8811 = vlaneseq
    %v8812 = vshrl.u32 %v8811, 7
    %v8813 = vsub.s32 0, %v8812
    %v8814 = vrot.slane %v8394, %v8813
    %v8815 = vlaneseq
    %v8816 = vshrl.u32 %v8815, 7
    %v8817 = vsub.s32 0, %v8816
    %v8818 = vrot.slane %v8395, %v8817
    %v8819 = vlaneseq
    %v8820 = vshrl.u32 %v8819, 7
    %v8821 = vsub.s32 0, %v8820
    %v8822 = vrot.slane %v8396, %v8821
    %v8823 = vlaneseq
    %v8824 = vshrl.u32 %v8823, 7
    %v8825 = vsub.s32 0, %v8824
    %v8826 = vrot.slane %v8397, %v8825
    %v8827 = vlaneseq
    %v8828 = vshrl.u32 %v8827, 7
    %v8829 = vsub.s32 0, %v8828
    %v8830 = vrot.slane %v8398, %v8829
    %v8831 = vlaneseq
    %v8832 = vshrl.u32 %v8831, 7
    %v8833 = vsub.s32 0, %v8832
    %v8834 = vrot.slane %v8399, %v8833
    %v8835 = vlaneseq
    %v8836 = vshrl.u32 %v8835, 7
    %v8837 = vsub.s32 0, %v8836
    %v8838 = vrot.slane %v8400, %v8837
    %v8839 = vlaneseq
    %v8840 = vshrl.u32 %v8839, 7
    %v8841 = vsub.s32 0, %v8840
    %v8842 = vrot.slane %v8401, %v8841
    %v8843 = vlaneseq
    %v8844 = vshrl.u32 %v8843, 7
    %v8845 = vsub.s32 0, %v8844
    %v8846 = vrot.slane %v8402, %v8845
    %v8847 = vlaneseq
    %v8848 = vshrl.u32 %v8847, 7
    %v8849 = vsub.s32 0, %v8848
    %v8850 = vrot.slane %v8403, %v8849
    %v8851 = vlaneseq
    %v8852 = vshrl.u32 %v8851, 7
    %v8853 = vsub.s32 0, %v8852
    %v8854 = vrot.slane %v8404, %v8853
    %v8855 = vlaneseq
    %v8856 = vshrl.u32 %v8855, 7
    %v8857 = vsub.s32 0, %v8856
    %v8858 = vrot.slane %v8405, %v8857
    %v8859 = vlaneseq
    %v8860 = vshrl.u32 %v8859, 7
    %v8861 = vsub.s32 0, %v8860
    %v8862 = vrot.slane %v8406, %v8861
    %v8863 = vlaneseq
    %v8864 = vshrl.u32 %v8863, 7
    %v8865 = vsub.s32 0, %v8864
    %v8866 = vrot.slane %v8407, %v8865
    %v8867 = vlaneseq
    %v8868 = vshrl.u32 %v8867, 7
    %v8869 = vsub.s32 0, %v8868
    %v8870 = vrot.slane %v8408, %v8869
    %v8871 = vlaneseq
    %v8872 = vshrl.u32 %v8871, 7
    %v8873 = vsub.s32 0, %v8872
    %v8874 = vrot.slane %v8409, %v8873
    %v8875 = vlaneseq
    %v8876 = vshrl.u32 %v8875, 7
    %v8877 = vsub.s32 0, %v8876
    %v8878 = vrot.slane %v8410, %v8877
    %v8879 = vlaneseq
    %v8880 = vshrl.u32 %v8879, 7
    %v8881 = vsub.s32 0, %v8880
    %v8882 = vrot.slane %v8411, %v8881
    %v8883 = vlaneseq
    %v8884 = vshrl.u32 %v8883, 7
    %v8885 = vsub.s32 0, %v8884
    %v8886 = vrot.slane %v8412, %v8885
    %v8887 = vlaneseq
    %v8888 = vshrl.u32 %v8887, 7
    %v8889 = vsub.s32 0, %v8888
    %v8890 = vrot.slane %v8413, %v8889
    %v8891 = vlaneseq
    %v8892 = vshrl.u32 %v8891, 7
    %v8893 = vsub.s32 0, %v8892
    %v8894 = vrot.slane %v8414, %v8893
    %v8895 = vlaneseq
    %v8896 = vshrl.u32 %v8895, 7
    %v8897 = vsub.s32 0, %v8896
    %v8898 = vrot.slane %v8415, %v8897
    %v8899 = vlaneseq
    %v8900 = vshrl.u32 %v8899, 7
    %v8901 = vsub.s32 0, %v8900
    %v8902 = vrot.slane %v8416, %v8901
    %v8903 = vlaneseq
    %v8904 = vshrl.u32 %v8903, 7
    %v8905 = vsub.s32 0, %v8904
    %v8906 = vrot.slane %v8417, %v8905
    %v8907 = vlaneseq
    %v8908 = vshrl.u32 %v8907, 7
    %v8909 = vsub.s32 0, %v8908
    %v8910 = vrot.slane %v8418, %v8909
    %v8911 = vlaneseq
    %v8912 = vshrl.u32 %v8911, 7
    %v8913 = vsub.s32 0, %v8912
    %v8914 = vrot.slane %v8419, %v8913
    %v8915 = vlaneseq
    %v8916 = vshrl.u32 %v8915, 7
    %v8917 = vsub.s32 0, %v8916
    %v8918 = vrot.slane %v8420, %v8917
    %v8919 = vlaneseq
    %v8920 = vshrl.u32 %v8919, 7
    %v8921 = vsub.s32 0, %v8920
    %v8922 = vrot.slane %v8421, %v8921
    %v8923 = vlaneseq
    %v8924 = vshrl.u32 %v8923, 7
    %v8925 = vsub.s32 0, %v8924
    %v8926 = vrot.slane %v8422, %v8925
    %v8927 = vlaneseq
    %v8928 = vshrl.u32 %v8927, 7
    %v8929 = vsub.s32 0, %v8928
    %v8930 = vrot.slane %v8423, %v8929
    %v8931 = vlaneseq
    %v8932 = vshrl.u32 %v8931, 7
    %v8933 = vsub.s32 0, %v8932
    %v8934 = vrot.slane %v8424, %v8933
    %v8935 = vlaneseq
    %v8936 = vshrl.u32 %v8935, 7
    %v8937 = vsub.s32 0, %v8936
    %v8938 = vrot.slane %v8425, %v8937
    %v8939 = vlaneseq
    %v8940 = vshrl.u32 %v8939, 7
    %v8941 = vsub.s32 0, %v8940
    %v8942 = vrot.slane %v8426, %v8941
    %v8943 = vlaneseq
    %v8944 = vshrl.u32 %v8943, 7
    %v8945 = vsub.s32 0, %v8944
    %v8946 = vrot.slane %v8427, %v8945
    %v8947 = vlaneseq
    %v8948 = vshrl.u32 %v8947, 7
    %v8949 = vsub.s32 0, %v8948
    %v8950 = vrot.slane %v8428, %v8949
    %v8951 = vlaneseq
    %v8952 = vshrl.u32 %v8951, 7
    %v8953 = vsub.s32 0, %v8952
    %v8954 = vrot.slane %v8429, %v8953
    %v8955 = vlaneseq
    %v8956 = vshrl.u32 %v8955, 7
    %v8957 = vsub.s32 0, %v8956
    %v8958 = vrot.slane %v8430, %v8957
    %v8959 = vlaneseq
    %v8960 = vshrl.u32 %v8959, 7
    %v8961 = vsub.s32 0, %v8960
    %v8962 = vrot.slane %v8431, %v8961
    %v8963 = vlaneseq
    %v8964 = vshrl.u32 %v8963, 7
    %v8965 = vsub.s32 0, %v8964
    %v8966 = vrot.slane %v8432, %v8965
    %v8967 = vlaneseq
    %v8968 = vshrl.u32 %v8967, 7
    %v8969 = vsub.s32 0, %v8968
    %v8970 = vrot.slane %v8433, %v8969
    %v8971 = vlaneseq
    %v8972 = vshrl.u32 %v8971, 7
    %v8973 = vsub.s32 0, %v8972
    %v8974 = vrot.slane %v8434, %v8973
    %v8975 = vlaneseq
    %v8976 = vshrl.u32 %v8975, 7
    %v8977 = vsub.s32 0, %v8976
    %v8978 = vrot.slane %v8435, %v8977
    %v8979 = vlaneseq
    %v8980 = vshrl.u32 %v8979, 7
    %v8981 = vsub.s32 0, %v8980
    %v8982 = vrot.slane %v8436, %v8981
    %v8983 = vlaneseq
    %v8984 = vshrl.u32 %v8983, 7
    %v8985 = vsub.s32 0, %v8984
    %v8986 = vrot.slane %v8437, %v8985
    %v8987 = vlaneseq
    %v8988 = vshrl.u32 %v8987, 7
    %v8989 = vsub.s32 0, %v8988
    %v8990 = vrot.slane %v8438, %v8989
    %v8991 = vlaneseq
    %v8992 = vshrl.u32 %v8991, 7
    %v8993 = vsub.s32 0, %v8992
    %v8994 = vrot.slane %v8439, %v8993
    %v8995 = vlaneseq
    %v8996 = vshrl.u32 %v8995, 7
    %v8997 = vsub.s32 0, %v8996
    %v8998 = vrot.slane %v8440, %v8997
    %v8999 = vlaneseq
    %v9000 = vshrl.u32 %v8999, 7
    %v9001 = vsub.s32 0, %v9000
    %v9002 = vrot.slane %v8441, %v9001
    %v9003 = vlaneseq
    %v9004 = vshrl.u32 %v9003, 7
    %v9005 = vsub.s32 0, %v9004
    %v9006 = vrot.slane %v8442, %v9005
    %v9007 = vlaneseq
    %v9008 = vshrl.u32 %v9007, 7
    %v9009 = vsub.s32 0, %v9008
    %v9010 = vrot.slane %v8443, %v9009
    %v9011 = vlaneseq
    %v9012 = vshrl.u32 %v9011, 7
    %v9013 = vsub.s32 0, %v9012
    %v9014 = vrot.slane %v8444, %v9013
    %v9015 = vlaneseq
    %v9016 = vshrl.u32 %v9015, 7
    %v9017 = vsub.s32 0, %v9016
    %v9018 = vrot.slane %v8445, %v9017
    %v9019 = vlaneseq
    %v9020 = vshrl.u32 %v9019, 7
    %v9021 = vsub.s32 0, %v9020
    %v9022 = vrot.slane %v8446, %v9021
    %v9023 = vlaneseq
    %v9024 = vshrl.u32 %v9023, 7
    %v9025 = vsub.s32 0, %v9024
    %v9026 = vrot.slane %v8447, %v9025
    %v9027 = vlaneseq
    %v9028 = vshrl.u32 %v9027, 7
    %v9029 = vsub.s32 0, %v9028
    %v9030 = vrot.slane %v8448, %v9029
    %v9031 = vlaneseq
    %v9032 = vshrl.u32 %v9031, 7
    %v9033 = vsub.s32 0, %v9032
    %v9034 = vrot.slane %v8449, %v9033
    %v9035 = vlaneseq
    %v9036 = vshrl.u32 %v9035, 7
    %v9037 = vsub.s32 0, %v9036
    %v9038 = vrot.slane %v8450, %v9037
    %v9039 = vlaneseq
    %v9040 = vshrl.u32 %v9039, 7
    %v9041 = vsub.s32 0, %v9040
    %v9042 = vrot.slane %v8451, %v9041
    %v9043 = vlaneseq
    %v9044 = vshrl.u32 %v9043, 7
    %v9045 = vsub.s32 0, %v9044
    %v9046 = vrot.slane %v8452, %v9045
    %v9047 = vlaneseq
    %v9048 = vshrl.u32 %v9047, 7
    %v9049 = vsub.s32 0, %v9048
    %v9050 = vrot.slane %v8453, %v9049
    %v9051 = vlaneseq
    %v9052 = vshrl.u32 %v9051, 7
    %v9053 = vsub.s32 0, %v9052
    %v9054 = vrot.slane %v8454, %v9053
    %v9055 = vlaneseq
    %v9056 = vshrl.u32 %v9055, 7
    %v9057 = vsub.s32 0, %v9056
    %v9058 = vrot.slane %v8455, %v9057
    %v9059 = vlaneseq
    %v9060 = vshrl.u32 %v9059, 7
    %v9061 = vsub.s32 0, %v9060
    %v9062 = vrot.slane %v8456, %v9061
    %v9063 = vlaneseq
    %v9064 = vshrl.u32 %v9063, 7
    %v9065 = vsub.s32 0, %v9064
    %v9066 = vrot.slane %v8457, %v9065
    %v9067 = vlaneseq
    %v9068 = vshrl.u32 %v9067, 7
    %v9069 = vsub.s32 0, %v9068
    %v9070 = vrot.slane %v8458, %v9069
    %v9071 = vlaneseq
    %v9072 = vshrl.u32 %v9071, 7
    %v9073 = vsub.s32 0, %v9072
    %v9074 = vrot.slane %v8459, %v9073
    %v9075 = vlaneseq
    %v9076 = vshrl.u32 %v9075, 7
    %v9077 = vsub.s32 0, %v9076
    %v9078 = vrot.slane %v8460, %v9077
    %v9079 = vlaneseq
    %v9080 = vshrl.u32 %v9079, 7
    %v9081 = vsub.s32 0, %v9080
    %v9082 = vrot.slane %v8461, %v9081
    %v9083 = vlaneseq
    %v9084 = vshrl.u32 %v9083, 7
    %v9085 = vsub.s32 0, %v9084
    %v9086 = vrot.slane %v8462, %v9085
    %v9087 = vlaneseq
    %v9088 = vshrl.u32 %v9087, 7
    %v9089 = vsub.s32 0, %v9088
    %v9090 = vrot.slane %v8463, %v9089
    %v9091 = vlaneseq
    %v9092 = vshrl.u32 %v9091, 7
    %v9093 = vsub.s32 0, %v9092
    %v9094 = vrot.slane %v8464, %v9093
    %v9095 = vlaneseq
    %v9096 = vshrl.u32 %v9095, 7
    %v9097 = vsub.s32 0, %v9096
    %v9098 = vrot.slane %v8465, %v9097
    %v9099 = vlaneseq
    %v9100 = vshrl.u32 %v9099, 7
    %v9101 = vsub.s32 0, %v9100
    %v9102 = vrot.slane %v8466, %v9101
    %v9103 = vlaneseq
    %v9104 = vshrl.u32 %v9103, 7
    %v9105 = vsub.s32 0, %v9104
    %v9106 = vrot.slane %v8467, %v9105
    %v9107 = vlaneseq
    %v9108 = vshrl.u32 %v9107, 7
    %v9109 = vsub.s32 0, %v9108
    %v9110 = vrot.slane %v8468, %v9109
    %v9111 = vlaneseq
    %v9112 = vshrl.u32 %v9111, 7
    %v9113 = vsub.s32 0, %v9112
    %v9114 = vrot.slane %v8469, %v9113
    %v9115 = vlaneseq
    %v9116 = vshrl.u32 %v9115, 7
    %v9117 = vsub.s32 0, %v9116
    %v9118 = vrot.slane %v8470, %v9117
    %v9119 = vlaneseq
    %v9120 = vshrl.u32 %v9119, 7
    %v9121 = vsub.s32 0, %v9120
    %v9122 = vrot.slane %v8471, %v9121
    %v9123 = vlaneseq
    %v9124 = vshrl.u32 %v9123, 7
    %v9125 = vsub.s32 0, %v9124
    %v9126 = vrot.slane %v8472, %v9125
    %v9127 = vlaneseq
    %v9128 = vshrl.u32 %v9127, 7
    %v9129 = vsub.s32 0, %v9128
    %v9130 = vrot.slane %v8473, %v9129
    %v9131 = vlaneseq
    %v9132 = vshrl.u32 %v9131, 7
    %v9133 = vsub.s32 0, %v9132
    %v9134 = vrot.slane %v8474, %v9133
    %v9135 = vlaneseq
    %v9136 = vshrl.u32 %v9135, 7
    %v9137 = vsub.s32 0, %v9136
    %v9138 = vrot.slane %v8475, %v9137
    %v9139 = vlaneseq
    %v9140 = vshrl.u32 %v9139, 7
    %v9141 = vsub.s32 0, %v9140
    %v9142 = vrot.slane %v8476, %v9141
    %v9143 = vlaneseq
    %v9144 = vshrl.u32 %v9143, 7
    %v9145 = vsub.s32 0, %v9144
    %v9146 = vrot.slane %v8477, %v9145
    %v9147 = vlaneseq
    %v9148 = vshrl.u32 %v9147, 7
    %v9149 = vsub.s32 0, %v9148
    %v9150 = vrot.slane %v8478, %v9149
    %v9151 = vlaneseq
    %v9152 = vshrl.u32 %v9151, 7
    %v9153 = vsub.s32 0, %v9152
    %v9154 = vrot.slane %v8479, %v9153
    %v9155 = vlaneseq
    %v9156 = vshrl.u32 %v9155, 7
    %v9157 = vsub.s32 0, %v9156
    %v9158 = vrot.slane %v8480, %v9157
    %v9159 = vlaneseq
    %v9160 = vshrl.u32 %v9159, 7
    %v9161 = vsub.s32 0, %v9160
    %v9162 = vrot.slane %v8481, %v9161
    %v9163 = vlaneseq
    %v9164 = vshrl.u32 %v9163, 7
    %v9165 = vsub.s32 0, %v9164
    %v9166 = vrot.slane %v8482, %v9165
    %v9167 = vlaneseq
    %v9168 = vshrl.u32 %v9167, 7
    %v9169 = vsub.s32 0, %v9168
    %v9170 = vrot.slane %v8483, %v9169
    %v9171 = vlaneseq
    %v9172 = vshrl.u32 %v9171, 7
    %v9173 = vsub.s32 0, %v9172
    %v9174 = vrot.slane %v8484, %v9173
    %vm9175 = vcmask 1041409
    %v9176 = vsel %vm9175, %v8670, %v8666
    %vm9177 = vcmask 1042434
    %v9178 = vsel %vm9177, %v8674, %v9176
    %vm9179 = vcmask 1043459
    %v9180 = vsel %vm9179, %v8678, %v9178
    %vm9181 = vcmask 1044484
    %v9182 = vsel %vm9181, %v8682, %v9180
    %vm9183 = vcmask 1045509
    %v9184 = vsel %vm9183, %v8686, %v9182
    %vm9185 = vcmask 1046534
    %v9186 = vsel %vm9185, %v8690, %v9184
    %vm9187 = vcmask 1047559
    %v9188 = vsel %vm9187, %v8694, %v9186
    %v9189 = vsel %vm9175, %v8702, %v8698
    %v9190 = vsel %vm9177, %v8706, %v9189
    %v9191 = vsel %vm9179, %v8710, %v9190
    %v9192 = vsel %vm9181, %v8714, %v9191
    %v9193 = vsel %vm9183, %v8718, %v9192
    %v9194 = vsel %vm9185, %v8722, %v9193
    %v9195 = vsel %vm9187, %v8726, %v9194
    %v9196 = vsel %vm9175, %v8734, %v8730
    %v9197 = vsel %vm9177, %v8738, %v9196
    %v9198 = vsel %vm9179, %v8742, %v9197
    %v9199 = vsel %vm9181, %v8746, %v9198
    %v9200 = vsel %vm9183, %v8750, %v9199
    %v9201 = vsel %vm9185, %v8754, %v9200
    %v9202 = vsel %vm9187, %v8758, %v9201
    %v9203 = vsel %vm9175, %v8766, %v8762
    %v9204 = vsel %vm9177, %v8770, %v9203
    %v9205 = vsel %vm9179, %v8774, %v9204
    %v9206 = vsel %vm9181, %v8778, %v9205
    %v9207 = vsel %vm9183, %v8782, %v9206
    %v9208 = vsel %vm9185, %v8786, %v9207
    %v9209 = vsel %vm9187, %v8790, %v9208
    %v9210 = vsel %vm9175, %v8798, %v8794
    %v9211 = vsel %vm9177, %v8802, %v9210
    %v9212 = vsel %vm9179, %v8806, %v9211
    %v9213 = vsel %vm9181, %v8810, %v9212
    %v9214 = vsel %vm9183, %v8814, %v9213
    %v9215 = vsel %vm9185, %v8818, %v9214
    %v9216 = vsel %vm9187, %v8822, %v9215
    %v9217 = vsel %vm9175, %v8830, %v8826
    %v9218 = vsel %vm9177, %v8834, %v9217
    %v9219 = vsel %vm9179, %v8838, %v9218
    %v9220 = vsel %vm9181, %v8842, %v9219
    %v9221 = vsel %vm9183, %v8846, %v9220
    %v9222 = vsel %vm9185, %v8850, %v9221
    %v9223 = vsel %vm9187, %v8854, %v9222
    %v9224 = vsel %vm9175, %v8862, %v8858
    %v9225 = vsel %vm9177, %v8866, %v9224
    %v9226 = vsel %vm9179, %v8870, %v9225
    %v9227 = vsel %vm9181, %v8874, %v9226
    %v9228 = vsel %vm9183, %v8878, %v9227
    %v9229 = vsel %vm9185, %v8882, %v9228
    %v9230 = vsel %vm9187, %v8886, %v9229
    %v9231 = vsel %vm9175, %v8894, %v8890
    %v9232 = vsel %vm9177, %v8898, %v9231
    %v9233 = vsel %vm9179, %v8902, %v9232
    %v9234 = vsel %vm9181, %v8906, %v9233
    %v9235 = vsel %vm9183, %v8910, %v9234
    %v9236 = vsel %vm9185, %v8914, %v9235
    %v9237 = vsel %vm9187, %v8918, %v9236
    %v9238 = vsel %vm9175, %v8926, %v8922
    %v9239 = vsel %vm9177, %v8930, %v9238
    %v9240 = vsel %vm9179, %v8934, %v9239
    %v9241 = vsel %vm9181, %v8938, %v9240
    %v9242 = vsel %vm9183, %v8942, %v9241
    %v9243 = vsel %vm9185, %v8946, %v9242
    %v9244 = vsel %vm9187, %v8950, %v9243
    %v9245 = vsel %vm9175, %v8958, %v8954
    %v9246 = vsel %vm9177, %v8962, %v9245
    %v9247 = vsel %vm9179, %v8966, %v9246
    %v9248 = vsel %vm9181, %v8970, %v9247
    %v9249 = vsel %vm9183, %v8974, %v9248
    %v9250 = vsel %vm9185, %v8978, %v9249
    %v9251 = vsel %vm9187, %v8982, %v9250
    %v9252 = vsel %vm9175, %v8990, %v8986
    %v9253 = vsel %vm9177, %v8994, %v9252
    %v9254 = vsel %vm9179, %v8998, %v9253
    %v9255 = vsel %vm9181, %v9002, %v9254
    %v9256 = vsel %vm9183, %v9006, %v9255
    %v9257 = vsel %vm9185, %v9010, %v9256
    %v9258 = vsel %vm9187, %v9014, %v9257
    %v9259 = vsel %vm9175, %v9022, %v9018
    %v9260 = vsel %vm9177, %v9026, %v9259
    %v9261 = vsel %vm9179, %v9030, %v9260
    %v9262 = vsel %vm9181, %v9034, %v9261
    %v9263 = vsel %vm9183, %v9038, %v9262
    %v9264 = vsel %vm9185, %v9042, %v9263
    %v9265 = vsel %vm9187, %v9046, %v9264
    %v9266 = vsel %vm9175, %v9054, %v9050
    %v9267 = vsel %vm9177, %v9058, %v9266
    %v9268 = vsel %vm9179, %v9062, %v9267
    %v9269 = vsel %vm9181, %v9066, %v9268
    %v9270 = vsel %vm9183, %v9070, %v9269
    %v9271 = vsel %vm9185, %v9074, %v9270
    %v9272 = vsel %vm9187, %v9078, %v9271
    %v9273 = vsel %vm9175, %v9086, %v9082
    %v9274 = vsel %vm9177, %v9090, %v9273
    %v9275 = vsel %vm9179, %v9094, %v9274
    %v9276 = vsel %vm9181, %v9098, %v9275
    %v9277 = vsel %vm9183, %v9102, %v9276
    %v9278 = vsel %vm9185, %v9106, %v9277
    %v9279 = vsel %vm9187, %v9110, %v9278
    %v9280 = vsel %vm9175, %v9118, %v9114
    %v9281 = vsel %vm9177, %v9122, %v9280
    %v9282 = vsel %vm9179, %v9126, %v9281
    %v9283 = vsel %vm9181, %v9130, %v9282
    %v9284 = vsel %vm9183, %v9134, %v9283
    %v9285 = vsel %vm9185, %v9138, %v9284
    %v9286 = vsel %vm9187, %v9142, %v9285
    %v9287 = vsel %vm9175, %v9150, %v9146
    %v9288 = vsel %vm9177, %v9154, %v9287
    %v9289 = vsel %vm9179, %v9158, %v9288
    %v9290 = vsel %vm9181, %v9162, %v9289
    %v9291 = vsel %vm9183, %v9166, %v9290
    %v9292 = vsel %vm9185, %v9170, %v9291
    %v9293 = vsel %vm9187, %v9174, %v9292
    %s9310 = scalar_lea.vmem [#allocation3], 16
    %9311 = vst.msk [vmem:[%s9310 + $0x1] sm:$0xff] %vm4772, %v9188
    %9312 = vst.msk [vmem:[%s9310 + $0x11] sm:$0xff] %vm4772, %v9195
    %9313 = vst.msk [vmem:[%s9310 + $0x21] sm:$0xff] %vm4772, %v9202
    %9314 = vst.msk [vmem:[%s9310 + $0x31] sm:$0xff] %vm4772, %v9209
    %9315 = vst.msk [vmem:[%s9310 + $0x41] sm:$0xff] %vm4772, %v9216
    %9316 = vst.msk [vmem:[%s9310 + $0x51] sm:$0xff] %vm4772, %v9223
    %9317 = vst.msk [vmem:[%s9310 + $0x61] sm:$0xff] %vm4772, %v9230
    %9318 = vst.msk [vmem:[%s9310 + $0x71] sm:$0xff] %vm4772, %v9237
    %9319 = vst.msk [vmem:[%s9310 + $0xa1] sm:$0xff] %vm4772, %v9244
    %9320 = vst.msk [vmem:[%s9310 + $0xb1] sm:$0xff] %vm4772, %v9251
    %9321 = vst.msk [vmem:[%s9310 + $0xc1] sm:$0xff] %vm4772, %v9258
    %9322 = vst.msk [vmem:[%s9310 + $0xd1] sm:$0xff] %vm4772, %v9265
    %9323 = vst.msk [vmem:[%s9310 + $0xe1] sm:$0xff] %vm4772, %v9272
    %9324 = vst.msk [vmem:[%s9310 + $0xf1] sm:$0xff] %vm4772, %v9279
    %9325 = vst.msk [vmem:[%s9310 + $0x101] sm:$0xff] %vm4772, %v9286
    %9326 = vst.msk [vmem:[%s9310 + $0x111] sm:$0xff] %vm4772, %v9293
    %v9327 = vld [vmem:[#allocation3] sm:$0xff]
    %v9328 = vld [vmem:[#allocation3 + $0x8] sm:$0x3]
    %v9329 = vld [vmem:[#allocation3 + $0x10] sm:$0xff]
    %v9330 = vld [vmem:[#allocation3 + $0x18] sm:$0x3]
    %v9331 = vld [vmem:[#allocation3 + $0x20] sm:$0xff]
    %v9332 = vld [vmem:[#allocation3 + $0x28] sm:$0x3]
    %v9333 = vld [vmem:[#allocation3 + $0x30] sm:$0xff]
    %v9334 = vld [vmem:[#allocation3 + $0x38] sm:$0x3]
    %v9335 = vld [vmem:[#allocation3 + $0x40] sm:$0xff]
    %v9336 = vld [vmem:[#allocation3 + $0x48] sm:$0x3]
    %v9337 = vld [vmem:[#allocation3 + $0x50] sm:$0xff]
    %v9338 = vld [vmem:[#allocation3 + $0x58] sm:$0x3]
    %v9339 = vld [vmem:[#allocation3 + $0x60] sm:$0xff]
    %v9340 = vld [vmem:[#allocation3 + $0x68] sm:$0x3]
    %v9341 = vld [vmem:[#allocation3 + $0x70] sm:$0xff]
    %v9342 = vld [vmem:[#allocation3 + $0x78] sm:$0x3]
    %v9343 = vld [vmem:[#allocation3 + $0x80] sm:$0xff]
    %v9344 = vld [vmem:[#allocation3 + $0x88] sm:$0x3]
    %v9345 = vld [vmem:[#allocation3 + $0x90] sm:$0xff]
    %v9346 = vld [vmem:[#allocation3 + $0x98] sm:$0x3]
    %v9347 = vld [vmem:[#allocation3 + $0xa0] sm:$0xff]
    %v9348 = vld [vmem:[#allocation3 + $0xa8] sm:$0x3]
    %v9349 = vld [vmem:[#allocation3 + $0xb0] sm:$0xff]
    %v9350 = vld [vmem:[#allocation3 + $0xb8] sm:$0x3]
    %v9351 = vld [vmem:[#allocation3 + $0xc0] sm:$0xff]
    %v9352 = vld [vmem:[#allocation3 + $0xc8] sm:$0x3]
    %v9353 = vld [vmem:[#allocation3 + $0xd0] sm:$0xff]
    %v9354 = vld [vmem:[#allocation3 + $0xd8] sm:$0x3]
    %v9355 = vld [vmem:[#allocation3 + $0xe0] sm:$0xff]
    %v9356 = vld [vmem:[#allocation3 + $0xe8] sm:$0x3]
    %v9357 = vld [vmem:[#allocation3 + $0xf0] sm:$0xff]
    %v9358 = vld [vmem:[#allocation3 + $0xf8] sm:$0x3]
    %v9359 = vld [vmem:[#allocation3 + $0x100] sm:$0xff]
    %v9360 = vld [vmem:[#allocation3 + $0x108] sm:$0x3]
    %v9361 = vld [vmem:[#allocation3 + $0x110] sm:$0xff]
    %v9362 = vld [vmem:[#allocation3 + $0x118] sm:$0x3]
    %v9363 = vld [vmem:[#allocation3 + $0x120] sm:$0xff]
    %v9364 = vld [vmem:[#allocation3 + $0x128] sm:$0x3]
    %v9365 = vld [vmem:[#allocation3 + $0x130] sm:$0xff]
    %v9366 = vld [vmem:[#allocation3 + $0x138] sm:$0x3]
    %v9399 = vrot.slane %v9327, 1
    %v9400 = vrot.slane %v9328, 1
    %v9401 = vsel %vm473, %v9399, %v9400
    %v9402 = vrot.slane %v9329, 1
    %v9403 = vrot.slane %v9330, 1
    %v9404 = vsel %vm473, %v9402, %v9403
    %v9405 = vrot.slane %v9331, 1
    %v9406 = vrot.slane %v9332, 1
    %v9407 = vsel %vm473, %v9405, %v9406
    %v9408 = vrot.slane %v9333, 1
    %v9409 = vrot.slane %v9334, 1
    %v9410 = vsel %vm473, %v9408, %v9409
    %v9411 = vrot.slane %v9335, 1
    %v9412 = vrot.slane %v9336, 1
    %v9413 = vsel %vm473, %v9411, %v9412
    %v9414 = vrot.slane %v9337, 1
    %v9415 = vrot.slane %v9338, 1
    %v9416 = vsel %vm473, %v9414, %v9415
    %v9417 = vrot.slane %v9339, 1
    %v9418 = vrot.slane %v9340, 1
    %v9419 = vsel %vm473, %v9417, %v9418
    %v9420 = vrot.slane %v9341, 1
    %v9421 = vrot.slane %v9342, 1
    %v9422 = vsel %vm473, %v9420, %v9421
    %v9423 = vrot.slane %v9347, 1
    %v9424 = vrot.slane %v9348, 1
    %v9425 = vsel %vm473, %v9423, %v9424
    %v9426 = vrot.slane %v9349, 1
    %v9427 = vrot.slane %v9350, 1
    %v9428 = vsel %vm473, %v9426, %v9427
    %v9429 = vrot.slane %v9351, 1
    %v9430 = vrot.slane %v9352, 1
    %v9431 = vsel %vm473, %v9429, %v9430
    %v9432 = vrot.slane %v9353, 1
    %v9433 = vrot.slane %v9354, 1
    %v9434 = vsel %vm473, %v9432, %v9433
    %v9435 = vrot.slane %v9355, 1
    %v9436 = vrot.slane %v9356, 1
    %v9437 = vsel %vm473, %v9435, %v9436
    %v9438 = vrot.slane %v9357, 1
    %v9439 = vrot.slane %v9358, 1
    %v9440 = vsel %vm473, %v9438, %v9439
    %v9441 = vrot.slane %v9359, 1
    %v9442 = vrot.slane %v9360, 1
    %v9443 = vsel %vm473, %v9441, %v9442
    %v9444 = vrot.slane %v9361, 1
    %v9445 = vrot.slane %v9362, 1
    %v9446 = vsel %vm473, %v9444, %v9445
    %v9447 = vrot.slane %v9327, 2
    %v9448 = vrot.slane %v9328, 2
    %v9449 = vsel %vm634, %v9447, %v9448
    %v9450 = vrot.slane %v9329, 2
    %v9451 = vrot.slane %v9330, 2
    %v9452 = vsel %vm634, %v9450, %v9451
    %v9453 = vrot.slane %v9331, 2
    %v9454 = vrot.slane %v9332, 2
    %v9455 = vsel %vm634, %v9453, %v9454
    %v9456 = vrot.slane %v9333, 2
    %v9457 = vrot.slane %v9334, 2
    %v9458 = vsel %vm634, %v9456, %v9457
    %v9459 = vrot.slane %v9335, 2
    %v9460 = vrot.slane %v9336, 2
    %v9461 = vsel %vm634, %v9459, %v9460
    %v9462 = vrot.slane %v9337, 2
    %v9463 = vrot.slane %v9338, 2
    %v9464 = vsel %vm634, %v9462, %v9463
    %v9465 = vrot.slane %v9339, 2
    %v9466 = vrot.slane %v9340, 2
    %v9467 = vsel %vm634, %v9465, %v9466
    %v9468 = vrot.slane %v9341, 2
    %v9469 = vrot.slane %v9342, 2
    %v9470 = vsel %vm634, %v9468, %v9469
    %v9471 = vrot.slane %v9347, 2
    %v9472 = vrot.slane %v9348, 2
    %v9473 = vsel %vm634, %v9471, %v9472
    %v9474 = vrot.slane %v9349, 2
    %v9475 = vrot.slane %v9350, 2
    %v9476 = vsel %vm634, %v9474, %v9475
    %v9477 = vrot.slane %v9351, 2
    %v9478 = vrot.slane %v9352, 2
    %v9479 = vsel %vm634, %v9477, %v9478
    %v9480 = vrot.slane %v9353, 2
    %v9481 = vrot.slane %v9354, 2
    %v9482 = vsel %vm634, %v9480, %v9481
    %v9483 = vrot.slane %v9355, 2
    %v9484 = vrot.slane %v9356, 2
    %v9485 = vsel %vm634, %v9483, %v9484
    %v9486 = vrot.slane %v9357, 2
    %v9487 = vrot.slane %v9358, 2
    %v9488 = vsel %vm634, %v9486, %v9487
    %v9489 = vrot.slane %v9359, 2
    %v9490 = vrot.slane %v9360, 2
    %v9491 = vsel %vm634, %v9489, %v9490
    %v9492 = vrot.slane %v9361, 2
    %v9493 = vrot.slane %v9362, 2
    %v9494 = vsel %vm634, %v9492, %v9493
    %v9499 = vrot.slane %v9343, 1
    %v9500 = vrot.slane %v9344, 1
    %v9501 = vsel %vm473, %v9499, %v9500
    %v9502 = vrot.slane %v9363, 1
    %v9503 = vrot.slane %v9364, 1
    %v9504 = vsel %vm473, %v9502, %v9503
    %v9505 = vrot.slane %v9343, 2
    %v9506 = vrot.slane %v9344, 2
    %v9507 = vsel %vm634, %v9505, %v9506
    %v9508 = vrot.slane %v9363, 2
    %v9509 = vrot.slane %v9364, 2
    %v9510 = vsel %vm634, %v9508, %v9509
    %v9515 = vrot.slane %v9345, 1
    %v9516 = vrot.slane %v9346, 1
    %v9517 = vsel %vm473, %v9515, %v9516
    %v9518 = vrot.slane %v9365, 1
    %v9519 = vrot.slane %v9366, 1
    %v9520 = vsel %vm473, %v9518, %v9519
    %v9521 = vrot.slane %v9345, 2
    %v9522 = vrot.slane %v9346, 2
    %v9523 = vsel %vm634, %v9521, %v9522
    %v9524 = vrot.slane %v9365, 2
    %v9525 = vrot.slane %v9366, 2
    %v9526 = vsel %vm634, %v9524, %v9525
    %v9527 = vsel %vm4772, %v9327, 0
    %v9529 = vsel %vm4772, %v9329, 0
    %v9531 = vsel %vm4772, %v9331, 0
    %v9533 = vsel %vm4772, %v9333, 0
    %v9535 = vsel %vm4772, %v9335, 0
    %v9537 = vsel %vm4772, %v9337, 0
    %v9539 = vsel %vm4772, %v9339, 0
    %v9541 = vsel %vm4772, %v9341, 0
    %v9543 = vsel %vm4772, %v9347, 0
    %v9545 = vsel %vm4772, %v9349, 0
    %v9547 = vsel %vm4772, %v9351, 0
    %v9549 = vsel %vm4772, %v9353, 0
    %v9551 = vsel %vm4772, %v9355, 0
    %v9553 = vsel %vm4772, %v9357, 0
    %v9555 = vsel %vm4772, %v9359, 0
    %v9557 = vsel %vm4772, %v9361, 0
    %9559 = vmatprep.subr.mxu0 0.0
    %9560 = vmatpush1.msra.mxu0 %v8485
    %9561 = vmatprep.subr.mxu0 0.0
    %9562 = vmatpush1.msra.mxu0 0.0
    %9563 = vmatprep.subr.mxu0 0.0
    %9564 = vmatpush1.msra.mxu0 0.0
    %9565 = vmatprep.subr.mxu0 0.0
    %9566 = vmatpush1.msra.mxu0 0.0
    %9567 = vmatprep.subr.mxu0 0.0
    %9568 = vmatpush1.msra.mxu0 0.0
    %9569 = vmatprep.subr.mxu0 0.0
    %9570 = vmatpush1.msra.mxu0 0.0
    %9571 = vmatprep.subr.mxu0 0.0
    %9572 = vmatpush1.msra.mxu0 0.0
    %9573 = vmatprep.subr.mxu0 0.0
    %9574 = vmatpush1.msra.mxu0 0.0
    %9575 = vmatprep.subr.mxu0 0.0
    %9576 = vmatpush1.msra.mxu0 0.0
    %9577 = vmatprep.subr.mxu0 0.0
    %9578 = vmatpush1.msra.mxu0 0.0
    %9579 = vmatprep.subr.mxu0 0.0
    %9580 = vmatpush1.msra.mxu0 0.0
    %9581 = vmatprep.subr.mxu0 0.0
    %9582 = vmatpush1.msra.mxu0 0.0
    %9583 = vmatprep.subr.mxu0 0.0
    %9584 = vmatpush1.msra.mxu0 0.0
    %9585 = vmatprep.subr.mxu0 0.0
    %9586 = vmatpush1.msra.mxu0 0.0
    %9587 = vmatprep.subr.mxu0 0.0
    %9588 = vmatpush1.msra.mxu0 0.0
    %9589 = vmatprep.subr.mxu0 0.0
    %9590 = vmatpush1.msra.mxu0 0.0
    %9591 = vmatprep.subr.mxu0 0.0
    %9592 = vmatpush1.msra.mxu0 0.0
    %9593 = vmatprep.subr.mxu0 0.0
    %9594 = vmatpush1.msra.mxu0 0.0
    %9595 = vmatprep.subr.mxu0 0.0
    %9596 = vmatpush1.msra.mxu0 0.0
    %9597 = vmatprep.subr.mxu0 0.0
    %9598 = vmatpush1.msra.mxu0 0.0
    %9599 = vmatprep.subr.mxu0 0.0
    %9600 = vmatpush1.msra.mxu0 0.0
    %9601 = vmatprep.subr.mxu0 0.0
    %9602 = vmatpush1.msra.mxu0 0.0
    %9603 = vmatprep.subr.mxu0 0.0
    %9604 = vmatpush1.msra.mxu0 0.0
    %9605 = vmatprep.subr.mxu0 0.0
    %9606 = vmatpush1.msra.mxu0 0.0
    %9607 = vmatprep.subr.mxu0 0.0
    %9608 = vmatpush1.msra.mxu0 0.0
    %9609 = vmatprep.subr.mxu0 0.0
    %9610 = vmatpush1.msra.mxu0 0.0
    %9611 = vmatprep.subr.mxu0 0.0
    %9612 = vmatpush1.msra.mxu0 0.0
    %9613 = vmatprep.subr.mxu0 0.0
    %9614 = vmatpush1.msra.mxu0 0.0
    %9615 = vmatprep.subr.mxu0 0.0
    %9616 = vmatpush1.msra.mxu0 0.0
    %9617 = vmatprep.subr.mxu0 0.0
    %9618 = vmatpush1.msra.mxu0 0.0
    %9619 = vmatprep.subr.mxu0 0.0
    %9620 = vmatpush1.msra.mxu0 0.0
    %9621 = vmatprep.subr.mxu0 0.0
    %9622 = vmatpush1.msra.mxu0 0.0
    %9623 = vmatprep.mubr.f32.mxu0 0.0
    %9624 = vmatmul.mubr.f32.gmra.mrb[0].mxu0 %v9527
    %v9625 = vpop.f32.mrb[0].mxu0
    %v9626 = vadd.f32 0.0, %v9625
    %v9627 = vpop.f32.mrb[0].mxu0
    %9628 = vmatprep.mubr.f32.mxu0 0.0
    %9629 = vmatmul.mubr.f32.gmra.mrb[0].mxu0 %v9529
    %v9630 = vpop.f32.mrb[0].mxu0
    %v9631 = vadd.f32 0.0, %v9630
    %v9632 = vpop.f32.mrb[0].mxu0
    %9633 = vmatprep.mubr.f32.mxu0 0.0
    %9634 = vmatmul.mubr.f32.gmra.mrb[0].mxu0 %v9531
    %v9635 = vpop.f32.mrb[0].mxu0
    %v9636 = vadd.f32 0.0, %v9635
    %v9637 = vpop.f32.mrb[0].mxu0
    %9638 = vmatprep.mubr.f32.mxu0 0.0
    %9639 = vmatmul.mubr.f32.gmra.mrb[0].mxu0 %v9533
    %v9640 = vpop.f32.mrb[0].mxu0
    %v9641 = vadd.f32 0.0, %v9640
    %v9642 = vpop.f32.mrb[0].mxu0
    %9643 = vmatprep.mubr.f32.mxu0 0.0
    %9644 = vmatmul.mubr.f32.gmra.mrb[0].mxu0 %v9535
    %v9645 = vpop.f32.mrb[0].mxu0
    %v9646 = vadd.f32 0.0, %v9645
    %v9647 = vpop.f32.mrb[0].mxu0
    %9648 = vmatprep.mubr.f32.mxu0 0.0
    %9649 = vmatmul.mubr.f32.gmra.mrb[0].mxu0 %v9537
    %v9650 = vpop.f32.mrb[0].mxu0
    %v9651 = vadd.f32 0.0, %v9650
    %v9652 = vpop.f32.mrb[0].mxu0
    %9653 = vmatprep.mubr.f32.mxu0 0.0
    %9654 = vmatmul.mubr.f32.gmra.mrb[0].mxu0 %v9539
    %v9655 = vpop.f32.mrb[0].mxu0
    %v9656 = vadd.f32 0.0, %v9655
    %v9657 = vpop.f32.mrb[0].mxu0
    %9658 = vmatprep.mubr.f32.mxu0 0.0
    %9659 = vmatmul.mubr.f32.gmra.mrb[0].mxu0 %v9541
    %v9660 = vpop.f32.mrb[0].mxu0
    %v9661 = vadd.f32 0.0, %v9660
    %v9662 = vpop.f32.mrb[0].mxu0
    %9663 = vmatprep.mubr.f32.mxu0 0.0
    %9664 = vmatmul.mubr.f32.gmra.mrb[0].mxu0 %v9543
    %v9665 = vpop.f32.mrb[0].mxu0
    %v9666 = vadd.f32 0.0, %v9665
    %v9667 = vpop.f32.mrb[0].mxu0
    %9668 = vmatprep.mubr.f32.mxu0 0.0
    %9669 = vmatmul.mubr.f32.gmra.mrb[0].mxu0 %v9545
    %v9670 = vpop.f32.mrb[0].mxu0
    %v9671 = vadd.f32 0.0, %v9670
    %v9672 = vpop.f32.mrb[0].mxu0
    %9673 = vmatprep.mubr.f32.mxu0 0.0
    %9674 = vmatmul.mubr.f32.gmra.mrb[0].mxu0 %v9547
    %v9675 = vpop.f32.mrb[0].mxu0
    %v9676 = vadd.f32 0.0, %v9675
    %v9677 = vpop.f32.mrb[0].mxu0
    %9678 = vmatprep.mubr.f32.mxu0 0.0
    %9679 = vmatmul.mubr.f32.gmra.mrb[0].mxu0 %v9549
    %v9680 = vpop.f32.mrb[0].mxu0
    %v9681 = vadd.f32 0.0, %v9680
    %v9682 = vpop.f32.mrb[0].mxu0
    %9683 = vmatprep.mubr.f32.mxu0 0.0
    %9684 = vmatmul.mubr.f32.gmra.mrb[0].mxu0 %v9551
    %v9685 = vpop.f32.mrb[0].mxu0
    %v9686 = vadd.f32 0.0, %v9685
    %v9687 = vpop.f32.mrb[0].mxu0
    %9688 = vmatprep.mubr.f32.mxu0 0.0
    %9689 = vmatmul.mubr.f32.gmra.mrb[0].mxu0 %v9553
    %v9690 = vpop.f32.mrb[0].mxu0
    %v9691 = vadd.f32 0.0, %v9690
    %v9692 = vpop.f32.mrb[0].mxu0
    %9693 = vmatprep.mubr.f32.mxu0 0.0
    %9694 = vmatmul.mubr.f32.gmra.mrb[0].mxu0 %v9555
    %v9695 = vpop.f32.mrb[0].mxu0
    %v9696 = vadd.f32 0.0, %v9695
    %v9697 = vpop.f32.mrb[0].mxu0
    %9698 = vmatprep.mubr.f32.mxu0 0.0
    %9699 = vmatmul.mubr.f32.gmra.mrb[0].mxu0 %v9557
    %v9700 = vpop.f32.mrb[0].mxu0
    %v9701 = vadd.f32 0.0, %v9700
    %v9702 = vpop.f32.mrb[0].mxu0
    %9703 = vdwg.mxu0
    %v9704 = vsel %vm4772, %v9401, 0
    %v9706 = vsel %vm4772, %v9404, 0
    %v9708 = vsel %vm4772, %v9407, 0
    %v9710 = vsel %vm4772, %v9410, 0
    %v9712 = vsel %vm4772, %v9413, 0
    %v9714 = vsel %vm4772, %v9416, 0
    %v9716 = vsel %vm4772, %v9419, 0
    %v9718 = vsel %vm4772, %v9422, 0
    %v9720 = vsel %vm4772, %v9425, 0
    %v9722 = vsel %vm4772, %v9428, 0
    %v9724 = vsel %vm4772, %v9431, 0
    %v9726 = vsel %vm4772, %v9434, 0
    %v9728 = vsel %vm4772, %v9437, 0
    %v9730 = vsel %vm4772, %v9440, 0
    %v9732 = vsel %vm4772, %v9443, 0
    %v9734 = vsel %vm4772, %v9446, 0
    %9736 = vmatprep.subr.mxu0 0.0
    %9737 = vmatpush1.msra.mxu0 %v8486
    %9738 = vmatprep.subr.mxu0 0.0
    %9739 = vmatpush1.msra.mxu0 0.0
    %9740 = vmatprep.subr.mxu0 0.0
    %9741 = vmatpush1.msra.mxu0 0.0
    %9742 = vmatprep.subr.mxu0 0.0
    %9743 = vmatpush1.msra.mxu0 0.0
    %9744 = vmatprep.subr.mxu0 0.0
    %9745 = vmatpush1.msra.mxu0 0.0
    %9746 = vmatprep.subr.mxu0 0.0
    %9747 = vmatpush1.msra.mxu0 0.0
    %9748 = vmatprep.subr.mxu0 0.0
    %9749 = vmatpush1.msra.mxu0 0.0
    %9750 = vmatprep.subr.mxu0 0.0
    %9751 = vmatpush1.msra.mxu0 0.0
    %9752 = vmatprep.subr.mxu0 0.0
    %9753 = vmatpush1.msra.mxu0 0.0
    %9754 = vmatprep.subr.mxu0 0.0
    %9755 = vmatpush1.msra.mxu0 0.0
    %9756 = vmatprep.subr.mxu0 0.0
    %9757 = vmatpush1.msra.mxu0 0.0
    %9758 = vmatprep.subr.mxu0 0.0
    %9759 = vmatpush1.msra.mxu0 0.0
    %9760 = vmatprep.subr.mxu0 0.0
    %9761 = vmatpush1.msra.mxu0 0.0
    %9762 = vmatprep.subr.mxu0 0.0
    %9763 = vmatpush1.msra.mxu0 0.0
    %9764 = vmatprep.subr.mxu0 0.0
    %9765 = vmatpush1.msra.mxu0 0.0
    %9766 = vmatprep.subr.mxu0 0.0
    %9767 = vmatpush1.msra.mxu0 0.0
    %9768 = vmatprep.subr.mxu0 0.0
    %9769 = vmatpush1.msra.mxu0 0.0
    %9770 = vmatprep.subr.mxu0 0.0
    %9771 = vmatpush1.msra.mxu0 0.0
    %9772 = vmatprep.subr.mxu0 0.0
    %9773 = vmatpush1.msra.mxu0 0.0
    %9774 = vmatprep.subr.mxu0 0.0
    %9775 = vmatpush1.msra.mxu0 0.0
    %9776 = vmatprep.subr.mxu0 0.0
    %9777 = vmatpush1.msra.mxu0 0.0
    %9778 = vmatprep.subr.mxu0 0.0
    %9779 = vmatpush1.msra.mxu0 0.0
    %9780 = vmatprep.subr.mxu0 0.0
    %9781 = vmatpush1.msra.mxu0 0.0
    %9782 = vmatprep.subr.mxu0 0.0
    %9783 = vmatpush1.msra.mxu0 0.0
    %9784 = vmatprep.subr.mxu0 0.0
    %9785 = vmatpush1.msra.mxu0 0.0
    %9786 = vmatprep.subr.mxu0 0.0
    %9787 = vmatpush1.msra.mxu0 0.0
    %9788 = vmatprep.subr.mxu0 0.0
    %9789 = vmatpush1.msra.mxu0 0.0
    %9790 = vmatprep.subr.mxu0 0.0
    %9791 = vmatpush1.msra.mxu0 0.0
    %9792 = vmatprep.subr.mxu0 0.0
    %9793 = vmatpush1.msra.mxu0 0.0
    %9794 = vmatprep.subr.mxu0 0.0
    %9795 = vmatpush1.msra.mxu0 0.0
    %9796 = vmatprep.subr.mxu0 0.0
    %9797 = vmatpush1.msra.mxu0 0.0
    %9798 = vmatprep.subr.mxu0 0.0
    %9799 = vmatpush1.msra.mxu0 0.0
    %9800 = vmatprep.mubr.f32.mxu0 0.0
    %9801 = vmatmul.mubr.f32.gmra.mrb[0].mxu0 %v9704
    %v9802 = vpop.f32.mrb[0].mxu0
    %v9803 = vadd.f32 0.0, %v9802
    %v9804 = vpop.f32.mrb[0].mxu0
    %9805 = vmatprep.mubr.f32.mxu0 0.0
    %9806 = vmatmul.mubr.f32.gmra.mrb[0].mxu0 %v9706
    %v9807 = vpop.f32.mrb[0].mxu0
    %v9808 = vadd.f32 0.0, %v9807
    %v9809 = vpop.f32.mrb[0].mxu0
    %9810 = vmatprep.mubr.f32.mxu0 0.0
    %9811 = vmatmul.mubr.f32.gmra.mrb[0].mxu0 %v9708
    %v9812 = vpop.f32.mrb[0].mxu0
    %v9813 = vadd.f32 0.0, %v9812
    %v9814 = vpop.f32.mrb[0].mxu0
    %9815 = vmatprep.mubr.f32.mxu0 0.0
    %9816 = vmatmul.mubr.f32.gmra.mrb[0].mxu0 %v9710
    %v9817 = vpop.f32.mrb[0].mxu0
    %v9818 = vadd.f32 0.0, %v9817
    %v9819 = vpop.f32.mrb[0].mxu0
    %9820 = vmatprep.mubr.f32.mxu0 0.0
    %9821 = vmatmul.mubr.f32.gmra.mrb[0].mxu0 %v9712
    %v9822 = vpop.f32.mrb[0].mxu0
    %v9823 = vadd.f32 0.0, %v9822
    %v9824 = vpop.f32.mrb[0].mxu0
    %9825 = vmatprep.mubr.f32.mxu0 0.0
    %9826 = vmatmul.mubr.f32.gmra.mrb[0].mxu0 %v9714
    %v9827 = vpop.f32.mrb[0].mxu0
    %v9828 = vadd.f32 0.0, %v9827
    %v9829 = vpop.f32.mrb[0].mxu0
    %9830 = vmatprep.mubr.f32.mxu0 0.0
    %9831 = vmatmul.mubr.f32.gmra.mrb[0].mxu0 %v9716
    %v9832 = vpop.f32.mrb[0].mxu0
    %v9833 = vadd.f32 0.0, %v9832
    %v9834 = vpop.f32.mrb[0].mxu0
    %9835 = vmatprep.mubr.f32.mxu0 0.0
    %9836 = vmatmul.mubr.f32.gmra.mrb[0].mxu0 %v9718
    %v9837 = vpop.f32.mrb[0].mxu0
    %v9838 = vadd.f32 0.0, %v9837
    %v9839 = vpop.f32.mrb[0].mxu0
    %9840 = vmatprep.mubr.f32.mxu0 0.0
    %9841 = vmatmul.mubr.f32.gmra.mrb[0].mxu0 %v9720
    %v9842 = vpop.f32.mrb[0].mxu0
    %v9843 = vadd.f32 0.0, %v9842
    %v9844 = vpop.f32.mrb[0].mxu0
    %9845 = vmatprep.mubr.f32.mxu0 0.0
    %9846 = vmatmul.mubr.f32.gmra.mrb[0].mxu0 %v9722
    %v9847 = vpop.f32.mrb[0].mxu0
    %v9848 = vadd.f32 0.0, %v9847
    %v9849 = vpop.f32.mrb[0].mxu0
    %9850 = vmatprep.mubr.f32.mxu0 0.0
    %9851 = vmatmul.mubr.f32.gmra.mrb[0].mxu0 %v9724
    %v9852 = vpop.f32.mrb[0].mxu0
    %v9853 = vadd.f32 0.0, %v9852
    %v9854 = vpop.f32.mrb[0].mxu0
    %9855 = vmatprep.mubr.f32.mxu0 0.0
    %9856 = vmatmul.mubr.f32.gmra.mrb[0].mxu0 %v9726
    %v9857 = vpop.f32.mrb[0].mxu0
    %v9858 = vadd.f32 0.0, %v9857
    %v9859 = vpop.f32.mrb[0].mxu0
    %9860 = vmatprep.mubr.f32.mxu0 0.0
    %9861 = vmatmul.mubr.f32.gmra.mrb[0].mxu0 %v9728
    %v9862 = vpop.f32.mrb[0].mxu0
    %v9863 = vadd.f32 0.0, %v9862
    %v9864 = vpop.f32.mrb[0].mxu0
    %9865 = vmatprep.mubr.f32.mxu0 0.0
    %9866 = vmatmul.mubr.f32.gmra.mrb[0].mxu0 %v9730
    %v9867 = vpop.f32.mrb[0].mxu0
    %v9868 = vadd.f32 0.0, %v9867
    %v9869 = vpop.f32.mrb[0].mxu0
    %9870 = vmatprep.mubr.f32.mxu0 0.0
    %9871 = vmatmul.mubr.f32.gmra.mrb[0].mxu0 %v9732
    %v9872 = vpop.f32.mrb[0].mxu0
    %v9873 = vadd.f32 0.0, %v9872
    %v9874 = vpop.f32.mrb[0].mxu0
    %9875 = vmatprep.mubr.f32.mxu0 0.0
    %9876 = vmatmul.mubr.f32.gmra.mrb[0].mxu0 %v9734
    %v9877 = vpop.f32.mrb[0].mxu0
    %v9878 = vadd.f32 0.0, %v9877
    %v9879 = vpop.f32.mrb[0].mxu0
    %9880 = vdwg.mxu0
    %v9881 = vsel %vm4772, %v9449, 0
    %v9883 = vsel %vm4772, %v9452, 0
    %v9885 = vsel %vm4772, %v9455, 0
    %v9887 = vsel %vm4772, %v9458, 0
    %v9889 = vsel %vm4772, %v9461, 0
    %v9891 = vsel %vm4772, %v9464, 0
    %v9893 = vsel %vm4772, %v9467, 0
    %v9895 = vsel %vm4772, %v9470, 0
    %v9897 = vsel %vm4772, %v9473, 0
    %v9899 = vsel %vm4772, %v9476, 0
    %v9901 = vsel %vm4772, %v9479, 0
    %v9903 = vsel %vm4772, %v9482, 0
    %v9905 = vsel %vm4772, %v9485, 0
    %v9907 = vsel %vm4772, %v9488, 0
    %v9909 = vsel %vm4772, %v9491, 0
    %v9911 = vsel %vm4772, %v9494, 0
    %9913 = vmatprep.subr.mxu0 0.0
    %9914 = vmatpush1.msra.mxu0 %v8487
    %9915 = vmatprep.subr.mxu0 0.0
    %9916 = vmatpush1.msra.mxu0 0.0
    %9917 = vmatprep.subr.mxu0 0.0
    %9918 = vmatpush1.msra.mxu0 0.0
    %9919 = vmatprep.subr.mxu0 0.0
    %9920 = vmatpush1.msra.mxu0 0.0
    %9921 = vmatprep.subr.mxu0 0.0
    %9922 = vmatpush1.msra.mxu0 0.0
    %9923 = vmatprep.subr.mxu0 0.0
    %9924 = vmatpush1.msra.mxu0 0.0
    %9925 = vmatprep.subr.mxu0 0.0
    %9926 = vmatpush1.msra.mxu0 0.0
    %9927 = vmatprep.subr.mxu0 0.0
    %9928 = vmatpush1.msra.mxu0 0.0
    %9929 = vmatprep.subr.mxu0 0.0
    %9930 = vmatpush1.msra.mxu0 0.0
    %9931 = vmatprep.subr.mxu0 0.0
    %9932 = vmatpush1.msra.mxu0 0.0
    %9933 = vmatprep.subr.mxu0 0.0
    %9934 = vmatpush1.msra.mxu0 0.0
    %9935 = vmatprep.subr.mxu0 0.0
    %9936 = vmatpush1.msra.mxu0 0.0
    %9937 = vmatprep.subr.mxu0 0.0
    %9938 = vmatpush1.msra.mxu0 0.0
    %9939 = vmatprep.subr.mxu0 0.0
    %9940 = vmatpush1.msra.mxu0 0.0
    %9941 = vmatprep.subr.mxu0 0.0
    %9942 = vmatpush1.msra.mxu0 0.0
    %9943 = vmatprep.subr.mxu0 0.0
    %9944 = vmatpush1.msra.mxu0 0.0
    %9945 = vmatprep.subr.mxu0 0.0
    %9946 = vmatpush1.msra.mxu0 0.0
    %9947 = vmatprep.subr.mxu0 0.0
    %9948 = vmatpush1.msra.mxu0 0.0
    %9949 = vmatprep.subr.mxu0 0.0
    %9950 = vmatpush1.msra.mxu0 0.0
    %9951 = vmatprep.subr.mxu0 0.0
    %9952 = vmatpush1.msra.mxu0 0.0
    %9953 = vmatprep.subr.mxu0 0.0
    %9954 = vmatpush1.msra.mxu0 0.0
    %9955 = vmatprep.subr.mxu0 0.0
    %9956 = vmatpush1.msra.mxu0 0.0
    %9957 = vmatprep.subr.mxu0 0.0
    %9958 = vmatpush1.msra.mxu0 0.0
    %9959 = vmatprep.subr.mxu0 0.0
    %9960 = vmatpush1.msra.mxu0 0.0
    %9961 = vmatprep.subr.mxu0 0.0
    %9962 = vmatpush1.msra.mxu0 0.0
    %9963 = vmatprep.subr.mxu0 0.0
    %9964 = vmatpush1.msra.mxu0 0.0
    %9965 = vmatprep.subr.mxu0 0.0
    %9966 = vmatpush1.msra.mxu0 0.0
    %9967 = vmatprep.subr.mxu0 0.0
    %9968 = vmatpush1.msra.mxu0 0.0
    %9969 = vmatprep.subr.mxu0 0.0
    %9970 = vmatpush1.msra.mxu0 0.0
    %9971 = vmatprep.subr.mxu0 0.0
    %9972 = vmatpush1.msra.mxu0 0.0
    %9973 = vmatprep.subr.mxu0 0.0
    %9974 = vmatpush1.msra.mxu0 0.0
    %9975 = vmatprep.subr.mxu0 0.0
    %9976 = vmatpush1.msra.mxu0 0.0
    %9977 = vmatprep.mubr.f32.mxu0 0.0
    %9978 = vmatmul.mubr.f32.gmra.mrb[0].mxu0 %v9881
    %v9979 = vpop.f32.mrb[0].mxu0
    %v9980 = vadd.f32 0.0, %v9979
    %v9981 = vpop.f32.mrb[0].mxu0
    %9982 = vmatprep.mubr.f32.mxu0 0.0
    %9983 = vmatmul.mubr.f32.gmra.mrb[0].mxu0 %v9883
    %v9984 = vpop.f32.mrb[0].mxu0
    %v9985 = vadd.f32 0.0, %v9984
    %v9986 = vpop.f32.mrb[0].mxu0
    %9987 = vmatprep.mubr.f32.mxu0 0.0
    %9988 = vmatmul.mubr.f32.gmra.mrb[0].mxu0 %v9885
    %v9989 = vpop.f32.mrb[0].mxu0
    %v9990 = vadd.f32 0.0, %v9989
    %v9991 = vpop.f32.mrb[0].mxu0
    %9992 = vmatprep.mubr.f32.mxu0 0.0
    %9993 = vmatmul.mubr.f32.gmra.mrb[0].mxu0 %v9887
    %v9994 = vpop.f32.mrb[0].mxu0
    %v9995 = vadd.f32 0.0, %v9994
    %v9996 = vpop.f32.mrb[0].mxu0
    %9997 = vmatprep.mubr.f32.mxu0 0.0
    %9998 = vmatmul.mubr.f32.gmra.mrb[0].mxu0 %v9889
    %v9999 = vpop.f32.mrb[0].mxu0
    %v10000 = vadd.f32 0.0, %v9999
    %v10001 = vpop.f32.mrb[0].mxu0
    %10002 = vmatprep.mubr.f32.mxu0 0.0
    %10003 = vmatmul.mubr.f32.gmra.mrb[0].mxu0 %v9891
    %v10004 = vpop.f32.mrb[0].mxu0
    %v10005 = vadd.f32 0.0, %v10004
    %v10006 = vpop.f32.mrb[0].mxu0
    %10007 = vmatprep.mubr.f32.mxu0 0.0
    %10008 = vmatmul.mubr.f32.gmra.mrb[0].mxu0 %v9893
    %v10009 = vpop.f32.mrb[0].mxu0
    %v10010 = vadd.f32 0.0, %v10009
    %v10011 = vpop.f32.mrb[0].mxu0
    %10012 = vmatprep.mubr.f32.mxu0 0.0
    %10013 = vmatmul.mubr.f32.gmra.mrb[0].mxu0 %v9895
    %v10014 = vpop.f32.mrb[0].mxu0
    %v10015 = vadd.f32 0.0, %v10014
    %v10016 = vpop.f32.mrb[0].mxu0
    %10017 = vmatprep.mubr.f32.mxu0 0.0
    %10018 = vmatmul.mubr.f32.gmra.mrb[0].mxu0 %v9897
    %v10019 = vpop.f32.mrb[0].mxu0
    %v10020 = vadd.f32 0.0, %v10019
    %v10021 = vpop.f32.mrb[0].mxu0
    %10022 = vmatprep.mubr.f32.mxu0 0.0
    %10023 = vmatmul.mubr.f32.gmra.mrb[0].mxu0 %v9899
    %v10024 = vpop.f32.mrb[0].mxu0
    %v10025 = vadd.f32 0.0, %v10024
    %v10026 = vpop.f32.mrb[0].mxu0
    %10027 = vmatprep.mubr.f32.mxu0 0.0
    %10028 = vmatmul.mubr.f32.gmra.mrb[0].mxu0 %v9901
    %v10029 = vpop.f32.mrb[0].mxu0
    %v10030 = vadd.f32 0.0, %v10029
    %v10031 = vpop.f32.mrb[0].mxu0
    %10032 = vmatprep.mubr.f32.mxu0 0.0
    %10033 = vmatmul.mubr.f32.gmra.mrb[0].mxu0 %v9903
    %v10034 = vpop.f32.mrb[0].mxu0
    %v10035 = vadd.f32 0.0, %v10034
    %v10036 = vpop.f32.mrb[0].mxu0
    %10037 = vmatprep.mubr.f32.mxu0 0.0
    %10038 = vmatmul.mubr.f32.gmra.mrb[0].mxu0 %v9905
    %v10039 = vpop.f32.mrb[0].mxu0
    %v10040 = vadd.f32 0.0, %v10039
    %v10041 = vpop.f32.mrb[0].mxu0
    %10042 = vmatprep.mubr.f32.mxu0 0.0
    %10043 = vmatmul.mubr.f32.gmra.mrb[0].mxu0 %v9907
    %v10044 = vpop.f32.mrb[0].mxu0
    %v10045 = vadd.f32 0.0, %v10044
    %v10046 = vpop.f32.mrb[0].mxu0
    %10047 = vmatprep.mubr.f32.mxu0 0.0
    %10048 = vmatmul.mubr.f32.gmra.mrb[0].mxu0 %v9909
    %v10049 = vpop.f32.mrb[0].mxu0
    %v10050 = vadd.f32 0.0, %v10049
    %v10051 = vpop.f32.mrb[0].mxu0
    %10052 = vmatprep.mubr.f32.mxu0 0.0
    %10053 = vmatmul.mubr.f32.gmra.mrb[0].mxu0 %v9911
    %v10054 = vpop.f32.mrb[0].mxu0
    %v10055 = vadd.f32 0.0, %v10054
    %v10056 = vpop.f32.mrb[0].mxu0
    %10057 = vdwg.mxu0
    %v10058 = vsel %vm4772, %v9343, 0
    %v10060 = vsel %vm4772, %v9363, 0
    %10062 = vmatprep.subr.mxu0 0.0
    %10063 = vmatpush1.msra.mxu0 %v8488
    %10064 = vmatprep.subr.mxu0 0.0
    %10065 = vmatpush1.msra.mxu0 0.0
    %10066 = vmatprep.subr.mxu0 0.0
    %10067 = vmatpush1.msra.mxu0 0.0
    %10068 = vmatprep.subr.mxu0 0.0
    %10069 = vmatpush1.msra.mxu0 0.0
    %10070 = vmatprep.subr.mxu0 0.0
    %10071 = vmatpush1.msra.mxu0 0.0
    %10072 = vmatprep.subr.mxu0 0.0
    %10073 = vmatpush1.msra.mxu0 0.0
    %10074 = vmatprep.subr.mxu0 0.0
    %10075 = vmatpush1.msra.mxu0 0.0
    %10076 = vmatprep.subr.mxu0 0.0
    %10077 = vmatpush1.msra.mxu0 0.0
    %10078 = vmatprep.subr.mxu0 0.0
    %10079 = vmatpush1.msra.mxu0 0.0
    %10080 = vmatprep.subr.mxu0 0.0
    %10081 = vmatpush1.msra.mxu0 0.0
    %10082 = vmatprep.subr.mxu0 0.0
    %10083 = vmatpush1.msra.mxu0 0.0
    %10084 = vmatprep.subr.mxu0 0.0
    %10085 = vmatpush1.msra.mxu0 0.0
    %10086 = vmatprep.subr.mxu0 0.0
    %10087 = vmatpush1.msra.mxu0 0.0
    %10088 = vmatprep.subr.mxu0 0.0
    %10089 = vmatpush1.msra.mxu0 0.0
    %10090 = vmatprep.subr.mxu0 0.0
    %10091 = vmatpush1.msra.mxu0 0.0
    %10092 = vmatprep.subr.mxu0 0.0
    %10093 = vmatpush1.msra.mxu0 0.0
    %10094 = vmatprep.subr.mxu0 0.0
    %10095 = vmatpush1.msra.mxu0 0.0
    %10096 = vmatprep.subr.mxu0 0.0
    %10097 = vmatpush1.msra.mxu0 0.0
    %10098 = vmatprep.subr.mxu0 0.0
    %10099 = vmatpush1.msra.mxu0 0.0
    %10100 = vmatprep.subr.mxu0 0.0
    %10101 = vmatpush1.msra.mxu0 0.0
    %10102 = vmatprep.subr.mxu0 0.0
    %10103 = vmatpush1.msra.mxu0 0.0
    %10104 = vmatprep.subr.mxu0 0.0
    %10105 = vmatpush1.msra.mxu0 0.0
    %10106 = vmatprep.subr.mxu0 0.0
    %10107 = vmatpush1.msra.mxu0 0.0
    %10108 = vmatprep.subr.mxu0 0.0
    %10109 = vmatpush1.msra.mxu0 0.0
    %10110 = vmatprep.subr.mxu0 0.0
    %10111 = vmatpush1.msra.mxu0 0.0
    %10112 = vmatprep.subr.mxu0 0.0
    %10113 = vmatpush1.msra.mxu0 0.0
    %10114 = vmatprep.subr.mxu0 0.0
    %10115 = vmatpush1.msra.mxu0 0.0
    %10116 = vmatprep.subr.mxu0 0.0
    %10117 = vmatpush1.msra.mxu0 0.0
    %10118 = vmatprep.subr.mxu0 0.0
    %10119 = vmatpush1.msra.mxu0 0.0
    %10120 = vmatprep.subr.mxu0 0.0
    %10121 = vmatpush1.msra.mxu0 0.0
    %10122 = vmatprep.subr.mxu0 0.0
    %10123 = vmatpush1.msra.mxu0 0.0
    %10124 = vmatprep.subr.mxu0 0.0
    %10125 = vmatpush1.msra.mxu0 0.0
    %10126 = vmatprep.mubr.f32.mxu0 0.0
    %10127 = vmatmul.mubr.f32.gmra.mrb[0].mxu0 %v9529
    %v10128 = vpop.f32.mrb[0].mxu0
    %v10129 = vadd.f32 0.0, %v10128
    %v10130 = vpop.f32.mrb[0].mxu0
    %10131 = vmatprep.mubr.f32.mxu0 0.0
    %10132 = vmatmul.mubr.f32.gmra.mrb[0].mxu0 %v9531
    %v10133 = vpop.f32.mrb[0].mxu0
    %v10134 = vadd.f32 0.0, %v10133
    %v10135 = vpop.f32.mrb[0].mxu0
    %10136 = vmatprep.mubr.f32.mxu0 0.0
    %10137 = vmatmul.mubr.f32.gmra.mrb[0].mxu0 %v9533
    %v10138 = vpop.f32.mrb[0].mxu0
    %v10139 = vadd.f32 0.0, %v10138
    %v10140 = vpop.f32.mrb[0].mxu0
    %10141 = vmatprep.mubr.f32.mxu0 0.0
    %10142 = vmatmul.mubr.f32.gmra.mrb[0].mxu0 %v9535
    %v10143 = vpop.f32.mrb[0].mxu0
    %v10144 = vadd.f32 0.0, %v10143
    %v10145 = vpop.f32.mrb[0].mxu0
    %10146 = vmatprep.mubr.f32.mxu0 0.0
    %10147 = vmatmul.mubr.f32.gmra.mrb[0].mxu0 %v9537
    %v10148 = vpop.f32.mrb[0].mxu0
    %v10149 = vadd.f32 0.0, %v10148
    %v10150 = vpop.f32.mrb[0].mxu0
    %10151 = vmatprep.mubr.f32.mxu0 0.0
    %10152 = vmatmul.mubr.f32.gmra.mrb[0].mxu0 %v9539
    %v10153 = vpop.f32.mrb[0].mxu0
    %v10154 = vadd.f32 0.0, %v10153
    %v10155 = vpop.f32.mrb[0].mxu0
    %10156 = vmatprep.mubr.f32.mxu0 0.0
    %10157 = vmatmul.mubr.f32.gmra.mrb[0].mxu0 %v9541
    %v10158 = vpop.f32.mrb[0].mxu0
    %v10159 = vadd.f32 0.0, %v10158
    %v10160 = vpop.f32.mrb[0].mxu0
    %10161 = vmatprep.mubr.f32.mxu0 0.0
    %10162 = vmatmul.mubr.f32.gmra.mrb[0].mxu0 %v10058
    %v10163 = vpop.f32.mrb[0].mxu0
    %v10164 = vadd.f32 0.0, %v10163
    %v10165 = vpop.f32.mrb[0].mxu0
    %10166 = vmatprep.mubr.f32.mxu0 0.0
    %10167 = vmatmul.mubr.f32.gmra.mrb[0].mxu0 %v9545
    %v10168 = vpop.f32.mrb[0].mxu0
    %v10169 = vadd.f32 0.0, %v10168
    %v10170 = vpop.f32.mrb[0].mxu0
    %10171 = vmatprep.mubr.f32.mxu0 0.0
    %10172 = vmatmul.mubr.f32.gmra.mrb[0].mxu0 %v9547
    %v10173 = vpop.f32.mrb[0].mxu0
    %v10174 = vadd.f32 0.0, %v10173
    %v10175 = vpop.f32.mrb[0].mxu0
    %10176 = vmatprep.mubr.f32.mxu0 0.0
    %10177 = vmatmul.mubr.f32.gmra.mrb[0].mxu0 %v9549
    %v10178 = vpop.f32.mrb[0].mxu0
    %v10179 = vadd.f32 0.0, %v10178
    %v10180 = vpop.f32.mrb[0].mxu0
    %10181 = vmatprep.mubr.f32.mxu0 0.0
    %10182 = vmatmul.mubr.f32.gmra.mrb[0].mxu0 %v9551
    %v10183 = vpop.f32.mrb[0].mxu0
    %v10184 = vadd.f32 0.0, %v10183
    %v10185 = vpop.f32.mrb[0].mxu0
    %10186 = vmatprep.mubr.f32.mxu0 0.0
    %10187 = vmatmul.mubr.f32.gmra.mrb[0].mxu0 %v9553
    %v10188 = vpop.f32.mrb[0].mxu0
    %v10189 = vadd.f32 0.0, %v10188
    %v10190 = vpop.f32.mrb[0].mxu0
    %10191 = vmatprep.mubr.f32.mxu0 0.0
    %10192 = vmatmul.mubr.f32.gmra.mrb[0].mxu0 %v9555
    %v10193 = vpop.f32.mrb[0].mxu0
    %v10194 = vadd.f32 0.0, %v10193
    %v10195 = vpop.f32.mrb[0].mxu0
    %10196 = vmatprep.mubr.f32.mxu0 0.0
    %10197 = vmatmul.mubr.f32.gmra.mrb[0].mxu0 %v9557
    %v10198 = vpop.f32.mrb[0].mxu0
    %v10199 = vadd.f32 0.0, %v10198
    %v10200 = vpop.f32.mrb[0].mxu0
    %10201 = vmatprep.mubr.f32.mxu0 0.0
    %10202 = vmatmul.mubr.f32.gmra.mrb[0].mxu0 %v10060
    %v10203 = vpop.f32.mrb[0].mxu0
    %v10204 = vadd.f32 0.0, %v10203
    %v10205 = vpop.f32.mrb[0].mxu0
    %10206 = vdwg.mxu0
    %v10207 = vsel %vm4772, %v9501, 0
    %v10209 = vsel %vm4772, %v9504, 0
    %10211 = vmatprep.subr.mxu0 0.0
    %10212 = vmatpush1.msra.mxu0 %v8489
    %10213 = vmatprep.subr.mxu0 0.0
    %10214 = vmatpush1.msra.mxu0 0.0
    %10215 = vmatprep.subr.mxu0 0.0
    %10216 = vmatpush1.msra.mxu0 0.0
    %10217 = vmatprep.subr.mxu0 0.0
    %10218 = vmatpush1.msra.mxu0 0.0
    %10219 = vmatprep.subr.mxu0 0.0
    %10220 = vmatpush1.msra.mxu0 0.0
    %10221 = vmatprep.subr.mxu0 0.0
    %10222 = vmatpush1.msra.mxu0 0.0
    %10223 = vmatprep.subr.mxu0 0.0
    %10224 = vmatpush1.msra.mxu0 0.0
    %10225 = vmatprep.subr.mxu0 0.0
    %10226 = vmatpush1.msra.mxu0 0.0
    %10227 = vmatprep.subr.mxu0 0.0
    %10228 = vmatpush1.msra.mxu0 0.0
    %10229 = vmatprep.subr.mxu0 0.0
    %10230 = vmatpush1.msra.mxu0 0.0
    %10231 = vmatprep.subr.mxu0 0.0
    %10232 = vmatpush1.msra.mxu0 0.0
    %10233 = vmatprep.subr.mxu0 0.0
    %10234 = vmatpush1.msra.mxu0 0.0
    %10235 = vmatprep.subr.mxu0 0.0
    %10236 = vmatpush1.msra.mxu0 0.0
    %10237 = vmatprep.subr.mxu0 0.0
    %10238 = vmatpush1.msra.mxu0 0.0
    %10239 = vmatprep.subr.mxu0 0.0
    %10240 = vmatpush1.msra.mxu0 0.0
    %10241 = vmatprep.subr.mxu0 0.0
    %10242 = vmatpush1.msra.mxu0 0.0
    %10243 = vmatprep.subr.mxu0 0.0
    %10244 = vmatpush1.msra.mxu0 0.0
    %10245 = vmatprep.subr.mxu0 0.0
    %10246 = vmatpush1.msra.mxu0 0.0
    %10247 = vmatprep.subr.mxu0 0.0
    %10248 = vmatpush1.msra.mxu0 0.0
    %10249 = vmatprep.subr.mxu0 0.0
    %10250 = vmatpush1.msra.mxu0 0.0
    %10251 = vmatprep.subr.mxu0 0.0
    %10252 = vmatpush1.msra.mxu0 0.0
    %10253 = vmatprep.subr.mxu0 0.0
    %10254 = vmatpush1.msra.mxu0 0.0
    %10255 = vmatprep.subr.mxu0 0.0
    %10256 = vmatpush1.msra.mxu0 0.0
    %10257 = vmatprep.subr.mxu0 0.0
    %10258 = vmatpush1.msra.mxu0 0.0
    %10259 = vmatprep.subr.mxu0 0.0
    %10260 = vmatpush1.msra.mxu0 0.0
    %10261 = vmatprep.subr.mxu0 0.0
    %10262 = vmatpush1.msra.mxu0 0.0
    %10263 = vmatprep.subr.mxu0 0.0
    %10264 = vmatpush1.msra.mxu0 0.0
    %10265 = vmatprep.subr.mxu0 0.0
    %10266 = vmatpush1.msra.mxu0 0.0
    %10267 = vmatprep.subr.mxu0 0.0
    %10268 = vmatpush1.msra.mxu0 0.0
    %10269 = vmatprep.subr.mxu0 0.0
    %10270 = vmatpush1.msra.mxu0 0.0
    %10271 = vmatprep.subr.mxu0 0.0
    %10272 = vmatpush1.msra.mxu0 0.0
    %10273 = vmatprep.subr.mxu0 0.0
    %10274 = vmatpush1.msra.mxu0 0.0
    %10275 = vmatprep.mubr.f32.mxu0 0.0
    %10276 = vmatmul.mubr.f32.gmra.mrb[0].mxu0 %v9706
    %v10277 = vpop.f32.mrb[0].mxu0
    %v10278 = vadd.f32 0.0, %v10277
    %v10279 = vpop.f32.mrb[0].mxu0
    %10280 = vmatprep.mubr.f32.mxu0 0.0
    %10281 = vmatmul.mubr.f32.gmra.mrb[0].mxu0 %v9708
    %v10282 = vpop.f32.mrb[0].mxu0
    %v10283 = vadd.f32 0.0, %v10282
    %v10284 = vpop.f32.mrb[0].mxu0
    %10285 = vmatprep.mubr.f32.mxu0 0.0
    %10286 = vmatmul.mubr.f32.gmra.mrb[0].mxu0 %v9710
    %v10287 = vpop.f32.mrb[0].mxu0
    %v10288 = vadd.f32 0.0, %v10287
    %v10289 = vpop.f32.mrb[0].mxu0
    %10290 = vmatprep.mubr.f32.mxu0 0.0
    %10291 = vmatmul.mubr.f32.gmra.mrb[0].mxu0 %v9712
    %v10292 = vpop.f32.mrb[0].mxu0
    %v10293 = vadd.f32 0.0, %v10292
    %v10294 = vpop.f32.mrb[0].mxu0
    %10295 = vmatprep.mubr.f32.mxu0 0.0
    %10296 = vmatmul.mubr.f32.gmra.mrb[0].mxu0 %v9714
    %v10297 = vpop.f32.mrb[0].mxu0
    %v10298 = vadd.f32 0.0, %v10297
    %v10299 = vpop.f32.mrb[0].mxu0
    %10300 = vmatprep.mubr.f32.mxu0 0.0
    %10301 = vmatmul.mubr.f32.gmra.mrb[0].mxu0 %v9716
    %v10302 = vpop.f32.mrb[0].mxu0
    %v10303 = vadd.f32 0.0, %v10302
    %v10304 = vpop.f32.mrb[0].mxu0
    %10305 = vmatprep.mubr.f32.mxu0 0.0
    %10306 = vmatmul.mubr.f32.gmra.mrb[0].mxu0 %v9718
    %v10307 = vpop.f32.mrb[0].mxu0
    %v10308 = vadd.f32 0.0, %v10307
    %v10309 = vpop.f32.mrb[0].mxu0
    %10310 = vmatprep.mubr.f32.mxu0 0.0
    %10311 = vmatmul.mubr.f32.gmra.mrb[0].mxu0 %v10207
    %v10312 = vpop.f32.mrb[0].mxu0
    %v10313 = vadd.f32 0.0, %v10312
    %v10314 = vpop.f32.mrb[0].mxu0
    %10315 = vmatprep.mubr.f32.mxu0 0.0
    %10316 = vmatmul.mubr.f32.gmra.mrb[0].mxu0 %v9722
    %v10317 = vpop.f32.mrb[0].mxu0
    %v10318 = vadd.f32 0.0, %v10317
    %v10319 = vpop.f32.mrb[0].mxu0
    %10320 = vmatprep.mubr.f32.mxu0 0.0
    %10321 = vmatmul.mubr.f32.gmra.mrb[0].mxu0 %v9724
    %v10322 = vpop.f32.mrb[0].mxu0
    %v10323 = vadd.f32 0.0, %v10322
    %v10324 = vpop.f32.mrb[0].mxu0
    %10325 = vmatprep.mubr.f32.mxu0 0.0
    %10326 = vmatmul.mubr.f32.gmra.mrb[0].mxu0 %v9726
    %v10327 = vpop.f32.mrb[0].mxu0
    %v10328 = vadd.f32 0.0, %v10327
    %v10329 = vpop.f32.mrb[0].mxu0
    %10330 = vmatprep.mubr.f32.mxu0 0.0
    %10331 = vmatmul.mubr.f32.gmra.mrb[0].mxu0 %v9728
    %v10332 = vpop.f32.mrb[0].mxu0
    %v10333 = vadd.f32 0.0, %v10332
    %v10334 = vpop.f32.mrb[0].mxu0
    %10335 = vmatprep.mubr.f32.mxu0 0.0
    %10336 = vmatmul.mubr.f32.gmra.mrb[0].mxu0 %v9730
    %v10337 = vpop.f32.mrb[0].mxu0
    %v10338 = vadd.f32 0.0, %v10337
    %v10339 = vpop.f32.mrb[0].mxu0
    %10340 = vmatprep.mubr.f32.mxu0 0.0
    %10341 = vmatmul.mubr.f32.gmra.mrb[0].mxu0 %v9732
    %v10342 = vpop.f32.mrb[0].mxu0
    %v10343 = vadd.f32 0.0, %v10342
    %v10344 = vpop.f32.mrb[0].mxu0
    %10345 = vmatprep.mubr.f32.mxu0 0.0
    %10346 = vmatmul.mubr.f32.gmra.mrb[0].mxu0 %v9734
    %v10347 = vpop.f32.mrb[0].mxu0
    %v10348 = vadd.f32 0.0, %v10347
    %v10349 = vpop.f32.mrb[0].mxu0
    %10350 = vmatprep.mubr.f32.mxu0 0.0
    %10351 = vmatmul.mubr.f32.gmra.mrb[0].mxu0 %v10209
    %v10352 = vpop.f32.mrb[0].mxu0
    %v10353 = vadd.f32 0.0, %v10352
    %v10354 = vpop.f32.mrb[0].mxu0
    %10355 = vdwg.mxu0
    %v10356 = vsel %vm4772, %v9507, 0
    %v10358 = vsel %vm4772, %v9510, 0
    %10360 = vmatprep.subr.mxu0 0.0
    %10361 = vmatpush1.msra.mxu0 %v8490
    %10362 = vmatprep.subr.mxu0 0.0
    %10363 = vmatpush1.msra.mxu0 0.0
    %10364 = vmatprep.subr.mxu0 0.0
    %10365 = vmatpush1.msra.mxu0 0.0
    %10366 = vmatprep.subr.mxu0 0.0
    %10367 = vmatpush1.msra.mxu0 0.0
    %10368 = vmatprep.subr.mxu0 0.0
    %10369 = vmatpush1.msra.mxu0 0.0
    %10370 = vmatprep.subr.mxu0 0.0
    %10371 = vmatpush1.msra.mxu0 0.0
    %10372 = vmatprep.subr.mxu0 0.0
    %10373 = vmatpush1.msra.mxu0 0.0
    %10374 = vmatprep.subr.mxu0 0.0
    %10375 = vmatpush1.msra.mxu0 0.0
    %10376 = vmatprep.subr.mxu0 0.0
    %10377 = vmatpush1.msra.mxu0 0.0
    %10378 = vmatprep.subr.mxu0 0.0
    %10379 = vmatpush1.msra.mxu0 0.0
    %10380 = vmatprep.subr.mxu0 0.0
    %10381 = vmatpush1.msra.mxu0 0.0
    %10382 = vmatprep.subr.mxu0 0.0
    %10383 = vmatpush1.msra.mxu0 0.0
    %10384 = vmatprep.subr.mxu0 0.0
    %10385 = vmatpush1.msra.mxu0 0.0
    %10386 = vmatprep.subr.mxu0 0.0
    %10387 = vmatpush1.msra.mxu0 0.0
    %10388 = vmatprep.subr.mxu0 0.0
    %10389 = vmatpush1.msra.mxu0 0.0
    %10390 = vmatprep.subr.mxu0 0.0
    %10391 = vmatpush1.msra.mxu0 0.0
    %10392 = vmatprep.subr.mxu0 0.0
    %10393 = vmatpush1.msra.mxu0 0.0
    %10394 = vmatprep.subr.mxu0 0.0
    %10395 = vmatpush1.msra.mxu0 0.0
    %10396 = vmatprep.subr.mxu0 0.0
    %10397 = vmatpush1.msra.mxu0 0.0
    %10398 = vmatprep.subr.mxu0 0.0
    %10399 = vmatpush1.msra.mxu0 0.0
    %10400 = vmatprep.subr.mxu0 0.0
    %10401 = vmatpush1.msra.mxu0 0.0
    %10402 = vmatprep.subr.mxu0 0.0
    %10403 = vmatpush1.msra.mxu0 0.0
    %10404 = vmatprep.subr.mxu0 0.0
    %10405 = vmatpush1.msra.mxu0 0.0
    %10406 = vmatprep.subr.mxu0 0.0
    %10407 = vmatpush1.msra.mxu0 0.0
    %10408 = vmatprep.subr.mxu0 0.0
    %10409 = vmatpush1.msra.mxu0 0.0
    %10410 = vmatprep.subr.mxu0 0.0
    %10411 = vmatpush1.msra.mxu0 0.0
    %10412 = vmatprep.subr.mxu0 0.0
    %10413 = vmatpush1.msra.mxu0 0.0
    %10414 = vmatprep.subr.mxu0 0.0
    %10415 = vmatpush1.msra.mxu0 0.0
    %10416 = vmatprep.subr.mxu0 0.0
    %10417 = vmatpush1.msra.mxu0 0.0
    %10418 = vmatprep.subr.mxu0 0.0
    %10419 = vmatpush1.msra.mxu0 0.0
    %10420 = vmatprep.subr.mxu0 0.0
    %10421 = vmatpush1.msra.mxu0 0.0
    %10422 = vmatprep.subr.mxu0 0.0
    %10423 = vmatpush1.msra.mxu0 0.0
    %10424 = vmatprep.mubr.f32.mxu0 0.0
    %10425 = vmatmul.mubr.f32.gmra.mrb[0].mxu0 %v9883
    %v10426 = vpop.f32.mrb[0].mxu0
    %v10427 = vadd.f32 0.0, %v10426
    %v10428 = vpop.f32.mrb[0].mxu0
    %10429 = vmatprep.mubr.f32.mxu0 0.0
    %10430 = vmatmul.mubr.f32.gmra.mrb[0].mxu0 %v9885
    %v10431 = vpop.f32.mrb[0].mxu0
    %v10432 = vadd.f32 0.0, %v10431
    %v10433 = vpop.f32.mrb[0].mxu0
    %10434 = vmatprep.mubr.f32.mxu0 0.0
    %10435 = vmatmul.mubr.f32.gmra.mrb[0].mxu0 %v9887
    %v10436 = vpop.f32.mrb[0].mxu0
    %v10437 = vadd.f32 0.0, %v10436
    %v10438 = vpop.f32.mrb[0].mxu0
    %10439 = vmatprep.mubr.f32.mxu0 0.0
    %10440 = vmatmul.mubr.f32.gmra.mrb[0].mxu0 %v9889
    %v10441 = vpop.f32.mrb[0].mxu0
    %v10442 = vadd.f32 0.0, %v10441
    %v10443 = vpop.f32.mrb[0].mxu0
    %10444 = vmatprep.mubr.f32.mxu0 0.0
    %10445 = vmatmul.mubr.f32.gmra.mrb[0].mxu0 %v9891
    %v10446 = vpop.f32.mrb[0].mxu0
    %v10447 = vadd.f32 0.0, %v10446
    %v10448 = vpop.f32.mrb[0].mxu0
    %10449 = vmatprep.mubr.f32.mxu0 0.0
    %10450 = vmatmul.mubr.f32.gmra.mrb[0].mxu0 %v9893
    %v10451 = vpop.f32.mrb[0].mxu0
    %v10452 = vadd.f32 0.0, %v10451
    %v10453 = vpop.f32.mrb[0].mxu0
    %10454 = vmatprep.mubr.f32.mxu0 0.0
    %10455 = vmatmul.mubr.f32.gmra.mrb[0].mxu0 %v9895
    %v10456 = vpop.f32.mrb[0].mxu0
    %v10457 = vadd.f32 0.0, %v10456
    %v10458 = vpop.f32.mrb[0].mxu0
    %10459 = vmatprep.mubr.f32.mxu0 0.0
    %10460 = vmatmul.mubr.f32.gmra.mrb[0].mxu0 %v10356
    %v10461 = vpop.f32.mrb[0].mxu0
    %v10462 = vadd.f32 0.0, %v10461
    %v10463 = vpop.f32.mrb[0].mxu0
    %10464 = vmatprep.mubr.f32.mxu0 0.0
    %10465 = vmatmul.mubr.f32.gmra.mrb[0].mxu0 %v9899
    %v10466 = vpop.f32.mrb[0].mxu0
    %v10467 = vadd.f32 0.0, %v10466
    %v10468 = vpop.f32.mrb[0].mxu0
    %10469 = vmatprep.mubr.f32.mxu0 0.0
    %10470 = vmatmul.mubr.f32.gmra.mrb[0].mxu0 %v9901
    %v10471 = vpop.f32.mrb[0].mxu0
    %v10472 = vadd.f32 0.0, %v10471
    %v10473 = vpop.f32.mrb[0].mxu0
    %10474 = vmatprep.mubr.f32.mxu0 0.0
    %10475 = vmatmul.mubr.f32.gmra.mrb[0].mxu0 %v9903
    %v10476 = vpop.f32.mrb[0].mxu0
    %v10477 = vadd.f32 0.0, %v10476
    %v10478 = vpop.f32.mrb[0].mxu0
    %10479 = vmatprep.mubr.f32.mxu0 0.0
    %10480 = vmatmul.mubr.f32.gmra.mrb[0].mxu0 %v9905
    %v10481 = vpop.f32.mrb[0].mxu0
    %v10482 = vadd.f32 0.0, %v10481
    %v10483 = vpop.f32.mrb[0].mxu0
    %10484 = vmatprep.mubr.f32.mxu0 0.0
    %10485 = vmatmul.mubr.f32.gmra.mrb[0].mxu0 %v9907
    %v10486 = vpop.f32.mrb[0].mxu0
    %v10487 = vadd.f32 0.0, %v10486
    %v10488 = vpop.f32.mrb[0].mxu0
    %10489 = vmatprep.mubr.f32.mxu0 0.0
    %10490 = vmatmul.mubr.f32.gmra.mrb[0].mxu0 %v9909
    %v10491 = vpop.f32.mrb[0].mxu0
    %v10492 = vadd.f32 0.0, %v10491
    %v10493 = vpop.f32.mrb[0].mxu0
    %10494 = vmatprep.mubr.f32.mxu0 0.0
    %10495 = vmatmul.mubr.f32.gmra.mrb[0].mxu0 %v9911
    %v10496 = vpop.f32.mrb[0].mxu0
    %v10497 = vadd.f32 0.0, %v10496
    %v10498 = vpop.f32.mrb[0].mxu0
    %10499 = vmatprep.mubr.f32.mxu0 0.0
    %10500 = vmatmul.mubr.f32.gmra.mrb[0].mxu0 %v10358
    %v10501 = vpop.f32.mrb[0].mxu0
    %v10502 = vadd.f32 0.0, %v10501
    %v10503 = vpop.f32.mrb[0].mxu0
    %10504 = vdwg.mxu0
    %v10505 = vsel %vm4772, %v9345, 0
    %v10507 = vsel %vm4772, %v9365, 0
    %10509 = vmatprep.subr.mxu0 0.0
    %10510 = vmatpush1.msra.mxu0 %v8491
    %10511 = vmatprep.subr.mxu0 0.0
    %10512 = vmatpush1.msra.mxu0 0.0
    %10513 = vmatprep.subr.mxu0 0.0
    %10514 = vmatpush1.msra.mxu0 0.0
    %10515 = vmatprep.subr.mxu0 0.0
    %10516 = vmatpush1.msra.mxu0 0.0
    %10517 = vmatprep.subr.mxu0 0.0
    %10518 = vmatpush1.msra.mxu0 0.0
    %10519 = vmatprep.subr.mxu0 0.0
    %10520 = vmatpush1.msra.mxu0 0.0
    %10521 = vmatprep.subr.mxu0 0.0
    %10522 = vmatpush1.msra.mxu0 0.0
    %10523 = vmatprep.subr.mxu0 0.0
    %10524 = vmatpush1.msra.mxu0 0.0
    %10525 = vmatprep.subr.mxu0 0.0
    %10526 = vmatpush1.msra.mxu0 0.0
    %10527 = vmatprep.subr.mxu0 0.0
    %10528 = vmatpush1.msra.mxu0 0.0
    %10529 = vmatprep.subr.mxu0 0.0
    %10530 = vmatpush1.msra.mxu0 0.0
    %10531 = vmatprep.subr.mxu0 0.0
    %10532 = vmatpush1.msra.mxu0 0.0
    %10533 = vmatprep.subr.mxu0 0.0
    %10534 = vmatpush1.msra.mxu0 0.0
    %10535 = vmatprep.subr.mxu0 0.0
    %10536 = vmatpush1.msra.mxu0 0.0
    %10537 = vmatprep.subr.mxu0 0.0
    %10538 = vmatpush1.msra.mxu0 0.0
    %10539 = vmatprep.subr.mxu0 0.0
    %10540 = vmatpush1.msra.mxu0 0.0
    %10541 = vmatprep.subr.mxu0 0.0
    %10542 = vmatpush1.msra.mxu0 0.0
    %10543 = vmatprep.subr.mxu0 0.0
    %10544 = vmatpush1.msra.mxu0 0.0
    %10545 = vmatprep.subr.mxu0 0.0
    %10546 = vmatpush1.msra.mxu0 0.0
    %10547 = vmatprep.subr.mxu0 0.0
    %10548 = vmatpush1.msra.mxu0 0.0
    %10549 = vmatprep.subr.mxu0 0.0
    %10550 = vmatpush1.msra.mxu0 0.0
    %10551 = vmatprep.subr.mxu0 0.0
    %10552 = vmatpush1.msra.mxu0 0.0
    %10553 = vmatprep.subr.mxu0 0.0
    %10554 = vmatpush1.msra.mxu0 0.0
    %10555 = vmatprep.subr.mxu0 0.0
    %10556 = vmatpush1.msra.mxu0 0.0
    %10557 = vmatprep.subr.mxu0 0.0
    %10558 = vmatpush1.msra.mxu0 0.0
    %10559 = vmatprep.subr.mxu0 0.0
    %10560 = vmatpush1.msra.mxu0 0.0
    %10561 = vmatprep.subr.mxu0 0.0
    %10562 = vmatpush1.msra.mxu0 0.0
    %10563 = vmatprep.subr.mxu0 0.0
    %10564 = vmatpush1.msra.mxu0 0.0
    %10565 = vmatprep.subr.mxu0 0.0
    %10566 = vmatpush1.msra.mxu0 0.0
    %10567 = vmatprep.subr.mxu0 0.0
    %10568 = vmatpush1.msra.mxu0 0.0
    %10569 = vmatprep.subr.mxu0 0.0
    %10570 = vmatpush1.msra.mxu0 0.0
    %10571 = vmatprep.subr.mxu0 0.0
    %10572 = vmatpush1.msra.mxu0 0.0
    %10573 = vmatprep.mubr.f32.mxu0 0.0
    %10574 = vmatmul.mubr.f32.gmra.mrb[0].mxu0 %v9531
    %v10575 = vpop.f32.mrb[0].mxu0
    %v10576 = vadd.f32 0.0, %v10575
    %v10577 = vpop.f32.mrb[0].mxu0
    %10578 = vmatprep.mubr.f32.mxu0 0.0
    %10579 = vmatmul.mubr.f32.gmra.mrb[0].mxu0 %v9533
    %v10580 = vpop.f32.mrb[0].mxu0
    %v10581 = vadd.f32 0.0, %v10580
    %v10582 = vpop.f32.mrb[0].mxu0
    %10583 = vmatprep.mubr.f32.mxu0 0.0
    %10584 = vmatmul.mubr.f32.gmra.mrb[0].mxu0 %v9535
    %v10585 = vpop.f32.mrb[0].mxu0
    %v10586 = vadd.f32 0.0, %v10585
    %v10587 = vpop.f32.mrb[0].mxu0
    %10588 = vmatprep.mubr.f32.mxu0 0.0
    %10589 = vmatmul.mubr.f32.gmra.mrb[0].mxu0 %v9537
    %v10590 = vpop.f32.mrb[0].mxu0
    %v10591 = vadd.f32 0.0, %v10590
    %v10592 = vpop.f32.mrb[0].mxu0
    %10593 = vmatprep.mubr.f32.mxu0 0.0
    %10594 = vmatmul.mubr.f32.gmra.mrb[0].mxu0 %v9539
    %v10595 = vpop.f32.mrb[0].mxu0
    %v10596 = vadd.f32 0.0, %v10595
    %v10597 = vpop.f32.mrb[0].mxu0
    %10598 = vmatprep.mubr.f32.mxu0 0.0
    %10599 = vmatmul.mubr.f32.gmra.mrb[0].mxu0 %v9541
    %v10600 = vpop.f32.mrb[0].mxu0
    %v10601 = vadd.f32 0.0, %v10600
    %v10602 = vpop.f32.mrb[0].mxu0
    %10603 = vmatprep.mubr.f32.mxu0 0.0
    %10604 = vmatmul.mubr.f32.gmra.mrb[0].mxu0 %v10058
    %v10605 = vpop.f32.mrb[0].mxu0
    %v10606 = vadd.f32 0.0, %v10605
    %v10607 = vpop.f32.mrb[0].mxu0
    %10608 = vmatprep.mubr.f32.mxu0 0.0
    %10609 = vmatmul.mubr.f32.gmra.mrb[0].mxu0 %v10505
    %v10610 = vpop.f32.mrb[0].mxu0
    %v10611 = vadd.f32 0.0, %v10610
    %v10612 = vpop.f32.mrb[0].mxu0
    %10613 = vmatprep.mubr.f32.mxu0 0.0
    %10614 = vmatmul.mubr.f32.gmra.mrb[0].mxu0 %v9547
    %v10615 = vpop.f32.mrb[0].mxu0
    %v10616 = vadd.f32 0.0, %v10615
    %v10617 = vpop.f32.mrb[0].mxu0
    %10618 = vmatprep.mubr.f32.mxu0 0.0
    %10619 = vmatmul.mubr.f32.gmra.mrb[0].mxu0 %v9549
    %v10620 = vpop.f32.mrb[0].mxu0
    %v10621 = vadd.f32 0.0, %v10620
    %v10622 = vpop.f32.mrb[0].mxu0
    %10623 = vmatprep.mubr.f32.mxu0 0.0
    %10624 = vmatmul.mubr.f32.gmra.mrb[0].mxu0 %v9551
    %v10625 = vpop.f32.mrb[0].mxu0
    %v10626 = vadd.f32 0.0, %v10625
    %v10627 = vpop.f32.mrb[0].mxu0
    %10628 = vmatprep.mubr.f32.mxu0 0.0
    %10629 = vmatmul.mubr.f32.gmra.mrb[0].mxu0 %v9553
    %v10630 = vpop.f32.mrb[0].mxu0
    %v10631 = vadd.f32 0.0, %v10630
    %v10632 = vpop.f32.mrb[0].mxu0
    %10633 = vmatprep.mubr.f32.mxu0 0.0
    %10634 = vmatmul.mubr.f32.gmra.mrb[0].mxu0 %v9555
    %v10635 = vpop.f32.mrb[0].mxu0
    %v10636 = vadd.f32 0.0, %v10635
    %v10637 = vpop.f32.mrb[0].mxu0
    %10638 = vmatprep.mubr.f32.mxu0 0.0
    %10639 = vmatmul.mubr.f32.gmra.mrb[0].mxu0 %v9557
    %v10640 = vpop.f32.mrb[0].mxu0
    %v10641 = vadd.f32 0.0, %v10640
    %v10642 = vpop.f32.mrb[0].mxu0
    %10643 = vmatprep.mubr.f32.mxu0 0.0
    %10644 = vmatmul.mubr.f32.gmra.mrb[0].mxu0 %v10060
    %v10645 = vpop.f32.mrb[0].mxu0
    %v10646 = vadd.f32 0.0, %v10645
    %v10647 = vpop.f32.mrb[0].mxu0
    %10648 = vmatprep.mubr.f32.mxu0 0.0
    %10649 = vmatmul.mubr.f32.gmra.mrb[0].mxu0 %v10507
    %v10650 = vpop.f32.mrb[0].mxu0
    %v10651 = vadd.f32 0.0, %v10650
    %v10652 = vpop.f32.mrb[0].mxu0
    %10653 = vdwg.mxu0
    %v10654 = vsel %vm4772, %v9517, 0
    %v10656 = vsel %vm4772, %v9520, 0
    %10658 = vmatprep.subr.mxu0 0.0
    %10659 = vmatpush1.msra.mxu0 %v8492
    %10660 = vmatprep.subr.mxu0 0.0
    %10661 = vmatpush1.msra.mxu0 0.0
    %10662 = vmatprep.subr.mxu0 0.0
    %10663 = vmatpush1.msra.mxu0 0.0
    %10664 = vmatprep.subr.mxu0 0.0
    %10665 = vmatpush1.msra.mxu0 0.0
    %10666 = vmatprep.subr.mxu0 0.0
    %10667 = vmatpush1.msra.mxu0 0.0
    %10668 = vmatprep.subr.mxu0 0.0
    %10669 = vmatpush1.msra.mxu0 0.0
    %10670 = vmatprep.subr.mxu0 0.0
    %10671 = vmatpush1.msra.mxu0 0.0
    %10672 = vmatprep.subr.mxu0 0.0
    %10673 = vmatpush1.msra.mxu0 0.0
    %10674 = vmatprep.subr.mxu0 0.0
    %10675 = vmatpush1.msra.mxu0 0.0
    %10676 = vmatprep.subr.mxu0 0.0
    %10677 = vmatpush1.msra.mxu0 0.0
    %10678 = vmatprep.subr.mxu0 0.0
    %10679 = vmatpush1.msra.mxu0 0.0
    %10680 = vmatprep.subr.mxu0 0.0
    %10681 = vmatpush1.msra.mxu0 0.0
    %10682 = vmatprep.subr.mxu0 0.0
    %10683 = vmatpush1.msra.mxu0 0.0
    %10684 = vmatprep.subr.mxu0 0.0
    %10685 = vmatpush1.msra.mxu0 0.0
    %10686 = vmatprep.subr.mxu0 0.0
    %10687 = vmatpush1.msra.mxu0 0.0
    %10688 = vmatprep.subr.mxu0 0.0
    %10689 = vmatpush1.msra.mxu0 0.0
    %10690 = vmatprep.subr.mxu0 0.0
    %10691 = vmatpush1.msra.mxu0 0.0
    %10692 = vmatprep.subr.mxu0 0.0
    %10693 = vmatpush1.msra.mxu0 0.0
    %10694 = vmatprep.subr.mxu0 0.0
    %10695 = vmatpush1.msra.mxu0 0.0
    %10696 = vmatprep.subr.mxu0 0.0
    %10697 = vmatpush1.msra.mxu0 0.0
    %10698 = vmatprep.subr.mxu0 0.0
    %10699 = vmatpush1.msra.mxu0 0.0
    %10700 = vmatprep.subr.mxu0 0.0
    %10701 = vmatpush1.msra.mxu0 0.0
    %10702 = vmatprep.subr.mxu0 0.0
    %10703 = vmatpush1.msra.mxu0 0.0
    %10704 = vmatprep.subr.mxu0 0.0
    %10705 = vmatpush1.msra.mxu0 0.0
    %10706 = vmatprep.subr.mxu0 0.0
    %10707 = vmatpush1.msra.mxu0 0.0
    %10708 = vmatprep.subr.mxu0 0.0
    %10709 = vmatpush1.msra.mxu0 0.0
    %10710 = vmatprep.subr.mxu0 0.0
    %10711 = vmatpush1.msra.mxu0 0.0
    %10712 = vmatprep.subr.mxu0 0.0
    %10713 = vmatpush1.msra.mxu0 0.0
    %10714 = vmatprep.subr.mxu0 0.0
    %10715 = vmatpush1.msra.mxu0 0.0
    %10716 = vmatprep.subr.mxu0 0.0
    %10717 = vmatpush1.msra.mxu0 0.0
    %10718 = vmatprep.subr.mxu0 0.0
    %10719 = vmatpush1.msra.mxu0 0.0
    %10720 = vmatprep.subr.mxu0 0.0
    %10721 = vmatpush1.msra.mxu0 0.0
    %10722 = vmatprep.mubr.f32.mxu0 0.0
    %10723 = vmatmul.mubr.f32.gmra.mrb[0].mxu0 %v9708
    %v10724 = vpop.f32.mrb[0].mxu0
    %v10725 = vadd.f32 0.0, %v10724
    %v10726 = vpop.f32.mrb[0].mxu0
    %10727 = vmatprep.mubr.f32.mxu0 0.0
    %10728 = vmatmul.mubr.f32.gmra.mrb[0].mxu0 %v9710
    %v10729 = vpop.f32.mrb[0].mxu0
    %v10730 = vadd.f32 0.0, %v10729
    %v10731 = vpop.f32.mrb[0].mxu0
    %10732 = vmatprep.mubr.f32.mxu0 0.0
    %10733 = vmatmul.mubr.f32.gmra.mrb[0].mxu0 %v9712
    %v10734 = vpop.f32.mrb[0].mxu0
    %v10735 = vadd.f32 0.0, %v10734
    %v10736 = vpop.f32.mrb[0].mxu0
    %10737 = vmatprep.mubr.f32.mxu0 0.0
    %10738 = vmatmul.mubr.f32.gmra.mrb[0].mxu0 %v9714
    %v10739 = vpop.f32.mrb[0].mxu0
    %v10740 = vadd.f32 0.0, %v10739
    %v10741 = vpop.f32.mrb[0].mxu0
    %10742 = vmatprep.mubr.f32.mxu0 0.0
    %10743 = vmatmul.mubr.f32.gmra.mrb[0].mxu0 %v9716
    %v10744 = vpop.f32.mrb[0].mxu0
    %v10745 = vadd.f32 0.0, %v10744
    %v10746 = vpop.f32.mrb[0].mxu0
    %10747 = vmatprep.mubr.f32.mxu0 0.0
    %10748 = vmatmul.mubr.f32.gmra.mrb[0].mxu0 %v9718
    %v10749 = vpop.f32.mrb[0].mxu0
    %v10750 = vadd.f32 0.0, %v10749
    %v10751 = vpop.f32.mrb[0].mxu0
    %10752 = vmatprep.mubr.f32.mxu0 0.0
    %10753 = vmatmul.mubr.f32.gmra.mrb[0].mxu0 %v10207
    %v10754 = vpop.f32.mrb[0].mxu0
    %v10755 = vadd.f32 0.0, %v10754
    %v10756 = vpop.f32.mrb[0].mxu0
    %10757 = vmatprep.mubr.f32.mxu0 0.0
    %10758 = vmatmul.mubr.f32.gmra.mrb[0].mxu0 %v10654
    %v10759 = vpop.f32.mrb[0].mxu0
    %v10760 = vadd.f32 0.0, %v10759
    %v10761 = vpop.f32.mrb[0].mxu0
    %10762 = vmatprep.mubr.f32.mxu0 0.0
    %10763 = vmatmul.mubr.f32.gmra.mrb[0].mxu0 %v9724
    %v10764 = vpop.f32.mrb[0].mxu0
    %v10765 = vadd.f32 0.0, %v10764
    %v10766 = vpop.f32.mrb[0].mxu0
    %10767 = vmatprep.mubr.f32.mxu0 0.0
    %10768 = vmatmul.mubr.f32.gmra.mrb[0].mxu0 %v9726
    %v10769 = vpop.f32.mrb[0].mxu0
    %v10770 = vadd.f32 0.0, %v10769
    %v10771 = vpop.f32.mrb[0].mxu0
    %10772 = vmatprep.mubr.f32.mxu0 0.0
    %10773 = vmatmul.mubr.f32.gmra.mrb[0].mxu0 %v9728
    %v10774 = vpop.f32.mrb[0].mxu0
    %v10775 = vadd.f32 0.0, %v10774
    %v10776 = vpop.f32.mrb[0].mxu0
    %10777 = vmatprep.mubr.f32.mxu0 0.0
    %10778 = vmatmul.mubr.f32.gmra.mrb[0].mxu0 %v9730
    %v10779 = vpop.f32.mrb[0].mxu0
    %v10780 = vadd.f32 0.0, %v10779
    %v10781 = vpop.f32.mrb[0].mxu0
    %10782 = vmatprep.mubr.f32.mxu0 0.0
    %10783 = vmatmul.mubr.f32.gmra.mrb[0].mxu0 %v9732
    %v10784 = vpop.f32.mrb[0].mxu0
    %v10785 = vadd.f32 0.0, %v10784
    %v10786 = vpop.f32.mrb[0].mxu0
    %10787 = vmatprep.mubr.f32.mxu0 0.0
    %10788 = vmatmul.mubr.f32.gmra.mrb[0].mxu0 %v9734
    %v10789 = vpop.f32.mrb[0].mxu0
    %v10790 = vadd.f32 0.0, %v10789
    %v10791 = vpop.f32.mrb[0].mxu0
    %10792 = vmatprep.mubr.f32.mxu0 0.0
    %10793 = vmatmul.mubr.f32.gmra.mrb[0].mxu0 %v10209
    %v10794 = vpop.f32.mrb[0].mxu0
    %v10795 = vadd.f32 0.0, %v10794
    %v10796 = vpop.f32.mrb[0].mxu0
    %10797 = vmatprep.mubr.f32.mxu0 0.0
    %10798 = vmatmul.mubr.f32.gmra.mrb[0].mxu0 %v10656
    %v10799 = vpop.f32.mrb[0].mxu0
    %v10800 = vadd.f32 0.0, %v10799
    %v10801 = vpop.f32.mrb[0].mxu0
    %10802 = vdwg.mxu0
    %v10803 = vsel %vm4772, %v9523, 0
    %v10805 = vsel %vm4772, %v9526, 0
    %10807 = vmatprep.subr.mxu0 0.0
    %10808 = vmatpush1.msra.mxu0 %v8493
    %10809 = vmatprep.subr.mxu0 0.0
    %10810 = vmatpush1.msra.mxu0 0.0
    %10811 = vmatprep.subr.mxu0 0.0
    %10812 = vmatpush1.msra.mxu0 0.0
    %10813 = vmatprep.subr.mxu0 0.0
    %10814 = vmatpush1.msra.mxu0 0.0
    %10815 = vmatprep.subr.mxu0 0.0
    %10816 = vmatpush1.msra.mxu0 0.0
    %10817 = vmatprep.subr.mxu0 0.0
    %10818 = vmatpush1.msra.mxu0 0.0
    %10819 = vmatprep.subr.mxu0 0.0
    %10820 = vmatpush1.msra.mxu0 0.0
    %10821 = vmatprep.subr.mxu0 0.0
    %10822 = vmatpush1.msra.mxu0 0.0
    %10823 = vmatprep.subr.mxu0 0.0
    %10824 = vmatpush1.msra.mxu0 0.0
    %10825 = vmatprep.subr.mxu0 0.0
    %10826 = vmatpush1.msra.mxu0 0.0
    %10827 = vmatprep.subr.mxu0 0.0
    %10828 = vmatpush1.msra.mxu0 0.0
    %10829 = vmatprep.subr.mxu0 0.0
    %10830 = vmatpush1.msra.mxu0 0.0
    %10831 = vmatprep.subr.mxu0 0.0
    %10832 = vmatpush1.msra.mxu0 0.0
    %10833 = vmatprep.subr.mxu0 0.0
    %10834 = vmatpush1.msra.mxu0 0.0
    %10835 = vmatprep.subr.mxu0 0.0
    %10836 = vmatpush1.msra.mxu0 0.0
    %10837 = vmatprep.subr.mxu0 0.0
    %10838 = vmatpush1.msra.mxu0 0.0
    %10839 = vmatprep.subr.mxu0 0.0
    %10840 = vmatpush1.msra.mxu0 0.0
    %10841 = vmatprep.subr.mxu0 0.0
    %10842 = vmatpush1.msra.mxu0 0.0
    %10843 = vmatprep.subr.mxu0 0.0
    %10844 = vmatpush1.msra.mxu0 0.0
    %10845 = vmatprep.subr.mxu0 0.0
    %10846 = vmatpush1.msra.mxu0 0.0
    %10847 = vmatprep.subr.mxu0 0.0
    %10848 = vmatpush1.msra.mxu0 0.0
    %10849 = vmatprep.subr.mxu0 0.0
    %10850 = vmatpush1.msra.mxu0 0.0
    %10851 = vmatprep.subr.mxu0 0.0
    %10852 = vmatpush1.msra.mxu0 0.0
    %10853 = vmatprep.subr.mxu0 0.0
    %10854 = vmatpush1.msra.mxu0 0.0
    %10855 = vmatprep.subr.mxu0 0.0
    %10856 = vmatpush1.msra.mxu0 0.0
    %10857 = vmatprep.subr.mxu0 0.0
    %10858 = vmatpush1.msra.mxu0 0.0
    %10859 = vmatprep.subr.mxu0 0.0
    %10860 = vmatpush1.msra.mxu0 0.0
    %10861 = vmatprep.subr.mxu0 0.0
    %10862 = vmatpush1.msra.mxu0 0.0
    %10863 = vmatprep.subr.mxu0 0.0
    %10864 = vmatpush1.msra.mxu0 0.0
    %10865 = vmatprep.subr.mxu0 0.0
    %10866 = vmatpush1.msra.mxu0 0.0
    %10867 = vmatprep.subr.mxu0 0.0
    %10868 = vmatpush1.msra.mxu0 0.0
    %10869 = vmatprep.subr.mxu0 0.0
    %10870 = vmatpush1.msra.mxu0 0.0
    %10871 = vmatprep.mubr.f32.mxu0 0.0
    %10872 = vmatmul.mubr.f32.gmra.mrb[0].mxu0 %v9885
    %v10873 = vpop.f32.mrb[0].mxu0
    %v10874 = vadd.f32 0.0, %v10873
    %v10875 = vpop.f32.mrb[0].mxu0
    %10876 = vmatprep.mubr.f32.mxu0 0.0
    %10877 = vmatmul.mubr.f32.gmra.mrb[0].mxu0 %v9887
    %v10878 = vpop.f32.mrb[0].mxu0
    %v10879 = vadd.f32 0.0, %v10878
    %v10880 = vpop.f32.mrb[0].mxu0
    %10881 = vmatprep.mubr.f32.mxu0 0.0
    %10882 = vmatmul.mubr.f32.gmra.mrb[0].mxu0 %v9889
    %v10883 = vpop.f32.mrb[0].mxu0
    %v10884 = vadd.f32 0.0, %v10883
    %v10885 = vpop.f32.mrb[0].mxu0
    %10886 = vmatprep.mubr.f32.mxu0 0.0
    %10887 = vmatmul.mubr.f32.gmra.mrb[0].mxu0 %v9891
    %v10888 = vpop.f32.mrb[0].mxu0
    %v10889 = vadd.f32 0.0, %v10888
    %v10890 = vpop.f32.mrb[0].mxu0
    %10891 = vmatprep.mubr.f32.mxu0 0.0
    %10892 = vmatmul.mubr.f32.gmra.mrb[0].mxu0 %v9893
    %v10893 = vpop.f32.mrb[0].mxu0
    %v10894 = vadd.f32 0.0, %v10893
    %v10895 = vpop.f32.mrb[0].mxu0
    %10896 = vmatprep.mubr.f32.mxu0 0.0
    %10897 = vmatmul.mubr.f32.gmra.mrb[0].mxu0 %v9895
    %v10898 = vpop.f32.mrb[0].mxu0
    %v10899 = vadd.f32 0.0, %v10898
    %v10900 = vpop.f32.mrb[0].mxu0
    %10901 = vmatprep.mubr.f32.mxu0 0.0
    %10902 = vmatmul.mubr.f32.gmra.mrb[0].mxu0 %v10356
    %v10903 = vpop.f32.mrb[0].mxu0
    %v10904 = vadd.f32 0.0, %v10903
    %v10905 = vpop.f32.mrb[0].mxu0
    %10906 = vmatprep.mubr.f32.mxu0 0.0
    %10907 = vmatmul.mubr.f32.gmra.mrb[0].mxu0 %v10803
    %v10908 = vpop.f32.mrb[0].mxu0
    %v10909 = vadd.f32 0.0, %v10908
    %v10910 = vpop.f32.mrb[0].mxu0
    %10911 = vmatprep.mubr.f32.mxu0 0.0
    %10912 = vmatmul.mubr.f32.gmra.mrb[0].mxu0 %v9901
    %v10913 = vpop.f32.mrb[0].mxu0
    %v10914 = vadd.f32 0.0, %v10913
    %v10915 = vpop.f32.mrb[0].mxu0
    %10916 = vmatprep.mubr.f32.mxu0 0.0
    %10917 = vmatmul.mubr.f32.gmra.mrb[0].mxu0 %v9903
    %v10918 = vpop.f32.mrb[0].mxu0
    %v10919 = vadd.f32 0.0, %v10918
    %v10920 = vpop.f32.mrb[0].mxu0
    %10921 = vmatprep.mubr.f32.mxu0 0.0
    %10922 = vmatmul.mubr.f32.gmra.mrb[0].mxu0 %v9905
    %v10923 = vpop.f32.mrb[0].mxu0
    %v10924 = vadd.f32 0.0, %v10923
    %v10925 = vpop.f32.mrb[0].mxu0
    %10926 = vmatprep.mubr.f32.mxu0 0.0
    %10927 = vmatmul.mubr.f32.gmra.mrb[0].mxu0 %v9907
    %v10928 = vpop.f32.mrb[0].mxu0
    %v10929 = vadd.f32 0.0, %v10928
    %v10930 = vpop.f32.mrb[0].mxu0
    %10931 = vmatprep.mubr.f32.mxu0 0.0
    %10932 = vmatmul.mubr.f32.gmra.mrb[0].mxu0 %v9909
    %v10933 = vpop.f32.mrb[0].mxu0
    %v10934 = vadd.f32 0.0, %v10933
    %v10935 = vpop.f32.mrb[0].mxu0
    %10936 = vmatprep.mubr.f32.mxu0 0.0
    %10937 = vmatmul.mubr.f32.gmra.mrb[0].mxu0 %v9911
    %v10938 = vpop.f32.mrb[0].mxu0
    %v10939 = vadd.f32 0.0, %v10938
    %v10940 = vpop.f32.mrb[0].mxu0
    %10941 = vmatprep.mubr.f32.mxu0 0.0
    %10942 = vmatmul.mubr.f32.gmra.mrb[0].mxu0 %v10358
    %v10943 = vpop.f32.mrb[0].mxu0
    %v10944 = vadd.f32 0.0, %v10943
    %v10945 = vpop.f32.mrb[0].mxu0
    %10946 = vmatprep.mubr.f32.mxu0 0.0
    %10947 = vmatmul.mubr.f32.gmra.mrb[0].mxu0 %v10805
    %v10948 = vpop.f32.mrb[0].mxu0
    %v10949 = vadd.f32 0.0, %v10948
    %v10950 = vpop.f32.mrb[0].mxu0
    %10951 = vdwg.mxu0
    %vm10952 = vcmask 130048
    %v10953 = vsel %vm10952, %v9626, 0.0
    %v10954 = vsel %vm10952, %v9803, 0.0
    %v10955 = vadd.f32 %v10953, %v10954
    %v10956 = vsel %vm10952, %v9980, 0.0
    %v10957 = vadd.f32 %v10955, %v10956
    %v10958 = vsel %vm10952, %v10129, 0.0
    %v10959 = vadd.f32 %v10957, %v10958
    %v10960 = vsel %vm10952, %v10278, 0.0
    %v10961 = vadd.f32 %v10959, %v10960
    %v10962 = vsel %vm10952, %v10427, 0.0
    %v10963 = vadd.f32 %v10961, %v10962
    %v10964 = vsel %vm10952, %v10576, 0.0
    %v10965 = vadd.f32 %v10963, %v10964
    %v10966 = vsel %vm10952, %v10725, 0.0
    %v10967 = vadd.f32 %v10965, %v10966
    %v10968 = vsel %vm10952, %v10874, 0.0
    %v10969 = vadd.f32 %v10967, %v10968
    %v10970 = vsel %vm10952, %v9631, 0.0
    %v10971 = vsel %vm10952, %v9808, 0.0
    %v10972 = vadd.f32 %v10970, %v10971
    %v10973 = vsel %vm10952, %v9985, 0.0
    %v10974 = vadd.f32 %v10972, %v10973
    %v10975 = vsel %vm10952, %v10134, 0.0
    %v10976 = vadd.f32 %v10974, %v10975
    %v10977 = vsel %vm10952, %v10283, 0.0
    %v10978 = vadd.f32 %v10976, %v10977
    %v10979 = vsel %vm10952, %v10432, 0.0
    %v10980 = vadd.f32 %v10978, %v10979
    %v10981 = vsel %vm10952, %v10581, 0.0
    %v10982 = vadd.f32 %v10980, %v10981
    %v10983 = vsel %vm10952, %v10730, 0.0
    %v10984 = vadd.f32 %v10982, %v10983
    %v10985 = vsel %vm10952, %v10879, 0.0
    %v10986 = vadd.f32 %v10984, %v10985
    %v10987 = vsel %vm10952, %v9636, 0.0
    %v10988 = vsel %vm10952, %v9813, 0.0
    %v10989 = vadd.f32 %v10987, %v10988
    %v10990 = vsel %vm10952, %v9990, 0.0
    %v10991 = vadd.f32 %v10989, %v10990
    %v10992 = vsel %vm10952, %v10139, 0.0
    %v10993 = vadd.f32 %v10991, %v10992
    %v10994 = vsel %vm10952, %v10288, 0.0
    %v10995 = vadd.f32 %v10993, %v10994
    %v10996 = vsel %vm10952, %v10437, 0.0
    %v10997 = vadd.f32 %v10995, %v10996
    %v10998 = vsel %vm10952, %v10586, 0.0
    %v10999 = vadd.f32 %v10997, %v10998
    %v11000 = vsel %vm10952, %v10735, 0.0
    %v11001 = vadd.f32 %v10999, %v11000
    %v11002 = vsel %vm10952, %v10884, 0.0
    %v11003 = vadd.f32 %v11001, %v11002
    %v11004 = vsel %vm10952, %v9641, 0.0
    %v11005 = vsel %vm10952, %v9818, 0.0
    %v11006 = vadd.f32 %v11004, %v11005
    %v11007 = vsel %vm10952, %v9995, 0.0
    %v11008 = vadd.f32 %v11006, %v11007
    %v11009 = vsel %vm10952, %v10144, 0.0
    %v11010 = vadd.f32 %v11008, %v11009
    %v11011 = vsel %vm10952, %v10293, 0.0
    %v11012 = vadd.f32 %v11010, %v11011
    %v11013 = vsel %vm10952, %v10442, 0.0
    %v11014 = vadd.f32 %v11012, %v11013
    %v11015 = vsel %vm10952, %v10591, 0.0
    %v11016 = vadd.f32 %v11014, %v11015
    %v11017 = vsel %vm10952, %v10740, 0.0
    %v11018 = vadd.f32 %v11016, %v11017
    %v11019 = vsel %vm10952, %v10889, 0.0
    %v11020 = vadd.f32 %v11018, %v11019
    %v11021 = vsel %vm10952, %v9646, 0.0
    %v11022 = vsel %vm10952, %v9823, 0.0
    %v11023 = vadd.f32 %v11021, %v11022
    %v11024 = vsel %vm10952, %v10000, 0.0
    %v11025 = vadd.f32 %v11023, %v11024
    %v11026 = vsel %vm10952, %v10149, 0.0
    %v11027 = vadd.f32 %v11025, %v11026
    %v11028 = vsel %vm10952, %v10298, 0.0
    %v11029 = vadd.f32 %v11027, %v11028
    %v11030 = vsel %vm10952, %v10447, 0.0
    %v11031 = vadd.f32 %v11029, %v11030
    %v11032 = vsel %vm10952, %v10596, 0.0
    %v11033 = vadd.f32 %v11031, %v11032
    %v11034 = vsel %vm10952, %v10745, 0.0
    %v11035 = vadd.f32 %v11033, %v11034
    %v11036 = vsel %vm10952, %v10894, 0.0
    %v11037 = vadd.f32 %v11035, %v11036
    %v11038 = vsel %vm10952, %v9651, 0.0
    %v11039 = vsel %vm10952, %v9828, 0.0
    %v11040 = vadd.f32 %v11038, %v11039
    %v11041 = vsel %vm10952, %v10005, 0.0
    %v11042 = vadd.f32 %v11040, %v11041
    %v11043 = vsel %vm10952, %v10154, 0.0
    %v11044 = vadd.f32 %v11042, %v11043
    %v11045 = vsel %vm10952, %v10303, 0.0
    %v11046 = vadd.f32 %v11044, %v11045
    %v11047 = vsel %vm10952, %v10452, 0.0
    %v11048 = vadd.f32 %v11046, %v11047
    %v11049 = vsel %vm10952, %v10601, 0.0
    %v11050 = vadd.f32 %v11048, %v11049
    %v11051 = vsel %vm10952, %v10750, 0.0
    %v11052 = vadd.f32 %v11050, %v11051
    %v11053 = vsel %vm10952, %v10899, 0.0
    %v11054 = vadd.f32 %v11052, %v11053
    %v11055 = vsel %vm10952, %v9656, 0.0
    %v11056 = vsel %vm10952, %v9833, 0.0
    %v11057 = vadd.f32 %v11055, %v11056
    %v11058 = vsel %vm10952, %v10010, 0.0
    %v11059 = vadd.f32 %v11057, %v11058
    %v11060 = vsel %vm10952, %v10159, 0.0
    %v11061 = vadd.f32 %v11059, %v11060
    %v11062 = vsel %vm10952, %v10308, 0.0
    %v11063 = vadd.f32 %v11061, %v11062
    %v11064 = vsel %vm10952, %v10457, 0.0
    %v11065 = vadd.f32 %v11063, %v11064
    %v11066 = vsel %vm10952, %v10606, 0.0
    %v11067 = vadd.f32 %v11065, %v11066
    %v11068 = vsel %vm10952, %v10755, 0.0
    %v11069 = vadd.f32 %v11067, %v11068
    %v11070 = vsel %vm10952, %v10904, 0.0
    %v11071 = vadd.f32 %v11069, %v11070
    %v11072 = vsel %vm10952, %v9661, 0.0
    %v11073 = vsel %vm10952, %v9838, 0.0
    %v11074 = vadd.f32 %v11072, %v11073
    %v11075 = vsel %vm10952, %v10015, 0.0
    %v11076 = vadd.f32 %v11074, %v11075
    %v11077 = vsel %vm10952, %v10164, 0.0
    %v11078 = vadd.f32 %v11076, %v11077
    %v11079 = vsel %vm10952, %v10313, 0.0
    %v11080 = vadd.f32 %v11078, %v11079
    %v11081 = vsel %vm10952, %v10462, 0.0
    %v11082 = vadd.f32 %v11080, %v11081
    %v11083 = vsel %vm10952, %v10611, 0.0
    %v11084 = vadd.f32 %v11082, %v11083
    %v11085 = vsel %vm10952, %v10760, 0.0
    %v11086 = vadd.f32 %v11084, %v11085
    %v11087 = vsel %vm10952, %v10909, 0.0
    %v11088 = vadd.f32 %v11086, %v11087
    %v11089 = vsel %vm10952, %v9666, 0.0
    %v11090 = vsel %vm10952, %v9843, 0.0
    %v11091 = vadd.f32 %v11089, %v11090
    %v11092 = vsel %vm10952, %v10020, 0.0
    %v11093 = vadd.f32 %v11091, %v11092
    %v11094 = vsel %vm10952, %v10169, 0.0
    %v11095 = vadd.f32 %v11093, %v11094
    %v11096 = vsel %vm10952, %v10318, 0.0
    %v11097 = vadd.f32 %v11095, %v11096
    %v11098 = vsel %vm10952, %v10467, 0.0
    %v11099 = vadd.f32 %v11097, %v11098
    %v11100 = vsel %vm10952, %v10616, 0.0
    %v11101 = vadd.f32 %v11099, %v11100
    %v11102 = vsel %vm10952, %v10765, 0.0
    %v11103 = vadd.f32 %v11101, %v11102
    %v11104 = vsel %vm10952, %v10914, 0.0
    %v11105 = vadd.f32 %v11103, %v11104
    %v11106 = vsel %vm10952, %v9671, 0.0
    %v11107 = vsel %vm10952, %v9848, 0.0
    %v11108 = vadd.f32 %v11106, %v11107
    %v11109 = vsel %vm10952, %v10025, 0.0
    %v11110 = vadd.f32 %v11108, %v11109
    %v11111 = vsel %vm10952, %v10174, 0.0
    %v11112 = vadd.f32 %v11110, %v11111
    %v11113 = vsel %vm10952, %v10323, 0.0
    %v11114 = vadd.f32 %v11112, %v11113
    %v11115 = vsel %vm10952, %v10472, 0.0
    %v11116 = vadd.f32 %v11114, %v11115
    %v11117 = vsel %vm10952, %v10621, 0.0
    %v11118 = vadd.f32 %v11116, %v11117
    %v11119 = vsel %vm10952, %v10770, 0.0
    %v11120 = vadd.f32 %v11118, %v11119
    %v11121 = vsel %vm10952, %v10919, 0.0
    %v11122 = vadd.f32 %v11120, %v11121
    %v11123 = vsel %vm10952, %v9676, 0.0
    %v11124 = vsel %vm10952, %v9853, 0.0
    %v11125 = vadd.f32 %v11123, %v11124
    %v11126 = vsel %vm10952, %v10030, 0.0
    %v11127 = vadd.f32 %v11125, %v11126
    %v11128 = vsel %vm10952, %v10179, 0.0
    %v11129 = vadd.f32 %v11127, %v11128
    %v11130 = vsel %vm10952, %v10328, 0.0
    %v11131 = vadd.f32 %v11129, %v11130
    %v11132 = vsel %vm10952, %v10477, 0.0
    %v11133 = vadd.f32 %v11131, %v11132
    %v11134 = vsel %vm10952, %v10626, 0.0
    %v11135 = vadd.f32 %v11133, %v11134
    %v11136 = vsel %vm10952, %v10775, 0.0
    %v11137 = vadd.f32 %v11135, %v11136
    %v11138 = vsel %vm10952, %v10924, 0.0
    %v11139 = vadd.f32 %v11137, %v11138
    %v11140 = vsel %vm10952, %v9681, 0.0
    %v11141 = vsel %vm10952, %v9858, 0.0
    %v11142 = vadd.f32 %v11140, %v11141
    %v11143 = vsel %vm10952, %v10035, 0.0
    %v11144 = vadd.f32 %v11142, %v11143
    %v11145 = vsel %vm10952, %v10184, 0.0
    %v11146 = vadd.f32 %v11144, %v11145
    %v11147 = vsel %vm10952, %v10333, 0.0
    %v11148 = vadd.f32 %v11146, %v11147
    %v11149 = vsel %vm10952, %v10482, 0.0
    %v11150 = vadd.f32 %v11148, %v11149
    %v11151 = vsel %vm10952, %v10631, 0.0
    %v11152 = vadd.f32 %v11150, %v11151
    %v11153 = vsel %vm10952, %v10780, 0.0
    %v11154 = vadd.f32 %v11152, %v11153
    %v11155 = vsel %vm10952, %v10929, 0.0
    %v11156 = vadd.f32 %v11154, %v11155
    %v11157 = vsel %vm10952, %v9686, 0.0
    %v11158 = vsel %vm10952, %v9863, 0.0
    %v11159 = vadd.f32 %v11157, %v11158
    %v11160 = vsel %vm10952, %v10040, 0.0
    %v11161 = vadd.f32 %v11159, %v11160
    %v11162 = vsel %vm10952, %v10189, 0.0
    %v11163 = vadd.f32 %v11161, %v11162
    %v11164 = vsel %vm10952, %v10338, 0.0
    %v11165 = vadd.f32 %v11163, %v11164
    %v11166 = vsel %vm10952, %v10487, 0.0
    %v11167 = vadd.f32 %v11165, %v11166
    %v11168 = vsel %vm10952, %v10636, 0.0
    %v11169 = vadd.f32 %v11167, %v11168
    %v11170 = vsel %vm10952, %v10785, 0.0
    %v11171 = vadd.f32 %v11169, %v11170
    %v11172 = vsel %vm10952, %v10934, 0.0
    %v11173 = vadd.f32 %v11171, %v11172
    %v11174 = vsel %vm10952, %v9691, 0.0
    %v11175 = vsel %vm10952, %v9868, 0.0
    %v11176 = vadd.f32 %v11174, %v11175
    %v11177 = vsel %vm10952, %v10045, 0.0
    %v11178 = vadd.f32 %v11176, %v11177
    %v11179 = vsel %vm10952, %v10194, 0.0
    %v11180 = vadd.f32 %v11178, %v11179
    %v11181 = vsel %vm10952, %v10343, 0.0
    %v11182 = vadd.f32 %v11180, %v11181
    %v11183 = vsel %vm10952, %v10492, 0.0
    %v11184 = vadd.f32 %v11182, %v11183
    %v11185 = vsel %vm10952, %v10641, 0.0
    %v11186 = vadd.f32 %v11184, %v11185
    %v11187 = vsel %vm10952, %v10790, 0.0
    %v11188 = vadd.f32 %v11186, %v11187
    %v11189 = vsel %vm10952, %v10939, 0.0
    %v11190 = vadd.f32 %v11188, %v11189
    %v11191 = vsel %vm10952, %v9696, 0.0
    %v11192 = vsel %vm10952, %v9873, 0.0
    %v11193 = vadd.f32 %v11191, %v11192
    %v11194 = vsel %vm10952, %v10050, 0.0
    %v11195 = vadd.f32 %v11193, %v11194
    %v11196 = vsel %vm10952, %v10199, 0.0
    %v11197 = vadd.f32 %v11195, %v11196
    %v11198 = vsel %vm10952, %v10348, 0.0
    %v11199 = vadd.f32 %v11197, %v11198
    %v11200 = vsel %vm10952, %v10497, 0.0
    %v11201 = vadd.f32 %v11199, %v11200
    %v11202 = vsel %vm10952, %v10646, 0.0
    %v11203 = vadd.f32 %v11201, %v11202
    %v11204 = vsel %vm10952, %v10795, 0.0
    %v11205 = vadd.f32 %v11203, %v11204
    %v11206 = vsel %vm10952, %v10944, 0.0
    %v11207 = vadd.f32 %v11205, %v11206
    %v11208 = vsel %vm10952, %v9701, 0.0
    %v11209 = vsel %vm10952, %v9878, 0.0
    %v11210 = vadd.f32 %v11208, %v11209
    %v11211 = vsel %vm10952, %v10055, 0.0
    %v11212 = vadd.f32 %v11210, %v11211
    %v11213 = vsel %vm10952, %v10204, 0.0
    %v11214 = vadd.f32 %v11212, %v11213
    %v11215 = vsel %vm10952, %v10353, 0.0
    %v11216 = vadd.f32 %v11214, %v11215
    %v11217 = vsel %vm10952, %v10502, 0.0
    %v11218 = vadd.f32 %v11216, %v11217
    %v11219 = vsel %vm10952, %v10651, 0.0
    %v11220 = vadd.f32 %v11218, %v11219
    %v11221 = vsel %vm10952, %v10800, 0.0
    %v11222 = vadd.f32 %v11220, %v11221
    %v11223 = vsel %vm10952, %v10949, 0.0
    %v11224 = vadd.f32 %v11222, %v11223
    %v11225 = vmax.f32 %v10969, 0.0
    %v11226 = vmax.f32 %v10986, 0.0
    %v11227 = vmax.f32 %v11003, 0.0
    %v11228 = vmax.f32 %v11020, 0.0
    %v11229 = vmax.f32 %v11037, 0.0
    %v11230 = vmax.f32 %v11054, 0.0
    %v11231 = vmax.f32 %v11071, 0.0
    %v11232 = vmax.f32 %v11088, 0.0
    %v11233 = vmax.f32 %v11105, 0.0
    %v11234 = vmax.f32 %v11122, 0.0
    %v11235 = vmax.f32 %v11139, 0.0
    %v11236 = vmax.f32 %v11156, 0.0
    %v11237 = vmax.f32 %v11173, 0.0
    %v11238 = vmax.f32 %v11190, 0.0
    %v11239 = vmax.f32 %v11207, 0.0
    %v11240 = vmax.f32 %v11224, 0.0
    %v11257 = vcombine.high %v11225, %v11225
    %v11259 = vunpack.c.l.s4 1983009808
    %v11260 = vunpack.c.0.s8 %v11259
    %v11261 = vlaneseq
    %v11262 = vshrl.u32 %v11261, 7
    %v11263 = vsub.s32 %v11260, %v11262
    %v11264 = vrot.slane %v11225, %v11263
    %v11266 = vunpack.c.l.s4 1983009808
    %v11267 = vunpack.c.0.s8 %v11266
    %v11268 = vlaneseq
    %v11269 = vshrl.u32 %v11268, 7
    %v11270 = vsub.s32 %v11267, %v11269
    %v11271 = vrot.slane %v11257, %v11270
    %v11272 = vcombine.high %v11264, %v11264
    %v11273 = vcombine.high %v11271, %v11271
    %v11274 = vcombine.high %v11226, %v11226
    %v11276 = vunpack.c.l.s4 1983009808
    %v11277 = vunpack.c.0.s8 %v11276
    %v11278 = vlaneseq
    %v11279 = vshrl.u32 %v11278, 7
    %v11280 = vsub.s32 %v11277, %v11279
    %v11281 = vrot.slane %v11226, %v11280
    %v11283 = vunpack.c.l.s4 1983009808
    %v11284 = vunpack.c.0.s8 %v11283
    %v11285 = vlaneseq
    %v11286 = vshrl.u32 %v11285, 7
    %v11287 = vsub.s32 %v11284, %v11286
    %v11288 = vrot.slane %v11274, %v11287
    %v11289 = vcombine.high %v11281, %v11281
    %v11290 = vcombine.high %v11288, %v11288
    %v11291 = vcombine.high %v11227, %v11227
    %v11293 = vunpack.c.l.s4 1983009808
    %v11294 = vunpack.c.0.s8 %v11293
    %v11295 = vlaneseq
    %v11296 = vshrl.u32 %v11295, 7
    %v11297 = vsub.s32 %v11294, %v11296
    %v11298 = vrot.slane %v11227, %v11297
    %v11300 = vunpack.c.l.s4 1983009808
    %v11301 = vunpack.c.0.s8 %v11300
    %v11302 = vlaneseq
    %v11303 = vshrl.u32 %v11302, 7
    %v11304 = vsub.s32 %v11301, %v11303
    %v11305 = vrot.slane %v11291, %v11304
    %v11306 = vcombine.high %v11298, %v11298
    %v11307 = vcombine.high %v11305, %v11305
    %v11308 = vcombine.high %v11228, %v11228
    %v11310 = vunpack.c.l.s4 1983009808
    %v11311 = vunpack.c.0.s8 %v11310
    %v11312 = vlaneseq
    %v11313 = vshrl.u32 %v11312, 7
    %v11314 = vsub.s32 %v11311, %v11313
    %v11315 = vrot.slane %v11228, %v11314
    %v11317 = vunpack.c.l.s4 1983009808
    %v11318 = vunpack.c.0.s8 %v11317
    %v11319 = vlaneseq
    %v11320 = vshrl.u32 %v11319, 7
    %v11321 = vsub.s32 %v11318, %v11320
    %v11322 = vrot.slane %v11308, %v11321
    %v11323 = vcombine.high %v11315, %v11315
    %v11324 = vcombine.high %v11322, %v11322
    %v11325 = vcombine.high %v11229, %v11229
    %v11327 = vunpack.c.l.s4 1983009808
    %v11328 = vunpack.c.0.s8 %v11327
    %v11329 = vlaneseq
    %v11330 = vshrl.u32 %v11329, 7
    %v11331 = vsub.s32 %v11328, %v11330
    %v11332 = vrot.slane %v11229, %v11331
    %v11334 = vunpack.c.l.s4 1983009808
    %v11335 = vunpack.c.0.s8 %v11334
    %v11336 = vlaneseq
    %v11337 = vshrl.u32 %v11336, 7
    %v11338 = vsub.s32 %v11335, %v11337
    %v11339 = vrot.slane %v11325, %v11338
    %v11340 = vcombine.high %v11332, %v11332
    %v11341 = vcombine.high %v11339, %v11339
    %v11342 = vcombine.high %v11230, %v11230
    %v11344 = vunpack.c.l.s4 1983009808
    %v11345 = vunpack.c.0.s8 %v11344
    %v11346 = vlaneseq
    %v11347 = vshrl.u32 %v11346, 7
    %v11348 = vsub.s32 %v11345, %v11347
    %v11349 = vrot.slane %v11230, %v11348
    %v11351 = vunpack.c.l.s4 1983009808
    %v11352 = vunpack.c.0.s8 %v11351
    %v11353 = vlaneseq
    %v11354 = vshrl.u32 %v11353, 7
    %v11355 = vsub.s32 %v11352, %v11354
    %v11356 = vrot.slane %v11342, %v11355
    %v11357 = vcombine.high %v11349, %v11349
    %v11358 = vcombine.high %v11356, %v11356
    %v11359 = vcombine.high %v11231, %v11231
    %v11361 = vunpack.c.l.s4 1983009808
    %v11362 = vunpack.c.0.s8 %v11361
    %v11363 = vlaneseq
    %v11364 = vshrl.u32 %v11363, 7
    %v11365 = vsub.s32 %v11362, %v11364
    %v11366 = vrot.slane %v11231, %v11365
    %v11368 = vunpack.c.l.s4 1983009808
    %v11369 = vunpack.c.0.s8 %v11368
    %v11370 = vlaneseq
    %v11371 = vshrl.u32 %v11370, 7
    %v11372 = vsub.s32 %v11369, %v11371
    %v11373 = vrot.slane %v11359, %v11372
    %v11374 = vcombine.high %v11366, %v11366
    %v11375 = vcombine.high %v11373, %v11373
    %v11376 = vcombine.high %v11232, %v11232
    %v11378 = vunpack.c.l.s4 1983009808
    %v11379 = vunpack.c.0.s8 %v11378
    %v11380 = vlaneseq
    %v11381 = vshrl.u32 %v11380, 7
    %v11382 = vsub.s32 %v11379, %v11381
    %v11383 = vrot.slane %v11232, %v11382
    %v11385 = vunpack.c.l.s4 1983009808
    %v11386 = vunpack.c.0.s8 %v11385
    %v11387 = vlaneseq
    %v11388 = vshrl.u32 %v11387, 7
    %v11389 = vsub.s32 %v11386, %v11388
    %v11390 = vrot.slane %v11376, %v11389
    %v11391 = vcombine.high %v11383, %v11383
    %v11392 = vcombine.high %v11390, %v11390
    %v11393 = vcombine.high %v11233, %v11233
    %v11395 = vunpack.c.l.s4 1983009808
    %v11396 = vunpack.c.0.s8 %v11395
    %v11397 = vlaneseq
    %v11398 = vshrl.u32 %v11397, 7
    %v11399 = vsub.s32 %v11396, %v11398
    %v11400 = vrot.slane %v11233, %v11399
    %v11402 = vunpack.c.l.s4 1983009808
    %v11403 = vunpack.c.0.s8 %v11402
    %v11404 = vlaneseq
    %v11405 = vshrl.u32 %v11404, 7
    %v11406 = vsub.s32 %v11403, %v11405
    %v11407 = vrot.slane %v11393, %v11406
    %v11408 = vcombine.high %v11400, %v11400
    %v11409 = vcombine.high %v11407, %v11407
    %v11410 = vcombine.high %v11234, %v11234
    %v11412 = vunpack.c.l.s4 1983009808
    %v11413 = vunpack.c.0.s8 %v11412
    %v11414 = vlaneseq
    %v11415 = vshrl.u32 %v11414, 7
    %v11416 = vsub.s32 %v11413, %v11415
    %v11417 = vrot.slane %v11234, %v11416
    %v11419 = vunpack.c.l.s4 1983009808
    %v11420 = vunpack.c.0.s8 %v11419
    %v11421 = vlaneseq
    %v11422 = vshrl.u32 %v11421, 7
    %v11423 = vsub.s32 %v11420, %v11422
    %v11424 = vrot.slane %v11410, %v11423
    %v11425 = vcombine.high %v11417, %v11417
    %v11426 = vcombine.high %v11424, %v11424
    %v11427 = vcombine.high %v11235, %v11235
    %v11429 = vunpack.c.l.s4 1983009808
    %v11430 = vunpack.c.0.s8 %v11429
    %v11431 = vlaneseq
    %v11432 = vshrl.u32 %v11431, 7
    %v11433 = vsub.s32 %v11430, %v11432
    %v11434 = vrot.slane %v11235, %v11433
    %v11436 = vunpack.c.l.s4 1983009808
    %v11437 = vunpack.c.0.s8 %v11436
    %v11438 = vlaneseq
    %v11439 = vshrl.u32 %v11438, 7
    %v11440 = vsub.s32 %v11437, %v11439
    %v11441 = vrot.slane %v11427, %v11440
    %v11442 = vcombine.high %v11434, %v11434
    %v11443 = vcombine.high %v11441, %v11441
    %v11444 = vcombine.high %v11236, %v11236
    %v11446 = vunpack.c.l.s4 1983009808
    %v11447 = vunpack.c.0.s8 %v11446
    %v11448 = vlaneseq
    %v11449 = vshrl.u32 %v11448, 7
    %v11450 = vsub.s32 %v11447, %v11449
    %v11451 = vrot.slane %v11236, %v11450
    %v11453 = vunpack.c.l.s4 1983009808
    %v11454 = vunpack.c.0.s8 %v11453
    %v11455 = vlaneseq
    %v11456 = vshrl.u32 %v11455, 7
    %v11457 = vsub.s32 %v11454, %v11456
    %v11458 = vrot.slane %v11444, %v11457
    %v11459 = vcombine.high %v11451, %v11451
    %v11460 = vcombine.high %v11458, %v11458
    %v11461 = vcombine.high %v11237, %v11237
    %v11463 = vunpack.c.l.s4 1983009808
    %v11464 = vunpack.c.0.s8 %v11463
    %v11465 = vlaneseq
    %v11466 = vshrl.u32 %v11465, 7
    %v11467 = vsub.s32 %v11464, %v11466
    %v11468 = vrot.slane %v11237, %v11467
    %v11470 = vunpack.c.l.s4 1983009808
    %v11471 = vunpack.c.0.s8 %v11470
    %v11472 = vlaneseq
    %v11473 = vshrl.u32 %v11472, 7
    %v11474 = vsub.s32 %v11471, %v11473
    %v11475 = vrot.slane %v11461, %v11474
    %v11476 = vcombine.high %v11468, %v11468
    %v11477 = vcombine.high %v11475, %v11475
    %v11478 = vcombine.high %v11238, %v11238
    %v11480 = vunpack.c.l.s4 1983009808
    %v11481 = vunpack.c.0.s8 %v11480
    %v11482 = vlaneseq
    %v11483 = vshrl.u32 %v11482, 7
    %v11484 = vsub.s32 %v11481, %v11483
    %v11485 = vrot.slane %v11238, %v11484
    %v11487 = vunpack.c.l.s4 1983009808
    %v11488 = vunpack.c.0.s8 %v11487
    %v11489 = vlaneseq
    %v11490 = vshrl.u32 %v11489, 7
    %v11491 = vsub.s32 %v11488, %v11490
    %v11492 = vrot.slane %v11478, %v11491
    %v11493 = vcombine.high %v11485, %v11485
    %v11494 = vcombine.high %v11492, %v11492
    %v11495 = vcombine.high %v11239, %v11239
    %v11497 = vunpack.c.l.s4 1983009808
    %v11498 = vunpack.c.0.s8 %v11497
    %v11499 = vlaneseq
    %v11500 = vshrl.u32 %v11499, 7
    %v11501 = vsub.s32 %v11498, %v11500
    %v11502 = vrot.slane %v11239, %v11501
    %v11504 = vunpack.c.l.s4 1983009808
    %v11505 = vunpack.c.0.s8 %v11504
    %v11506 = vlaneseq
    %v11507 = vshrl.u32 %v11506, 7
    %v11508 = vsub.s32 %v11505, %v11507
    %v11509 = vrot.slane %v11495, %v11508
    %v11510 = vcombine.high %v11502, %v11502
    %v11511 = vcombine.high %v11509, %v11509
    %v11512 = vcombine.high %v11240, %v11240
    %v11514 = vunpack.c.l.s4 1983009808
    %v11515 = vunpack.c.0.s8 %v11514
    %v11516 = vlaneseq
    %v11517 = vshrl.u32 %v11516, 7
    %v11518 = vsub.s32 %v11515, %v11517
    %v11519 = vrot.slane %v11240, %v11518
    %v11521 = vunpack.c.l.s4 1983009808
    %v11522 = vunpack.c.0.s8 %v11521
    %v11523 = vlaneseq
    %v11524 = vshrl.u32 %v11523, 7
    %v11525 = vsub.s32 %v11522, %v11524
    %v11526 = vrot.slane %v11512, %v11525
    %v11527 = vcombine.high %v11519, %v11519
    %v11528 = vcombine.high %v11526, %v11526
    %v11593 = vrot.slane %v11264, 7
    %v11594 = vrot.slane %v11593, 2
    %v11595 = vrot.slane %v11272, 7
    %v11596 = vrot.slane %v11595, 2
    %v11597 = vrot.slane %v11271, 7
    %v11598 = vrot.slane %v11597, 2
    %v11599 = vrot.slane %v11273, 7
    %v11600 = vrot.slane %v11599, 2
    %v11601 = vrot.slane %v11298, 7
    %v11602 = vrot.slane %v11601, 2
    %v11603 = vrot.slane %v11306, 7
    %v11604 = vrot.slane %v11603, 2
    %v11605 = vrot.slane %v11305, 7
    %v11606 = vrot.slane %v11605, 2
    %v11607 = vrot.slane %v11307, 7
    %v11608 = vrot.slane %v11607, 2
    %v11609 = vrot.slane %v11332, 7
    %v11610 = vrot.slane %v11609, 2
    %v11611 = vrot.slane %v11340, 7
    %v11612 = vrot.slane %v11611, 2
    %v11613 = vrot.slane %v11339, 7
    %v11614 = vrot.slane %v11613, 2
    %v11615 = vrot.slane %v11341, 7
    %v11616 = vrot.slane %v11615, 2
    %v11617 = vrot.slane %v11366, 7
    %v11618 = vrot.slane %v11617, 2
    %v11619 = vrot.slane %v11374, 7
    %v11620 = vrot.slane %v11619, 2
    %v11621 = vrot.slane %v11373, 7
    %v11622 = vrot.slane %v11621, 2
    %v11623 = vrot.slane %v11375, 7
    %v11624 = vrot.slane %v11623, 2
    %v11625 = vrot.slane %v11400, 7
    %v11626 = vrot.slane %v11625, 2
    %v11627 = vrot.slane %v11408, 7
    %v11628 = vrot.slane %v11627, 2
    %v11629 = vrot.slane %v11407, 7
    %v11630 = vrot.slane %v11629, 2
    %v11631 = vrot.slane %v11409, 7
    %v11632 = vrot.slane %v11631, 2
    %v11633 = vrot.slane %v11434, 7
    %v11634 = vrot.slane %v11633, 2
    %v11635 = vrot.slane %v11442, 7
    %v11636 = vrot.slane %v11635, 2
    %v11637 = vrot.slane %v11441, 7
    %v11638 = vrot.slane %v11637, 2
    %v11639 = vrot.slane %v11443, 7
    %v11640 = vrot.slane %v11639, 2
    %v11641 = vrot.slane %v11468, 7
    %v11642 = vrot.slane %v11641, 2
    %v11643 = vrot.slane %v11476, 7
    %v11644 = vrot.slane %v11643, 2
    %v11645 = vrot.slane %v11475, 7
    %v11646 = vrot.slane %v11645, 2
    %v11647 = vrot.slane %v11477, 7
    %v11648 = vrot.slane %v11647, 2
    %v11649 = vrot.slane %v11502, 7
    %v11650 = vrot.slane %v11649, 2
    %v11651 = vrot.slane %v11510, 7
    %v11652 = vrot.slane %v11651, 2
    %v11653 = vrot.slane %v11509, 7
    %v11654 = vrot.slane %v11653, 2
    %v11655 = vrot.slane %v11511, 7
    %v11656 = vrot.slane %v11655, 2
    %v11689 = vmax.f32 %v11264, %v11594
    %v11690 = vmax.f32 %v11272, %v11596
    %v11691 = vmax.f32 %v11271, %v11598
    %v11692 = vmax.f32 %v11273, %v11600
    %v11693 = vmax.f32 %v11298, %v11602
    %v11694 = vmax.f32 %v11306, %v11604
    %v11695 = vmax.f32 %v11305, %v11606
    %v11696 = vmax.f32 %v11307, %v11608
    %v11697 = vmax.f32 %v11332, %v11610
    %v11698 = vmax.f32 %v11340, %v11612
    %v11699 = vmax.f32 %v11339, %v11614
    %v11700 = vmax.f32 %v11341, %v11616
    %v11701 = vmax.f32 %v11366, %v11618
    %v11702 = vmax.f32 %v11374, %v11620
    %v11703 = vmax.f32 %v11373, %v11622
    %v11704 = vmax.f32 %v11375, %v11624
    %v11705 = vmax.f32 %v11400, %v11626
    %v11706 = vmax.f32 %v11408, %v11628
    %v11707 = vmax.f32 %v11407, %v11630
    %v11708 = vmax.f32 %v11409, %v11632
    %v11709 = vmax.f32 %v11434, %v11634
    %v11710 = vmax.f32 %v11442, %v11636
    %v11711 = vmax.f32 %v11441, %v11638
    %v11712 = vmax.f32 %v11443, %v11640
    %v11713 = vmax.f32 %v11468, %v11642
    %v11714 = vmax.f32 %v11476, %v11644
    %v11715 = vmax.f32 %v11475, %v11646
    %v11716 = vmax.f32 %v11477, %v11648
    %v11717 = vmax.f32 %v11502, %v11650
    %v11718 = vmax.f32 %v11510, %v11652
    %v11719 = vmax.f32 %v11509, %v11654
    %v11720 = vmax.f32 %v11511, %v11656
    %v11721 = vrot.slane %v11281, 7
    %v11722 = vrot.slane %v11721, 2
    %v11723 = vrot.slane %v11289, 7
    %v11724 = vrot.slane %v11723, 2
    %v11725 = vrot.slane %v11288, 7
    %v11726 = vrot.slane %v11725, 2
    %v11727 = vrot.slane %v11290, 7
    %v11728 = vrot.slane %v11727, 2
    %v11729 = vrot.slane %v11315, 7
    %v11730 = vrot.slane %v11729, 2
    %v11731 = vrot.slane %v11323, 7
    %v11732 = vrot.slane %v11731, 2
    %v11733 = vrot.slane %v11322, 7
    %v11734 = vrot.slane %v11733, 2
    %v11735 = vrot.slane %v11324, 7
    %v11736 = vrot.slane %v11735, 2
    %v11737 = vrot.slane %v11349, 7
    %v11738 = vrot.slane %v11737, 2
    %v11739 = vrot.slane %v11357, 7
    %v11740 = vrot.slane %v11739, 2
    %v11741 = vrot.slane %v11356, 7
    %v11742 = vrot.slane %v11741, 2
    %v11743 = vrot.slane %v11358, 7
    %v11744 = vrot.slane %v11743, 2
    %v11745 = vrot.slane %v11383, 7
    %v11746 = vrot.slane %v11745, 2
    %v11747 = vrot.slane %v11391, 7
    %v11748 = vrot.slane %v11747, 2
    %v11749 = vrot.slane %v11390, 7
    %v11750 = vrot.slane %v11749, 2
    %v11751 = vrot.slane %v11392, 7
    %v11752 = vrot.slane %v11751, 2
    %v11753 = vrot.slane %v11417, 7
    %v11754 = vrot.slane %v11753, 2
    %v11755 = vrot.slane %v11425, 7
    %v11756 = vrot.slane %v11755, 2
    %v11757 = vrot.slane %v11424, 7
    %v11758 = vrot.slane %v11757, 2
    %v11759 = vrot.slane %v11426, 7
    %v11760 = vrot.slane %v11759, 2
    %v11761 = vrot.slane %v11451, 7
    %v11762 = vrot.slane %v11761, 2
    %v11763 = vrot.slane %v11459, 7
    %v11764 = vrot.slane %v11763, 2
    %v11765 = vrot.slane %v11458, 7
    %v11766 = vrot.slane %v11765, 2
    %v11767 = vrot.slane %v11460, 7
    %v11768 = vrot.slane %v11767, 2
    %v11769 = vrot.slane %v11485, 7
    %v11770 = vrot.slane %v11769, 2
    %v11771 = vrot.slane %v11493, 7
    %v11772 = vrot.slane %v11771, 2
    %v11773 = vrot.slane %v11492, 7
    %v11774 = vrot.slane %v11773, 2
    %v11775 = vrot.slane %v11494, 7
    %v11776 = vrot.slane %v11775, 2
    %v11777 = vrot.slane %v11519, 7
    %v11778 = vrot.slane %v11777, 2
    %v11779 = vrot.slane %v11527, 7
    %v11780 = vrot.slane %v11779, 2
    %v11781 = vrot.slane %v11526, 7
    %v11782 = vrot.slane %v11781, 2
    %v11783 = vrot.slane %v11528, 7
    %v11784 = vrot.slane %v11783, 2
    %v11817 = vmax.f32 %v11281, %v11722
    %v11818 = vmax.f32 %v11289, %v11724
    %v11819 = vmax.f32 %v11288, %v11726
    %v11820 = vmax.f32 %v11290, %v11728
    %v11821 = vmax.f32 %v11315, %v11730
    %v11822 = vmax.f32 %v11323, %v11732
    %v11823 = vmax.f32 %v11322, %v11734
    %v11824 = vmax.f32 %v11324, %v11736
    %v11825 = vmax.f32 %v11349, %v11738
    %v11826 = vmax.f32 %v11357, %v11740
    %v11827 = vmax.f32 %v11356, %v11742
    %v11828 = vmax.f32 %v11358, %v11744
    %v11829 = vmax.f32 %v11383, %v11746
    %v11830 = vmax.f32 %v11391, %v11748
    %v11831 = vmax.f32 %v11390, %v11750
    %v11832 = vmax.f32 %v11392, %v11752
    %v11833 = vmax.f32 %v11417, %v11754
    %v11834 = vmax.f32 %v11425, %v11756
    %v11835 = vmax.f32 %v11424, %v11758
    %v11836 = vmax.f32 %v11426, %v11760
    %v11837 = vmax.f32 %v11451, %v11762
    %v11838 = vmax.f32 %v11459, %v11764
    %v11839 = vmax.f32 %v11458, %v11766
    %v11840 = vmax.f32 %v11460, %v11768
    %v11841 = vmax.f32 %v11485, %v11770
    %v11842 = vmax.f32 %v11493, %v11772
    %v11843 = vmax.f32 %v11492, %v11774
    %v11844 = vmax.f32 %v11494, %v11776
    %v11845 = vmax.f32 %v11519, %v11778
    %v11846 = vmax.f32 %v11527, %v11780
    %v11847 = vmax.f32 %v11526, %v11782
    %v11848 = vmax.f32 %v11528, %v11784
    %v11849 = vmax.f32 %v11689, %v11817
    %v11850 = vmax.f32 %v11690, %v11818
    %v11851 = vmax.f32 %v11691, %v11819
    %v11852 = vmax.f32 %v11692, %v11820
    %v11853 = vmax.f32 %v11693, %v11821
    %v11854 = vmax.f32 %v11694, %v11822
    %v11855 = vmax.f32 %v11695, %v11823
    %v11856 = vmax.f32 %v11696, %v11824
    %v11857 = vmax.f32 %v11697, %v11825
    %v11858 = vmax.f32 %v11698, %v11826
    %v11859 = vmax.f32 %v11699, %v11827
    %v11860 = vmax.f32 %v11700, %v11828
    %v11861 = vmax.f32 %v11701, %v11829
    %v11862 = vmax.f32 %v11702, %v11830
    %v11863 = vmax.f32 %v11703, %v11831
    %v11864 = vmax.f32 %v11704, %v11832
    %v11865 = vmax.f32 %v11705, %v11833
    %v11866 = vmax.f32 %v11706, %v11834
    %v11867 = vmax.f32 %v11707, %v11835
    %v11868 = vmax.f32 %v11708, %v11836
    %v11869 = vmax.f32 %v11709, %v11837
    %v11870 = vmax.f32 %v11710, %v11838
    %v11871 = vmax.f32 %v11711, %v11839
    %v11872 = vmax.f32 %v11712, %v11840
    %v11873 = vmax.f32 %v11713, %v11841
    %v11874 = vmax.f32 %v11714, %v11842
    %v11875 = vmax.f32 %v11715, %v11843
    %v11876 = vmax.f32 %v11716, %v11844
    %v11877 = vmax.f32 %v11717, %v11845
    %v11878 = vmax.f32 %v11718, %v11846
    %v11879 = vmax.f32 %v11719, %v11847
    %v11880 = vmax.f32 %v11720, %v11848
    %v11913 = vlaneseq
    %v11914 = vshrl.u32 %v11913, 7
    %v11915 = vsub.s32 0, %v11914
    %v11916 = vrot.slane %v11849, %v11915
    %v11917 = vlaneseq
    %v11918 = vshrl.u32 %v11917, 7
    %v11919 = vsub.s32 0, %v11918
    %v11920 = vrot.slane %v11850, %v11919
    %v11921 = vlaneseq
    %v11922 = vshrl.u32 %v11921, 7
    %v11923 = vsub.s32 0, %v11922
    %v11924 = vrot.slane %v11851, %v11923
    %v11925 = vlaneseq
    %v11926 = vshrl.u32 %v11925, 7
    %v11927 = vsub.s32 0, %v11926
    %v11928 = vrot.slane %v11852, %v11927
    %v11929 = vlaneseq
    %v11930 = vshrl.u32 %v11929, 7
    %v11931 = vsub.s32 0, %v11930
    %v11932 = vrot.slane %v11853, %v11931
    %v11933 = vlaneseq
    %v11934 = vshrl.u32 %v11933, 7
    %v11935 = vsub.s32 0, %v11934
    %v11936 = vrot.slane %v11854, %v11935
    %v11937 = vlaneseq
    %v11938 = vshrl.u32 %v11937, 7
    %v11939 = vsub.s32 0, %v11938
    %v11940 = vrot.slane %v11855, %v11939
    %v11941 = vlaneseq
    %v11942 = vshrl.u32 %v11941, 7
    %v11943 = vsub.s32 0, %v11942
    %v11944 = vrot.slane %v11856, %v11943
    %v11945 = vlaneseq
    %v11946 = vshrl.u32 %v11945, 7
    %v11947 = vsub.s32 0, %v11946
    %v11948 = vrot.slane %v11857, %v11947
    %v11949 = vlaneseq
    %v11950 = vshrl.u32 %v11949, 7
    %v11951 = vsub.s32 0, %v11950
    %v11952 = vrot.slane %v11858, %v11951
    %v11953 = vlaneseq
    %v11954 = vshrl.u32 %v11953, 7
    %v11955 = vsub.s32 0, %v11954
    %v11956 = vrot.slane %v11859, %v11955
    %v11957 = vlaneseq
    %v11958 = vshrl.u32 %v11957, 7
    %v11959 = vsub.s32 0, %v11958
    %v11960 = vrot.slane %v11860, %v11959
    %v11961 = vlaneseq
    %v11962 = vshrl.u32 %v11961, 7
    %v11963 = vsub.s32 0, %v11962
    %v11964 = vrot.slane %v11861, %v11963
    %v11965 = vlaneseq
    %v11966 = vshrl.u32 %v11965, 7
    %v11967 = vsub.s32 0, %v11966
    %v11968 = vrot.slane %v11862, %v11967
    %v11969 = vlaneseq
    %v11970 = vshrl.u32 %v11969, 7
    %v11971 = vsub.s32 0, %v11970
    %v11972 = vrot.slane %v11863, %v11971
    %v11973 = vlaneseq
    %v11974 = vshrl.u32 %v11973, 7
    %v11975 = vsub.s32 0, %v11974
    %v11976 = vrot.slane %v11864, %v11975
    %v11977 = vlaneseq
    %v11978 = vshrl.u32 %v11977, 7
    %v11979 = vsub.s32 0, %v11978
    %v11980 = vrot.slane %v11865, %v11979
    %v11981 = vlaneseq
    %v11982 = vshrl.u32 %v11981, 7
    %v11983 = vsub.s32 0, %v11982
    %v11984 = vrot.slane %v11866, %v11983
    %v11985 = vlaneseq
    %v11986 = vshrl.u32 %v11985, 7
    %v11987 = vsub.s32 0, %v11986
    %v11988 = vrot.slane %v11867, %v11987
    %v11989 = vlaneseq
    %v11990 = vshrl.u32 %v11989, 7
    %v11991 = vsub.s32 0, %v11990
    %v11992 = vrot.slane %v11868, %v11991
    %v11993 = vlaneseq
    %v11994 = vshrl.u32 %v11993, 7
    %v11995 = vsub.s32 0, %v11994
    %v11996 = vrot.slane %v11869, %v11995
    %v11997 = vlaneseq
    %v11998 = vshrl.u32 %v11997, 7
    %v11999 = vsub.s32 0, %v11998
    %v12000 = vrot.slane %v11870, %v11999
    %v12001 = vlaneseq
    %v12002 = vshrl.u32 %v12001, 7
    %v12003 = vsub.s32 0, %v12002
    %v12004 = vrot.slane %v11871, %v12003
    %v12005 = vlaneseq
    %v12006 = vshrl.u32 %v12005, 7
    %v12007 = vsub.s32 0, %v12006
    %v12008 = vrot.slane %v11872, %v12007
    %v12009 = vlaneseq
    %v12010 = vshrl.u32 %v12009, 7
    %v12011 = vsub.s32 0, %v12010
    %v12012 = vrot.slane %v11873, %v12011
    %v12013 = vlaneseq
    %v12014 = vshrl.u32 %v12013, 7
    %v12015 = vsub.s32 0, %v12014
    %v12016 = vrot.slane %v11874, %v12015
    %v12017 = vlaneseq
    %v12018 = vshrl.u32 %v12017, 7
    %v12019 = vsub.s32 0, %v12018
    %v12020 = vrot.slane %v11875, %v12019
    %v12021 = vlaneseq
    %v12022 = vshrl.u32 %v12021, 7
    %v12023 = vsub.s32 0, %v12022
    %v12024 = vrot.slane %v11876, %v12023
    %v12025 = vlaneseq
    %v12026 = vshrl.u32 %v12025, 7
    %v12027 = vsub.s32 0, %v12026
    %v12028 = vrot.slane %v11877, %v12027
    %v12029 = vlaneseq
    %v12030 = vshrl.u32 %v12029, 7
    %v12031 = vsub.s32 0, %v12030
    %v12032 = vrot.slane %v11878, %v12031
    %v12033 = vlaneseq
    %v12034 = vshrl.u32 %v12033, 7
    %v12035 = vsub.s32 0, %v12034
    %v12036 = vrot.slane %v11879, %v12035
    %v12037 = vlaneseq
    %v12038 = vshrl.u32 %v12037, 7
    %v12039 = vsub.s32 0, %v12038
    %v12040 = vrot.slane %v11880, %v12039
    %v12041 = vsel %vm9175, %v11920, %v11916
    %v12042 = vsel %vm9177, %v11924, %v12041
    %v12043 = vsel %vm9179, %v11928, %v12042
    %v12044 = vsel %vm9175, %v11936, %v11932
    %v12045 = vsel %vm9177, %v11940, %v12044
    %v12046 = vsel %vm9179, %v11944, %v12045
    %v12047 = vsel %vm9175, %v11952, %v11948
    %v12048 = vsel %vm9177, %v11956, %v12047
    %v12049 = vsel %vm9179, %v11960, %v12048
    %v12050 = vsel %vm9175, %v11968, %v11964
    %v12051 = vsel %vm9177, %v11972, %v12050
    %v12052 = vsel %vm9179, %v11976, %v12051
    %v12053 = vsel %vm9175, %v11984, %v11980
    %v12054 = vsel %vm9177, %v11988, %v12053
    %v12055 = vsel %vm9179, %v11992, %v12054
    %v12056 = vsel %vm9175, %v12000, %v11996
    %v12057 = vsel %vm9177, %v12004, %v12056
    %v12058 = vsel %vm9179, %v12008, %v12057
    %v12059 = vsel %vm9175, %v12016, %v12012
    %v12060 = vsel %vm9177, %v12020, %v12059
    %v12061 = vsel %vm9179, %v12024, %v12060
    %v12062 = vsel %vm9175, %v12032, %v12028
    %v12063 = vsel %vm9177, %v12036, %v12062
    %v12064 = vsel %vm9179, %v12040, %v12063
    %vm12073 = vcmask 125952
    %v12074 = vsel %vm12073, %v12043, 0.0
    %v12075 = vsel %vm12073, %v12046, 0.0
    %v12076 = vadd.f32 %v12074, %v12075
    %v12077 = vsel %vm12073, %v12049, 0.0
    %v12078 = vadd.f32 %v12076, %v12077
    %v12079 = vsel %vm12073, %v12052, 0.0
    %v12080 = vadd.f32 %v12078, %v12079
    %v12081 = vrot.slane %v12080, 4
    %v12082 = vadd.f32 %v12080, %v12081
    %v12083 = vrot.slane %v12082, 2
    %v12084 = vadd.f32 %v12082, %v12083
    %v12085 = vrot.slane %v12084, 1
    %v12086 = vadd.f32 %v12084, %v12085
    %v12087 = vsel %vm12073, %v12055, 0.0
    %v12088 = vsel %vm12073, %v12058, 0.0
    %v12089 = vadd.f32 %v12087, %v12088
    %v12090 = vsel %vm12073, %v12061, 0.0
    %v12091 = vadd.f32 %v12089, %v12090
    %v12092 = vsel %vm12073, %v12064, 0.0
    %v12093 = vadd.f32 %v12091, %v12092
    %v12094 = vrot.slane %v12093, 4
    %v12095 = vadd.f32 %v12093, %v12094
    %v12096 = vrot.slane %v12095, 2
    %v12097 = vadd.f32 %v12095, %v12096
    %v12098 = vrot.slane %v12097, 1
    %v12099 = vadd.f32 %v12097, %v12098
    %v12100 = vrcp.pop 16.0
    %v12101 = vmul.f32 %v12086, %v12100
    %v12102 = vmul.f32 %v12099, %v12100
    %v12103 = vld [vmem:[%s3] sm:$0xff]
    %v12104 = vld [vmem:[%s3 + $0x8] sm:$0xff]
    %v12105 = vld [vmem:[%s4] sm:$0x1]
    %v12107 = vlaneseq
    %v12108 = vshrl.u32 %v12107, 7
    %v12109 = vsub.s32 0, %v12108
    %v12110 = vrot.slane %v12105, %v12109
    %v12114 = vrot.slane %v12102, 7
    %v12115 = vsel %vm9175, %v12114, %v12101
    %v12116 = vsel %vm10952, %v12115, 0
    %12118 = vmatprep.subr.mxu0 0.0
    %12119 = vmatpush1.msra.mxu0 %v12103
    %12120 = vmatprep.subr.mxu0 0.0
    %12121 = vmatpush1.msra.mxu0 %v12104
    %12122 = vmatprep.subr.mxu0 0.0
    %12123 = vmatpush1.msra.mxu0 0.0
    %12124 = vmatprep.subr.mxu0 0.0
    %12125 = vmatpush1.msra.mxu0 0.0
    %12126 = vmatprep.subr.mxu0 0.0
    %12127 = vmatpush1.msra.mxu0 0.0
    %12128 = vmatprep.subr.mxu0 0.0
    %12129 = vmatpush1.msra.mxu0 0.0
    %12130 = vmatprep.subr.mxu0 0.0
    %12131 = vmatpush1.msra.mxu0 0.0
    %12132 = vmatprep.subr.mxu0 0.0
    %12133 = vmatpush1.msra.mxu0 0.0
    %12134 = vmatprep.subr.mxu0 0.0
    %12135 = vmatpush1.msra.mxu0 0.0
    %12136 = vmatprep.subr.mxu0 0.0
    %12137 = vmatpush1.msra.mxu0 0.0
    %12138 = vmatprep.subr.mxu0 0.0
    %12139 = vmatpush1.msra.mxu0 0.0
    %12140 = vmatprep.subr.mxu0 0.0
    %12141 = vmatpush1.msra.mxu0 0.0
    %12142 = vmatprep.subr.mxu0 0.0
    %12143 = vmatpush1.msra.mxu0 0.0
    %12144 = vmatprep.subr.mxu0 0.0
    %12145 = vmatpush1.msra.mxu0 0.0
    %12146 = vmatprep.subr.mxu0 0.0
    %12147 = vmatpush1.msra.mxu0 0.0
    %12148 = vmatprep.subr.mxu0 0.0
    %12149 = vmatpush1.msra.mxu0 0.0
    %12150 = vmatprep.subr.mxu0 0.0
    %12151 = vmatpush1.msra.mxu0 0.0
    %12152 = vmatprep.subr.mxu0 0.0
    %12153 = vmatpush1.msra.mxu0 0.0
    %12154 = vmatprep.subr.mxu0 0.0
    %12155 = vmatpush1.msra.mxu0 0.0
    %12156 = vmatprep.subr.mxu0 0.0
    %12157 = vmatpush1.msra.mxu0 0.0
    %12158 = vmatprep.subr.mxu0 0.0
    %12159 = vmatpush1.msra.mxu0 0.0
    %12160 = vmatprep.subr.mxu0 0.0
    %12161 = vmatpush1.msra.mxu0 0.0
    %12162 = vmatprep.subr.mxu0 0.0
    %12163 = vmatpush1.msra.mxu0 0.0
    %12164 = vmatprep.subr.mxu0 0.0
    %12165 = vmatpush1.msra.mxu0 0.0
    %12166 = vmatprep.subr.mxu0 0.0
    %12167 = vmatpush1.msra.mxu0 0.0
    %12168 = vmatprep.subr.mxu0 0.0
    %12169 = vmatpush1.msra.mxu0 0.0
    %12170 = vmatprep.subr.mxu0 0.0
    %12171 = vmatpush1.msra.mxu0 0.0
    %12172 = vmatprep.subr.mxu0 0.0
    %12173 = vmatpush1.msra.mxu0 0.0
    %12174 = vmatprep.subr.mxu0 0.0
    %12175 = vmatpush1.msra.mxu0 0.0
    %12176 = vmatprep.subr.mxu0 0.0
    %12177 = vmatpush1.msra.mxu0 0.0
    %12178 = vmatprep.subr.mxu0 0.0
    %12179 = vmatpush1.msra.mxu0 0.0
    %12180 = vmatprep.subr.mxu0 0.0
    %12181 = vmatpush1.msra.mxu0 0.0
    %12182 = vmatprep.mubr.f32.mxu0 0.0
    %12183 = vmatmul.mubr.f32.gmra.mrb[0].mxu0 %v12116
    %v12184 = vpop.f32.mrb[0].mxu0
    %v12185 = vadd.f32 %v12110, %v12184
    %v12186 = vpop.f32.mrb[0].mxu0
    %12187 = vdwg.mxu0
    %vm12188 = vcmask 74752
    %12189 = vst.msk [vmem:[#allocation4] sm:$0x3] %vm12188, %v12185
    // Predicated region
    $region22: #{vgg_cifar_forward.1} parent=1 // pred_check
      _
    $region23: #{vgg_cifar_forward.1} parent=1 // pred_check_branch
      %12191 = sbr.rel (0) target = $region25
    $region24: #{vgg_cifar_forward.1} parent=1 // pred_region
      %s12193 = ssub.s32 32, 32
      %12194 = vsyncadd [#allocation5], %s12193
      %s12196 = sshll.u32 [#allocation4], 4
      %s12197 = int_to_ptr.vmem [resolvable:$true] %s12196
      %12199 = dma.vmem_to_hbm [thread:$0]  %s12197, 32, %s5, [#allocation5]
    $region25: #{vgg_cifar_forward.1} parent=1 // pred_fallthru
      _
    // Predicated region
    $region26: #{vgg_cifar_forward.1} parent=1 // pred_check
      _
    $region27: #{vgg_cifar_forward.1} parent=1 // pred_check_branch
      %12201 = sbr.rel (0) target = $region29
    $region28: #{vgg_cifar_forward.1} parent=1 // pred_region
      %12202 = dma.done [#allocation5], 32
    $region29: #{vgg_cifar_forward.1} parent=1 // pred_fallthru
      _
    %12203 = vsyncpa [#allocation5], 1

</llo_original>
